<compile_context>
chip_gen: v6e
topology: v6e:2x2x1
jax: 0.10.0
libtpu: 0.0.40
codegen_flags: <defaults>
</compile_context>

<pallas_src>
import functools
import math

import jax
import jax.numpy as jnp
from jax.experimental import pallas as pl
from jax.experimental.pallas import tpu as pltpu

EPS = 1e-5          # F.layer_norm default eps
N_ACTIONS = 6

_VMEM = pl.BlockSpec(memory_space=pltpu.MemorySpace.VMEM)


# --------------------------------------------------------------------------------------
# Pallas kernels
# --------------------------------------------------------------------------------------
def layernorm_kernel(x_ref, o_ref):
    # x_ref: (1, R, C) f32 -- one sample's features as a 2-D slab.
    x = x_ref[0]
    mean = jnp.mean(x)
    var = jnp.mean((x - mean) ** 2)
    y = (x - mean) * jax.lax.rsqrt(var + EPS)
    o_ref[...] = y.astype(o_ref.dtype)[None]


def conv_relu_kernel(p_ref, w_ref, b_ref, o_ref):
    # p_ref: (1, K, M) bf16   w_ref: (OC, K) bf16   b_ref: (OC, 1) f32
    # o_ref: (1, OC, M)  -- lane-dense: last dim M = OH*OW.
    acc = jnp.dot(w_ref[...], p_ref[0], preferred_element_type=jnp.float32)
    acc = jnp.maximum(acc + b_ref[...], 0.0)
    o_ref[...] = acc.astype(o_ref.dtype)[None]


def conv_ln_relu_kernel(p_ref, w_ref, b_ref, o_ref):
    # conv + bias + per-sample LayerNorm (over all OC*M elements) + ReLU, fused.
    acc = jnp.dot(w_ref[...], p_ref[0], preferred_element_type=jnp.float32)
    acc = acc + b_ref[...]
    mean = jnp.mean(acc)
    var = jnp.mean((acc - mean) ** 2)
    y = (acc - mean) * jax.lax.rsqrt(var + EPS)
    y = jnp.maximum(y, 0.0)
    o_ref[...] = y.astype(o_ref.dtype)[None]


def dueling_head_kernel(x_ref, w_ref, b_ref, o_ref, *, n_actions):
    # x_ref: (B, 8192) bf16   w_ref: (8192, A+1) bf16 (cols 0..A-1 = advantage, col A = value)
    # b_ref: (1, A+1) f32     o_ref: (B, A) f32
    out = jnp.dot(x_ref[...], w_ref[...], preferred_element_type=jnp.float32)
    out = out + b_ref[...]
    adv = out[:, :n_actions]
    v = out[:, n_actions:n_actions + 1]
    # q = v + advantage - mean(advantage); torch.mean(advantage) is a global scalar mean.
    o_ref[...] = v + adv - jnp.mean(adv)


# --------------------------------------------------------------------------------------
# Pallas wrappers
# --------------------------------------------------------------------------------------
def layer_norm_input_pallas(x):
    """Per-sample LayerNorm over all non-batch dims (no affine), f32 math, bf16 output
    (feeds the bf16 conv1 matmul).  Presented as a (C*H, W) slab per sample."""
    b, c, h, w = x.shape
    xf = x.reshape(b, c * h, w)
    out = pl.pallas_call(
        layernorm_kernel,
        out_shape=jax.ShapeDtypeStruct((b, c * h, w), jnp.bfloat16),
        grid=(b,),
        in_specs=[pl.BlockSpec((1, c * h, w), lambda i: (i, 0, 0))],
        out_specs=pl.BlockSpec((1, c * h, w), lambda i: (i, 0, 0)),
        compiler_params=pltpu.CompilerParams(dimension_semantics=("parallel",)),
    )(xf)
    return out.reshape(b, c, h, w)


def _im2col_kt(x, kh, kw, stride):
    """NCHW -> (B, C*KH*KW, OH*OW) patches, feature order (c, kh, kw) to match
    torch weight.reshape(OC, -1); K-major so the kernel computes W @ patches and
    stores a lane-dense (OC, OH*OW) tile that is already the NCHW flatten."""
    b, c, h, w = x.shape
    oh = (h - kh) // stride + 1
    ow = (w - kw) // stride + 1
    p = jax.lax.conv_general_dilated_patches(
        x, filter_shape=(kh, kw), window_strides=(stride, stride), padding="VALID")
    return p.reshape(b, c * kh * kw, oh * ow), oh, ow


def conv_fused_pallas(x, w, bias, *, stride, fuse_layernorm):
    """PyTorch-semantics Conv2d (VALID padding) with fused bias (+ LayerNorm) + ReLU.
    One grid step per sample; MXU inputs in bf16, accumulation/epilogue in f32."""
    oc, ic, kh, kw = w.shape
    bsz = x.shape[0]
    patches, oh, ow = _im2col_kt(x.astype(jnp.bfloat16), kh, kw, stride)
    k = ic * kh * kw
    m = oh * ow
    w2d = w.reshape(oc, k).astype(jnp.bfloat16)        # (OC, K)
    b2d = bias.reshape(oc, 1).astype(jnp.float32)      # (OC, 1)
    kern = conv_ln_relu_kernel if fuse_layernorm else conv_relu_kernel
    out = pl.pallas_call(
        kern,
        out_shape=jax.ShapeDtypeStruct((bsz, oc, m), jnp.bfloat16),
        grid=(bsz,),
        in_specs=[
            pl.BlockSpec((1, k, m), lambda i: (i, 0, 0)),
            pl.BlockSpec((oc, k), lambda i: (0, 0)),
            pl.BlockSpec((oc, 1), lambda i: (0, 0)),
        ],
        out_specs=pl.BlockSpec((1, oc, m), lambda i: (i, 0, 0)),
        compiler_params=pltpu.CompilerParams(dimension_semantics=("parallel",)),
    )(patches, w2d, b2d)
    return out.reshape(bsz, oc, oh, ow)                # NCHW (bf16)


def dueling_head_pallas(flat, w_cat, b_cat, n_actions):
    bsz = flat.shape[0]
    kern = functools.partial(dueling_head_kernel, n_actions=n_actions)
    return pl.pallas_call(
        kern,
        out_shape=jax.ShapeDtypeStruct((bsz, n_actions), jnp.float32),
        in_specs=[_VMEM, _VMEM, _VMEM],
        out_specs=_VMEM,
    )(flat, w_cat, b_cat)


# --------------------------------------------------------------------------------------
# Model: parameter init + forward
# --------------------------------------------------------------------------------------
def init_params(key, n_actions=N_ACTIONS):
    ks = jax.random.split(key, 10)

    def uinit(k, shape, fan_in):
        bound = 1.0 / math.sqrt(fan_in)
        return jax.random.uniform(k, shape, jnp.float32, -bound, bound)

    return {
        "w1": uinit(ks[0], (32, 4, 10, 10), 4 * 10 * 10),
        "b1": uinit(ks[1], (32,), 4 * 10 * 10),
        "w2": uinit(ks[2], (64, 32, 4, 4), 32 * 4 * 4),
        "b2": uinit(ks[3], (64,), 32 * 4 * 4),
        "w3": uinit(ks[4], (64, 64, 3, 3), 64 * 3 * 3),
        "b3": uinit(ks[5], (64,), 64 * 3 * 3),
        "fc1_w": uinit(ks[6], (8192, 1), 8192),          # value head, (K, 1) for x @ w
        "fc1_b": uinit(ks[7], (1,), 8192),
        "fc2_w": uinit(ks[8], (8192, n_actions), 8192),  # advantage head, (K, A)
        "fc2_b": uinit(ks[9], (n_actions,), 8192),
    }


@jax.jit
def deep_q_forward(x, params):
    # input = F.layer_norm(input, input.shape[1:])
    xn = layer_norm_input_pallas(x)
    # conv1 + relu (fused)
    c1 = conv_fused_pallas(xn, params["w1"], params["b1"], stride=8, fuse_layernorm=False)
    # conv2 -> layer_norm -> relu (fused in one kernel)
    c2 = conv_fused_pallas(c1, params["w2"], params["b2"], stride=2, fuse_layernorm=True)
    # conv3 -> layer_norm -> relu (fused in one kernel)
    c3 = conv_fused_pallas(c2, params["w3"], params["b3"], stride=1, fuse_layernorm=True)
    # view(-1, 8192): conv kernels already store the NCHW-flatten (C, H*W) per sample.
    flat = c3.reshape(-1, 8192)
    # dueling head: value stream folded into the advantage matmul as an extra column.
    n_actions = params["fc2_w"].shape[1]
    w_cat = jnp.concatenate([params["fc2_w"], params["fc1_w"]], axis=1).astype(jnp.bfloat16)
    b_cat = jnp.concatenate([params["fc2_b"], params["fc1_b"]]).reshape(1, n_actions + 1)
    # q = v + advantage - mean(advantage)   (global scalar mean, as in the reference)
    return dueling_head_pallas(flat, w_cat, b_cat, n_actions)


# --------------------------------------------------------------------------------------
if __name__ == "__main__":
    key = jax.random.PRNGKey(0)
    pkey, xkey = jax.random.split(key)

    params = init_params(pkey)

    # Smallest input consistent with the hard-coded 8192 flatten:
    # (B, 4, 178, 306) -> conv1 (22,38) -> conv2 (10,18) -> conv3 (8,16); 64*8*16 = 8192.
    x = jax.random.normal(xkey, (2, 4, 178, 306), dtype=jnp.float32)

    q = jax.block_until_ready(deep_q_forward(x, params))

    assert q.shape == (2, N_ACTIONS), q.shape
    assert bool(jnp.all(jnp.isfinite(q)))
    print("KERNEL_OK")
</pallas_src>

<mosaic_0001>
module attributes {stable_mosaic.version = 11 : i64} {
  func.func @layernorm_kernel(%arg0: i32, %arg1: memref<1x712x306xf32, #tpu.memory_space<vmem>>, %arg2: memref<1x712x306xbf16, #tpu.memory_space<vmem>>) attributes {dimension_semantics = [#tpu.dimension_semantics<parallel>], iteration_bounds = array<i64: 2>, scalar_prefetch = 0 : i64, scratch_operands = 0 : i64, tpu.core_type = #tpu.core_type<tc>, window_params = [{transform_indices = @transform_0, window_bounds = array<i64: 1, 712, 306>}, {transform_indices = @transform_1, window_bounds = array<i64: 1, 712, 306>}]} {
    %c0 = arith.constant 0 : index
    %c0_0 = arith.constant 0 : index
    %c0_1 = arith.constant 0 : index
    %0 = vector.load %arg1[%c0, %c0_0, %c0_1] : memref<1x712x306xf32, #tpu.memory_space<vmem>>, vector<1x712x306xf32>
    %1 = vector.shape_cast %0 : vector<1x712x306xf32> to vector<712x306xf32>
    %2 = vector.shape_cast %1 : vector<712x306xf32> to vector<1x712x306xf32>
    %cst = arith.constant dense<0.000000e+00> : vector<1xf32>
    %3 = vector.multi_reduction <add>, %2, %cst [1, 2] : vector<1x712x306xf32> to vector<1xf32>
    %4 = vector.shape_cast %3 : vector<1xf32> to vector<1x1x1xf32>
    %5 = vector.extract %4[0, 0, 0] : f32 from vector<1x1x1xf32>
    %cst_2 = arith.constant 2.178720e+05 : f32
    %6 = arith.divf %5, %cst_2 : f32
    %7 = vector.broadcast %6 : f32 to vector<712x306xf32>
    %8 = arith.subf %1, %7 : vector<712x306xf32>
    %9 = arith.mulf %8, %8 : vector<712x306xf32>
    %10 = vector.shape_cast %9 : vector<712x306xf32> to vector<1x712x306xf32>
    %cst_3 = arith.constant dense<0.000000e+00> : vector<1xf32>
    %11 = vector.multi_reduction <add>, %10, %cst_3 [1, 2] : vector<1x712x306xf32> to vector<1xf32>
    %12 = vector.shape_cast %11 : vector<1xf32> to vector<1x1x1xf32>
    %13 = vector.extract %12[0, 0, 0] : f32 from vector<1x1x1xf32>
    %cst_4 = arith.constant 2.178720e+05 : f32
    %14 = arith.divf %13, %cst_4 : f32
    %15 = vector.broadcast %6 : f32 to vector<712x306xf32>
    %16 = arith.subf %1, %15 : vector<712x306xf32>
    %cst_5 = arith.constant 9.99999974E-6 : f32
    %17 = arith.addf %14, %cst_5 : f32
    %18 = math.rsqrt %17 : f32
    %19 = vector.broadcast %18 : f32 to vector<712x306xf32>
    %20 = arith.mulf %16, %19 : vector<712x306xf32>
    %21 = arith.truncf %20 : vector<712x306xf32> to vector<712x306xbf16>
    %22 = vector.shape_cast %21 : vector<712x306xbf16> to vector<1x712x306xbf16>
    %c0_6 = arith.constant 0 : index
    %c0_7 = arith.constant 0 : index
    %c0_8 = arith.constant 0 : index
    %23 = vector.load %arg2[%c0_6, %c0_7, %c0_8] : memref<1x712x306xbf16, #tpu.memory_space<vmem>>, vector<1x712x306xbf16>
    tpu.vector_store %arg2[%c0_6, %c0_7, %c0_8], %22 {strides = array<i32>} : memref<1x712x306xbf16, #tpu.memory_space<vmem>>, vector<1x712x306xbf16>,
    return
  }
  func.func @transform_0(%arg0: i32) -> (i32, i32, i32) {
    %c0_i32 = arith.constant 0 : i32
    %c0_i32_0 = arith.constant 0 : i32
    %c0_i32_1 = arith.constant 0 : i32
    return %arg0, %c0_i32, %c0_i32_0 : i32, i32, i32
  }
  func.func @transform_1(%arg0: i32) -> (i32, i32, i32) {
    %c0_i32 = arith.constant 0 : i32
    %c0_i32_0 = arith.constant 0 : i32
    %c0_i32_1 = arith.constant 0 : i32
    return %arg0, %c0_i32, %c0_i32_0 : i32, i32, i32
  }
}

module attributes {stable_mosaic.version = 11 : i64} {
  func.func @conv_relu_kernel(%arg0: i32, %arg1: memref<1x400x836xbf16, #tpu.memory_space<vmem>>, %arg2: memref<32x400xbf16, #tpu.memory_space<vmem>>, %arg3: memref<32x1xf32, #tpu.memory_space<vmem>>, %arg4: memref<1x32x836xbf16, #tpu.memory_space<vmem>>) attributes {dimension_semantics = [#tpu.dimension_semantics<parallel>], iteration_bounds = array<i64: 2>, scalar_prefetch = 0 : i64, scratch_operands = 0 : i64, tpu.core_type = #tpu.core_type<tc>, window_params = [{transform_indices = @transform_0, window_bounds = array<i64: 1, 400, 836>}, {pipeline_mode = #tpu.pipeline_mode<synchronous>, transform_indices = @transform_1, window_bounds = array<i64: 32, 400>}, {pipeline_mode = #tpu.pipeline_mode<synchronous>, transform_indices = @transform_2, window_bounds = array<i64: 32, 1>}, {transform_indices = @transform_3, window_bounds = array<i64: 1, 32, 836>}]} {
    %c0 = arith.constant 0 : index
    %c0_0 = arith.constant 0 : index
    %0 = vector.load %arg2[%c0, %c0_0] : memref<32x400xbf16, #tpu.memory_space<vmem>>, vector<32x400xbf16>
    %c0_1 = arith.constant 0 : index
    %c0_2 = arith.constant 0 : index
    %c0_3 = arith.constant 0 : index
    %1 = vector.load %arg1[%c0_1, %c0_2, %c0_3] : memref<1x400x836xbf16, #tpu.memory_space<vmem>>, vector<1x400x836xbf16>
    %2 = vector.shape_cast %1 : vector<1x400x836xbf16> to vector<400x836xbf16>
    %cst = arith.constant dense<0.000000e+00> : vector<32x836xf32>
    %3 = tpu.matmul %0, %2, %cst {dimension_numbers = #tpu.dot_dimension_numbers<[1], [0], [0], [1], [0, 0, 1, 1], [], []>} : vector<32x400xbf16>, vector<400x836xbf16>, vector<32x836xf32> -> vector<32x836xf32>
    %c0_4 = arith.constant 0 : index
    %c0_5 = arith.constant 0 : index
    %4 = vector.load %arg3[%c0_4, %c0_5] : memref<32x1xf32, #tpu.memory_space<vmem>>, vector<32x1xf32>
    %5 = vector.broadcast %4 : vector<32x1xf32> to vector<32x836xf32>
    %6 = arith.addf %3, %5 : vector<32x836xf32>
    %cst_6 = arith.constant 0.000000e+00 : f32
    %7 = vector.broadcast %cst_6 : f32 to vector<32x836xf32>
    %8 = arith.maximumf %6, %7 : vector<32x836xf32>
    %9 = arith.truncf %8 : vector<32x836xf32> to vector<32x836xbf16>
    %10 = vector.shape_cast %9 : vector<32x836xbf16> to vector<1x32x836xbf16>
    %c0_7 = arith.constant 0 : index
    %c0_8 = arith.constant 0 : index
    %c0_9 = arith.constant 0 : index
    %11 = vector.load %arg4[%c0_7, %c0_8, %c0_9] : memref<1x32x836xbf16, #tpu.memory_space<vmem>>, vector<1x32x836xbf16>
    tpu.vector_store %arg4[%c0_7, %c0_8, %c0_9], %10 {strides = array<i32>} : memref<1x32x836xbf16, #tpu.memory_space<vmem>>, vector<1x32x836xbf16>,
    return
  }
  func.func @transform_0(%arg0: i32) -> (i32, i32, i32) {
    %c0_i32 = arith.constant 0 : i32
    %c0_i32_0 = arith.constant 0 : i32
    %c0_i32_1 = arith.constant 0 : i32
    return %arg0, %c0_i32, %c0_i32_0 : i32, i32, i32
  }
  func.func @transform_1(%arg0: i32) -> (i32, i32) {
    %c0_i32 = arith.constant 0 : i32
    %c0_i32_0 = arith.constant 0 : i32
    %c0_i32_1 = arith.constant 0 : i32
    return %c0_i32, %c0_i32_0 : i32, i32
  }
  func.func @transform_2(%arg0: i32) -> (i32, i32) {
    %c0_i32 = arith.constant 0 : i32
    %c0_i32_0 = arith.constant 0 : i32
    %c0_i32_1 = arith.constant 0 : i32
    return %c0_i32, %c0_i32_0 : i32, i32
  }
  func.func @transform_3(%arg0: i32) -> (i32, i32, i32) {
    %c0_i32 = arith.constant 0 : i32
    %c0_i32_0 = arith.constant 0 : i32
    %c0_i32_1 = arith.constant 0 : i32
    return %arg0, %c0_i32, %c0_i32_0 : i32, i32, i32
  }
}

module attributes {stable_mosaic.version = 11 : i64} {
  func.func @conv_ln_relu_kernel(%arg0: i32, %arg1: memref<1x512x180xbf16, #tpu.memory_space<vmem>>, %arg2: memref<64x512xbf16, #tpu.memory_space<vmem>>, %arg3: memref<64x1xf32, #tpu.memory_space<vmem>>, %arg4: memref<1x64x180xbf16, #tpu.memory_space<vmem>>) attributes {dimension_semantics = [#tpu.dimension_semantics<parallel>], iteration_bounds = array<i64: 2>, scalar_prefetch = 0 : i64, scratch_operands = 0 : i64, tpu.core_type = #tpu.core_type<tc>, window_params = [{transform_indices = @transform_0, window_bounds = array<i64: 1, 512, 180>}, {pipeline_mode = #tpu.pipeline_mode<synchronous>, transform_indices = @transform_1, window_bounds = array<i64: 64, 512>}, {pipeline_mode = #tpu.pipeline_mode<synchronous>, transform_indices = @transform_2, window_bounds = array<i64: 64, 1>}, {transform_indices = @transform_3, window_bounds = array<i64: 1, 64, 180>}]} {
    %c0 = arith.constant 0 : index
    %c0_0 = arith.constant 0 : index
    %0 = vector.load %arg2[%c0, %c0_0] : memref<64x512xbf16, #tpu.memory_space<vmem>>, vector<64x512xbf16>
    %c0_1 = arith.constant 0 : index
    %c0_2 = arith.constant 0 : index
    %c0_3 = arith.constant 0 : index
    %1 = vector.load %arg1[%c0_1, %c0_2, %c0_3] : memref<1x512x180xbf16, #tpu.memory_space<vmem>>, vector<1x512x180xbf16>
    %2 = vector.shape_cast %1 : vector<1x512x180xbf16> to vector<512x180xbf16>
    %cst = arith.constant dense<0.000000e+00> : vector<64x180xf32>
    %3 = tpu.matmul %0, %2, %cst {dimension_numbers = #tpu.dot_dimension_numbers<[1], [0], [0], [1], [0, 0, 1, 1], [], []>} : vector<64x512xbf16>, vector<512x180xbf16>, vector<64x180xf32> -> vector<64x180xf32>
    %c0_4 = arith.constant 0 : index
    %c0_5 = arith.constant 0 : index
    %4 = vector.load %arg3[%c0_4, %c0_5] : memref<64x1xf32, #tpu.memory_space<vmem>>, vector<64x1xf32>
    %5 = vector.broadcast %4 : vector<64x1xf32> to vector<64x180xf32>
    %6 = arith.addf %3, %5 : vector<64x180xf32>
    %7 = vector.shape_cast %6 : vector<64x180xf32> to vector<1x64x180xf32>
    %cst_6 = arith.constant dense<0.000000e+00> : vector<1xf32>
    %8 = vector.multi_reduction <add>, %7, %cst_6 [1, 2] : vector<1x64x180xf32> to vector<1xf32>
    %9 = vector.shape_cast %8 : vector<1xf32> to vector<1x1x1xf32>
    %10 = vector.extract %9[0, 0, 0] : f32 from vector<1x1x1xf32>
    %cst_7 = arith.constant 1.152000e+04 : f32
    %11 = arith.divf %10, %cst_7 : f32
    %12 = vector.broadcast %11 : f32 to vector<64x180xf32>
    %13 = arith.subf %6, %12 : vector<64x180xf32>
    %14 = arith.mulf %13, %13 : vector<64x180xf32>
    %15 = vector.shape_cast %14 : vector<64x180xf32> to vector<1x64x180xf32>
    %cst_8 = arith.constant dense<0.000000e+00> : vector<1xf32>
    %16 = vector.multi_reduction <add>, %15, %cst_8 [1, 2] : vector<1x64x180xf32> to vector<1xf32>
    %17 = vector.shape_cast %16 : vector<1xf32> to vector<1x1x1xf32>
    %18 = vector.extract %17[0, 0, 0] : f32 from vector<1x1x1xf32>
    %cst_9 = arith.constant 1.152000e+04 : f32
    %19 = arith.divf %18, %cst_9 : f32
    %20 = vector.broadcast %11 : f32 to vector<64x180xf32>
    %21 = arith.subf %6, %20 : vector<64x180xf32>
    %cst_10 = arith.constant 9.99999974E-6 : f32
    %22 = arith.addf %19, %cst_10 : f32
    %23 = math.rsqrt %22 : f32
    %24 = vector.broadcast %23 : f32 to vector<64x180xf32>
    %25 = arith.mulf %21, %24 : vector<64x180xf32>
    %cst_11 = arith.constant 0.000000e+00 : f32
    %26 = vector.broadcast %cst_11 : f32 to vector<64x180xf32>
    %27 = arith.maximumf %25, %26 : vector<64x180xf32>
    %28 = arith.truncf %27 : vector<64x180xf32> to vector<64x180xbf16>
    %29 = vector.shape_cast %28 : vector<64x180xbf16> to vector<1x64x180xbf16>
    %c0_12 = arith.constant 0 : index
    %c0_13 = arith.constant 0 : index
    %c0_14 = arith.constant 0 : index
    %30 = vector.load %arg4[%c0_12, %c0_13, %c0_14] : memref<1x64x180xbf16, #tpu.memory_space<vmem>>, vector<1x64x180xbf16>
    tpu.vector_store %arg4[%c0_12, %c0_13, %c0_14], %29 {strides = array<i32>} : memref<1x64x180xbf16, #tpu.memory_space<vmem>>, vector<1x64x180xbf16>,
    return
  }
  func.func @transform_0(%arg0: i32) -> (i32, i32, i32) {
    %c0_i32 = arith.constant 0 : i32
    %c0_i32_0 = arith.constant 0 : i32
    %c0_i32_1 = arith.constant 0 : i32
    return %arg0, %c0_i32, %c0_i32_0 : i32, i32, i32
  }
  func.func @transform_1(%arg0: i32) -> (i32, i32) {
    %c0_i32 = arith.constant 0 : i32
    %c0_i32_0 = arith.constant 0 : i32
    %c0_i32_1 = arith.constant 0 : i32
    return %c0_i32, %c0_i32_0 : i32, i32
  }
  func.func @transform_2(%arg0: i32) -> (i32, i32) {
    %c0_i32 = arith.constant 0 : i32
    %c0_i32_0 = arith.constant 0 : i32
    %c0_i32_1 = arith.constant 0 : i32
    return %c0_i32, %c0_i32_0 : i32, i32
  }
  func.func @transform_3(%arg0: i32) -> (i32, i32, i32) {
    %c0_i32 = arith.constant 0 : i32
    %c0_i32_0 = arith.constant 0 : i32
    %c0_i32_1 = arith.constant 0 : i32
    return %arg0, %c0_i32, %c0_i32_0 : i32, i32, i32
  }
}

module attributes {stable_mosaic.version = 11 : i64} {
  func.func @conv_ln_relu_kernel(%arg0: i32, %arg1: memref<1x576x128xbf16, #tpu.memory_space<vmem>>, %arg2: memref<64x576xbf16, #tpu.memory_space<vmem>>, %arg3: memref<64x1xf32, #tpu.memory_space<vmem>>, %arg4: memref<1x64x128xbf16, #tpu.memory_space<vmem>>) attributes {dimension_semantics = [#tpu.dimension_semantics<parallel>], iteration_bounds = array<i64: 2>, scalar_prefetch = 0 : i64, scratch_operands = 0 : i64, tpu.core_type = #tpu.core_type<tc>, window_params = [{transform_indices = @transform_0, window_bounds = array<i64: 1, 576, 128>}, {pipeline_mode = #tpu.pipeline_mode<synchronous>, transform_indices = @transform_1, window_bounds = array<i64: 64, 576>}, {pipeline_mode = #tpu.pipeline_mode<synchronous>, transform_indices = @transform_2, window_bounds = array<i64: 64, 1>}, {transform_indices = @transform_3, window_bounds = array<i64: 1, 64, 128>}]} {
    %c0 = arith.constant 0 : index
    %c0_0 = arith.constant 0 : index
    %0 = vector.load %arg2[%c0, %c0_0] : memref<64x576xbf16, #tpu.memory_space<vmem>>, vector<64x576xbf16>
    %c0_1 = arith.constant 0 : index
    %c0_2 = arith.constant 0 : index
    %c0_3 = arith.constant 0 : index
    %1 = vector.load %arg1[%c0_1, %c0_2, %c0_3] : memref<1x576x128xbf16, #tpu.memory_space<vmem>>, vector<1x576x128xbf16>
    %2 = vector.shape_cast %1 : vector<1x576x128xbf16> to vector<576x128xbf16>
    %cst = arith.constant dense<0.000000e+00> : vector<64x128xf32>
    %3 = tpu.matmul %0, %2, %cst {dimension_numbers = #tpu.dot_dimension_numbers<[1], [0], [0], [1], [0, 0, 1, 1], [], []>} : vector<64x576xbf16>, vector<576x128xbf16>, vector<64x128xf32> -> vector<64x128xf32>
    %c0_4 = arith.constant 0 : index
    %c0_5 = arith.constant 0 : index
    %4 = vector.load %arg3[%c0_4, %c0_5] : memref<64x1xf32, #tpu.memory_space<vmem>>, vector<64x1xf32>
    %5 = vector.broadcast %4 : vector<64x1xf32> to vector<64x128xf32>
    %6 = arith.addf %3, %5 : vector<64x128xf32>
    %7 = vector.shape_cast %6 : vector<64x128xf32> to vector<1x64x128xf32>
    %cst_6 = arith.constant dense<0.000000e+00> : vector<1xf32>
    %8 = vector.multi_reduction <add>, %7, %cst_6 [1, 2] : vector<1x64x128xf32> to vector<1xf32>
    %9 = vector.shape_cast %8 : vector<1xf32> to vector<1x1x1xf32>
    %10 = vector.extract %9[0, 0, 0] : f32 from vector<1x1x1xf32>
    %cst_7 = arith.constant 8.192000e+03 : f32
    %11 = arith.divf %10, %cst_7 : f32
    %12 = vector.broadcast %11 : f32 to vector<64x128xf32>
    %13 = arith.subf %6, %12 : vector<64x128xf32>
    %14 = arith.mulf %13, %13 : vector<64x128xf32>
    %15 = vector.shape_cast %14 : vector<64x128xf32> to vector<1x64x128xf32>
    %cst_8 = arith.constant dense<0.000000e+00> : vector<1xf32>
    %16 = vector.multi_reduction <add>, %15, %cst_8 [1, 2] : vector<1x64x128xf32> to vector<1xf32>
    %17 = vector.shape_cast %16 : vector<1xf32> to vector<1x1x1xf32>
    %18 = vector.extract %17[0, 0, 0] : f32 from vector<1x1x1xf32>
    %cst_9 = arith.constant 8.192000e+03 : f32
    %19 = arith.divf %18, %cst_9 : f32
    %20 = vector.broadcast %11 : f32 to vector<64x128xf32>
    %21 = arith.subf %6, %20 : vector<64x128xf32>
    %cst_10 = arith.constant 9.99999974E-6 : f32
    %22 = arith.addf %19, %cst_10 : f32
    %23 = math.rsqrt %22 : f32
    %24 = vector.broadcast %23 : f32 to vector<64x128xf32>
    %25 = arith.mulf %21, %24 : vector<64x128xf32>
    %cst_11 = arith.constant 0.000000e+00 : f32
    %26 = vector.broadcast %cst_11 : f32 to vector<64x128xf32>
    %27 = arith.maximumf %25, %26 : vector<64x128xf32>
    %28 = arith.truncf %27 : vector<64x128xf32> to vector<64x128xbf16>
    %29 = vector.shape_cast %28 : vector<64x128xbf16> to vector<1x64x128xbf16>
    %c0_12 = arith.constant 0 : index
    %c0_13 = arith.constant 0 : index
    %c0_14 = arith.constant 0 : index
    %30 = vector.load %arg4[%c0_12, %c0_13, %c0_14] : memref<1x64x128xbf16, #tpu.memory_space<vmem>>, vector<1x64x128xbf16>
    tpu.vector_store %arg4[%c0_12, %c0_13, %c0_14], %29 {strides = array<i32>} : memref<1x64x128xbf16, #tpu.memory_space<vmem>>, vector<1x64x128xbf16>,
    return
  }
  func.func @transform_0(%arg0: i32) -> (i32, i32, i32) {
    %c0_i32 = arith.constant 0 : i32
    %c0_i32_0 = arith.constant 0 : i32
    %c0_i32_1 = arith.constant 0 : i32
    return %arg0, %c0_i32, %c0_i32_0 : i32, i32, i32
  }
  func.func @transform_1(%arg0: i32) -> (i32, i32) {
    %c0_i32 = arith.constant 0 : i32
    %c0_i32_0 = arith.constant 0 : i32
    %c0_i32_1 = arith.constant 0 : i32
    return %c0_i32, %c0_i32_0 : i32, i32
  }
  func.func @transform_2(%arg0: i32) -> (i32, i32) {
    %c0_i32 = arith.constant 0 : i32
    %c0_i32_0 = arith.constant 0 : i32
    %c0_i32_1 = arith.constant 0 : i32
    return %c0_i32, %c0_i32_0 : i32, i32
  }
  func.func @transform_3(%arg0: i32) -> (i32, i32, i32) {
    %c0_i32 = arith.constant 0 : i32
    %c0_i32_0 = arith.constant 0 : i32
    %c0_i32_1 = arith.constant 0 : i32
    return %arg0, %c0_i32, %c0_i32_0 : i32, i32, i32
  }
}

module attributes {stable_mosaic.version = 11 : i64} {
  func.func @dueling_head_kernel(%arg0: memref<2x8192xbf16, #tpu.memory_space<vmem>>, %arg1: memref<8192x7xbf16, #tpu.memory_space<vmem>>, %arg2: memref<1x7xf32, #tpu.memory_space<vmem>>, %arg3: memref<2x6xf32, #tpu.memory_space<vmem>>) attributes {dimension_semantics = [], scalar_prefetch = 0 : i64, scratch_operands = 0 : i64, tpu.core_type = #tpu.core_type<tc>} {
    %c0 = arith.constant 0 : index
    %c0_0 = arith.constant 0 : index
    %0 = vector.load %arg0[%c0, %c0_0] : memref<2x8192xbf16, #tpu.memory_space<vmem>>, vector<2x8192xbf16>
    %c0_1 = arith.constant 0 : index
    %c0_2 = arith.constant 0 : index
    %1 = vector.load %arg1[%c0_1, %c0_2] : memref<8192x7xbf16, #tpu.memory_space<vmem>>, vector<8192x7xbf16>
    %cst = arith.constant dense<0.000000e+00> : vector<2x7xf32>
    %2 = tpu.matmul %0, %1, %cst {dimension_numbers = #tpu.dot_dimension_numbers<[1], [0], [0], [1], [0, 0, 1, 1], [], []>} : vector<2x8192xbf16>, vector<8192x7xbf16>, vector<2x7xf32> -> vector<2x7xf32>
    %c0_3 = arith.constant 0 : index
    %c0_4 = arith.constant 0 : index
    %3 = vector.load %arg2[%c0_3, %c0_4] : memref<1x7xf32, #tpu.memory_space<vmem>>, vector<1x7xf32>
    %4 = vector.broadcast %3 : vector<1x7xf32> to vector<2x7xf32>
    %5 = arith.addf %2, %4 : vector<2x7xf32>
    %6 = vector.extract_strided_slice %5 {offsets = [0, 0], sizes = [2, 6], strides = [1, 1]} : vector<2x7xf32> to vector<2x6xf32>
    %7 = vector.extract_strided_slice %5 {offsets = [0, 6], sizes = [2, 1], strides = [1, 1]} : vector<2x7xf32> to vector<2x1xf32>
    %8 = vector.broadcast %7 : vector<2x1xf32> to vector<2x6xf32>
    %9 = arith.addf %8, %6 : vector<2x6xf32>
    %10 = vector.shape_cast %6 : vector<2x6xf32> to vector<1x2x6xf32>
    %cst_5 = arith.constant dense<0.000000e+00> : vector<1xf32>
    %11 = vector.multi_reduction <add>, %10, %cst_5 [1, 2] : vector<1x2x6xf32> to vector<1xf32>
    %12 = vector.shape_cast %11 : vector<1xf32> to vector<1x1x1xf32>
    %13 = vector.extract %12[0, 0, 0] : f32 from vector<1x1x1xf32>
    %cst_6 = arith.constant 1.200000e+01 : f32
    %14 = arith.divf %13, %cst_6 : f32
    %15 = vector.broadcast %14 : f32 to vector<2x6xf32>
    %16 = arith.subf %9, %15 : vector<2x6xf32>
    %c0_7 = arith.constant 0 : index
    %c0_8 = arith.constant 0 : index
    %17 = vector.load %arg3[%c0_7, %c0_8] : memref<2x6xf32, #tpu.memory_space<vmem>>, vector<2x6xf32>
    tpu.vector_store %arg3[%c0_7, %c0_8], %16 {strides = array<i32>} : memref<2x6xf32, #tpu.memory_space<vmem>>, vector<2x6xf32>,
    return
  }
}

</mosaic_0001>

<llo_original>
// kernel: deep_q_forward.5
$region0: #{deep_q_forward.5}
  #allocation0 [shape = 'u32[]', space=smem, size = 0x4, offset = 0x4, fixed_abs, tag = 'smem constant byte address 0x4 - core index']
  #allocation1 [shape = 'u32[144,128]{1,0:T(1,128)}', space=vmem, size = 0x12000, scoped, tag = 'internal scratch']
  %s0 = inlined_call_operand.vmem [shape: f32[2,712,306], index: 0, kind: input, shape index: {}]
  %s1 = inlined_call_operand.vmem [shape: bf16[2,712,306], index: 1, kind: output, shape index: {}]
  %s2 = sld [smem:[#allocation0]]
  $region37: #{deep_q_forward.5} parent=0
    _
  %s4 = ssub.s32 1, %s2
  %s5 = scalar_select 0, %s4, %s2
  loop: start=0, step=1, limit=4
  $region2: #{deep_q_forward.5} parent=0 // loop_pre_header
    _
  $region3: #{deep_q_forward.5} parent=0 // loop_header
    %s7 = sphi 0, %s11
    %p8 = scmp.ge.s32.totalorder %s7, 4
    %s17 = sphi 0, %s19
    %s20 = sphi 0, %s17
    %s21 = sphi 0, %s20
    %s37 = sphi 0, %s21
    %s43 = sphi 0, %s45
    %s46 = sphi 0, %s43
    %s47 = sphi 0, %s46
    %s63 = sphi 0, %s47
  $region4: #{deep_q_forward.5} parent=0 // loop_header_branch
    %10 = sbr.rel (%p8) target = $region8
  $region5: #{deep_q_forward.5} parent=0 // loop_body
    %s12 = ssub.s32 %s7, 1
    %s13 = ssub.s32 %s7, 2
    %s14 = sadd.s32 %s7, 1
    %s15 = ssub.s32 %s7, %s14
    %p16 = scmp.eq.s32.totalorder %s15, 0
    %s18 = sadd.s32 %s17, 1
    %s19 = scalar_select %p16, %s17, %s18
    %p22 = pneg %p16
    %p23 = scmp.eq.s32.totalorder %s7, 1
    %p24 = por %p22, %p23
    %p25 = scmp.ne.s32.totalorder %s17, %s20
    %p26 = scmp.eq.s32.totalorder %s7, 0
    %p27 = por %p25, %p26
    %p28 = scmp.ne.s32.totalorder %s17, %s20
    %p29 = scmp.eq.s32.totalorder %s12, 1
    %p30 = por %p28, %p29
    %p31 = scmp.ne.s32.totalorder %s20, %s21
    %p32 = scmp.eq.s32.totalorder %s12, 0
    %p33 = por %p31, %p32
    %p34 = scmp.ne.s32.totalorder %s20, %s21
    %p35 = scmp.eq.s32.totalorder %s13, 1
    %p36 = por %p34, %p35
    %p38 = scmp.ne.s32.totalorder %s21, %s37
    %p39 = scmp.eq.s32.totalorder %s13, 0
    %p40 = por %p38, %p39
    %s41 = ssub.s32 %s7, %s14
    %p42 = scmp.eq.s32.totalorder %s41, 0
    %s44 = sadd.s32 %s43, 1
    %s45 = scalar_select %p42, %s43, %s44
    %p48 = pneg %p42
    %p49 = scmp.eq.s32.totalorder %s7, 1
    %p50 = por %p48, %p49
    %p51 = scmp.ne.s32.totalorder %s43, %s46
    %p52 = scmp.eq.s32.totalorder %s7, 0
    %p53 = por %p51, %p52
    %p54 = scmp.ne.s32.totalorder %s43, %s46
    %p55 = scmp.eq.s32.totalorder %s12, 1
    %p56 = por %p54, %p55
    %p57 = scmp.ne.s32.totalorder %s46, %s47
    %p58 = scmp.eq.s32.totalorder %s12, 0
    %p59 = por %p57, %p58
    %p60 = scmp.ne.s32.totalorder %s46, %s47
    %p61 = scmp.eq.s32.totalorder %s13, 1
    %p62 = por %p60, %p61
    %p64 = scmp.ne.s32.totalorder %s47, %s63
    %p65 = scmp.eq.s32.totalorder %s13, 0
    %p66 = por %p64, %p65
    %p67 = scmp.le.s32.totalorder 1, %s7
    %p68 = scmp.lt.s32.totalorder %s7, 3
    %p69 = pnand %p67, %p68
    %p70 = pneg %p69
    // Predicated region
    $region9: #{deep_q_forward.5} parent=5 // pred_check
      _
    $region10: #{deep_q_forward.5} parent=5 // pred_check_branch
      %72 = sbr.rel (%p69) target = $region12
    $region11: #{deep_q_forward.5} parent=5 // pred_region
      %s73 = ssub.s32 %s7, 1
    $region12: #{deep_q_forward.5} parent=5 // pred_fallthru
      _
    %p74 = scmp.lt.s32.totalorder %s7, 2
    // Predicated region
    $region13: #{deep_q_forward.5} parent=5 // pred_check
      %p75 = pneg %p74
    $region14: #{deep_q_forward.5} parent=5 // pred_check_branch
      %77 = sbr.rel (%p75) target = $region16
    $region15: #{deep_q_forward.5} parent=5 // pred_region
      // Predicated region
      $region17: #{deep_q_forward.5} parent=15 // pred_check
        %p78 = pneg %p27
      $region18: #{deep_q_forward.5} parent=15 // pred_check_branch
        %80 = sbr.rel (%p78) target = $region20
      $region19: #{deep_q_forward.5} parent=15 // pred_region
        %p81 = scmp.lt.s32.totalorder %s7, 1
        %s82 = scalar_select %p81, %s7, 1
        %s83 = smul.addr %s82, 267
        %s84 = smul.addr %s83, 8
        %s85 = scalar_lea.vmem %s0, %s84
      $region20: #{deep_q_forward.5} parent=15 // pred_fallthru
        _
    $region16: #{deep_q_forward.5} parent=5 // pred_fallthru
      _
    %p86 = scmp.le.s32.totalorder 1, %s7
    %p87 = scmp.lt.s32.totalorder %s7, 3
    %p88 = pnand %p86, %p87
    %p89 = pneg %p88
    // Predicated region
    $region21: #{deep_q_forward.5} parent=5 // pred_check
      _
    $region22: #{deep_q_forward.5} parent=5 // pred_check_branch
      %91 = sbr.rel (%p88) target = $region24
    $region23: #{deep_q_forward.5} parent=5 // pred_region
      %s92 = ssub.s32 %s7, 1
      %p93 = scmp.lt.s32.totalorder %s12, 1
      %s94 = scalar_select %p93, %s12, 1
      %s95 = smul.addr %s94, 267
      %s96 = smul.addr %s95, 8
      %s97 = scalar_lea.vmem %s0, %s96
      %p98 = pneg %p33
      %p99 = pneg %p30
      %p100 = pneg %p59
      %p101 = pneg %p56
      %p102 = scmp.lt.s32.totalorder %s12, 1
      %s103 = scalar_select %p102, %s12, 1
      %s104 = smul.addr %s103, 267
      %s105 = smul.addr %s104, 4
      %s106 = scalar_lea.vmem %s1, %s105
      %p107 = scmp.lt.s32.totalorder %s12, 1
      %s108 = scalar_select %p107, %s12, 1
      %s109 = smul.addr %s108, 267
      %s110 = smul.addr %s109, 8
      %s111 = scalar_lea.vmem %s0, %s110
      %p112 = scmp.lt.s32.totalorder %s12, 1
      %s113 = scalar_select %p112, %s12, 1
      %s114 = smul.addr %s113, 267
      %s115 = smul.addr %s114, 4
      %s116 = scalar_lea.vmem %s1, %s115
      %v117 = vld [vmem:[%s111] sm:$0xff]
      %v118 = vld [vmem:[%s111 + $0x8] sm:$0xff]
      %v119 = vld [vmem:[%s111 + $0x10] sm:$0xff]
      %v120 = vld [vmem:[%s111 + $0x18] sm:$0xff]
      %v121 = vld [vmem:[%s111 + $0x20] sm:$0xff]
      %v122 = vld [vmem:[%s111 + $0x28] sm:$0xff]
      %v123 = vld [vmem:[%s111 + $0x30] sm:$0xff]
      %v124 = vld [vmem:[%s111 + $0x38] sm:$0xff]
      %v125 = vld [vmem:[%s111 + $0x40] sm:$0xff]
      %v126 = vld [vmem:[%s111 + $0x48] sm:$0xff]
      %v127 = vld [vmem:[%s111 + $0x50] sm:$0xff]
      %v128 = vld [vmem:[%s111 + $0x58] sm:$0xff]
      %v129 = vld [vmem:[%s111 + $0x60] sm:$0xff]
      %v130 = vld [vmem:[%s111 + $0x68] sm:$0xff]
      %v131 = vld [vmem:[%s111 + $0x70] sm:$0xff]
      %v132 = vld [vmem:[%s111 + $0x78] sm:$0xff]
      %v133 = vld [vmem:[%s111 + $0x80] sm:$0xff]
      %v134 = vld [vmem:[%s111 + $0x88] sm:$0xff]
      %v135 = vld [vmem:[%s111 + $0x90] sm:$0xff]
      %v136 = vld [vmem:[%s111 + $0x98] sm:$0xff]
      %v137 = vld [vmem:[%s111 + $0xa0] sm:$0xff]
      %v138 = vld [vmem:[%s111 + $0xa8] sm:$0xff]
      %v139 = vld [vmem:[%s111 + $0xb0] sm:$0xff]
      %v140 = vld [vmem:[%s111 + $0xb8] sm:$0xff]
      %v141 = vld [vmem:[%s111 + $0xc0] sm:$0xff]
      %v142 = vld [vmem:[%s111 + $0xc8] sm:$0xff]
      %v143 = vld [vmem:[%s111 + $0xd0] sm:$0xff]
      %v144 = vld [vmem:[%s111 + $0xd8] sm:$0xff]
      %v145 = vld [vmem:[%s111 + $0xe0] sm:$0xff]
      %v146 = vld [vmem:[%s111 + $0xe8] sm:$0xff]
      %v147 = vld [vmem:[%s111 + $0xf0] sm:$0xff]
      %v148 = vld [vmem:[%s111 + $0xf8] sm:$0xff]
      %v149 = vld [vmem:[%s111 + $0x100] sm:$0xff]
      %v150 = vld [vmem:[%s111 + $0x108] sm:$0xff]
      %v151 = vld [vmem:[%s111 + $0x110] sm:$0xff]
      %v152 = vld [vmem:[%s111 + $0x118] sm:$0xff]
      %v153 = vld [vmem:[%s111 + $0x120] sm:$0xff]
      %v154 = vld [vmem:[%s111 + $0x128] sm:$0xff]
      %v155 = vld [vmem:[%s111 + $0x130] sm:$0xff]
      %v156 = vld [vmem:[%s111 + $0x138] sm:$0xff]
      %v157 = vld [vmem:[%s111 + $0x140] sm:$0xff]
      %v158 = vld [vmem:[%s111 + $0x148] sm:$0xff]
      %v159 = vld [vmem:[%s111 + $0x150] sm:$0xff]
      %v160 = vld [vmem:[%s111 + $0x158] sm:$0xff]
      %v161 = vld [vmem:[%s111 + $0x160] sm:$0xff]
      %v162 = vld [vmem:[%s111 + $0x168] sm:$0xff]
      %v163 = vld [vmem:[%s111 + $0x170] sm:$0xff]
      %v164 = vld [vmem:[%s111 + $0x178] sm:$0xff]
      %v165 = vld [vmem:[%s111 + $0x180] sm:$0xff]
      %v166 = vld [vmem:[%s111 + $0x188] sm:$0xff]
      %v167 = vld [vmem:[%s111 + $0x190] sm:$0xff]
      %v168 = vld [vmem:[%s111 + $0x198] sm:$0xff]
      %v169 = vld [vmem:[%s111 + $0x1a0] sm:$0xff]
      %v170 = vld [vmem:[%s111 + $0x1a8] sm:$0xff]
      %v171 = vld [vmem:[%s111 + $0x1b0] sm:$0xff]
      %v172 = vld [vmem:[%s111 + $0x1b8] sm:$0xff]
      %v173 = vld [vmem:[%s111 + $0x1c0] sm:$0xff]
      %v174 = vld [vmem:[%s111 + $0x1c8] sm:$0xff]
      %v175 = vld [vmem:[%s111 + $0x1d0] sm:$0xff]
      %v176 = vld [vmem:[%s111 + $0x1d8] sm:$0xff]
      %v177 = vld [vmem:[%s111 + $0x1e0] sm:$0xff]
      %v178 = vld [vmem:[%s111 + $0x1e8] sm:$0xff]
      %v179 = vld [vmem:[%s111 + $0x1f0] sm:$0xff]
      %v180 = vld [vmem:[%s111 + $0x1f8] sm:$0xff]
      %v181 = vld [vmem:[%s111 + $0x200] sm:$0xff]
      %v182 = vld [vmem:[%s111 + $0x208] sm:$0xff]
      %v183 = vld [vmem:[%s111 + $0x210] sm:$0xff]
      %v184 = vld [vmem:[%s111 + $0x218] sm:$0xff]
      %v185 = vld [vmem:[%s111 + $0x220] sm:$0xff]
      %v186 = vld [vmem:[%s111 + $0x228] sm:$0xff]
      %v187 = vld [vmem:[%s111 + $0x230] sm:$0xff]
      %v188 = vld [vmem:[%s111 + $0x238] sm:$0xff]
      %v189 = vld [vmem:[%s111 + $0x240] sm:$0xff]
      %v190 = vld [vmem:[%s111 + $0x248] sm:$0xff]
      %v191 = vld [vmem:[%s111 + $0x250] sm:$0xff]
      %v192 = vld [vmem:[%s111 + $0x258] sm:$0xff]
      %v193 = vld [vmem:[%s111 + $0x260] sm:$0xff]
      %v194 = vld [vmem:[%s111 + $0x268] sm:$0xff]
      %v195 = vld [vmem:[%s111 + $0x270] sm:$0xff]
      %v196 = vld [vmem:[%s111 + $0x278] sm:$0xff]
      %v197 = vld [vmem:[%s111 + $0x280] sm:$0xff]
      %v198 = vld [vmem:[%s111 + $0x288] sm:$0xff]
      %v199 = vld [vmem:[%s111 + $0x290] sm:$0xff]
      %v200 = vld [vmem:[%s111 + $0x298] sm:$0xff]
      %v201 = vld [vmem:[%s111 + $0x2a0] sm:$0xff]
      %v202 = vld [vmem:[%s111 + $0x2a8] sm:$0xff]
      %v203 = vld [vmem:[%s111 + $0x2b0] sm:$0xff]
      %v204 = vld [vmem:[%s111 + $0x2b8] sm:$0xff]
      %v205 = vld [vmem:[%s111 + $0x2c0] sm:$0xff]
      %v206 = vld [vmem:[%s111 + $0x2c8] sm:$0xff]
      %v207 = vld [vmem:[%s111 + $0x2d0] sm:$0xff]
      %v208 = vld [vmem:[%s111 + $0x2d8] sm:$0xff]
      %v209 = vld [vmem:[%s111 + $0x2e0] sm:$0xff]
      %v210 = vld [vmem:[%s111 + $0x2e8] sm:$0xff]
      %v211 = vld [vmem:[%s111 + $0x2f0] sm:$0xff]
      %v212 = vld [vmem:[%s111 + $0x2f8] sm:$0xff]
      %v213 = vld [vmem:[%s111 + $0x300] sm:$0xff]
      %v214 = vld [vmem:[%s111 + $0x308] sm:$0xff]
      %v215 = vld [vmem:[%s111 + $0x310] sm:$0xff]
      %v216 = vld [vmem:[%s111 + $0x318] sm:$0xff]
      %v217 = vld [vmem:[%s111 + $0x320] sm:$0xff]
      %v218 = vld [vmem:[%s111 + $0x328] sm:$0xff]
      %v219 = vld [vmem:[%s111 + $0x330] sm:$0xff]
      %v220 = vld [vmem:[%s111 + $0x338] sm:$0xff]
      %v221 = vld [vmem:[%s111 + $0x340] sm:$0xff]
      %v222 = vld [vmem:[%s111 + $0x348] sm:$0xff]
      %v223 = vld [vmem:[%s111 + $0x350] sm:$0xff]
      %v224 = vld [vmem:[%s111 + $0x358] sm:$0xff]
      %v225 = vld [vmem:[%s111 + $0x360] sm:$0xff]
      %v226 = vld [vmem:[%s111 + $0x368] sm:$0xff]
      %v227 = vld [vmem:[%s111 + $0x370] sm:$0xff]
      %v228 = vld [vmem:[%s111 + $0x378] sm:$0xff]
      %v229 = vld [vmem:[%s111 + $0x380] sm:$0xff]
      %v230 = vld [vmem:[%s111 + $0x388] sm:$0xff]
      %v231 = vld [vmem:[%s111 + $0x390] sm:$0xff]
      %v232 = vld [vmem:[%s111 + $0x398] sm:$0xff]
      %v233 = vld [vmem:[%s111 + $0x3a0] sm:$0xff]
      %v234 = vld [vmem:[%s111 + $0x3a8] sm:$0xff]
      %v235 = vld [vmem:[%s111 + $0x3b0] sm:$0xff]
      %v236 = vld [vmem:[%s111 + $0x3b8] sm:$0xff]
      %v237 = vld [vmem:[%s111 + $0x3c0] sm:$0xff]
      %v238 = vld [vmem:[%s111 + $0x3c8] sm:$0xff]
      %v239 = vld [vmem:[%s111 + $0x3d0] sm:$0xff]
      %v240 = vld [vmem:[%s111 + $0x3d8] sm:$0xff]
      %v241 = vld [vmem:[%s111 + $0x3e0] sm:$0xff]
      %v242 = vld [vmem:[%s111 + $0x3e8] sm:$0xff]
      %v243 = vld [vmem:[%s111 + $0x3f0] sm:$0xff]
      %v244 = vld [vmem:[%s111 + $0x3f8] sm:$0xff]
      %v245 = vld [vmem:[%s111 + $0x400] sm:$0xff]
      %v246 = vld [vmem:[%s111 + $0x408] sm:$0xff]
      %v247 = vld [vmem:[%s111 + $0x410] sm:$0xff]
      %v248 = vld [vmem:[%s111 + $0x418] sm:$0xff]
      %v249 = vld [vmem:[%s111 + $0x420] sm:$0xff]
      %v250 = vld [vmem:[%s111 + $0x428] sm:$0xff]
      %v251 = vld [vmem:[%s111 + $0x430] sm:$0xff]
      %v252 = vld [vmem:[%s111 + $0x438] sm:$0xff]
      %v253 = vld [vmem:[%s111 + $0x440] sm:$0xff]
      %v254 = vld [vmem:[%s111 + $0x448] sm:$0xff]
      %v255 = vld [vmem:[%s111 + $0x450] sm:$0xff]
      %v256 = vld [vmem:[%s111 + $0x458] sm:$0xff]
      %v257 = vld [vmem:[%s111 + $0x460] sm:$0xff]
      %v258 = vld [vmem:[%s111 + $0x468] sm:$0xff]
      %v259 = vld [vmem:[%s111 + $0x470] sm:$0xff]
      %v260 = vld [vmem:[%s111 + $0x478] sm:$0xff]
      %v261 = vld [vmem:[%s111 + $0x480] sm:$0xff]
      %v262 = vld [vmem:[%s111 + $0x488] sm:$0xff]
      %v263 = vld [vmem:[%s111 + $0x490] sm:$0xff]
      %v264 = vld [vmem:[%s111 + $0x498] sm:$0xff]
      %v265 = vld [vmem:[%s111 + $0x4a0] sm:$0xff]
      %v266 = vld [vmem:[%s111 + $0x4a8] sm:$0xff]
      %v267 = vld [vmem:[%s111 + $0x4b0] sm:$0xff]
      %v268 = vld [vmem:[%s111 + $0x4b8] sm:$0xff]
      %v269 = vld [vmem:[%s111 + $0x4c0] sm:$0xff]
      %v270 = vld [vmem:[%s111 + $0x4c8] sm:$0xff]
      %v271 = vld [vmem:[%s111 + $0x4d0] sm:$0xff]
      %v272 = vld [vmem:[%s111 + $0x4d8] sm:$0xff]
      %v273 = vld [vmem:[%s111 + $0x4e0] sm:$0xff]
      %v274 = vld [vmem:[%s111 + $0x4e8] sm:$0xff]
      %v275 = vld [vmem:[%s111 + $0x4f0] sm:$0xff]
      %v276 = vld [vmem:[%s111 + $0x4f8] sm:$0xff]
      %v277 = vld [vmem:[%s111 + $0x500] sm:$0xff]
      %v278 = vld [vmem:[%s111 + $0x508] sm:$0xff]
      %v279 = vld [vmem:[%s111 + $0x510] sm:$0xff]
      %v280 = vld [vmem:[%s111 + $0x518] sm:$0xff]
      %v281 = vld [vmem:[%s111 + $0x520] sm:$0xff]
      %v282 = vld [vmem:[%s111 + $0x528] sm:$0xff]
      %v283 = vld [vmem:[%s111 + $0x530] sm:$0xff]
      %v284 = vld [vmem:[%s111 + $0x538] sm:$0xff]
      %v285 = vld [vmem:[%s111 + $0x540] sm:$0xff]
      %v286 = vld [vmem:[%s111 + $0x548] sm:$0xff]
      %v287 = vld [vmem:[%s111 + $0x550] sm:$0xff]
      %v288 = vld [vmem:[%s111 + $0x558] sm:$0xff]
      %v289 = vld [vmem:[%s111 + $0x560] sm:$0xff]
      %v290 = vld [vmem:[%s111 + $0x568] sm:$0xff]
      %v291 = vld [vmem:[%s111 + $0x570] sm:$0xff]
      %v292 = vld [vmem:[%s111 + $0x578] sm:$0xff]
      %v293 = vld [vmem:[%s111 + $0x580] sm:$0xff]
      %v294 = vld [vmem:[%s111 + $0x588] sm:$0xff]
      %v295 = vld [vmem:[%s111 + $0x590] sm:$0xff]
      %v296 = vld [vmem:[%s111 + $0x598] sm:$0xff]
      %v297 = vld [vmem:[%s111 + $0x5a0] sm:$0xff]
      %v298 = vld [vmem:[%s111 + $0x5a8] sm:$0xff]
      %v299 = vld [vmem:[%s111 + $0x5b0] sm:$0xff]
      %v300 = vld [vmem:[%s111 + $0x5b8] sm:$0xff]
      %v301 = vld [vmem:[%s111 + $0x5c0] sm:$0xff]
      %v302 = vld [vmem:[%s111 + $0x5c8] sm:$0xff]
      %v303 = vld [vmem:[%s111 + $0x5d0] sm:$0xff]
      %v304 = vld [vmem:[%s111 + $0x5d8] sm:$0xff]
      %v305 = vld [vmem:[%s111 + $0x5e0] sm:$0xff]
      %v306 = vld [vmem:[%s111 + $0x5e8] sm:$0xff]
      %v307 = vld [vmem:[%s111 + $0x5f0] sm:$0xff]
      %v308 = vld [vmem:[%s111 + $0x5f8] sm:$0xff]
      %v309 = vld [vmem:[%s111 + $0x600] sm:$0xff]
      %v310 = vld [vmem:[%s111 + $0x608] sm:$0xff]
      %v311 = vld [vmem:[%s111 + $0x610] sm:$0xff]
      %v312 = vld [vmem:[%s111 + $0x618] sm:$0xff]
      %v313 = vld [vmem:[%s111 + $0x620] sm:$0xff]
      %v314 = vld [vmem:[%s111 + $0x628] sm:$0xff]
      %v315 = vld [vmem:[%s111 + $0x630] sm:$0xff]
      %v316 = vld [vmem:[%s111 + $0x638] sm:$0xff]
      %v317 = vld [vmem:[%s111 + $0x640] sm:$0xff]
      %v318 = vld [vmem:[%s111 + $0x648] sm:$0xff]
      %v319 = vld [vmem:[%s111 + $0x650] sm:$0xff]
      %v320 = vld [vmem:[%s111 + $0x658] sm:$0xff]
      %v321 = vld [vmem:[%s111 + $0x660] sm:$0xff]
      %v322 = vld [vmem:[%s111 + $0x668] sm:$0xff]
      %v323 = vld [vmem:[%s111 + $0x670] sm:$0xff]
      %v324 = vld [vmem:[%s111 + $0x678] sm:$0xff]
      %v325 = vld [vmem:[%s111 + $0x680] sm:$0xff]
      %v326 = vld [vmem:[%s111 + $0x688] sm:$0xff]
      %v327 = vld [vmem:[%s111 + $0x690] sm:$0xff]
      %v328 = vld [vmem:[%s111 + $0x698] sm:$0xff]
      %v329 = vld [vmem:[%s111 + $0x6a0] sm:$0xff]
      %v330 = vld [vmem:[%s111 + $0x6a8] sm:$0xff]
      %v331 = vld [vmem:[%s111 + $0x6b0] sm:$0xff]
      %v332 = vld [vmem:[%s111 + $0x6b8] sm:$0xff]
      %v333 = vld [vmem:[%s111 + $0x6c0] sm:$0xff]
      %v334 = vld [vmem:[%s111 + $0x6c8] sm:$0xff]
      %v335 = vld [vmem:[%s111 + $0x6d0] sm:$0xff]
      %v336 = vld [vmem:[%s111 + $0x6d8] sm:$0xff]
      %v337 = vld [vmem:[%s111 + $0x6e0] sm:$0xff]
      %v338 = vld [vmem:[%s111 + $0x6e8] sm:$0xff]
      %v339 = vld [vmem:[%s111 + $0x6f0] sm:$0xff]
      %v340 = vld [vmem:[%s111 + $0x6f8] sm:$0xff]
      %v341 = vld [vmem:[%s111 + $0x700] sm:$0xff]
      %v342 = vld [vmem:[%s111 + $0x708] sm:$0xff]
      %v343 = vld [vmem:[%s111 + $0x710] sm:$0xff]
      %v344 = vld [vmem:[%s111 + $0x718] sm:$0xff]
      %v345 = vld [vmem:[%s111 + $0x720] sm:$0xff]
      %v346 = vld [vmem:[%s111 + $0x728] sm:$0xff]
      %v347 = vld [vmem:[%s111 + $0x730] sm:$0xff]
      %v348 = vld [vmem:[%s111 + $0x738] sm:$0xff]
      %v349 = vld [vmem:[%s111 + $0x740] sm:$0xff]
      %v350 = vld [vmem:[%s111 + $0x748] sm:$0xff]
      %v351 = vld [vmem:[%s111 + $0x750] sm:$0xff]
      %v352 = vld [vmem:[%s111 + $0x758] sm:$0xff]
      %v353 = vld [vmem:[%s111 + $0x760] sm:$0xff]
      %v354 = vld [vmem:[%s111 + $0x768] sm:$0xff]
      %v355 = vld [vmem:[%s111 + $0x770] sm:$0xff]
      %v356 = vld [vmem:[%s111 + $0x778] sm:$0xff]
      %v357 = vld [vmem:[%s111 + $0x780] sm:$0xff]
      %v358 = vld [vmem:[%s111 + $0x788] sm:$0xff]
      %v359 = vld [vmem:[%s111 + $0x790] sm:$0xff]
      %v360 = vld [vmem:[%s111 + $0x798] sm:$0xff]
      %v361 = vld [vmem:[%s111 + $0x7a0] sm:$0xff]
      %v362 = vld [vmem:[%s111 + $0x7a8] sm:$0xff]
      %v363 = vld [vmem:[%s111 + $0x7b0] sm:$0xff]
      %v364 = vld [vmem:[%s111 + $0x7b8] sm:$0xff]
      %v365 = vld [vmem:[%s111 + $0x7c0] sm:$0xff]
      %v366 = vld [vmem:[%s111 + $0x7c8] sm:$0xff]
      %v367 = vld [vmem:[%s111 + $0x7d0] sm:$0xff]
      %v368 = vld [vmem:[%s111 + $0x7d8] sm:$0xff]
      %v369 = vld [vmem:[%s111 + $0x7e0] sm:$0xff]
      %v370 = vld [vmem:[%s111 + $0x7e8] sm:$0xff]
      %v371 = vld [vmem:[%s111 + $0x7f0] sm:$0xff]
      %v372 = vld [vmem:[%s111 + $0x7f8] sm:$0xff]
      %v373 = vld [vmem:[%s111 + $0x800] sm:$0xff]
      %v374 = vld [vmem:[%s111 + $0x808] sm:$0xff]
      %v375 = vld [vmem:[%s111 + $0x810] sm:$0xff]
      %v376 = vld [vmem:[%s111 + $0x818] sm:$0xff]
      %v377 = vld [vmem:[%s111 + $0x820] sm:$0xff]
      %v378 = vld [vmem:[%s111 + $0x828] sm:$0xff]
      %v379 = vld [vmem:[%s111 + $0x830] sm:$0xff]
      %v380 = vld [vmem:[%s111 + $0x838] sm:$0xff]
      %v381 = vld [vmem:[%s111 + $0x840] sm:$0xff]
      %v382 = vld [vmem:[%s111 + $0x848] sm:$0xff]
      %v383 = vld [vmem:[%s111 + $0x850] sm:$0xff]
      %v384 = vadd.f32 %v117, %v118
      %vm385 = vcmask 408576
      %v386 = vsel %vm385, %v119, 0.0
      %v387 = vadd.f32 %v384, %v386
      %v388 = vadd.f32 %v387, %v120
      %v389 = vadd.f32 %v388, %v121
      %v390 = vsel %vm385, %v122, 0.0
      %v391 = vadd.f32 %v389, %v390
      %v392 = vadd.f32 %v391, %v123
      %v393 = vadd.f32 %v392, %v124
      %v394 = vsel %vm385, %v125, 0.0
      %v395 = vadd.f32 %v393, %v394
      %v396 = vadd.f32 %v395, %v126
      %v397 = vadd.f32 %v396, %v127
      %v398 = vsel %vm385, %v128, 0.0
      %v399 = vadd.f32 %v397, %v398
      %v400 = vadd.f32 %v399, %v129
      %v401 = vadd.f32 %v400, %v130
      %v402 = vsel %vm385, %v131, 0.0
      %v403 = vadd.f32 %v401, %v402
      %v404 = vadd.f32 %v403, %v132
      %v405 = vadd.f32 %v404, %v133
      %v406 = vsel %vm385, %v134, 0.0
      %v407 = vadd.f32 %v405, %v406
      %v408 = vadd.f32 %v407, %v135
      %v409 = vadd.f32 %v408, %v136
      %v410 = vsel %vm385, %v137, 0.0
      %v411 = vadd.f32 %v409, %v410
      %v412 = vadd.f32 %v411, %v138
      %v413 = vadd.f32 %v412, %v139
      %v414 = vsel %vm385, %v140, 0.0
      %v415 = vadd.f32 %v413, %v414
      %v416 = vadd.f32 %v415, %v141
      %v417 = vadd.f32 %v416, %v142
      %v418 = vsel %vm385, %v143, 0.0
      %v419 = vadd.f32 %v417, %v418
      %v420 = vadd.f32 %v419, %v144
      %v421 = vadd.f32 %v420, %v145
      %v422 = vsel %vm385, %v146, 0.0
      %v423 = vadd.f32 %v421, %v422
      %v424 = vadd.f32 %v423, %v147
      %v425 = vadd.f32 %v424, %v148
      %v426 = vsel %vm385, %v149, 0.0
      %v427 = vadd.f32 %v425, %v426
      %v428 = vadd.f32 %v427, %v150
      %v429 = vadd.f32 %v428, %v151
      %v430 = vsel %vm385, %v152, 0.0
      %v431 = vadd.f32 %v429, %v430
      %v432 = vadd.f32 %v431, %v153
      %v433 = vadd.f32 %v432, %v154
      %v434 = vsel %vm385, %v155, 0.0
      %v435 = vadd.f32 %v433, %v434
      %v436 = vadd.f32 %v435, %v156
      %v437 = vadd.f32 %v436, %v157
      %v438 = vsel %vm385, %v158, 0.0
      %v439 = vadd.f32 %v437, %v438
      %v440 = vadd.f32 %v439, %v159
      %v441 = vadd.f32 %v440, %v160
      %v442 = vsel %vm385, %v161, 0.0
      %v443 = vadd.f32 %v441, %v442
      %v444 = vadd.f32 %v443, %v162
      %v445 = vadd.f32 %v444, %v163
      %v446 = vsel %vm385, %v164, 0.0
      %v447 = vadd.f32 %v445, %v446
      %v448 = vadd.f32 %v447, %v165
      %v449 = vadd.f32 %v448, %v166
      %v450 = vsel %vm385, %v167, 0.0
      %v451 = vadd.f32 %v449, %v450
      %v452 = vadd.f32 %v451, %v168
      %v453 = vadd.f32 %v452, %v169
      %v454 = vsel %vm385, %v170, 0.0
      %v455 = vadd.f32 %v453, %v454
      %v456 = vadd.f32 %v455, %v171
      %v457 = vadd.f32 %v456, %v172
      %v458 = vsel %vm385, %v173, 0.0
      %v459 = vadd.f32 %v457, %v458
      %v460 = vadd.f32 %v459, %v174
      %v461 = vadd.f32 %v460, %v175
      %v462 = vsel %vm385, %v176, 0.0
      %v463 = vadd.f32 %v461, %v462
      %v464 = vadd.f32 %v463, %v177
      %v465 = vadd.f32 %v464, %v178
      %v466 = vsel %vm385, %v179, 0.0
      %v467 = vadd.f32 %v465, %v466
      %v468 = vadd.f32 %v467, %v180
      %v469 = vadd.f32 %v468, %v181
      %v470 = vsel %vm385, %v182, 0.0
      %v471 = vadd.f32 %v469, %v470
      %v472 = vadd.f32 %v471, %v183
      %v473 = vadd.f32 %v472, %v184
      %v474 = vsel %vm385, %v185, 0.0
      %v475 = vadd.f32 %v473, %v474
      %v476 = vadd.f32 %v475, %v186
      %v477 = vadd.f32 %v476, %v187
      %v478 = vsel %vm385, %v188, 0.0
      %v479 = vadd.f32 %v477, %v478
      %v480 = vadd.f32 %v479, %v189
      %v481 = vadd.f32 %v480, %v190
      %v482 = vsel %vm385, %v191, 0.0
      %v483 = vadd.f32 %v481, %v482
      %v484 = vadd.f32 %v483, %v192
      %v485 = vadd.f32 %v484, %v193
      %v486 = vsel %vm385, %v194, 0.0
      %v487 = vadd.f32 %v485, %v486
      %v488 = vadd.f32 %v487, %v195
      %v489 = vadd.f32 %v488, %v196
      %v490 = vsel %vm385, %v197, 0.0
      %v491 = vadd.f32 %v489, %v490
      %v492 = vadd.f32 %v491, %v198
      %v493 = vadd.f32 %v492, %v199
      %v494 = vsel %vm385, %v200, 0.0
      %v495 = vadd.f32 %v493, %v494
      %v496 = vadd.f32 %v495, %v201
      %v497 = vadd.f32 %v496, %v202
      %v498 = vsel %vm385, %v203, 0.0
      %v499 = vadd.f32 %v497, %v498
      %v500 = vadd.f32 %v499, %v204
      %v501 = vadd.f32 %v500, %v205
      %v502 = vsel %vm385, %v206, 0.0
      %v503 = vadd.f32 %v501, %v502
      %v504 = vadd.f32 %v503, %v207
      %v505 = vadd.f32 %v504, %v208
      %v506 = vsel %vm385, %v209, 0.0
      %v507 = vadd.f32 %v505, %v506
      %v508 = vadd.f32 %v507, %v210
      %v509 = vadd.f32 %v508, %v211
      %v510 = vsel %vm385, %v212, 0.0
      %v511 = vadd.f32 %v509, %v510
      %v512 = vadd.f32 %v511, %v213
      %v513 = vadd.f32 %v512, %v214
      %v514 = vsel %vm385, %v215, 0.0
      %v515 = vadd.f32 %v513, %v514
      %v516 = vadd.f32 %v515, %v216
      %v517 = vadd.f32 %v516, %v217
      %v518 = vsel %vm385, %v218, 0.0
      %v519 = vadd.f32 %v517, %v518
      %v520 = vadd.f32 %v519, %v219
      %v521 = vadd.f32 %v520, %v220
      %v522 = vsel %vm385, %v221, 0.0
      %v523 = vadd.f32 %v521, %v522
      %v524 = vadd.f32 %v523, %v222
      %v525 = vadd.f32 %v524, %v223
      %v526 = vsel %vm385, %v224, 0.0
      %v527 = vadd.f32 %v525, %v526
      %v528 = vadd.f32 %v527, %v225
      %v529 = vadd.f32 %v528, %v226
      %v530 = vsel %vm385, %v227, 0.0
      %v531 = vadd.f32 %v529, %v530
      %v532 = vadd.f32 %v531, %v228
      %v533 = vadd.f32 %v532, %v229
      %v534 = vsel %vm385, %v230, 0.0
      %v535 = vadd.f32 %v533, %v534
      %v536 = vadd.f32 %v535, %v231
      %v537 = vadd.f32 %v536, %v232
      %v538 = vsel %vm385, %v233, 0.0
      %v539 = vadd.f32 %v537, %v538
      %v540 = vadd.f32 %v539, %v234
      %v541 = vadd.f32 %v540, %v235
      %v542 = vsel %vm385, %v236, 0.0
      %v543 = vadd.f32 %v541, %v542
      %v544 = vadd.f32 %v543, %v237
      %v545 = vadd.f32 %v544, %v238
      %v546 = vsel %vm385, %v239, 0.0
      %v547 = vadd.f32 %v545, %v546
      %v548 = vadd.f32 %v547, %v240
      %v549 = vadd.f32 %v548, %v241
      %v550 = vsel %vm385, %v242, 0.0
      %v551 = vadd.f32 %v549, %v550
      %v552 = vadd.f32 %v551, %v243
      %v553 = vadd.f32 %v552, %v244
      %v554 = vsel %vm385, %v245, 0.0
      %v555 = vadd.f32 %v553, %v554
      %v556 = vadd.f32 %v555, %v246
      %v557 = vadd.f32 %v556, %v247
      %v558 = vsel %vm385, %v248, 0.0
      %v559 = vadd.f32 %v557, %v558
      %v560 = vadd.f32 %v559, %v249
      %v561 = vadd.f32 %v560, %v250
      %v562 = vsel %vm385, %v251, 0.0
      %v563 = vadd.f32 %v561, %v562
      %v564 = vadd.f32 %v563, %v252
      %v565 = vadd.f32 %v564, %v253
      %v566 = vsel %vm385, %v254, 0.0
      %v567 = vadd.f32 %v565, %v566
      %v568 = vadd.f32 %v567, %v255
      %v569 = vadd.f32 %v568, %v256
      %v570 = vsel %vm385, %v257, 0.0
      %v571 = vadd.f32 %v569, %v570
      %v572 = vadd.f32 %v571, %v258
      %v573 = vadd.f32 %v572, %v259
      %v574 = vsel %vm385, %v260, 0.0
      %v575 = vadd.f32 %v573, %v574
      %v576 = vadd.f32 %v575, %v261
      %v577 = vadd.f32 %v576, %v262
      %v578 = vsel %vm385, %v263, 0.0
      %v579 = vadd.f32 %v577, %v578
      %v580 = vadd.f32 %v579, %v264
      %v581 = vadd.f32 %v580, %v265
      %v582 = vsel %vm385, %v266, 0.0
      %v583 = vadd.f32 %v581, %v582
      %v584 = vadd.f32 %v583, %v267
      %v585 = vadd.f32 %v584, %v268
      %v586 = vsel %vm385, %v269, 0.0
      %v587 = vadd.f32 %v585, %v586
      %v588 = vadd.f32 %v587, %v270
      %v589 = vadd.f32 %v588, %v271
      %v590 = vsel %vm385, %v272, 0.0
      %v591 = vadd.f32 %v589, %v590
      %v592 = vadd.f32 %v591, %v273
      %v593 = vadd.f32 %v592, %v274
      %v594 = vsel %vm385, %v275, 0.0
      %v595 = vadd.f32 %v593, %v594
      %v596 = vadd.f32 %v595, %v276
      %v597 = vadd.f32 %v596, %v277
      %v598 = vsel %vm385, %v278, 0.0
      %v599 = vadd.f32 %v597, %v598
      %v600 = vadd.f32 %v599, %v279
      %v601 = vadd.f32 %v600, %v280
      %v602 = vsel %vm385, %v281, 0.0
      %v603 = vadd.f32 %v601, %v602
      %v604 = vadd.f32 %v603, %v282
      %v605 = vadd.f32 %v604, %v283
      %v606 = vsel %vm385, %v284, 0.0
      %v607 = vadd.f32 %v605, %v606
      %v608 = vadd.f32 %v607, %v285
      %v609 = vadd.f32 %v608, %v286
      %v610 = vsel %vm385, %v287, 0.0
      %v611 = vadd.f32 %v609, %v610
      %v612 = vadd.f32 %v611, %v288
      %v613 = vadd.f32 %v612, %v289
      %v614 = vsel %vm385, %v290, 0.0
      %v615 = vadd.f32 %v613, %v614
      %v616 = vadd.f32 %v615, %v291
      %v617 = vadd.f32 %v616, %v292
      %v618 = vsel %vm385, %v293, 0.0
      %v619 = vadd.f32 %v617, %v618
      %v620 = vadd.f32 %v619, %v294
      %v621 = vadd.f32 %v620, %v295
      %v622 = vsel %vm385, %v296, 0.0
      %v623 = vadd.f32 %v621, %v622
      %v624 = vadd.f32 %v623, %v297
      %v625 = vadd.f32 %v624, %v298
      %v626 = vsel %vm385, %v299, 0.0
      %v627 = vadd.f32 %v625, %v626
      %v628 = vadd.f32 %v627, %v300
      %v629 = vadd.f32 %v628, %v301
      %v630 = vsel %vm385, %v302, 0.0
      %v631 = vadd.f32 %v629, %v630
      %v632 = vadd.f32 %v631, %v303
      %v633 = vadd.f32 %v632, %v304
      %v634 = vsel %vm385, %v305, 0.0
      %v635 = vadd.f32 %v633, %v634
      %v636 = vadd.f32 %v635, %v306
      %v637 = vadd.f32 %v636, %v307
      %v638 = vsel %vm385, %v308, 0.0
      %v639 = vadd.f32 %v637, %v638
      %v640 = vadd.f32 %v639, %v309
      %v641 = vadd.f32 %v640, %v310
      %v642 = vsel %vm385, %v311, 0.0
      %v643 = vadd.f32 %v641, %v642
      %v644 = vadd.f32 %v643, %v312
      %v645 = vadd.f32 %v644, %v313
      %v646 = vsel %vm385, %v314, 0.0
      %v647 = vadd.f32 %v645, %v646
      %v648 = vadd.f32 %v647, %v315
      %v649 = vadd.f32 %v648, %v316
      %v650 = vsel %vm385, %v317, 0.0
      %v651 = vadd.f32 %v649, %v650
      %v652 = vadd.f32 %v651, %v318
      %v653 = vadd.f32 %v652, %v319
      %v654 = vsel %vm385, %v320, 0.0
      %v655 = vadd.f32 %v653, %v654
      %v656 = vadd.f32 %v655, %v321
      %v657 = vadd.f32 %v656, %v322
      %v658 = vsel %vm385, %v323, 0.0
      %v659 = vadd.f32 %v657, %v658
      %v660 = vadd.f32 %v659, %v324
      %v661 = vadd.f32 %v660, %v325
      %v662 = vsel %vm385, %v326, 0.0
      %v663 = vadd.f32 %v661, %v662
      %v664 = vadd.f32 %v663, %v327
      %v665 = vadd.f32 %v664, %v328
      %v666 = vsel %vm385, %v329, 0.0
      %v667 = vadd.f32 %v665, %v666
      %v668 = vadd.f32 %v667, %v330
      %v669 = vadd.f32 %v668, %v331
      %v670 = vsel %vm385, %v332, 0.0
      %v671 = vadd.f32 %v669, %v670
      %v672 = vadd.f32 %v671, %v333
      %v673 = vadd.f32 %v672, %v334
      %v674 = vsel %vm385, %v335, 0.0
      %v675 = vadd.f32 %v673, %v674
      %v676 = vadd.f32 %v675, %v336
      %v677 = vadd.f32 %v676, %v337
      %v678 = vsel %vm385, %v338, 0.0
      %v679 = vadd.f32 %v677, %v678
      %v680 = vadd.f32 %v679, %v339
      %v681 = vadd.f32 %v680, %v340
      %v682 = vsel %vm385, %v341, 0.0
      %v683 = vadd.f32 %v681, %v682
      %v684 = vadd.f32 %v683, %v342
      %v685 = vadd.f32 %v684, %v343
      %v686 = vsel %vm385, %v344, 0.0
      %v687 = vadd.f32 %v685, %v686
      %v688 = vadd.f32 %v687, %v345
      %v689 = vadd.f32 %v688, %v346
      %v690 = vsel %vm385, %v347, 0.0
      %v691 = vadd.f32 %v689, %v690
      %v692 = vadd.f32 %v691, %v348
      %v693 = vadd.f32 %v692, %v349
      %v694 = vsel %vm385, %v350, 0.0
      %v695 = vadd.f32 %v693, %v694
      %v696 = vadd.f32 %v695, %v351
      %v697 = vadd.f32 %v696, %v352
      %v698 = vsel %vm385, %v353, 0.0
      %v699 = vadd.f32 %v697, %v698
      %v700 = vadd.f32 %v699, %v354
      %v701 = vadd.f32 %v700, %v355
      %v702 = vsel %vm385, %v356, 0.0
      %v703 = vadd.f32 %v701, %v702
      %v704 = vadd.f32 %v703, %v357
      %v705 = vadd.f32 %v704, %v358
      %v706 = vsel %vm385, %v359, 0.0
      %v707 = vadd.f32 %v705, %v706
      %v708 = vadd.f32 %v707, %v360
      %v709 = vadd.f32 %v708, %v361
      %v710 = vsel %vm385, %v362, 0.0
      %v711 = vadd.f32 %v709, %v710
      %v712 = vadd.f32 %v711, %v363
      %v713 = vadd.f32 %v712, %v364
      %v714 = vsel %vm385, %v365, 0.0
      %v715 = vadd.f32 %v713, %v714
      %v716 = vadd.f32 %v715, %v366
      %v717 = vadd.f32 %v716, %v367
      %v718 = vsel %vm385, %v368, 0.0
      %v719 = vadd.f32 %v717, %v718
      %v720 = vadd.f32 %v719, %v369
      %v721 = vadd.f32 %v720, %v370
      %v722 = vsel %vm385, %v371, 0.0
      %v723 = vadd.f32 %v721, %v722
      %v724 = vadd.f32 %v723, %v372
      %v725 = vadd.f32 %v724, %v373
      %v726 = vsel %vm385, %v374, 0.0
      %v727 = vadd.f32 %v725, %v726
      %v728 = vadd.f32 %v727, %v375
      %v729 = vadd.f32 %v728, %v376
      %v730 = vsel %vm385, %v377, 0.0
      %v731 = vadd.f32 %v729, %v730
      %v732 = vadd.f32 %v731, %v378
      %v733 = vadd.f32 %v732, %v379
      %v734 = vsel %vm385, %v380, 0.0
      %v735 = vadd.f32 %v733, %v734
      %v736 = vadd.f32 %v735, %v381
      %v737 = vadd.f32 %v736, %v382
      %v738 = vsel %vm385, %v383, 0.0
      %v739 = vadd.f32 %v737, %v738
      %740 = vadd.xlane.f32.xlu0 %v739
      %v741 = vpop.xlane.xlu0 %740
      %v742 = vrot.slane %v741, 4
      %v743 = vadd.f32 %v741, %v742
      %v744 = vrot.slane %v743, 2
      %v745 = vadd.f32 %v743, %v744
      %v746 = vrot.slane %v745, 1
      %v747 = vadd.f32 %v745, %v746
      %s748 = vtos %v747
      %v749 = vrcp.pop 217872.0
      %s750 = vtos %v749
      %s751 = smul.f32 %s748, %s750
      %v752 = vstv %s751
      %v753 = vsub.f32 %v117, %v752
      %v754 = vsub.f32 %v118, %v752
      %v755 = vsub.f32 %v119, %v752
      %v756 = vsub.f32 %v120, %v752
      %v757 = vsub.f32 %v121, %v752
      %v758 = vsub.f32 %v122, %v752
      %v759 = vsub.f32 %v123, %v752
      %v760 = vsub.f32 %v124, %v752
      %v761 = vsub.f32 %v125, %v752
      %v762 = vsub.f32 %v126, %v752
      %v763 = vsub.f32 %v127, %v752
      %v764 = vsub.f32 %v128, %v752
      %v765 = vsub.f32 %v129, %v752
      %v766 = vsub.f32 %v130, %v752
      %v767 = vsub.f32 %v131, %v752
      %v768 = vsub.f32 %v132, %v752
      %v769 = vsub.f32 %v133, %v752
      %v770 = vsub.f32 %v134, %v752
      %v771 = vsub.f32 %v135, %v752
      %v772 = vsub.f32 %v136, %v752
      %v773 = vsub.f32 %v137, %v752
      %v774 = vsub.f32 %v138, %v752
      %v775 = vsub.f32 %v139, %v752
      %v776 = vsub.f32 %v140, %v752
      %v777 = vsub.f32 %v141, %v752
      %v778 = vsub.f32 %v142, %v752
      %v779 = vsub.f32 %v143, %v752
      %v780 = vsub.f32 %v144, %v752
      %v781 = vsub.f32 %v145, %v752
      %v782 = vsub.f32 %v146, %v752
      %v783 = vsub.f32 %v147, %v752
      %v784 = vsub.f32 %v148, %v752
      %v785 = vsub.f32 %v149, %v752
      %v786 = vsub.f32 %v150, %v752
      %v787 = vsub.f32 %v151, %v752
      %v788 = vsub.f32 %v152, %v752
      %v789 = vsub.f32 %v153, %v752
      %v790 = vsub.f32 %v154, %v752
      %v791 = vsub.f32 %v155, %v752
      %v792 = vsub.f32 %v156, %v752
      %v793 = vsub.f32 %v157, %v752
      %v794 = vsub.f32 %v158, %v752
      %v795 = vsub.f32 %v159, %v752
      %v796 = vsub.f32 %v160, %v752
      %v797 = vsub.f32 %v161, %v752
      %v798 = vsub.f32 %v162, %v752
      %v799 = vsub.f32 %v163, %v752
      %v800 = vsub.f32 %v164, %v752
      %v801 = vsub.f32 %v165, %v752
      %v802 = vsub.f32 %v166, %v752
      %v803 = vsub.f32 %v167, %v752
      %v804 = vsub.f32 %v168, %v752
      %v805 = vsub.f32 %v169, %v752
      %v806 = vsub.f32 %v170, %v752
      %v807 = vsub.f32 %v171, %v752
      %v808 = vsub.f32 %v172, %v752
      %v809 = vsub.f32 %v173, %v752
      %v810 = vsub.f32 %v174, %v752
      %v811 = vsub.f32 %v175, %v752
      %v812 = vsub.f32 %v176, %v752
      %v813 = vsub.f32 %v177, %v752
      %v814 = vsub.f32 %v178, %v752
      %v815 = vsub.f32 %v179, %v752
      %v816 = vsub.f32 %v180, %v752
      %v817 = vsub.f32 %v181, %v752
      %v818 = vsub.f32 %v182, %v752
      %v819 = vsub.f32 %v183, %v752
      %v820 = vsub.f32 %v184, %v752
      %v821 = vsub.f32 %v185, %v752
      %v822 = vsub.f32 %v186, %v752
      %v823 = vsub.f32 %v187, %v752
      %v824 = vsub.f32 %v188, %v752
      %v825 = vsub.f32 %v189, %v752
      %v826 = vsub.f32 %v190, %v752
      %v827 = vsub.f32 %v191, %v752
      %v828 = vsub.f32 %v192, %v752
      %v829 = vsub.f32 %v193, %v752
      %v830 = vsub.f32 %v194, %v752
      %v831 = vsub.f32 %v195, %v752
      %v832 = vsub.f32 %v196, %v752
      %v833 = vsub.f32 %v197, %v752
      %v834 = vsub.f32 %v198, %v752
      %v835 = vsub.f32 %v199, %v752
      %v836 = vsub.f32 %v200, %v752
      %v837 = vsub.f32 %v201, %v752
      %v838 = vsub.f32 %v202, %v752
      %v839 = vsub.f32 %v203, %v752
      %v840 = vsub.f32 %v204, %v752
      %v841 = vsub.f32 %v205, %v752
      %v842 = vsub.f32 %v206, %v752
      %v843 = vsub.f32 %v207, %v752
      %v844 = vsub.f32 %v208, %v752
      %v845 = vsub.f32 %v209, %v752
      %v846 = vsub.f32 %v210, %v752
      %v847 = vsub.f32 %v211, %v752
      %v848 = vsub.f32 %v212, %v752
      %v849 = vsub.f32 %v213, %v752
      %v850 = vsub.f32 %v214, %v752
      %v851 = vsub.f32 %v215, %v752
      %v852 = vsub.f32 %v216, %v752
      %v853 = vsub.f32 %v217, %v752
      %v854 = vsub.f32 %v218, %v752
      %v855 = vsub.f32 %v219, %v752
      %v856 = vsub.f32 %v220, %v752
      %v857 = vsub.f32 %v221, %v752
      %v858 = vsub.f32 %v222, %v752
      %v859 = vsub.f32 %v223, %v752
      %v860 = vsub.f32 %v224, %v752
      %v861 = vsub.f32 %v225, %v752
      %v862 = vsub.f32 %v226, %v752
      %v863 = vsub.f32 %v227, %v752
      %v864 = vsub.f32 %v228, %v752
      %v865 = vsub.f32 %v229, %v752
      %v866 = vsub.f32 %v230, %v752
      %v867 = vsub.f32 %v231, %v752
      %v868 = vsub.f32 %v232, %v752
      %v869 = vsub.f32 %v233, %v752
      %v870 = vsub.f32 %v234, %v752
      %v871 = vsub.f32 %v235, %v752
      %v872 = vsub.f32 %v236, %v752
      %v873 = vsub.f32 %v237, %v752
      %v874 = vsub.f32 %v238, %v752
      %v875 = vsub.f32 %v239, %v752
      %v876 = vsub.f32 %v240, %v752
      %v877 = vsub.f32 %v241, %v752
      %v878 = vsub.f32 %v242, %v752
      %v879 = vsub.f32 %v243, %v752
      %v880 = vsub.f32 %v244, %v752
      %v881 = vsub.f32 %v245, %v752
      %v882 = vsub.f32 %v246, %v752
      %v883 = vsub.f32 %v247, %v752
      %v884 = vsub.f32 %v248, %v752
      %v885 = vsub.f32 %v249, %v752
      %v886 = vsub.f32 %v250, %v752
      %v887 = vsub.f32 %v251, %v752
      %v888 = vsub.f32 %v252, %v752
      %v889 = vsub.f32 %v253, %v752
      %v890 = vsub.f32 %v254, %v752
      %v891 = vsub.f32 %v255, %v752
      %v892 = vsub.f32 %v256, %v752
      %v893 = vsub.f32 %v257, %v752
      %v894 = vsub.f32 %v258, %v752
      %v895 = vsub.f32 %v259, %v752
      %v896 = vsub.f32 %v260, %v752
      %v897 = vsub.f32 %v261, %v752
      %v898 = vsub.f32 %v262, %v752
      %v899 = vsub.f32 %v263, %v752
      %v900 = vsub.f32 %v264, %v752
      %v901 = vsub.f32 %v265, %v752
      %v902 = vsub.f32 %v266, %v752
      %v903 = vsub.f32 %v267, %v752
      %v904 = vsub.f32 %v268, %v752
      %v905 = vsub.f32 %v269, %v752
      %v906 = vsub.f32 %v270, %v752
      %v907 = vsub.f32 %v271, %v752
      %v908 = vsub.f32 %v272, %v752
      %v909 = vsub.f32 %v273, %v752
      %v910 = vsub.f32 %v274, %v752
      %v911 = vsub.f32 %v275, %v752
      %v912 = vsub.f32 %v276, %v752
      %v913 = vsub.f32 %v277, %v752
      %v914 = vsub.f32 %v278, %v752
      %v915 = vsub.f32 %v279, %v752
      %v916 = vsub.f32 %v280, %v752
      %v917 = vsub.f32 %v281, %v752
      %v918 = vsub.f32 %v282, %v752
      %v919 = vsub.f32 %v283, %v752
      %v920 = vsub.f32 %v284, %v752
      %v921 = vsub.f32 %v285, %v752
      %v922 = vsub.f32 %v286, %v752
      %v923 = vsub.f32 %v287, %v752
      %v924 = vsub.f32 %v288, %v752
      %v925 = vsub.f32 %v289, %v752
      %v926 = vsub.f32 %v290, %v752
      %v927 = vsub.f32 %v291, %v752
      %v928 = vsub.f32 %v292, %v752
      %v929 = vsub.f32 %v293, %v752
      %v930 = vsub.f32 %v294, %v752
      %v931 = vsub.f32 %v295, %v752
      %v932 = vsub.f32 %v296, %v752
      %v933 = vsub.f32 %v297, %v752
      %v934 = vsub.f32 %v298, %v752
      %v935 = vsub.f32 %v299, %v752
      %v936 = vsub.f32 %v300, %v752
      %v937 = vsub.f32 %v301, %v752
      %v938 = vsub.f32 %v302, %v752
      %v939 = vsub.f32 %v303, %v752
      %v940 = vsub.f32 %v304, %v752
      %v941 = vsub.f32 %v305, %v752
      %v942 = vsub.f32 %v306, %v752
      %v943 = vsub.f32 %v307, %v752
      %v944 = vsub.f32 %v308, %v752
      %v945 = vsub.f32 %v309, %v752
      %v946 = vsub.f32 %v310, %v752
      %v947 = vsub.f32 %v311, %v752
      %v948 = vsub.f32 %v312, %v752
      %v949 = vsub.f32 %v313, %v752
      %v950 = vsub.f32 %v314, %v752
      %v951 = vsub.f32 %v315, %v752
      %v952 = vsub.f32 %v316, %v752
      %v953 = vsub.f32 %v317, %v752
      %v954 = vsub.f32 %v318, %v752
      %v955 = vsub.f32 %v319, %v752
      %v956 = vsub.f32 %v320, %v752
      %v957 = vsub.f32 %v321, %v752
      %v958 = vsub.f32 %v322, %v752
      %v959 = vsub.f32 %v323, %v752
      %v960 = vsub.f32 %v324, %v752
      %v961 = vsub.f32 %v325, %v752
      %v962 = vsub.f32 %v326, %v752
      %v963 = vsub.f32 %v327, %v752
      %v964 = vsub.f32 %v328, %v752
      %v965 = vsub.f32 %v329, %v752
      %v966 = vsub.f32 %v330, %v752
      %v967 = vsub.f32 %v331, %v752
      %v968 = vsub.f32 %v332, %v752
      %v969 = vsub.f32 %v333, %v752
      %v970 = vsub.f32 %v334, %v752
      %v971 = vsub.f32 %v335, %v752
      %v972 = vsub.f32 %v336, %v752
      %v973 = vsub.f32 %v337, %v752
      %v974 = vsub.f32 %v338, %v752
      %v975 = vsub.f32 %v339, %v752
      %v976 = vsub.f32 %v340, %v752
      %v977 = vsub.f32 %v341, %v752
      %v978 = vsub.f32 %v342, %v752
      %v979 = vsub.f32 %v343, %v752
      %v980 = vsub.f32 %v344, %v752
      %v981 = vsub.f32 %v345, %v752
      %v982 = vsub.f32 %v346, %v752
      %v983 = vsub.f32 %v347, %v752
      %v984 = vsub.f32 %v348, %v752
      %v985 = vsub.f32 %v349, %v752
      %v986 = vsub.f32 %v350, %v752
      %v987 = vsub.f32 %v351, %v752
      %v988 = vsub.f32 %v352, %v752
      %v989 = vsub.f32 %v353, %v752
      %v990 = vsub.f32 %v354, %v752
      %v991 = vsub.f32 %v355, %v752
      %v992 = vsub.f32 %v356, %v752
      %v993 = vsub.f32 %v357, %v752
      %v994 = vsub.f32 %v358, %v752
      %v995 = vsub.f32 %v359, %v752
      %v996 = vsub.f32 %v360, %v752
      %v997 = vsub.f32 %v361, %v752
      %v998 = vsub.f32 %v362, %v752
      %v999 = vsub.f32 %v363, %v752
      %v1000 = vsub.f32 %v364, %v752
      %v1001 = vsub.f32 %v365, %v752
      %v1002 = vsub.f32 %v366, %v752
      %v1003 = vsub.f32 %v367, %v752
      %v1004 = vsub.f32 %v368, %v752
      %v1005 = vsub.f32 %v369, %v752
      %v1006 = vsub.f32 %v370, %v752
      %v1007 = vsub.f32 %v371, %v752
      %v1008 = vsub.f32 %v372, %v752
      %v1009 = vsub.f32 %v373, %v752
      %v1010 = vsub.f32 %v374, %v752
      %v1011 = vsub.f32 %v375, %v752
      %v1012 = vsub.f32 %v376, %v752
      %v1013 = vsub.f32 %v377, %v752
      %v1014 = vsub.f32 %v378, %v752
      %v1015 = vsub.f32 %v379, %v752
      %v1016 = vsub.f32 %v380, %v752
      %v1017 = vsub.f32 %v381, %v752
      %v1018 = vsub.f32 %v382, %v752
      %v1019 = vsub.f32 %v383, %v752
      %v1020 = vmul.f32 %v753, %v753
      %v1021 = vmul.f32 %v754, %v754
      %v1022 = vmul.f32 %v755, %v755
      %v1023 = vmul.f32 %v756, %v756
      %v1024 = vmul.f32 %v757, %v757
      %v1025 = vmul.f32 %v758, %v758
      %v1026 = vmul.f32 %v759, %v759
      %v1027 = vmul.f32 %v760, %v760
      %v1028 = vmul.f32 %v761, %v761
      %v1029 = vmul.f32 %v762, %v762
      %v1030 = vmul.f32 %v763, %v763
      %v1031 = vmul.f32 %v764, %v764
      %v1032 = vmul.f32 %v765, %v765
      %v1033 = vmul.f32 %v766, %v766
      %v1034 = vmul.f32 %v767, %v767
      %v1035 = vmul.f32 %v768, %v768
      %v1036 = vmul.f32 %v769, %v769
      %v1037 = vmul.f32 %v770, %v770
      %v1038 = vmul.f32 %v771, %v771
      %v1039 = vmul.f32 %v772, %v772
      %v1040 = vmul.f32 %v773, %v773
      %v1041 = vmul.f32 %v774, %v774
      %v1042 = vmul.f32 %v775, %v775
      %v1043 = vmul.f32 %v776, %v776
      %v1044 = vmul.f32 %v777, %v777
      %v1045 = vmul.f32 %v778, %v778
      %v1046 = vmul.f32 %v779, %v779
      %v1047 = vmul.f32 %v780, %v780
      %v1048 = vmul.f32 %v781, %v781
      %v1049 = vmul.f32 %v782, %v782
      %v1050 = vmul.f32 %v783, %v783
      %v1051 = vmul.f32 %v784, %v784
      %v1052 = vmul.f32 %v785, %v785
      %v1053 = vmul.f32 %v786, %v786
      %v1054 = vmul.f32 %v787, %v787
      %v1055 = vmul.f32 %v788, %v788
      %v1056 = vmul.f32 %v789, %v789
      %v1057 = vmul.f32 %v790, %v790
      %v1058 = vmul.f32 %v791, %v791
      %v1059 = vmul.f32 %v792, %v792
      %v1060 = vmul.f32 %v793, %v793
      %v1061 = vmul.f32 %v794, %v794
      %v1062 = vmul.f32 %v795, %v795
      %v1063 = vmul.f32 %v796, %v796
      %v1064 = vmul.f32 %v797, %v797
      %v1065 = vmul.f32 %v798, %v798
      %v1066 = vmul.f32 %v799, %v799
      %v1067 = vmul.f32 %v800, %v800
      %v1068 = vmul.f32 %v801, %v801
      %v1069 = vmul.f32 %v802, %v802
      %v1070 = vmul.f32 %v803, %v803
      %v1071 = vmul.f32 %v804, %v804
      %v1072 = vmul.f32 %v805, %v805
      %v1073 = vmul.f32 %v806, %v806
      %v1074 = vmul.f32 %v807, %v807
      %v1075 = vmul.f32 %v808, %v808
      %v1076 = vmul.f32 %v809, %v809
      %v1077 = vmul.f32 %v810, %v810
      %v1078 = vmul.f32 %v811, %v811
      %v1079 = vmul.f32 %v812, %v812
      %v1080 = vmul.f32 %v813, %v813
      %v1081 = vmul.f32 %v814, %v814
      %v1082 = vmul.f32 %v815, %v815
      %v1083 = vmul.f32 %v816, %v816
      %v1084 = vmul.f32 %v817, %v817
      %v1085 = vmul.f32 %v818, %v818
      %v1086 = vmul.f32 %v819, %v819
      %v1087 = vmul.f32 %v820, %v820
      %v1088 = vmul.f32 %v821, %v821
      %v1089 = vmul.f32 %v822, %v822
      %v1090 = vmul.f32 %v823, %v823
      %v1091 = vmul.f32 %v824, %v824
      %v1092 = vmul.f32 %v825, %v825
      %v1093 = vmul.f32 %v826, %v826
      %v1094 = vmul.f32 %v827, %v827
      %v1095 = vmul.f32 %v828, %v828
      %v1096 = vmul.f32 %v829, %v829
      %v1097 = vmul.f32 %v830, %v830
      %v1098 = vmul.f32 %v831, %v831
      %v1099 = vmul.f32 %v832, %v832
      %v1100 = vmul.f32 %v833, %v833
      %v1101 = vmul.f32 %v834, %v834
      %v1102 = vmul.f32 %v835, %v835
      %v1103 = vmul.f32 %v836, %v836
      %v1104 = vmul.f32 %v837, %v837
      %v1105 = vmul.f32 %v838, %v838
      %v1106 = vmul.f32 %v839, %v839
      %v1107 = vmul.f32 %v840, %v840
      %v1108 = vmul.f32 %v841, %v841
      %v1109 = vmul.f32 %v842, %v842
      %v1110 = vmul.f32 %v843, %v843
      %v1111 = vmul.f32 %v844, %v844
      %v1112 = vmul.f32 %v845, %v845
      %v1113 = vmul.f32 %v846, %v846
      %v1114 = vmul.f32 %v847, %v847
      %v1115 = vmul.f32 %v848, %v848
      %v1116 = vmul.f32 %v849, %v849
      %v1117 = vmul.f32 %v850, %v850
      %v1118 = vmul.f32 %v851, %v851
      %v1119 = vmul.f32 %v852, %v852
      %v1120 = vmul.f32 %v853, %v853
      %v1121 = vmul.f32 %v854, %v854
      %v1122 = vmul.f32 %v855, %v855
      %v1123 = vmul.f32 %v856, %v856
      %v1124 = vmul.f32 %v857, %v857
      %v1125 = vmul.f32 %v858, %v858
      %v1126 = vmul.f32 %v859, %v859
      %v1127 = vmul.f32 %v860, %v860
      %v1128 = vmul.f32 %v861, %v861
      %v1129 = vmul.f32 %v862, %v862
      %v1130 = vmul.f32 %v863, %v863
      %v1131 = vmul.f32 %v864, %v864
      %v1132 = vmul.f32 %v865, %v865
      %v1133 = vmul.f32 %v866, %v866
      %v1134 = vmul.f32 %v867, %v867
      %v1135 = vmul.f32 %v868, %v868
      %v1136 = vmul.f32 %v869, %v869
      %v1137 = vmul.f32 %v870, %v870
      %v1138 = vmul.f32 %v871, %v871
      %v1139 = vmul.f32 %v872, %v872
      %v1140 = vmul.f32 %v873, %v873
      %v1141 = vmul.f32 %v874, %v874
      %v1142 = vmul.f32 %v875, %v875
      %v1143 = vmul.f32 %v876, %v876
      %v1144 = vmul.f32 %v877, %v877
      %v1145 = vmul.f32 %v878, %v878
      %v1146 = vmul.f32 %v879, %v879
      %v1147 = vmul.f32 %v880, %v880
      %v1148 = vmul.f32 %v881, %v881
      %v1149 = vmul.f32 %v882, %v882
      %v1150 = vmul.f32 %v883, %v883
      %v1151 = vmul.f32 %v884, %v884
      %v1152 = vmul.f32 %v885, %v885
      %v1153 = vmul.f32 %v886, %v886
      %v1154 = vmul.f32 %v887, %v887
      %v1155 = vmul.f32 %v888, %v888
      %v1156 = vmul.f32 %v889, %v889
      %v1157 = vmul.f32 %v890, %v890
      %v1158 = vmul.f32 %v891, %v891
      %v1159 = vmul.f32 %v892, %v892
      %v1160 = vmul.f32 %v893, %v893
      %v1161 = vmul.f32 %v894, %v894
      %v1162 = vmul.f32 %v895, %v895
      %v1163 = vmul.f32 %v896, %v896
      %v1164 = vmul.f32 %v897, %v897
      %v1165 = vmul.f32 %v898, %v898
      %v1166 = vmul.f32 %v899, %v899
      %v1167 = vmul.f32 %v900, %v900
      %v1168 = vmul.f32 %v901, %v901
      %v1169 = vmul.f32 %v902, %v902
      %v1170 = vmul.f32 %v903, %v903
      %v1171 = vmul.f32 %v904, %v904
      %v1172 = vmul.f32 %v905, %v905
      %v1173 = vmul.f32 %v906, %v906
      %v1174 = vmul.f32 %v907, %v907
      %v1175 = vmul.f32 %v908, %v908
      %v1176 = vmul.f32 %v909, %v909
      %v1177 = vmul.f32 %v910, %v910
      %v1178 = vmul.f32 %v911, %v911
      %v1179 = vmul.f32 %v912, %v912
      %v1180 = vmul.f32 %v913, %v913
      %v1181 = vmul.f32 %v914, %v914
      %v1182 = vmul.f32 %v915, %v915
      %v1183 = vmul.f32 %v916, %v916
      %v1184 = vmul.f32 %v917, %v917
      %v1185 = vmul.f32 %v918, %v918
      %v1186 = vmul.f32 %v919, %v919
      %v1187 = vmul.f32 %v920, %v920
      %v1188 = vmul.f32 %v921, %v921
      %v1189 = vmul.f32 %v922, %v922
      %v1190 = vmul.f32 %v923, %v923
      %v1191 = vmul.f32 %v924, %v924
      %v1192 = vmul.f32 %v925, %v925
      %v1193 = vmul.f32 %v926, %v926
      %v1194 = vmul.f32 %v927, %v927
      %v1195 = vmul.f32 %v928, %v928
      %v1196 = vmul.f32 %v929, %v929
      %v1197 = vmul.f32 %v930, %v930
      %v1198 = vmul.f32 %v931, %v931
      %v1199 = vmul.f32 %v932, %v932
      %v1200 = vmul.f32 %v933, %v933
      %v1201 = vmul.f32 %v934, %v934
      %v1202 = vmul.f32 %v935, %v935
      %v1203 = vmul.f32 %v936, %v936
      %v1204 = vmul.f32 %v937, %v937
      %v1205 = vmul.f32 %v938, %v938
      %v1206 = vmul.f32 %v939, %v939
      %v1207 = vmul.f32 %v940, %v940
      %v1208 = vmul.f32 %v941, %v941
      %v1209 = vmul.f32 %v942, %v942
      %v1210 = vmul.f32 %v943, %v943
      %v1211 = vmul.f32 %v944, %v944
      %v1212 = vmul.f32 %v945, %v945
      %v1213 = vmul.f32 %v946, %v946
      %v1214 = vmul.f32 %v947, %v947
      %v1215 = vmul.f32 %v948, %v948
      %v1216 = vmul.f32 %v949, %v949
      %v1217 = vmul.f32 %v950, %v950
      %v1218 = vmul.f32 %v951, %v951
      %v1219 = vmul.f32 %v952, %v952
      %v1220 = vmul.f32 %v953, %v953
      %v1221 = vmul.f32 %v954, %v954
      %v1222 = vmul.f32 %v955, %v955
      %v1223 = vmul.f32 %v956, %v956
      %v1224 = vmul.f32 %v957, %v957
      %v1225 = vmul.f32 %v958, %v958
      %v1226 = vmul.f32 %v959, %v959
      %v1227 = vmul.f32 %v960, %v960
      %v1228 = vmul.f32 %v961, %v961
      %v1229 = vmul.f32 %v962, %v962
      %v1230 = vmul.f32 %v963, %v963
      %v1231 = vmul.f32 %v964, %v964
      %v1232 = vmul.f32 %v965, %v965
      %v1233 = vmul.f32 %v966, %v966
      %v1234 = vmul.f32 %v967, %v967
      %v1235 = vmul.f32 %v968, %v968
      %v1236 = vmul.f32 %v969, %v969
      %v1237 = vmul.f32 %v970, %v970
      %v1238 = vmul.f32 %v971, %v971
      %v1239 = vmul.f32 %v972, %v972
      %v1240 = vmul.f32 %v973, %v973
      %v1241 = vmul.f32 %v974, %v974
      %v1242 = vmul.f32 %v975, %v975
      %v1243 = vmul.f32 %v976, %v976
      %v1244 = vmul.f32 %v977, %v977
      %v1245 = vmul.f32 %v978, %v978
      %v1246 = vmul.f32 %v979, %v979
      %v1247 = vmul.f32 %v980, %v980
      %v1248 = vmul.f32 %v981, %v981
      %v1249 = vmul.f32 %v982, %v982
      %v1250 = vmul.f32 %v983, %v983
      %v1251 = vmul.f32 %v984, %v984
      %v1252 = vmul.f32 %v985, %v985
      %v1253 = vmul.f32 %v986, %v986
      %v1254 = vmul.f32 %v987, %v987
      %v1255 = vmul.f32 %v988, %v988
      %v1256 = vmul.f32 %v989, %v989
      %v1257 = vmul.f32 %v990, %v990
      %v1258 = vmul.f32 %v991, %v991
      %v1259 = vmul.f32 %v992, %v992
      %v1260 = vmul.f32 %v993, %v993
      %v1261 = vmul.f32 %v994, %v994
      %v1262 = vmul.f32 %v995, %v995
      %v1263 = vmul.f32 %v996, %v996
      %v1264 = vmul.f32 %v997, %v997
      %v1265 = vmul.f32 %v998, %v998
      %v1266 = vmul.f32 %v999, %v999
      %v1267 = vmul.f32 %v1000, %v1000
      %v1268 = vmul.f32 %v1001, %v1001
      %v1269 = vmul.f32 %v1002, %v1002
      %v1270 = vmul.f32 %v1003, %v1003
      %v1271 = vmul.f32 %v1004, %v1004
      %v1272 = vmul.f32 %v1005, %v1005
      %v1273 = vmul.f32 %v1006, %v1006
      %v1274 = vmul.f32 %v1007, %v1007
      %v1275 = vmul.f32 %v1008, %v1008
      %v1276 = vmul.f32 %v1009, %v1009
      %v1277 = vmul.f32 %v1010, %v1010
      %v1278 = vmul.f32 %v1011, %v1011
      %v1279 = vmul.f32 %v1012, %v1012
      %v1280 = vmul.f32 %v1013, %v1013
      %v1281 = vmul.f32 %v1014, %v1014
      %v1282 = vmul.f32 %v1015, %v1015
      %v1283 = vmul.f32 %v1016, %v1016
      %v1284 = vmul.f32 %v1017, %v1017
      %v1285 = vmul.f32 %v1018, %v1018
      %v1286 = vmul.f32 %v1019, %v1019
      %v1287 = vadd.f32 %v1020, %v1021
      %v1288 = vsel %vm385, %v1022, 0.0
      %v1289 = vadd.f32 %v1287, %v1288
      %v1290 = vadd.f32 %v1289, %v1023
      %v1291 = vadd.f32 %v1290, %v1024
      %v1292 = vsel %vm385, %v1025, 0.0
      %v1293 = vadd.f32 %v1291, %v1292
      %v1294 = vadd.f32 %v1293, %v1026
      %v1295 = vadd.f32 %v1294, %v1027
      %v1296 = vsel %vm385, %v1028, 0.0
      %v1297 = vadd.f32 %v1295, %v1296
      %v1298 = vadd.f32 %v1297, %v1029
      %v1299 = vadd.f32 %v1298, %v1030
      %v1300 = vsel %vm385, %v1031, 0.0
      %v1301 = vadd.f32 %v1299, %v1300
      %v1302 = vadd.f32 %v1301, %v1032
      %v1303 = vadd.f32 %v1302, %v1033
      %v1304 = vsel %vm385, %v1034, 0.0
      %v1305 = vadd.f32 %v1303, %v1304
      %v1306 = vadd.f32 %v1305, %v1035
      %v1307 = vadd.f32 %v1306, %v1036
      %v1308 = vsel %vm385, %v1037, 0.0
      %v1309 = vadd.f32 %v1307, %v1308
      %v1310 = vadd.f32 %v1309, %v1038
      %v1311 = vadd.f32 %v1310, %v1039
      %v1312 = vsel %vm385, %v1040, 0.0
      %v1313 = vadd.f32 %v1311, %v1312
      %v1314 = vadd.f32 %v1313, %v1041
      %v1315 = vadd.f32 %v1314, %v1042
      %v1316 = vsel %vm385, %v1043, 0.0
      %v1317 = vadd.f32 %v1315, %v1316
      %v1318 = vadd.f32 %v1317, %v1044
      %v1319 = vadd.f32 %v1318, %v1045
      %v1320 = vsel %vm385, %v1046, 0.0
      %v1321 = vadd.f32 %v1319, %v1320
      %v1322 = vadd.f32 %v1321, %v1047
      %v1323 = vadd.f32 %v1322, %v1048
      %v1324 = vsel %vm385, %v1049, 0.0
      %v1325 = vadd.f32 %v1323, %v1324
      %v1326 = vadd.f32 %v1325, %v1050
      %v1327 = vadd.f32 %v1326, %v1051
      %v1328 = vsel %vm385, %v1052, 0.0
      %v1329 = vadd.f32 %v1327, %v1328
      %v1330 = vadd.f32 %v1329, %v1053
      %v1331 = vadd.f32 %v1330, %v1054
      %v1332 = vsel %vm385, %v1055, 0.0
      %v1333 = vadd.f32 %v1331, %v1332
      %v1334 = vadd.f32 %v1333, %v1056
      %v1335 = vadd.f32 %v1334, %v1057
      %v1336 = vsel %vm385, %v1058, 0.0
      %v1337 = vadd.f32 %v1335, %v1336
      %v1338 = vadd.f32 %v1337, %v1059
      %v1339 = vadd.f32 %v1338, %v1060
      %v1340 = vsel %vm385, %v1061, 0.0
      %v1341 = vadd.f32 %v1339, %v1340
      %v1342 = vadd.f32 %v1341, %v1062
      %v1343 = vadd.f32 %v1342, %v1063
      %v1344 = vsel %vm385, %v1064, 0.0
      %v1345 = vadd.f32 %v1343, %v1344
      %v1346 = vadd.f32 %v1345, %v1065
      %v1347 = vadd.f32 %v1346, %v1066
      %v1348 = vsel %vm385, %v1067, 0.0
      %v1349 = vadd.f32 %v1347, %v1348
      %v1350 = vadd.f32 %v1349, %v1068
      %v1351 = vadd.f32 %v1350, %v1069
      %v1352 = vsel %vm385, %v1070, 0.0
      %v1353 = vadd.f32 %v1351, %v1352
      %v1354 = vadd.f32 %v1353, %v1071
      %v1355 = vadd.f32 %v1354, %v1072
      %v1356 = vsel %vm385, %v1073, 0.0
      %v1357 = vadd.f32 %v1355, %v1356
      %v1358 = vadd.f32 %v1357, %v1074
      %v1359 = vadd.f32 %v1358, %v1075
      %v1360 = vsel %vm385, %v1076, 0.0
      %v1361 = vadd.f32 %v1359, %v1360
      %v1362 = vadd.f32 %v1361, %v1077
      %v1363 = vadd.f32 %v1362, %v1078
      %v1364 = vsel %vm385, %v1079, 0.0
      %v1365 = vadd.f32 %v1363, %v1364
      %v1366 = vadd.f32 %v1365, %v1080
      %v1367 = vadd.f32 %v1366, %v1081
      %v1368 = vsel %vm385, %v1082, 0.0
      %v1369 = vadd.f32 %v1367, %v1368
      %v1370 = vadd.f32 %v1369, %v1083
      %v1371 = vadd.f32 %v1370, %v1084
      %v1372 = vsel %vm385, %v1085, 0.0
      %v1373 = vadd.f32 %v1371, %v1372
      %v1374 = vadd.f32 %v1373, %v1086
      %v1375 = vadd.f32 %v1374, %v1087
      %v1376 = vsel %vm385, %v1088, 0.0
      %v1377 = vadd.f32 %v1375, %v1376
      %v1378 = vadd.f32 %v1377, %v1089
      %v1379 = vadd.f32 %v1378, %v1090
      %v1380 = vsel %vm385, %v1091, 0.0
      %v1381 = vadd.f32 %v1379, %v1380
      %v1382 = vadd.f32 %v1381, %v1092
      %v1383 = vadd.f32 %v1382, %v1093
      %v1384 = vsel %vm385, %v1094, 0.0
      %v1385 = vadd.f32 %v1383, %v1384
      %v1386 = vadd.f32 %v1385, %v1095
      %v1387 = vadd.f32 %v1386, %v1096
      %v1388 = vsel %vm385, %v1097, 0.0
      %v1389 = vadd.f32 %v1387, %v1388
      %v1390 = vadd.f32 %v1389, %v1098
      %v1391 = vadd.f32 %v1390, %v1099
      %v1392 = vsel %vm385, %v1100, 0.0
      %v1393 = vadd.f32 %v1391, %v1392
      %v1394 = vadd.f32 %v1393, %v1101
      %v1395 = vadd.f32 %v1394, %v1102
      %v1396 = vsel %vm385, %v1103, 0.0
      %v1397 = vadd.f32 %v1395, %v1396
      %v1398 = vadd.f32 %v1397, %v1104
      %v1399 = vadd.f32 %v1398, %v1105
      %v1400 = vsel %vm385, %v1106, 0.0
      %v1401 = vadd.f32 %v1399, %v1400
      %v1402 = vadd.f32 %v1401, %v1107
      %v1403 = vadd.f32 %v1402, %v1108
      %v1404 = vsel %vm385, %v1109, 0.0
      %v1405 = vadd.f32 %v1403, %v1404
      %v1406 = vadd.f32 %v1405, %v1110
      %v1407 = vadd.f32 %v1406, %v1111
      %v1408 = vsel %vm385, %v1112, 0.0
      %v1409 = vadd.f32 %v1407, %v1408
      %v1410 = vadd.f32 %v1409, %v1113
      %v1411 = vadd.f32 %v1410, %v1114
      %v1412 = vsel %vm385, %v1115, 0.0
      %v1413 = vadd.f32 %v1411, %v1412
      %v1414 = vadd.f32 %v1413, %v1116
      %v1415 = vadd.f32 %v1414, %v1117
      %v1416 = vsel %vm385, %v1118, 0.0
      %v1417 = vadd.f32 %v1415, %v1416
      %v1418 = vadd.f32 %v1417, %v1119
      %v1419 = vadd.f32 %v1418, %v1120
      %v1420 = vsel %vm385, %v1121, 0.0
      %v1421 = vadd.f32 %v1419, %v1420
      %v1422 = vadd.f32 %v1421, %v1122
      %v1423 = vadd.f32 %v1422, %v1123
      %v1424 = vsel %vm385, %v1124, 0.0
      %v1425 = vadd.f32 %v1423, %v1424
      %v1426 = vadd.f32 %v1425, %v1125
      %v1427 = vadd.f32 %v1426, %v1126
      %v1428 = vsel %vm385, %v1127, 0.0
      %v1429 = vadd.f32 %v1427, %v1428
      %v1430 = vadd.f32 %v1429, %v1128
      %v1431 = vadd.f32 %v1430, %v1129
      %v1432 = vsel %vm385, %v1130, 0.0
      %v1433 = vadd.f32 %v1431, %v1432
      %v1434 = vadd.f32 %v1433, %v1131
      %v1435 = vadd.f32 %v1434, %v1132
      %v1436 = vsel %vm385, %v1133, 0.0
      %v1437 = vadd.f32 %v1435, %v1436
      %v1438 = vadd.f32 %v1437, %v1134
      %v1439 = vadd.f32 %v1438, %v1135
      %v1440 = vsel %vm385, %v1136, 0.0
      %v1441 = vadd.f32 %v1439, %v1440
      %v1442 = vadd.f32 %v1441, %v1137
      %v1443 = vadd.f32 %v1442, %v1138
      %v1444 = vsel %vm385, %v1139, 0.0
      %v1445 = vadd.f32 %v1443, %v1444
      %v1446 = vadd.f32 %v1445, %v1140
      %v1447 = vadd.f32 %v1446, %v1141
      %v1448 = vsel %vm385, %v1142, 0.0
      %v1449 = vadd.f32 %v1447, %v1448
      %v1450 = vadd.f32 %v1449, %v1143
      %v1451 = vadd.f32 %v1450, %v1144
      %v1452 = vsel %vm385, %v1145, 0.0
      %v1453 = vadd.f32 %v1451, %v1452
      %v1454 = vadd.f32 %v1453, %v1146
      %v1455 = vadd.f32 %v1454, %v1147
      %v1456 = vsel %vm385, %v1148, 0.0
      %v1457 = vadd.f32 %v1455, %v1456
      %v1458 = vadd.f32 %v1457, %v1149
      %v1459 = vadd.f32 %v1458, %v1150
      %v1460 = vsel %vm385, %v1151, 0.0
      %v1461 = vadd.f32 %v1459, %v1460
      %v1462 = vadd.f32 %v1461, %v1152
      %v1463 = vadd.f32 %v1462, %v1153
      %v1464 = vsel %vm385, %v1154, 0.0
      %v1465 = vadd.f32 %v1463, %v1464
      %v1466 = vadd.f32 %v1465, %v1155
      %v1467 = vadd.f32 %v1466, %v1156
      %v1468 = vsel %vm385, %v1157, 0.0
      %v1469 = vadd.f32 %v1467, %v1468
      %v1470 = vadd.f32 %v1469, %v1158
      %v1471 = vadd.f32 %v1470, %v1159
      %v1472 = vsel %vm385, %v1160, 0.0
      %v1473 = vadd.f32 %v1471, %v1472
      %v1474 = vadd.f32 %v1473, %v1161
      %v1475 = vadd.f32 %v1474, %v1162
      %v1476 = vsel %vm385, %v1163, 0.0
      %v1477 = vadd.f32 %v1475, %v1476
      %v1478 = vadd.f32 %v1477, %v1164
      %v1479 = vadd.f32 %v1478, %v1165
      %v1480 = vsel %vm385, %v1166, 0.0
      %v1481 = vadd.f32 %v1479, %v1480
      %v1482 = vadd.f32 %v1481, %v1167
      %v1483 = vadd.f32 %v1482, %v1168
      %v1484 = vsel %vm385, %v1169, 0.0
      %v1485 = vadd.f32 %v1483, %v1484
      %v1486 = vadd.f32 %v1485, %v1170
      %v1487 = vadd.f32 %v1486, %v1171
      %v1488 = vsel %vm385, %v1172, 0.0
      %v1489 = vadd.f32 %v1487, %v1488
      %v1490 = vadd.f32 %v1489, %v1173
      %v1491 = vadd.f32 %v1490, %v1174
      %v1492 = vsel %vm385, %v1175, 0.0
      %v1493 = vadd.f32 %v1491, %v1492
      %v1494 = vadd.f32 %v1493, %v1176
      %v1495 = vadd.f32 %v1494, %v1177
      %v1496 = vsel %vm385, %v1178, 0.0
      %v1497 = vadd.f32 %v1495, %v1496
      %v1498 = vadd.f32 %v1497, %v1179
      %v1499 = vadd.f32 %v1498, %v1180
      %v1500 = vsel %vm385, %v1181, 0.0
      %v1501 = vadd.f32 %v1499, %v1500
      %v1502 = vadd.f32 %v1501, %v1182
      %v1503 = vadd.f32 %v1502, %v1183
      %v1504 = vsel %vm385, %v1184, 0.0
      %v1505 = vadd.f32 %v1503, %v1504
      %v1506 = vadd.f32 %v1505, %v1185
      %v1507 = vadd.f32 %v1506, %v1186
      %v1508 = vsel %vm385, %v1187, 0.0
      %v1509 = vadd.f32 %v1507, %v1508
      %v1510 = vadd.f32 %v1509, %v1188
      %v1511 = vadd.f32 %v1510, %v1189
      %v1512 = vsel %vm385, %v1190, 0.0
      %v1513 = vadd.f32 %v1511, %v1512
      %v1514 = vadd.f32 %v1513, %v1191
      %v1515 = vadd.f32 %v1514, %v1192
      %v1516 = vsel %vm385, %v1193, 0.0
      %v1517 = vadd.f32 %v1515, %v1516
      %v1518 = vadd.f32 %v1517, %v1194
      %v1519 = vadd.f32 %v1518, %v1195
      %v1520 = vsel %vm385, %v1196, 0.0
      %v1521 = vadd.f32 %v1519, %v1520
      %v1522 = vadd.f32 %v1521, %v1197
      %v1523 = vadd.f32 %v1522, %v1198
      %v1524 = vsel %vm385, %v1199, 0.0
      %v1525 = vadd.f32 %v1523, %v1524
      %v1526 = vadd.f32 %v1525, %v1200
      %v1527 = vadd.f32 %v1526, %v1201
      %v1528 = vsel %vm385, %v1202, 0.0
      %v1529 = vadd.f32 %v1527, %v1528
      %v1530 = vadd.f32 %v1529, %v1203
      %v1531 = vadd.f32 %v1530, %v1204
      %v1532 = vsel %vm385, %v1205, 0.0
      %v1533 = vadd.f32 %v1531, %v1532
      %v1534 = vadd.f32 %v1533, %v1206
      %v1535 = vadd.f32 %v1534, %v1207
      %v1536 = vsel %vm385, %v1208, 0.0
      %v1537 = vadd.f32 %v1535, %v1536
      %v1538 = vadd.f32 %v1537, %v1209
      %v1539 = vadd.f32 %v1538, %v1210
      %v1540 = vsel %vm385, %v1211, 0.0
      %v1541 = vadd.f32 %v1539, %v1540
      %v1542 = vadd.f32 %v1541, %v1212
      %v1543 = vadd.f32 %v1542, %v1213
      %v1544 = vsel %vm385, %v1214, 0.0
      %v1545 = vadd.f32 %v1543, %v1544
      %v1546 = vadd.f32 %v1545, %v1215
      %v1547 = vadd.f32 %v1546, %v1216
      %v1548 = vsel %vm385, %v1217, 0.0
      %v1549 = vadd.f32 %v1547, %v1548
      %v1550 = vadd.f32 %v1549, %v1218
      %v1551 = vadd.f32 %v1550, %v1219
      %v1552 = vsel %vm385, %v1220, 0.0
      %v1553 = vadd.f32 %v1551, %v1552
      %v1554 = vadd.f32 %v1553, %v1221
      %v1555 = vadd.f32 %v1554, %v1222
      %v1556 = vsel %vm385, %v1223, 0.0
      %v1557 = vadd.f32 %v1555, %v1556
      %v1558 = vadd.f32 %v1557, %v1224
      %v1559 = vadd.f32 %v1558, %v1225
      %v1560 = vsel %vm385, %v1226, 0.0
      %v1561 = vadd.f32 %v1559, %v1560
      %v1562 = vadd.f32 %v1561, %v1227
      %v1563 = vadd.f32 %v1562, %v1228
      %v1564 = vsel %vm385, %v1229, 0.0
      %v1565 = vadd.f32 %v1563, %v1564
      %v1566 = vadd.f32 %v1565, %v1230
      %v1567 = vadd.f32 %v1566, %v1231
      %v1568 = vsel %vm385, %v1232, 0.0
      %v1569 = vadd.f32 %v1567, %v1568
      %v1570 = vadd.f32 %v1569, %v1233
      %v1571 = vadd.f32 %v1570, %v1234
      %v1572 = vsel %vm385, %v1235, 0.0
      %v1573 = vadd.f32 %v1571, %v1572
      %v1574 = vadd.f32 %v1573, %v1236
      %v1575 = vadd.f32 %v1574, %v1237
      %v1576 = vsel %vm385, %v1238, 0.0
      %v1577 = vadd.f32 %v1575, %v1576
      %v1578 = vadd.f32 %v1577, %v1239
      %v1579 = vadd.f32 %v1578, %v1240
      %v1580 = vsel %vm385, %v1241, 0.0
      %v1581 = vadd.f32 %v1579, %v1580
      %v1582 = vadd.f32 %v1581, %v1242
      %v1583 = vadd.f32 %v1582, %v1243
      %v1584 = vsel %vm385, %v1244, 0.0
      %v1585 = vadd.f32 %v1583, %v1584
      %v1586 = vadd.f32 %v1585, %v1245
      %v1587 = vadd.f32 %v1586, %v1246
      %v1588 = vsel %vm385, %v1247, 0.0
      %v1589 = vadd.f32 %v1587, %v1588
      %v1590 = vadd.f32 %v1589, %v1248
      %v1591 = vadd.f32 %v1590, %v1249
      %v1592 = vsel %vm385, %v1250, 0.0
      %v1593 = vadd.f32 %v1591, %v1592
      %v1594 = vadd.f32 %v1593, %v1251
      %v1595 = vadd.f32 %v1594, %v1252
      %v1596 = vsel %vm385, %v1253, 0.0
      %v1597 = vadd.f32 %v1595, %v1596
      %v1598 = vadd.f32 %v1597, %v1254
      %v1599 = vadd.f32 %v1598, %v1255
      %v1600 = vsel %vm385, %v1256, 0.0
      %v1601 = vadd.f32 %v1599, %v1600
      %v1602 = vadd.f32 %v1601, %v1257
      %v1603 = vadd.f32 %v1602, %v1258
      %v1604 = vsel %vm385, %v1259, 0.0
      %v1605 = vadd.f32 %v1603, %v1604
      %v1606 = vadd.f32 %v1605, %v1260
      %v1607 = vadd.f32 %v1606, %v1261
      %v1608 = vsel %vm385, %v1262, 0.0
      %v1609 = vadd.f32 %v1607, %v1608
      %v1610 = vadd.f32 %v1609, %v1263
      %v1611 = vadd.f32 %v1610, %v1264
      %v1612 = vsel %vm385, %v1265, 0.0
      %v1613 = vadd.f32 %v1611, %v1612
      %v1614 = vadd.f32 %v1613, %v1266
      %v1615 = vadd.f32 %v1614, %v1267
      %v1616 = vsel %vm385, %v1268, 0.0
      %v1617 = vadd.f32 %v1615, %v1616
      %v1618 = vadd.f32 %v1617, %v1269
      %v1619 = vadd.f32 %v1618, %v1270
      %v1620 = vsel %vm385, %v1271, 0.0
      %v1621 = vadd.f32 %v1619, %v1620
      %v1622 = vadd.f32 %v1621, %v1272
      %v1623 = vadd.f32 %v1622, %v1273
      %v1624 = vsel %vm385, %v1274, 0.0
      %v1625 = vadd.f32 %v1623, %v1624
      %v1626 = vadd.f32 %v1625, %v1275
      %v1627 = vadd.f32 %v1626, %v1276
      %v1628 = vsel %vm385, %v1277, 0.0
      %v1629 = vadd.f32 %v1627, %v1628
      %v1630 = vadd.f32 %v1629, %v1278
      %v1631 = vadd.f32 %v1630, %v1279
      %v1632 = vsel %vm385, %v1280, 0.0
      %v1633 = vadd.f32 %v1631, %v1632
      %v1634 = vadd.f32 %v1633, %v1281
      %v1635 = vadd.f32 %v1634, %v1282
      %v1636 = vsel %vm385, %v1283, 0.0
      %v1637 = vadd.f32 %v1635, %v1636
      %v1638 = vadd.f32 %v1637, %v1284
      %v1639 = vadd.f32 %v1638, %v1285
      %v1640 = vsel %vm385, %v1286, 0.0
      %v1641 = vadd.f32 %v1639, %v1640
      %1642 = vadd.xlane.f32.xlu0 %v1641
      %v1643 = vpop.xlane.xlu0 %1642
      %v1644 = vrot.slane %v1643, 4
      %v1645 = vadd.f32 %v1643, %v1644
      %v1646 = vrot.slane %v1645, 2
      %v1647 = vadd.f32 %v1645, %v1646
      %v1648 = vrot.slane %v1647, 1
      %v1649 = vadd.f32 %v1647, %v1648
      %s1650 = vtos %v1649
      %v1651 = vrcp.pop 217872.0
      %s1652 = vtos %v1651
      %s1653 = smul.f32 %s1650, %s1652
      %s1654 = sadd.f32 %s1653, 1e-05
      %v1655 = vstv %s1654
      %v1656 = vrsqrt.pop %v1655
      %s1657 = vtos %v1656
      %v1658 = vstv %s1657
      %v1659 = vmul.f32 %v753, %v1658
      %v1660 = vmul.f32 %v754, %v1658
      %v1661 = vmul.f32 %v755, %v1658
      %v1662 = vmul.f32 %v756, %v1658
      %v1663 = vmul.f32 %v757, %v1658
      %v1664 = vmul.f32 %v758, %v1658
      %v1665 = vmul.f32 %v759, %v1658
      %v1666 = vmul.f32 %v760, %v1658
      %v1667 = vmul.f32 %v761, %v1658
      %v1668 = vmul.f32 %v762, %v1658
      %v1669 = vmul.f32 %v763, %v1658
      %v1670 = vmul.f32 %v764, %v1658
      %v1671 = vmul.f32 %v765, %v1658
      %v1672 = vmul.f32 %v766, %v1658
      %v1673 = vmul.f32 %v767, %v1658
      %v1674 = vmul.f32 %v768, %v1658
      %v1675 = vmul.f32 %v769, %v1658
      %v1676 = vmul.f32 %v770, %v1658
      %v1677 = vmul.f32 %v771, %v1658
      %v1678 = vmul.f32 %v772, %v1658
      %v1679 = vmul.f32 %v773, %v1658
      %v1680 = vmul.f32 %v774, %v1658
      %v1681 = vmul.f32 %v775, %v1658
      %v1682 = vmul.f32 %v776, %v1658
      %v1683 = vmul.f32 %v777, %v1658
      %v1684 = vmul.f32 %v778, %v1658
      %v1685 = vmul.f32 %v779, %v1658
      %v1686 = vmul.f32 %v780, %v1658
      %v1687 = vmul.f32 %v781, %v1658
      %v1688 = vmul.f32 %v782, %v1658
      %v1689 = vmul.f32 %v783, %v1658
      %v1690 = vmul.f32 %v784, %v1658
      %v1691 = vmul.f32 %v785, %v1658
      %v1692 = vmul.f32 %v786, %v1658
      %v1693 = vmul.f32 %v787, %v1658
      %v1694 = vmul.f32 %v788, %v1658
      %v1695 = vmul.f32 %v789, %v1658
      %v1696 = vmul.f32 %v790, %v1658
      %v1697 = vmul.f32 %v791, %v1658
      %v1698 = vmul.f32 %v792, %v1658
      %v1699 = vmul.f32 %v793, %v1658
      %v1700 = vmul.f32 %v794, %v1658
      %v1701 = vmul.f32 %v795, %v1658
      %v1702 = vmul.f32 %v796, %v1658
      %v1703 = vmul.f32 %v797, %v1658
      %v1704 = vmul.f32 %v798, %v1658
      %v1705 = vmul.f32 %v799, %v1658
      %v1706 = vmul.f32 %v800, %v1658
      %v1707 = vmul.f32 %v801, %v1658
      %v1708 = vmul.f32 %v802, %v1658
      %v1709 = vmul.f32 %v803, %v1658
      %v1710 = vmul.f32 %v804, %v1658
      %v1711 = vmul.f32 %v805, %v1658
      %v1712 = vmul.f32 %v806, %v1658
      %v1713 = vmul.f32 %v807, %v1658
      %v1714 = vmul.f32 %v808, %v1658
      %v1715 = vmul.f32 %v809, %v1658
      %v1716 = vmul.f32 %v810, %v1658
      %v1717 = vmul.f32 %v811, %v1658
      %v1718 = vmul.f32 %v812, %v1658
      %v1719 = vmul.f32 %v813, %v1658
      %v1720 = vmul.f32 %v814, %v1658
      %v1721 = vmul.f32 %v815, %v1658
      %v1722 = vmul.f32 %v816, %v1658
      %v1723 = vmul.f32 %v817, %v1658
      %v1724 = vmul.f32 %v818, %v1658
      %v1725 = vmul.f32 %v819, %v1658
      %v1726 = vmul.f32 %v820, %v1658
      %v1727 = vmul.f32 %v821, %v1658
      %v1728 = vmul.f32 %v822, %v1658
      %v1729 = vmul.f32 %v823, %v1658
      %v1730 = vmul.f32 %v824, %v1658
      %v1731 = vmul.f32 %v825, %v1658
      %v1732 = vmul.f32 %v826, %v1658
      %v1733 = vmul.f32 %v827, %v1658
      %v1734 = vmul.f32 %v828, %v1658
      %v1735 = vmul.f32 %v829, %v1658
      %v1736 = vmul.f32 %v830, %v1658
      %v1737 = vmul.f32 %v831, %v1658
      %v1738 = vmul.f32 %v832, %v1658
      %v1739 = vmul.f32 %v833, %v1658
      %v1740 = vmul.f32 %v834, %v1658
      %v1741 = vmul.f32 %v835, %v1658
      %v1742 = vmul.f32 %v836, %v1658
      %v1743 = vmul.f32 %v837, %v1658
      %v1744 = vmul.f32 %v838, %v1658
      %v1745 = vmul.f32 %v839, %v1658
      %v1746 = vmul.f32 %v840, %v1658
      %v1747 = vmul.f32 %v841, %v1658
      %v1748 = vmul.f32 %v842, %v1658
      %v1749 = vmul.f32 %v843, %v1658
      %v1750 = vmul.f32 %v844, %v1658
      %v1751 = vmul.f32 %v845, %v1658
      %v1752 = vmul.f32 %v846, %v1658
      %v1753 = vmul.f32 %v847, %v1658
      %v1754 = vmul.f32 %v848, %v1658
      %v1755 = vmul.f32 %v849, %v1658
      %v1756 = vmul.f32 %v850, %v1658
      %v1757 = vmul.f32 %v851, %v1658
      %v1758 = vmul.f32 %v852, %v1658
      %v1759 = vmul.f32 %v853, %v1658
      %v1760 = vmul.f32 %v854, %v1658
      %v1761 = vmul.f32 %v855, %v1658
      %v1762 = vmul.f32 %v856, %v1658
      %v1763 = vmul.f32 %v857, %v1658
      %v1764 = vmul.f32 %v858, %v1658
      %v1765 = vmul.f32 %v859, %v1658
      %v1766 = vmul.f32 %v860, %v1658
      %v1767 = vmul.f32 %v861, %v1658
      %v1768 = vmul.f32 %v862, %v1658
      %v1769 = vmul.f32 %v863, %v1658
      %v1770 = vmul.f32 %v864, %v1658
      %v1771 = vmul.f32 %v865, %v1658
      %v1772 = vmul.f32 %v866, %v1658
      %v1773 = vmul.f32 %v867, %v1658
      %v1774 = vmul.f32 %v868, %v1658
      %v1775 = vmul.f32 %v869, %v1658
      %v1776 = vmul.f32 %v870, %v1658
      %v1777 = vmul.f32 %v871, %v1658
      %v1778 = vmul.f32 %v872, %v1658
      %v1779 = vmul.f32 %v873, %v1658
      %v1780 = vmul.f32 %v874, %v1658
      %v1781 = vmul.f32 %v875, %v1658
      %v1782 = vmul.f32 %v876, %v1658
      %v1783 = vmul.f32 %v877, %v1658
      %v1784 = vmul.f32 %v878, %v1658
      %v1785 = vmul.f32 %v879, %v1658
      %v1786 = vmul.f32 %v880, %v1658
      %v1787 = vmul.f32 %v881, %v1658
      %v1788 = vmul.f32 %v882, %v1658
      %v1789 = vmul.f32 %v883, %v1658
      %v1790 = vmul.f32 %v884, %v1658
      %v1791 = vmul.f32 %v885, %v1658
      %v1792 = vmul.f32 %v886, %v1658
      %v1793 = vmul.f32 %v887, %v1658
      %v1794 = vmul.f32 %v888, %v1658
      %v1795 = vmul.f32 %v889, %v1658
      %v1796 = vmul.f32 %v890, %v1658
      %v1797 = vmul.f32 %v891, %v1658
      %v1798 = vmul.f32 %v892, %v1658
      %v1799 = vmul.f32 %v893, %v1658
      %v1800 = vmul.f32 %v894, %v1658
      %v1801 = vmul.f32 %v895, %v1658
      %v1802 = vmul.f32 %v896, %v1658
      %v1803 = vmul.f32 %v897, %v1658
      %v1804 = vmul.f32 %v898, %v1658
      %v1805 = vmul.f32 %v899, %v1658
      %v1806 = vmul.f32 %v900, %v1658
      %v1807 = vmul.f32 %v901, %v1658
      %v1808 = vmul.f32 %v902, %v1658
      %v1809 = vmul.f32 %v903, %v1658
      %v1810 = vmul.f32 %v904, %v1658
      %v1811 = vmul.f32 %v905, %v1658
      %v1812 = vmul.f32 %v906, %v1658
      %v1813 = vmul.f32 %v907, %v1658
      %v1814 = vmul.f32 %v908, %v1658
      %v1815 = vmul.f32 %v909, %v1658
      %v1816 = vmul.f32 %v910, %v1658
      %v1817 = vmul.f32 %v911, %v1658
      %v1818 = vmul.f32 %v912, %v1658
      %v1819 = vmul.f32 %v913, %v1658
      %v1820 = vmul.f32 %v914, %v1658
      %v1821 = vmul.f32 %v915, %v1658
      %v1822 = vmul.f32 %v916, %v1658
      %v1823 = vmul.f32 %v917, %v1658
      %v1824 = vmul.f32 %v918, %v1658
      %v1825 = vmul.f32 %v919, %v1658
      %v1826 = vmul.f32 %v920, %v1658
      %v1827 = vmul.f32 %v921, %v1658
      %v1828 = vmul.f32 %v922, %v1658
      %v1829 = vmul.f32 %v923, %v1658
      %v1830 = vmul.f32 %v924, %v1658
      %v1831 = vmul.f32 %v925, %v1658
      %v1832 = vmul.f32 %v926, %v1658
      %v1833 = vmul.f32 %v927, %v1658
      %v1834 = vmul.f32 %v928, %v1658
      %v1835 = vmul.f32 %v929, %v1658
      %v1836 = vmul.f32 %v930, %v1658
      %v1837 = vmul.f32 %v931, %v1658
      %v1838 = vmul.f32 %v932, %v1658
      %v1839 = vmul.f32 %v933, %v1658
      %v1840 = vmul.f32 %v934, %v1658
      %v1841 = vmul.f32 %v935, %v1658
      %v1842 = vmul.f32 %v936, %v1658
      %v1843 = vmul.f32 %v937, %v1658
      %v1844 = vmul.f32 %v938, %v1658
      %v1845 = vmul.f32 %v939, %v1658
      %v1846 = vmul.f32 %v940, %v1658
      %v1847 = vmul.f32 %v941, %v1658
      %v1848 = vmul.f32 %v942, %v1658
      %v1849 = vmul.f32 %v943, %v1658
      %v1850 = vmul.f32 %v944, %v1658
      %v1851 = vmul.f32 %v945, %v1658
      %v1852 = vmul.f32 %v946, %v1658
      %v1853 = vmul.f32 %v947, %v1658
      %v1854 = vmul.f32 %v948, %v1658
      %v1855 = vmul.f32 %v949, %v1658
      %v1856 = vmul.f32 %v950, %v1658
      %v1857 = vmul.f32 %v951, %v1658
      %v1858 = vmul.f32 %v952, %v1658
      %v1859 = vmul.f32 %v953, %v1658
      %v1860 = vmul.f32 %v954, %v1658
      %v1861 = vmul.f32 %v955, %v1658
      %v1862 = vmul.f32 %v956, %v1658
      %v1863 = vmul.f32 %v957, %v1658
      %v1864 = vmul.f32 %v958, %v1658
      %v1865 = vmul.f32 %v959, %v1658
      %v1866 = vmul.f32 %v960, %v1658
      %v1867 = vmul.f32 %v961, %v1658
      %v1868 = vmul.f32 %v962, %v1658
      %v1869 = vmul.f32 %v963, %v1658
      %v1870 = vmul.f32 %v964, %v1658
      %v1871 = vmul.f32 %v965, %v1658
      %v1872 = vmul.f32 %v966, %v1658
      %v1873 = vmul.f32 %v967, %v1658
      %v1874 = vmul.f32 %v968, %v1658
      %v1875 = vmul.f32 %v969, %v1658
      %v1876 = vmul.f32 %v970, %v1658
      %v1877 = vmul.f32 %v971, %v1658
      %v1878 = vmul.f32 %v972, %v1658
      %v1879 = vmul.f32 %v973, %v1658
      %v1880 = vmul.f32 %v974, %v1658
      %v1881 = vmul.f32 %v975, %v1658
      %v1882 = vmul.f32 %v976, %v1658
      %v1883 = vmul.f32 %v977, %v1658
      %v1884 = vmul.f32 %v978, %v1658
      %v1885 = vmul.f32 %v979, %v1658
      %v1886 = vmul.f32 %v980, %v1658
      %v1887 = vmul.f32 %v981, %v1658
      %v1888 = vmul.f32 %v982, %v1658
      %v1889 = vmul.f32 %v983, %v1658
      %v1890 = vmul.f32 %v984, %v1658
      %v1891 = vmul.f32 %v985, %v1658
      %v1892 = vmul.f32 %v986, %v1658
      %v1893 = vmul.f32 %v987, %v1658
      %v1894 = vmul.f32 %v988, %v1658
      %v1895 = vmul.f32 %v989, %v1658
      %v1896 = vmul.f32 %v990, %v1658
      %v1897 = vmul.f32 %v991, %v1658
      %v1898 = vmul.f32 %v992, %v1658
      %v1899 = vmul.f32 %v993, %v1658
      %v1900 = vmul.f32 %v994, %v1658
      %v1901 = vmul.f32 %v995, %v1658
      %v1902 = vmul.f32 %v996, %v1658
      %v1903 = vmul.f32 %v997, %v1658
      %v1904 = vmul.f32 %v998, %v1658
      %v1905 = vmul.f32 %v999, %v1658
      %v1906 = vmul.f32 %v1000, %v1658
      %v1907 = vmul.f32 %v1001, %v1658
      %v1908 = vmul.f32 %v1002, %v1658
      %v1909 = vmul.f32 %v1003, %v1658
      %v1910 = vmul.f32 %v1004, %v1658
      %v1911 = vmul.f32 %v1005, %v1658
      %v1912 = vmul.f32 %v1006, %v1658
      %v1913 = vmul.f32 %v1007, %v1658
      %v1914 = vmul.f32 %v1008, %v1658
      %v1915 = vmul.f32 %v1009, %v1658
      %v1916 = vmul.f32 %v1010, %v1658
      %v1917 = vmul.f32 %v1011, %v1658
      %v1918 = vmul.f32 %v1012, %v1658
      %v1919 = vmul.f32 %v1013, %v1658
      %v1920 = vmul.f32 %v1014, %v1658
      %v1921 = vmul.f32 %v1015, %v1658
      %v1922 = vmul.f32 %v1016, %v1658
      %v1923 = vmul.f32 %v1017, %v1658
      %v1924 = vmul.f32 %v1018, %v1658
      %v1925 = vmul.f32 %v1019, %v1658
      %v1926 = vpack.c.bf16 %v1662, %v1659
      %v1927 = vpack.c.bf16 %v1663, %v1660
      %v1928 = vpack.c.bf16 %v1664, %v1661
      %v1929 = vpack.c.bf16 %v1668, %v1665
      %v1930 = vpack.c.bf16 %v1669, %v1666
      %v1931 = vpack.c.bf16 %v1670, %v1667
      %v1932 = vpack.c.bf16 %v1674, %v1671
      %v1933 = vpack.c.bf16 %v1675, %v1672
      %v1934 = vpack.c.bf16 %v1676, %v1673
      %v1935 = vpack.c.bf16 %v1680, %v1677
      %v1936 = vpack.c.bf16 %v1681, %v1678
      %v1937 = vpack.c.bf16 %v1682, %v1679
      %v1938 = vpack.c.bf16 %v1686, %v1683
      %v1939 = vpack.c.bf16 %v1687, %v1684
      %v1940 = vpack.c.bf16 %v1688, %v1685
      %v1941 = vpack.c.bf16 %v1692, %v1689
      %v1942 = vpack.c.bf16 %v1693, %v1690
      %v1943 = vpack.c.bf16 %v1694, %v1691
      %v1944 = vpack.c.bf16 %v1698, %v1695
      %v1945 = vpack.c.bf16 %v1699, %v1696
      %v1946 = vpack.c.bf16 %v1700, %v1697
      %v1947 = vpack.c.bf16 %v1704, %v1701
      %v1948 = vpack.c.bf16 %v1705, %v1702
      %v1949 = vpack.c.bf16 %v1706, %v1703
      %v1950 = vpack.c.bf16 %v1710, %v1707
      %v1951 = vpack.c.bf16 %v1711, %v1708
      %v1952 = vpack.c.bf16 %v1712, %v1709
      %v1953 = vpack.c.bf16 %v1716, %v1713
      %v1954 = vpack.c.bf16 %v1717, %v1714
      %v1955 = vpack.c.bf16 %v1718, %v1715
      %v1956 = vpack.c.bf16 %v1722, %v1719
      %v1957 = vpack.c.bf16 %v1723, %v1720
      %v1958 = vpack.c.bf16 %v1724, %v1721
      %v1959 = vpack.c.bf16 %v1728, %v1725
      %v1960 = vpack.c.bf16 %v1729, %v1726
      %v1961 = vpack.c.bf16 %v1730, %v1727
      %v1962 = vpack.c.bf16 %v1734, %v1731
      %v1963 = vpack.c.bf16 %v1735, %v1732
      %v1964 = vpack.c.bf16 %v1736, %v1733
      %v1965 = vpack.c.bf16 %v1740, %v1737
      %v1966 = vpack.c.bf16 %v1741, %v1738
      %v1967 = vpack.c.bf16 %v1742, %v1739
      %v1968 = vpack.c.bf16 %v1746, %v1743
      %v1969 = vpack.c.bf16 %v1747, %v1744
      %v1970 = vpack.c.bf16 %v1748, %v1745
      %v1971 = vpack.c.bf16 %v1752, %v1749
      %v1972 = vpack.c.bf16 %v1753, %v1750
      %v1973 = vpack.c.bf16 %v1754, %v1751
      %v1974 = vpack.c.bf16 %v1758, %v1755
      %v1975 = vpack.c.bf16 %v1759, %v1756
      %v1976 = vpack.c.bf16 %v1760, %v1757
      %v1977 = vpack.c.bf16 %v1764, %v1761
      %v1978 = vpack.c.bf16 %v1765, %v1762
      %v1979 = vpack.c.bf16 %v1766, %v1763
      %v1980 = vpack.c.bf16 %v1770, %v1767
      %v1981 = vpack.c.bf16 %v1771, %v1768
      %v1982 = vpack.c.bf16 %v1772, %v1769
      %v1983 = vpack.c.bf16 %v1776, %v1773
      %v1984 = vpack.c.bf16 %v1777, %v1774
      %v1985 = vpack.c.bf16 %v1778, %v1775
      %v1986 = vpack.c.bf16 %v1782, %v1779
      %v1987 = vpack.c.bf16 %v1783, %v1780
      %v1988 = vpack.c.bf16 %v1784, %v1781
      %v1989 = vpack.c.bf16 %v1788, %v1785
      %v1990 = vpack.c.bf16 %v1789, %v1786
      %v1991 = vpack.c.bf16 %v1790, %v1787
      %v1992 = vpack.c.bf16 %v1794, %v1791
      %v1993 = vpack.c.bf16 %v1795, %v1792
      %v1994 = vpack.c.bf16 %v1796, %v1793
      %v1995 = vpack.c.bf16 %v1800, %v1797
      %v1996 = vpack.c.bf16 %v1801, %v1798
      %v1997 = vpack.c.bf16 %v1802, %v1799
      %v1998 = vpack.c.bf16 %v1806, %v1803
      %v1999 = vpack.c.bf16 %v1807, %v1804
      %v2000 = vpack.c.bf16 %v1808, %v1805
      %v2001 = vpack.c.bf16 %v1812, %v1809
      %v2002 = vpack.c.bf16 %v1813, %v1810
      %v2003 = vpack.c.bf16 %v1814, %v1811
      %v2004 = vpack.c.bf16 %v1818, %v1815
      %v2005 = vpack.c.bf16 %v1819, %v1816
      %v2006 = vpack.c.bf16 %v1820, %v1817
      %v2007 = vpack.c.bf16 %v1824, %v1821
      %v2008 = vpack.c.bf16 %v1825, %v1822
      %v2009 = vpack.c.bf16 %v1826, %v1823
      %v2010 = vpack.c.bf16 %v1830, %v1827
      %v2011 = vpack.c.bf16 %v1831, %v1828
      %v2012 = vpack.c.bf16 %v1832, %v1829
      %v2013 = vpack.c.bf16 %v1836, %v1833
      %v2014 = vpack.c.bf16 %v1837, %v1834
      %v2015 = vpack.c.bf16 %v1838, %v1835
      %v2016 = vpack.c.bf16 %v1842, %v1839
      %v2017 = vpack.c.bf16 %v1843, %v1840
      %v2018 = vpack.c.bf16 %v1844, %v1841
      %v2019 = vpack.c.bf16 %v1848, %v1845
      %v2020 = vpack.c.bf16 %v1849, %v1846
      %v2021 = vpack.c.bf16 %v1850, %v1847
      %v2022 = vpack.c.bf16 %v1854, %v1851
      %v2023 = vpack.c.bf16 %v1855, %v1852
      %v2024 = vpack.c.bf16 %v1856, %v1853
      %v2025 = vpack.c.bf16 %v1860, %v1857
      %v2026 = vpack.c.bf16 %v1861, %v1858
      %v2027 = vpack.c.bf16 %v1862, %v1859
      %v2028 = vpack.c.bf16 %v1866, %v1863
      %v2029 = vpack.c.bf16 %v1867, %v1864
      %v2030 = vpack.c.bf16 %v1868, %v1865
      %v2031 = vpack.c.bf16 %v1872, %v1869
      %v2032 = vpack.c.bf16 %v1873, %v1870
      %v2033 = vpack.c.bf16 %v1874, %v1871
      %v2034 = vpack.c.bf16 %v1878, %v1875
      %v2035 = vpack.c.bf16 %v1879, %v1876
      %v2036 = vpack.c.bf16 %v1880, %v1877
      %v2037 = vpack.c.bf16 %v1884, %v1881
      %v2038 = vpack.c.bf16 %v1885, %v1882
      %v2039 = vpack.c.bf16 %v1886, %v1883
      %v2040 = vpack.c.bf16 %v1890, %v1887
      %v2041 = vpack.c.bf16 %v1891, %v1888
      %v2042 = vpack.c.bf16 %v1892, %v1889
      %v2043 = vpack.c.bf16 %v1896, %v1893
      %v2044 = vpack.c.bf16 %v1897, %v1894
      %v2045 = vpack.c.bf16 %v1898, %v1895
      %v2046 = vpack.c.bf16 %v1902, %v1899
      %v2047 = vpack.c.bf16 %v1903, %v1900
      %v2048 = vpack.c.bf16 %v1904, %v1901
      %v2049 = vpack.c.bf16 %v1908, %v1905
      %v2050 = vpack.c.bf16 %v1909, %v1906
      %v2051 = vpack.c.bf16 %v1910, %v1907
      %v2052 = vpack.c.bf16 %v1914, %v1911
      %v2053 = vpack.c.bf16 %v1915, %v1912
      %v2054 = vpack.c.bf16 %v1916, %v1913
      %v2055 = vpack.c.bf16 %v1920, %v1917
      %v2056 = vpack.c.bf16 %v1921, %v1918
      %v2057 = vpack.c.bf16 %v1922, %v1919
      %v2058 = vpack.c.bf16 %v1923, %v1923
      %v2059 = vpack.c.bf16 %v1924, %v1924
      %v2060 = vpack.c.bf16 %v1925, %v1925
      %v2196 = vunpack.c.l.b16 %v1926
      %v2197 = vunpack.c.l.b16 %v1927
      %v2198 = vunpack.c.l.b16 %v1928
      %v2199 = vunpack.c.h.b16 %v1926
      %v2200 = vunpack.c.h.b16 %v1927
      %v2201 = vunpack.c.h.b16 %v1928
      %v2202 = vunpack.c.l.b16 %v1929
      %v2203 = vunpack.c.l.b16 %v1930
      %v2204 = vunpack.c.l.b16 %v1931
      %v2205 = vunpack.c.h.b16 %v1929
      %v2206 = vunpack.c.h.b16 %v1930
      %v2207 = vunpack.c.h.b16 %v1931
      %v2208 = vunpack.c.l.b16 %v1932
      %v2209 = vunpack.c.l.b16 %v1933
      %v2210 = vunpack.c.l.b16 %v1934
      %v2211 = vunpack.c.h.b16 %v1932
      %v2212 = vunpack.c.h.b16 %v1933
      %v2213 = vunpack.c.h.b16 %v1934
      %v2214 = vunpack.c.l.b16 %v1935
      %v2215 = vunpack.c.l.b16 %v1936
      %v2216 = vunpack.c.l.b16 %v1937
      %v2217 = vunpack.c.h.b16 %v1935
      %v2218 = vunpack.c.h.b16 %v1936
      %v2219 = vunpack.c.h.b16 %v1937
      %v2220 = vunpack.c.l.b16 %v1938
      %v2221 = vunpack.c.l.b16 %v1939
      %v2222 = vunpack.c.l.b16 %v1940
      %v2223 = vunpack.c.h.b16 %v1938
      %v2224 = vunpack.c.h.b16 %v1939
      %v2225 = vunpack.c.h.b16 %v1940
      %v2226 = vunpack.c.l.b16 %v1941
      %v2227 = vunpack.c.l.b16 %v1942
      %v2228 = vunpack.c.l.b16 %v1943
      %v2229 = vunpack.c.h.b16 %v1941
      %v2230 = vunpack.c.h.b16 %v1942
      %v2231 = vunpack.c.h.b16 %v1943
      %v2232 = vunpack.c.l.b16 %v1944
      %v2233 = vunpack.c.l.b16 %v1945
      %v2234 = vunpack.c.l.b16 %v1946
      %v2235 = vunpack.c.h.b16 %v1944
      %v2236 = vunpack.c.h.b16 %v1945
      %v2237 = vunpack.c.h.b16 %v1946
      %v2238 = vunpack.c.l.b16 %v1947
      %v2239 = vunpack.c.l.b16 %v1948
      %v2240 = vunpack.c.l.b16 %v1949
      %v2241 = vunpack.c.h.b16 %v1947
      %v2242 = vunpack.c.h.b16 %v1948
      %v2243 = vunpack.c.h.b16 %v1949
      %v2244 = vunpack.c.l.b16 %v1950
      %v2245 = vunpack.c.l.b16 %v1951
      %v2246 = vunpack.c.l.b16 %v1952
      %v2247 = vunpack.c.h.b16 %v1950
      %v2248 = vunpack.c.h.b16 %v1951
      %v2249 = vunpack.c.h.b16 %v1952
      %v2250 = vunpack.c.l.b16 %v1953
      %v2251 = vunpack.c.l.b16 %v1954
      %v2252 = vunpack.c.l.b16 %v1955
      %v2253 = vunpack.c.h.b16 %v1953
      %v2254 = vunpack.c.h.b16 %v1954
      %v2255 = vunpack.c.h.b16 %v1955
      %v2256 = vunpack.c.l.b16 %v1956
      %v2257 = vunpack.c.l.b16 %v1957
      %v2258 = vunpack.c.l.b16 %v1958
      %v2259 = vunpack.c.h.b16 %v1956
      %v2260 = vunpack.c.h.b16 %v1957
      %v2261 = vunpack.c.h.b16 %v1958
      %v2262 = vunpack.c.l.b16 %v1959
      %v2263 = vunpack.c.l.b16 %v1960
      %v2264 = vunpack.c.l.b16 %v1961
      %v2265 = vunpack.c.h.b16 %v1959
      %v2266 = vunpack.c.h.b16 %v1960
      %v2267 = vunpack.c.h.b16 %v1961
      %v2268 = vunpack.c.l.b16 %v1962
      %v2269 = vunpack.c.l.b16 %v1963
      %v2270 = vunpack.c.l.b16 %v1964
      %v2271 = vunpack.c.h.b16 %v1962
      %v2272 = vunpack.c.h.b16 %v1963
      %v2273 = vunpack.c.h.b16 %v1964
      %v2274 = vunpack.c.l.b16 %v1965
      %v2275 = vunpack.c.l.b16 %v1966
      %v2276 = vunpack.c.l.b16 %v1967
      %v2277 = vunpack.c.h.b16 %v1965
      %v2278 = vunpack.c.h.b16 %v1966
      %v2279 = vunpack.c.h.b16 %v1967
      %v2280 = vunpack.c.l.b16 %v1968
      %v2281 = vunpack.c.l.b16 %v1969
      %v2282 = vunpack.c.l.b16 %v1970
      %v2283 = vunpack.c.h.b16 %v1968
      %v2284 = vunpack.c.h.b16 %v1969
      %v2285 = vunpack.c.h.b16 %v1970
      %v2286 = vunpack.c.l.b16 %v1971
      %v2287 = vunpack.c.l.b16 %v1972
      %v2288 = vunpack.c.l.b16 %v1973
      %v2289 = vunpack.c.h.b16 %v1971
      %v2290 = vunpack.c.h.b16 %v1972
      %v2291 = vunpack.c.h.b16 %v1973
      %v2292 = vunpack.c.l.b16 %v1974
      %v2293 = vunpack.c.l.b16 %v1975
      %v2294 = vunpack.c.l.b16 %v1976
      %v2295 = vunpack.c.h.b16 %v1974
      %v2296 = vunpack.c.h.b16 %v1975
      %v2297 = vunpack.c.h.b16 %v1976
      %v2298 = vunpack.c.l.b16 %v1977
      %v2299 = vunpack.c.l.b16 %v1978
      %v2300 = vunpack.c.l.b16 %v1979
      %v2301 = vunpack.c.h.b16 %v1977
      %v2302 = vunpack.c.h.b16 %v1978
      %v2303 = vunpack.c.h.b16 %v1979
      %v2304 = vunpack.c.l.b16 %v1980
      %v2305 = vunpack.c.l.b16 %v1981
      %v2306 = vunpack.c.l.b16 %v1982
      %v2307 = vunpack.c.h.b16 %v1980
      %v2308 = vunpack.c.h.b16 %v1981
      %v2309 = vunpack.c.h.b16 %v1982
      %v2310 = vunpack.c.l.b16 %v1983
      %v2311 = vunpack.c.l.b16 %v1984
      %v2312 = vunpack.c.l.b16 %v1985
      %v2313 = vunpack.c.h.b16 %v1983
      %v2314 = vunpack.c.h.b16 %v1984
      %v2315 = vunpack.c.h.b16 %v1985
      %v2316 = vunpack.c.l.b16 %v1986
      %v2317 = vunpack.c.l.b16 %v1987
      %v2318 = vunpack.c.l.b16 %v1988
      %v2319 = vunpack.c.h.b16 %v1986
      %v2320 = vunpack.c.h.b16 %v1987
      %v2321 = vunpack.c.h.b16 %v1988
      %v2322 = vunpack.c.l.b16 %v1989
      %v2323 = vunpack.c.l.b16 %v1990
      %v2324 = vunpack.c.l.b16 %v1991
      %v2325 = vunpack.c.h.b16 %v1989
      %v2326 = vunpack.c.h.b16 %v1990
      %v2327 = vunpack.c.h.b16 %v1991
      %v2328 = vunpack.c.l.b16 %v1992
      %v2329 = vunpack.c.l.b16 %v1993
      %v2330 = vunpack.c.l.b16 %v1994
      %v2331 = vunpack.c.h.b16 %v1992
      %v2332 = vunpack.c.h.b16 %v1993
      %v2333 = vunpack.c.h.b16 %v1994
      %v2334 = vunpack.c.l.b16 %v1995
      %v2335 = vunpack.c.l.b16 %v1996
      %v2336 = vunpack.c.l.b16 %v1997
      %v2337 = vunpack.c.h.b16 %v1995
      %v2338 = vunpack.c.h.b16 %v1996
      %v2339 = vunpack.c.h.b16 %v1997
      %v2340 = vunpack.c.l.b16 %v1998
      %v2341 = vunpack.c.l.b16 %v1999
      %v2342 = vunpack.c.l.b16 %v2000
      %v2343 = vunpack.c.h.b16 %v1998
      %v2344 = vunpack.c.h.b16 %v1999
      %v2345 = vunpack.c.h.b16 %v2000
      %v2346 = vunpack.c.l.b16 %v2001
      %v2347 = vunpack.c.l.b16 %v2002
      %v2348 = vunpack.c.l.b16 %v2003
      %v2349 = vunpack.c.h.b16 %v2001
      %v2350 = vunpack.c.h.b16 %v2002
      %v2351 = vunpack.c.h.b16 %v2003
      %v2352 = vunpack.c.l.b16 %v2004
      %v2353 = vunpack.c.l.b16 %v2005
      %v2354 = vunpack.c.l.b16 %v2006
      %v2355 = vunpack.c.h.b16 %v2004
      %v2356 = vunpack.c.h.b16 %v2005
      %v2357 = vunpack.c.h.b16 %v2006
      %v2358 = vunpack.c.l.b16 %v2007
      %v2359 = vunpack.c.l.b16 %v2008
      %v2360 = vunpack.c.l.b16 %v2009
      %v2361 = vunpack.c.h.b16 %v2007
      %v2362 = vunpack.c.h.b16 %v2008
      %v2363 = vunpack.c.h.b16 %v2009
      %v2364 = vunpack.c.l.b16 %v2010
      %v2365 = vunpack.c.l.b16 %v2011
      %v2366 = vunpack.c.l.b16 %v2012
      %v2367 = vunpack.c.h.b16 %v2010
      %v2368 = vunpack.c.h.b16 %v2011
      %v2369 = vunpack.c.h.b16 %v2012
      %v2370 = vunpack.c.l.b16 %v2013
      %v2371 = vunpack.c.l.b16 %v2014
      %v2372 = vunpack.c.l.b16 %v2015
      %v2373 = vunpack.c.h.b16 %v2013
      %v2374 = vunpack.c.h.b16 %v2014
      %v2375 = vunpack.c.h.b16 %v2015
      %v2376 = vunpack.c.l.b16 %v2016
      %v2377 = vunpack.c.l.b16 %v2017
      %v2378 = vunpack.c.l.b16 %v2018
      %v2379 = vunpack.c.h.b16 %v2016
      %v2380 = vunpack.c.h.b16 %v2017
      %v2381 = vunpack.c.h.b16 %v2018
      %v2382 = vunpack.c.l.b16 %v2019
      %v2383 = vunpack.c.l.b16 %v2020
      %v2384 = vunpack.c.l.b16 %v2021
      %v2385 = vunpack.c.h.b16 %v2019
      %v2386 = vunpack.c.h.b16 %v2020
      %v2387 = vunpack.c.h.b16 %v2021
      %v2388 = vunpack.c.l.b16 %v2022
      %v2389 = vunpack.c.l.b16 %v2023
      %v2390 = vunpack.c.l.b16 %v2024
      %v2391 = vunpack.c.h.b16 %v2022
      %v2392 = vunpack.c.h.b16 %v2023
      %v2393 = vunpack.c.h.b16 %v2024
      %v2394 = vunpack.c.l.b16 %v2025
      %v2395 = vunpack.c.l.b16 %v2026
      %v2396 = vunpack.c.l.b16 %v2027
      %v2397 = vunpack.c.h.b16 %v2025
      %v2398 = vunpack.c.h.b16 %v2026
      %v2399 = vunpack.c.h.b16 %v2027
      %v2400 = vunpack.c.l.b16 %v2028
      %v2401 = vunpack.c.l.b16 %v2029
      %v2402 = vunpack.c.l.b16 %v2030
      %v2403 = vunpack.c.h.b16 %v2028
      %v2404 = vunpack.c.h.b16 %v2029
      %v2405 = vunpack.c.h.b16 %v2030
      %v2406 = vunpack.c.l.b16 %v2031
      %v2407 = vunpack.c.l.b16 %v2032
      %v2408 = vunpack.c.l.b16 %v2033
      %v2409 = vunpack.c.h.b16 %v2031
      %v2410 = vunpack.c.h.b16 %v2032
      %v2411 = vunpack.c.h.b16 %v2033
      %v2412 = vunpack.c.l.b16 %v2034
      %v2413 = vunpack.c.l.b16 %v2035
      %v2414 = vunpack.c.l.b16 %v2036
      %v2415 = vunpack.c.h.b16 %v2034
      %v2416 = vunpack.c.h.b16 %v2035
      %v2417 = vunpack.c.h.b16 %v2036
      %v2418 = vunpack.c.l.b16 %v2037
      %v2419 = vunpack.c.l.b16 %v2038
      %v2420 = vunpack.c.l.b16 %v2039
      %v2421 = vunpack.c.h.b16 %v2037
      %v2422 = vunpack.c.h.b16 %v2038
      %v2423 = vunpack.c.h.b16 %v2039
      %v2424 = vunpack.c.l.b16 %v2040
      %v2425 = vunpack.c.l.b16 %v2041
      %v2426 = vunpack.c.l.b16 %v2042
      %v2427 = vunpack.c.h.b16 %v2040
      %v2428 = vunpack.c.h.b16 %v2041
      %v2429 = vunpack.c.h.b16 %v2042
      %v2430 = vunpack.c.l.b16 %v2043
      %v2431 = vunpack.c.l.b16 %v2044
      %v2432 = vunpack.c.l.b16 %v2045
      %v2433 = vunpack.c.h.b16 %v2043
      %v2434 = vunpack.c.h.b16 %v2044
      %v2435 = vunpack.c.h.b16 %v2045
      %v2436 = vunpack.c.l.b16 %v2046
      %v2437 = vunpack.c.l.b16 %v2047
      %v2438 = vunpack.c.l.b16 %v2048
      %v2439 = vunpack.c.h.b16 %v2046
      %v2440 = vunpack.c.h.b16 %v2047
      %v2441 = vunpack.c.h.b16 %v2048
      %v2442 = vunpack.c.l.b16 %v2049
      %v2443 = vunpack.c.l.b16 %v2050
      %v2444 = vunpack.c.l.b16 %v2051
      %v2445 = vunpack.c.h.b16 %v2049
      %v2446 = vunpack.c.h.b16 %v2050
      %v2447 = vunpack.c.h.b16 %v2051
      %v2448 = vunpack.c.l.b16 %v2052
      %v2449 = vunpack.c.l.b16 %v2053
      %v2450 = vunpack.c.l.b16 %v2054
      %v2451 = vunpack.c.h.b16 %v2052
      %v2452 = vunpack.c.h.b16 %v2053
      %v2453 = vunpack.c.h.b16 %v2054
      %v2454 = vunpack.c.l.b16 %v2055
      %v2455 = vunpack.c.l.b16 %v2056
      %v2456 = vunpack.c.l.b16 %v2057
      %v2457 = vunpack.c.h.b16 %v2055
      %v2458 = vunpack.c.h.b16 %v2056
      %v2459 = vunpack.c.h.b16 %v2057
      %v2460 = vunpack.c.l.b16 %v2058
      %v2461 = vunpack.c.l.b16 %v2059
      %v2462 = vunpack.c.l.b16 %v2060
      %v2463 = vpack.c.b16 %v2197, %v2196
      %v2464 = vpack.c.b16 %v2198, %v2198
      %v2465 = vpack.c.b16 %v2200, %v2199
      %v2466 = vpack.c.b16 %v2201, %v2201
      %v2467 = vpack.c.b16 %v2203, %v2202
      %v2468 = vpack.c.b16 %v2204, %v2204
      %v2469 = vpack.c.b16 %v2206, %v2205
      %v2470 = vpack.c.b16 %v2207, %v2207
      %v2471 = vpack.c.b16 %v2209, %v2208
      %v2472 = vpack.c.b16 %v2210, %v2210
      %v2473 = vpack.c.b16 %v2212, %v2211
      %v2474 = vpack.c.b16 %v2213, %v2213
      %v2475 = vpack.c.b16 %v2215, %v2214
      %v2476 = vpack.c.b16 %v2216, %v2216
      %v2477 = vpack.c.b16 %v2218, %v2217
      %v2478 = vpack.c.b16 %v2219, %v2219
      %v2479 = vpack.c.b16 %v2221, %v2220
      %v2480 = vpack.c.b16 %v2222, %v2222
      %v2481 = vpack.c.b16 %v2224, %v2223
      %v2482 = vpack.c.b16 %v2225, %v2225
      %v2483 = vpack.c.b16 %v2227, %v2226
      %v2484 = vpack.c.b16 %v2228, %v2228
      %v2485 = vpack.c.b16 %v2230, %v2229
      %v2486 = vpack.c.b16 %v2231, %v2231
      %v2487 = vpack.c.b16 %v2233, %v2232
      %v2488 = vpack.c.b16 %v2234, %v2234
      %v2489 = vpack.c.b16 %v2236, %v2235
      %v2490 = vpack.c.b16 %v2237, %v2237
      %v2491 = vpack.c.b16 %v2239, %v2238
      %v2492 = vpack.c.b16 %v2240, %v2240
      %v2493 = vpack.c.b16 %v2242, %v2241
      %v2494 = vpack.c.b16 %v2243, %v2243
      %v2495 = vpack.c.b16 %v2245, %v2244
      %v2496 = vpack.c.b16 %v2246, %v2246
      %v2497 = vpack.c.b16 %v2248, %v2247
      %v2498 = vpack.c.b16 %v2249, %v2249
      %v2499 = vpack.c.b16 %v2251, %v2250
      %v2500 = vpack.c.b16 %v2252, %v2252
      %v2501 = vpack.c.b16 %v2254, %v2253
      %v2502 = vpack.c.b16 %v2255, %v2255
      %v2503 = vpack.c.b16 %v2257, %v2256
      %v2504 = vpack.c.b16 %v2258, %v2258
      %v2505 = vpack.c.b16 %v2260, %v2259
      %v2506 = vpack.c.b16 %v2261, %v2261
      %v2507 = vpack.c.b16 %v2263, %v2262
      %v2508 = vpack.c.b16 %v2264, %v2264
      %v2509 = vpack.c.b16 %v2266, %v2265
      %v2510 = vpack.c.b16 %v2267, %v2267
      %v2511 = vpack.c.b16 %v2269, %v2268
      %v2512 = vpack.c.b16 %v2270, %v2270
      %v2513 = vpack.c.b16 %v2272, %v2271
      %v2514 = vpack.c.b16 %v2273, %v2273
      %v2515 = vpack.c.b16 %v2275, %v2274
      %v2516 = vpack.c.b16 %v2276, %v2276
      %v2517 = vpack.c.b16 %v2278, %v2277
      %v2518 = vpack.c.b16 %v2279, %v2279
      %v2519 = vpack.c.b16 %v2281, %v2280
      %v2520 = vpack.c.b16 %v2282, %v2282
      %v2521 = vpack.c.b16 %v2284, %v2283
      %v2522 = vpack.c.b16 %v2285, %v2285
      %v2523 = vpack.c.b16 %v2287, %v2286
      %v2524 = vpack.c.b16 %v2288, %v2288
      %v2525 = vpack.c.b16 %v2290, %v2289
      %v2526 = vpack.c.b16 %v2291, %v2291
      %v2527 = vpack.c.b16 %v2293, %v2292
      %v2528 = vpack.c.b16 %v2294, %v2294
      %v2529 = vpack.c.b16 %v2296, %v2295
      %v2530 = vpack.c.b16 %v2297, %v2297
      %v2531 = vpack.c.b16 %v2299, %v2298
      %v2532 = vpack.c.b16 %v2300, %v2300
      %v2533 = vpack.c.b16 %v2302, %v2301
      %v2534 = vpack.c.b16 %v2303, %v2303
      %v2535 = vpack.c.b16 %v2305, %v2304
      %v2536 = vpack.c.b16 %v2306, %v2306
      %v2537 = vpack.c.b16 %v2308, %v2307
      %v2538 = vpack.c.b16 %v2309, %v2309
      %v2539 = vpack.c.b16 %v2311, %v2310
      %v2540 = vpack.c.b16 %v2312, %v2312
      %v2541 = vpack.c.b16 %v2314, %v2313
      %v2542 = vpack.c.b16 %v2315, %v2315
      %v2543 = vpack.c.b16 %v2317, %v2316
      %v2544 = vpack.c.b16 %v2318, %v2318
      %v2545 = vpack.c.b16 %v2320, %v2319
      %v2546 = vpack.c.b16 %v2321, %v2321
      %v2547 = vpack.c.b16 %v2323, %v2322
      %v2548 = vpack.c.b16 %v2324, %v2324
      %v2549 = vpack.c.b16 %v2326, %v2325
      %v2550 = vpack.c.b16 %v2327, %v2327
      %v2551 = vpack.c.b16 %v2329, %v2328
      %v2552 = vpack.c.b16 %v2330, %v2330
      %v2553 = vpack.c.b16 %v2332, %v2331
      %v2554 = vpack.c.b16 %v2333, %v2333
      %v2555 = vpack.c.b16 %v2335, %v2334
      %v2556 = vpack.c.b16 %v2336, %v2336
      %v2557 = vpack.c.b16 %v2338, %v2337
      %v2558 = vpack.c.b16 %v2339, %v2339
      %v2559 = vpack.c.b16 %v2341, %v2340
      %v2560 = vpack.c.b16 %v2342, %v2342
      %v2561 = vpack.c.b16 %v2344, %v2343
      %v2562 = vpack.c.b16 %v2345, %v2345
      %v2563 = vpack.c.b16 %v2347, %v2346
      %v2564 = vpack.c.b16 %v2348, %v2348
      %v2565 = vpack.c.b16 %v2350, %v2349
      %v2566 = vpack.c.b16 %v2351, %v2351
      %v2567 = vpack.c.b16 %v2353, %v2352
      %v2568 = vpack.c.b16 %v2354, %v2354
      %v2569 = vpack.c.b16 %v2356, %v2355
      %v2570 = vpack.c.b16 %v2357, %v2357
      %v2571 = vpack.c.b16 %v2359, %v2358
      %v2572 = vpack.c.b16 %v2360, %v2360
      %v2573 = vpack.c.b16 %v2362, %v2361
      %v2574 = vpack.c.b16 %v2363, %v2363
      %v2575 = vpack.c.b16 %v2365, %v2364
      %v2576 = vpack.c.b16 %v2366, %v2366
      %v2577 = vpack.c.b16 %v2368, %v2367
      %v2578 = vpack.c.b16 %v2369, %v2369
      %v2579 = vpack.c.b16 %v2371, %v2370
      %v2580 = vpack.c.b16 %v2372, %v2372
      %v2581 = vpack.c.b16 %v2374, %v2373
      %v2582 = vpack.c.b16 %v2375, %v2375
      %v2583 = vpack.c.b16 %v2377, %v2376
      %v2584 = vpack.c.b16 %v2378, %v2378
      %v2585 = vpack.c.b16 %v2380, %v2379
      %v2586 = vpack.c.b16 %v2381, %v2381
      %v2587 = vpack.c.b16 %v2383, %v2382
      %v2588 = vpack.c.b16 %v2384, %v2384
      %v2589 = vpack.c.b16 %v2386, %v2385
      %v2590 = vpack.c.b16 %v2387, %v2387
      %v2591 = vpack.c.b16 %v2389, %v2388
      %v2592 = vpack.c.b16 %v2390, %v2390
      %v2593 = vpack.c.b16 %v2392, %v2391
      %v2594 = vpack.c.b16 %v2393, %v2393
      %v2595 = vpack.c.b16 %v2395, %v2394
      %v2596 = vpack.c.b16 %v2396, %v2396
      %v2597 = vpack.c.b16 %v2398, %v2397
      %v2598 = vpack.c.b16 %v2399, %v2399
      %v2599 = vpack.c.b16 %v2401, %v2400
      %v2600 = vpack.c.b16 %v2402, %v2402
      %v2601 = vpack.c.b16 %v2404, %v2403
      %v2602 = vpack.c.b16 %v2405, %v2405
      %v2603 = vpack.c.b16 %v2407, %v2406
      %v2604 = vpack.c.b16 %v2408, %v2408
      %v2605 = vpack.c.b16 %v2410, %v2409
      %v2606 = vpack.c.b16 %v2411, %v2411
      %v2607 = vpack.c.b16 %v2413, %v2412
      %v2608 = vpack.c.b16 %v2414, %v2414
      %v2609 = vpack.c.b16 %v2416, %v2415
      %v2610 = vpack.c.b16 %v2417, %v2417
      %v2611 = vpack.c.b16 %v2419, %v2418
      %v2612 = vpack.c.b16 %v2420, %v2420
      %v2613 = vpack.c.b16 %v2422, %v2421
      %v2614 = vpack.c.b16 %v2423, %v2423
      %v2615 = vpack.c.b16 %v2425, %v2424
      %v2616 = vpack.c.b16 %v2426, %v2426
      %v2617 = vpack.c.b16 %v2428, %v2427
      %v2618 = vpack.c.b16 %v2429, %v2429
      %v2619 = vpack.c.b16 %v2431, %v2430
      %v2620 = vpack.c.b16 %v2432, %v2432
      %v2621 = vpack.c.b16 %v2434, %v2433
      %v2622 = vpack.c.b16 %v2435, %v2435
      %v2623 = vpack.c.b16 %v2437, %v2436
      %v2624 = vpack.c.b16 %v2438, %v2438
      %v2625 = vpack.c.b16 %v2440, %v2439
      %v2626 = vpack.c.b16 %v2441, %v2441
      %v2627 = vpack.c.b16 %v2443, %v2442
      %v2628 = vpack.c.b16 %v2444, %v2444
      %v2629 = vpack.c.b16 %v2446, %v2445
      %v2630 = vpack.c.b16 %v2447, %v2447
      %v2631 = vpack.c.b16 %v2449, %v2448
      %v2632 = vpack.c.b16 %v2450, %v2450
      %v2633 = vpack.c.b16 %v2452, %v2451
      %v2634 = vpack.c.b16 %v2453, %v2453
      %v2635 = vpack.c.b16 %v2455, %v2454
      %v2636 = vpack.c.b16 %v2456, %v2456
      %v2637 = vpack.c.b16 %v2458, %v2457
      %v2638 = vpack.c.b16 %v2459, %v2459
      %v2639 = vpack.c.b16 %v2461, %v2460
      %v2640 = vpack.c.b16 %v2462, %v2462
      %2819 = vst [vmem:[%s116] sm:$0xff] %v2463
      %vm2820 = vcmask 404480
      %2821 = vst.msk [vmem:[%s116 + $0x8] sm:$0xf] %vm2820, %v2464
      %2822 = vst [vmem:[%s116 + $0xc] sm:$0xff] %v2465
      %2823 = vst.msk [vmem:[%s116 + $0x14] sm:$0xf] %vm2820, %v2466
      %2824 = vst [vmem:[%s116 + $0x18] sm:$0xff] %v2467
      %2825 = vst.msk [vmem:[%s116 + $0x20] sm:$0xf] %vm2820, %v2468
      %2826 = vst [vmem:[%s116 + $0x24] sm:$0xff] %v2469
      %2827 = vst.msk [vmem:[%s116 + $0x2c] sm:$0xf] %vm2820, %v2470
      %2828 = vst [vmem:[%s116 + $0x30] sm:$0xff] %v2471
      %2829 = vst.msk [vmem:[%s116 + $0x38] sm:$0xf] %vm2820, %v2472
      %2830 = vst [vmem:[%s116 + $0x3c] sm:$0xff] %v2473
      %2831 = vst.msk [vmem:[%s116 + $0x44] sm:$0xf] %vm2820, %v2474
      %2832 = vst [vmem:[%s116 + $0x48] sm:$0xff] %v2475
      %2833 = vst.msk [vmem:[%s116 + $0x50] sm:$0xf] %vm2820, %v2476
      %2834 = vst [vmem:[%s116 + $0x54] sm:$0xff] %v2477
      %2835 = vst.msk [vmem:[%s116 + $0x5c] sm:$0xf] %vm2820, %v2478
      %2836 = vst [vmem:[%s116 + $0x60] sm:$0xff] %v2479
      %2837 = vst.msk [vmem:[%s116 + $0x68] sm:$0xf] %vm2820, %v2480
      %2838 = vst [vmem:[%s116 + $0x6c] sm:$0xff] %v2481
      %2839 = vst.msk [vmem:[%s116 + $0x74] sm:$0xf] %vm2820, %v2482
      %2840 = vst [vmem:[%s116 + $0x78] sm:$0xff] %v2483
      %2841 = vst.msk [vmem:[%s116 + $0x80] sm:$0xf] %vm2820, %v2484
      %2842 = vst [vmem:[%s116 + $0x84] sm:$0xff] %v2485
      %2843 = vst.msk [vmem:[%s116 + $0x8c] sm:$0xf] %vm2820, %v2486
      %2844 = vst [vmem:[%s116 + $0x90] sm:$0xff] %v2487
      %2845 = vst.msk [vmem:[%s116 + $0x98] sm:$0xf] %vm2820, %v2488
      %2846 = vst [vmem:[%s116 + $0x9c] sm:$0xff] %v2489
      %2847 = vst.msk [vmem:[%s116 + $0xa4] sm:$0xf] %vm2820, %v2490
      %2848 = vst [vmem:[%s116 + $0xa8] sm:$0xff] %v2491
      %2849 = vst.msk [vmem:[%s116 + $0xb0] sm:$0xf] %vm2820, %v2492
      %2850 = vst [vmem:[%s116 + $0xb4] sm:$0xff] %v2493
      %2851 = vst.msk [vmem:[%s116 + $0xbc] sm:$0xf] %vm2820, %v2494
      %2852 = vst [vmem:[%s116 + $0xc0] sm:$0xff] %v2495
      %2853 = vst.msk [vmem:[%s116 + $0xc8] sm:$0xf] %vm2820, %v2496
      %2854 = vst [vmem:[%s116 + $0xcc] sm:$0xff] %v2497
      %2855 = vst.msk [vmem:[%s116 + $0xd4] sm:$0xf] %vm2820, %v2498
      %2856 = vst [vmem:[%s116 + $0xd8] sm:$0xff] %v2499
      %2857 = vst.msk [vmem:[%s116 + $0xe0] sm:$0xf] %vm2820, %v2500
      %2858 = vst [vmem:[%s116 + $0xe4] sm:$0xff] %v2501
      %2859 = vst.msk [vmem:[%s116 + $0xec] sm:$0xf] %vm2820, %v2502
      %2860 = vst [vmem:[%s116 + $0xf0] sm:$0xff] %v2503
      %2861 = vst.msk [vmem:[%s116 + $0xf8] sm:$0xf] %vm2820, %v2504
      %2862 = vst [vmem:[%s116 + $0xfc] sm:$0xff] %v2505
      %2863 = vst.msk [vmem:[%s116 + $0x104] sm:$0xf] %vm2820, %v2506
      %2864 = vst [vmem:[%s116 + $0x108] sm:$0xff] %v2507
      %2865 = vst.msk [vmem:[%s116 + $0x110] sm:$0xf] %vm2820, %v2508
      %2866 = vst [vmem:[%s116 + $0x114] sm:$0xff] %v2509
      %2867 = vst.msk [vmem:[%s116 + $0x11c] sm:$0xf] %vm2820, %v2510
      %2868 = vst [vmem:[%s116 + $0x120] sm:$0xff] %v2511
      %2869 = vst.msk [vmem:[%s116 + $0x128] sm:$0xf] %vm2820, %v2512
      %2870 = vst [vmem:[%s116 + $0x12c] sm:$0xff] %v2513
      %2871 = vst.msk [vmem:[%s116 + $0x134] sm:$0xf] %vm2820, %v2514
      %2872 = vst [vmem:[%s116 + $0x138] sm:$0xff] %v2515
      %2873 = vst.msk [vmem:[%s116 + $0x140] sm:$0xf] %vm2820, %v2516
      %2874 = vst [vmem:[%s116 + $0x144] sm:$0xff] %v2517
      %2875 = vst.msk [vmem:[%s116 + $0x14c] sm:$0xf] %vm2820, %v2518
      %2876 = vst [vmem:[%s116 + $0x150] sm:$0xff] %v2519
      %2877 = vst.msk [vmem:[%s116 + $0x158] sm:$0xf] %vm2820, %v2520
      %2878 = vst [vmem:[%s116 + $0x15c] sm:$0xff] %v2521
      %2879 = vst.msk [vmem:[%s116 + $0x164] sm:$0xf] %vm2820, %v2522
      %2880 = vst [vmem:[%s116 + $0x168] sm:$0xff] %v2523
      %2881 = vst.msk [vmem:[%s116 + $0x170] sm:$0xf] %vm2820, %v2524
      %2882 = vst [vmem:[%s116 + $0x174] sm:$0xff] %v2525
      %2883 = vst.msk [vmem:[%s116 + $0x17c] sm:$0xf] %vm2820, %v2526
      %2884 = vst [vmem:[%s116 + $0x180] sm:$0xff] %v2527
      %2885 = vst.msk [vmem:[%s116 + $0x188] sm:$0xf] %vm2820, %v2528
      %2886 = vst [vmem:[%s116 + $0x18c] sm:$0xff] %v2529
      %2887 = vst.msk [vmem:[%s116 + $0x194] sm:$0xf] %vm2820, %v2530
      %2888 = vst [vmem:[%s116 + $0x198] sm:$0xff] %v2531
      %2889 = vst.msk [vmem:[%s116 + $0x1a0] sm:$0xf] %vm2820, %v2532
      %2890 = vst [vmem:[%s116 + $0x1a4] sm:$0xff] %v2533
      %2891 = vst.msk [vmem:[%s116 + $0x1ac] sm:$0xf] %vm2820, %v2534
      %2892 = vst [vmem:[%s116 + $0x1b0] sm:$0xff] %v2535
      %2893 = vst.msk [vmem:[%s116 + $0x1b8] sm:$0xf] %vm2820, %v2536
      %2894 = vst [vmem:[%s116 + $0x1bc] sm:$0xff] %v2537
      %2895 = vst.msk [vmem:[%s116 + $0x1c4] sm:$0xf] %vm2820, %v2538
      %2896 = vst [vmem:[%s116 + $0x1c8] sm:$0xff] %v2539
      %2897 = vst.msk [vmem:[%s116 + $0x1d0] sm:$0xf] %vm2820, %v2540
      %2898 = vst [vmem:[%s116 + $0x1d4] sm:$0xff] %v2541
      %2899 = vst.msk [vmem:[%s116 + $0x1dc] sm:$0xf] %vm2820, %v2542
      %2900 = vst [vmem:[%s116 + $0x1e0] sm:$0xff] %v2543
      %2901 = vst.msk [vmem:[%s116 + $0x1e8] sm:$0xf] %vm2820, %v2544
      %2902 = vst [vmem:[%s116 + $0x1ec] sm:$0xff] %v2545
      %2903 = vst.msk [vmem:[%s116 + $0x1f4] sm:$0xf] %vm2820, %v2546
      %2904 = vst [vmem:[%s116 + $0x1f8] sm:$0xff] %v2547
      %2905 = vst.msk [vmem:[%s116 + $0x200] sm:$0xf] %vm2820, %v2548
      %2906 = vst [vmem:[%s116 + $0x204] sm:$0xff] %v2549
      %2907 = vst.msk [vmem:[%s116 + $0x20c] sm:$0xf] %vm2820, %v2550
      %2908 = vst [vmem:[%s116 + $0x210] sm:$0xff] %v2551
      %2909 = vst.msk [vmem:[%s116 + $0x218] sm:$0xf] %vm2820, %v2552
      %2910 = vst [vmem:[%s116 + $0x21c] sm:$0xff] %v2553
      %2911 = vst.msk [vmem:[%s116 + $0x224] sm:$0xf] %vm2820, %v2554
      %2912 = vst [vmem:[%s116 + $0x228] sm:$0xff] %v2555
      %2913 = vst.msk [vmem:[%s116 + $0x230] sm:$0xf] %vm2820, %v2556
      %2914 = vst [vmem:[%s116 + $0x234] sm:$0xff] %v2557
      %2915 = vst.msk [vmem:[%s116 + $0x23c] sm:$0xf] %vm2820, %v2558
      %2916 = vst [vmem:[%s116 + $0x240] sm:$0xff] %v2559
      %2917 = vst.msk [vmem:[%s116 + $0x248] sm:$0xf] %vm2820, %v2560
      %2918 = vst [vmem:[%s116 + $0x24c] sm:$0xff] %v2561
      %2919 = vst.msk [vmem:[%s116 + $0x254] sm:$0xf] %vm2820, %v2562
      %2920 = vst [vmem:[%s116 + $0x258] sm:$0xff] %v2563
      %2921 = vst.msk [vmem:[%s116 + $0x260] sm:$0xf] %vm2820, %v2564
      %2922 = vst [vmem:[%s116 + $0x264] sm:$0xff] %v2565
      %2923 = vst.msk [vmem:[%s116 + $0x26c] sm:$0xf] %vm2820, %v2566
      %2924 = vst [vmem:[%s116 + $0x270] sm:$0xff] %v2567
      %2925 = vst.msk [vmem:[%s116 + $0x278] sm:$0xf] %vm2820, %v2568
      %2926 = vst [vmem:[%s116 + $0x27c] sm:$0xff] %v2569
      %2927 = vst.msk [vmem:[%s116 + $0x284] sm:$0xf] %vm2820, %v2570
      %2928 = vst [vmem:[%s116 + $0x288] sm:$0xff] %v2571
      %2929 = vst.msk [vmem:[%s116 + $0x290] sm:$0xf] %vm2820, %v2572
      %2930 = vst [vmem:[%s116 + $0x294] sm:$0xff] %v2573
      %2931 = vst.msk [vmem:[%s116 + $0x29c] sm:$0xf] %vm2820, %v2574
      %2932 = vst [vmem:[%s116 + $0x2a0] sm:$0xff] %v2575
      %2933 = vst.msk [vmem:[%s116 + $0x2a8] sm:$0xf] %vm2820, %v2576
      %2934 = vst [vmem:[%s116 + $0x2ac] sm:$0xff] %v2577
      %2935 = vst.msk [vmem:[%s116 + $0x2b4] sm:$0xf] %vm2820, %v2578
      %2936 = vst [vmem:[%s116 + $0x2b8] sm:$0xff] %v2579
      %2937 = vst.msk [vmem:[%s116 + $0x2c0] sm:$0xf] %vm2820, %v2580
      %2938 = vst [vmem:[%s116 + $0x2c4] sm:$0xff] %v2581
      %2939 = vst.msk [vmem:[%s116 + $0x2cc] sm:$0xf] %vm2820, %v2582
      %2940 = vst [vmem:[%s116 + $0x2d0] sm:$0xff] %v2583
      %2941 = vst.msk [vmem:[%s116 + $0x2d8] sm:$0xf] %vm2820, %v2584
      %2942 = vst [vmem:[%s116 + $0x2dc] sm:$0xff] %v2585
      %2943 = vst.msk [vmem:[%s116 + $0x2e4] sm:$0xf] %vm2820, %v2586
      %2944 = vst [vmem:[%s116 + $0x2e8] sm:$0xff] %v2587
      %2945 = vst.msk [vmem:[%s116 + $0x2f0] sm:$0xf] %vm2820, %v2588
      %2946 = vst [vmem:[%s116 + $0x2f4] sm:$0xff] %v2589
      %2947 = vst.msk [vmem:[%s116 + $0x2fc] sm:$0xf] %vm2820, %v2590
      %2948 = vst [vmem:[%s116 + $0x300] sm:$0xff] %v2591
      %2949 = vst.msk [vmem:[%s116 + $0x308] sm:$0xf] %vm2820, %v2592
      %2950 = vst [vmem:[%s116 + $0x30c] sm:$0xff] %v2593
      %2951 = vst.msk [vmem:[%s116 + $0x314] sm:$0xf] %vm2820, %v2594
      %2952 = vst [vmem:[%s116 + $0x318] sm:$0xff] %v2595
      %2953 = vst.msk [vmem:[%s116 + $0x320] sm:$0xf] %vm2820, %v2596
      %2954 = vst [vmem:[%s116 + $0x324] sm:$0xff] %v2597
      %2955 = vst.msk [vmem:[%s116 + $0x32c] sm:$0xf] %vm2820, %v2598
      %2956 = vst [vmem:[%s116 + $0x330] sm:$0xff] %v2599
      %2957 = vst.msk [vmem:[%s116 + $0x338] sm:$0xf] %vm2820, %v2600
      %2958 = vst [vmem:[%s116 + $0x33c] sm:$0xff] %v2601
      %2959 = vst.msk [vmem:[%s116 + $0x344] sm:$0xf] %vm2820, %v2602
      %2960 = vst [vmem:[%s116 + $0x348] sm:$0xff] %v2603
      %2961 = vst.msk [vmem:[%s116 + $0x350] sm:$0xf] %vm2820, %v2604
      %2962 = vst [vmem:[%s116 + $0x354] sm:$0xff] %v2605
      %2963 = vst.msk [vmem:[%s116 + $0x35c] sm:$0xf] %vm2820, %v2606
      %2964 = vst [vmem:[%s116 + $0x360] sm:$0xff] %v2607
      %2965 = vst.msk [vmem:[%s116 + $0x368] sm:$0xf] %vm2820, %v2608
      %2966 = vst [vmem:[%s116 + $0x36c] sm:$0xff] %v2609
      %2967 = vst.msk [vmem:[%s116 + $0x374] sm:$0xf] %vm2820, %v2610
      %2968 = vst [vmem:[%s116 + $0x378] sm:$0xff] %v2611
      %2969 = vst.msk [vmem:[%s116 + $0x380] sm:$0xf] %vm2820, %v2612
      %2970 = vst [vmem:[%s116 + $0x384] sm:$0xff] %v2613
      %2971 = vst.msk [vmem:[%s116 + $0x38c] sm:$0xf] %vm2820, %v2614
      %2972 = vst [vmem:[%s116 + $0x390] sm:$0xff] %v2615
      %2973 = vst.msk [vmem:[%s116 + $0x398] sm:$0xf] %vm2820, %v2616
      %2974 = vst [vmem:[%s116 + $0x39c] sm:$0xff] %v2617
      %2975 = vst.msk [vmem:[%s116 + $0x3a4] sm:$0xf] %vm2820, %v2618
      %2976 = vst [vmem:[%s116 + $0x3a8] sm:$0xff] %v2619
      %2977 = vst.msk [vmem:[%s116 + $0x3b0] sm:$0xf] %vm2820, %v2620
      %2978 = vst [vmem:[%s116 + $0x3b4] sm:$0xff] %v2621
      %2979 = vst.msk [vmem:[%s116 + $0x3bc] sm:$0xf] %vm2820, %v2622
      %2980 = vst [vmem:[%s116 + $0x3c0] sm:$0xff] %v2623
      %2981 = vst.msk [vmem:[%s116 + $0x3c8] sm:$0xf] %vm2820, %v2624
      %2982 = vst [vmem:[%s116 + $0x3cc] sm:$0xff] %v2625
      %2983 = vst.msk [vmem:[%s116 + $0x3d4] sm:$0xf] %vm2820, %v2626
      %2984 = vst [vmem:[%s116 + $0x3d8] sm:$0xff] %v2627
      %2985 = vst.msk [vmem:[%s116 + $0x3e0] sm:$0xf] %vm2820, %v2628
      %2986 = vst [vmem:[%s116 + $0x3e4] sm:$0xff] %v2629
      %2987 = vst.msk [vmem:[%s116 + $0x3ec] sm:$0xf] %vm2820, %v2630
      %2988 = vst [vmem:[%s116 + $0x3f0] sm:$0xff] %v2631
      %2989 = vst.msk [vmem:[%s116 + $0x3f8] sm:$0xf] %vm2820, %v2632
      %2990 = vst [vmem:[%s116 + $0x3fc] sm:$0xff] %v2633
      %2991 = vst.msk [vmem:[%s116 + $0x404] sm:$0xf] %vm2820, %v2634
      %2992 = vst [vmem:[%s116 + $0x408] sm:$0xff] %v2635
      %2993 = vst.msk [vmem:[%s116 + $0x410] sm:$0xf] %vm2820, %v2636
      %2994 = vst [vmem:[%s116 + $0x414] sm:$0xff] %v2637
      %2995 = vst.msk [vmem:[%s116 + $0x41c] sm:$0xf] %vm2820, %v2638
      %2996 = vst [vmem:[%s116 + $0x420] sm:$0xff] %v2639
      %2997 = vst.msk [vmem:[%s116 + $0x428] sm:$0xf] %vm2820, %v2640
      %p2998 = scmp.lt.s32.totalorder %s12, 1
      %s2999 = scalar_select %p2998, %s12, 1
      %s3000 = smul.addr %s2999, 267
      %s3001 = smul.addr %s3000, 4
      %s3002 = scalar_lea.vmem %s1, %s3001
      // Predicated region
      $region25: #{deep_q_forward.5} parent=23 // pred_check
        %p3003 = pneg %p56
      $region26: #{deep_q_forward.5} parent=23 // pred_check_branch
        %3005 = sbr.rel (%p3003) target = $region28
      $region27: #{deep_q_forward.5} parent=23 // pred_region
        _
      $region28: #{deep_q_forward.5} parent=23 // pred_fallthru
        _
    $region24: #{deep_q_forward.5} parent=5 // pred_fallthru
      _
    %p3006 = scmp.le.s32.totalorder 2, %s7
    // Predicated region
    $region29: #{deep_q_forward.5} parent=5 // pred_check
      %p3007 = pneg %p3006
    $region30: #{deep_q_forward.5} parent=5 // pred_check_branch
      %3009 = sbr.rel (%p3007) target = $region32
    $region31: #{deep_q_forward.5} parent=5 // pred_region
      %s3010 = ssub.s32 %s7, 2
      // Predicated region
      $region33: #{deep_q_forward.5} parent=31 // pred_check
        %p3011 = pneg %p62
      $region34: #{deep_q_forward.5} parent=31 // pred_check_branch
        %3013 = sbr.rel (%p3011) target = $region36
      $region35: #{deep_q_forward.5} parent=31 // pred_region
        %p3014 = scmp.lt.s32.totalorder %s13, 1
        %s3015 = scalar_select %p3014, %s13, 1
        %s3016 = smul.addr %s3015, 267
        %s3017 = smul.addr %s3016, 4
        %s3018 = scalar_lea.vmem %s1, %s3017
      $region36: #{deep_q_forward.5} parent=31 // pred_fallthru
        _
    $region32: #{deep_q_forward.5} parent=5 // pred_fallthru
      _
  $region6: #{deep_q_forward.5} parent=0 // loop_footer
    %s11 = sadd.s32 1, %s7
  $region7: #{deep_q_forward.5} parent=0 // loop_footer_branch
    %6 = sbr.rel target = $region3
  $region8: #{deep_q_forward.5} parent=0 // loop_exit
    _

// kernel: deep_q_forward.6
$region0: #{deep_q_forward.6}
  #allocation0 [shape = 'u32[]', space=smem, size = 0x4, offset = 0x4, fixed_abs, tag = 'smem constant byte address 0x4 - core index']
  #allocation1 [shape = 'u32[144,128]{1,0:T(1,128)}', space=vmem, size = 0x12000, scoped, tag = 'internal scratch']
  %s0 = inlined_call_operand.vmem [shape: bf16[2,400,836], index: 0, kind: input, shape index: {}]
  %s1 = inlined_call_operand.vmem [shape: bf16[32,400], index: 1, kind: input, shape index: {}]
  %s2 = inlined_call_operand.vmem [shape: f32[32,1], index: 2, kind: input, shape index: {}]
  %s3 = inlined_call_operand.vmem [shape: bf16[2,32,836], index: 3, kind: output, shape index: {}]
  %s4 = sld [smem:[#allocation0]]
  $region45: #{deep_q_forward.6} parent=0
    _
  %s6 = ssub.s32 1, %s4
  %s7 = scalar_select 0, %s6, %s4
  loop: start=0, step=1, limit=4
  $region2: #{deep_q_forward.6} parent=0 // loop_pre_header
    _
  $region3: #{deep_q_forward.6} parent=0 // loop_header
    %s9 = sphi 0, %s13
    %p10 = scmp.ge.s32.totalorder %s9, 4
    %s19 = sphi 0, %s21
    %s22 = sphi 0, %s19
    %s23 = sphi 0, %s22
    %s39 = sphi 0, %s23
    %s43 = sphi 0, %s43
    %s45 = sphi 0, %s43
    %s46 = sphi 0, %s45
    %s60 = sphi 0, %s46
    %s64 = sphi 0, %s64
    %s66 = sphi 0, %s64
    %s67 = sphi 0, %s66
    %s81 = sphi 0, %s67
    %s87 = sphi 0, %s89
    %s90 = sphi 0, %s87
    %s91 = sphi 0, %s90
    %s107 = sphi 0, %s91
  $region4: #{deep_q_forward.6} parent=0 // loop_header_branch
    %12 = sbr.rel (%p10) target = $region8
  $region5: #{deep_q_forward.6} parent=0 // loop_body
    %s14 = ssub.s32 %s9, 1
    %s15 = ssub.s32 %s9, 2
    %s16 = sadd.s32 %s9, 1
    %s17 = ssub.s32 %s9, %s16
    %p18 = scmp.eq.s32.totalorder %s17, 0
    %s20 = sadd.s32 %s19, 1
    %s21 = scalar_select %p18, %s19, %s20
    %p24 = pneg %p18
    %p25 = scmp.eq.s32.totalorder %s9, 1
    %p26 = por %p24, %p25
    %p27 = scmp.ne.s32.totalorder %s19, %s22
    %p28 = scmp.eq.s32.totalorder %s9, 0
    %p29 = por %p27, %p28
    %p30 = scmp.ne.s32.totalorder %s19, %s22
    %p31 = scmp.eq.s32.totalorder %s14, 1
    %p32 = por %p30, %p31
    %p33 = scmp.ne.s32.totalorder %s22, %s23
    %p34 = scmp.eq.s32.totalorder %s14, 0
    %p35 = por %p33, %p34
    %p36 = scmp.ne.s32.totalorder %s22, %s23
    %p37 = scmp.eq.s32.totalorder %s15, 1
    %p38 = por %p36, %p37
    %p40 = scmp.ne.s32.totalorder %s23, %s39
    %p41 = scmp.eq.s32.totalorder %s15, 0
    %p42 = por %p40, %p41
    %s44 = sadd.s32 %s43, 1
    %p47 = scmp.eq.s32.totalorder %s9, 1
    %p48 = scmp.ne.s32.totalorder %s43, %s45
    %p49 = scmp.eq.s32.totalorder %s9, 0
    %p50 = por %p48, %p49
    %p51 = scmp.ne.s32.totalorder %s43, %s45
    %p52 = scmp.eq.s32.totalorder %s14, 1
    %p53 = por %p51, %p52
    %p54 = scmp.ne.s32.totalorder %s45, %s46
    %p55 = scmp.eq.s32.totalorder %s14, 0
    %p56 = por %p54, %p55
    %p57 = scmp.ne.s32.totalorder %s45, %s46
    %p58 = scmp.eq.s32.totalorder %s15, 1
    %p59 = por %p57, %p58
    %p61 = scmp.ne.s32.totalorder %s46, %s60
    %p62 = scmp.eq.s32.totalorder %s15, 0
    %p63 = por %p61, %p62
    %s65 = sadd.s32 %s64, 1
    %p68 = scmp.eq.s32.totalorder %s9, 1
    %p69 = scmp.ne.s32.totalorder %s64, %s66
    %p70 = scmp.eq.s32.totalorder %s9, 0
    %p71 = por %p69, %p70
    %p72 = scmp.ne.s32.totalorder %s64, %s66
    %p73 = scmp.eq.s32.totalorder %s14, 1
    %p74 = por %p72, %p73
    %p75 = scmp.ne.s32.totalorder %s66, %s67
    %p76 = scmp.eq.s32.totalorder %s14, 0
    %p77 = por %p75, %p76
    %p78 = scmp.ne.s32.totalorder %s66, %s67
    %p79 = scmp.eq.s32.totalorder %s15, 1
    %p80 = por %p78, %p79
    %p82 = scmp.ne.s32.totalorder %s67, %s81
    %p83 = scmp.eq.s32.totalorder %s15, 0
    %p84 = por %p82, %p83
    %s85 = ssub.s32 %s9, %s16
    %p86 = scmp.eq.s32.totalorder %s85, 0
    %s88 = sadd.s32 %s87, 1
    %s89 = scalar_select %p86, %s87, %s88
    %p92 = pneg %p86
    %p93 = scmp.eq.s32.totalorder %s9, 1
    %p94 = por %p92, %p93
    %p95 = scmp.ne.s32.totalorder %s87, %s90
    %p96 = scmp.eq.s32.totalorder %s9, 0
    %p97 = por %p95, %p96
    %p98 = scmp.ne.s32.totalorder %s87, %s90
    %p99 = scmp.eq.s32.totalorder %s14, 1
    %p100 = por %p98, %p99
    %p101 = scmp.ne.s32.totalorder %s90, %s91
    %p102 = scmp.eq.s32.totalorder %s14, 0
    %p103 = por %p101, %p102
    %p104 = scmp.ne.s32.totalorder %s90, %s91
    %p105 = scmp.eq.s32.totalorder %s15, 1
    %p106 = por %p104, %p105
    %p108 = scmp.ne.s32.totalorder %s91, %s107
    %p109 = scmp.eq.s32.totalorder %s15, 0
    %p110 = por %p108, %p109
    %p111 = scmp.le.s32.totalorder 1, %s9
    %p112 = scmp.lt.s32.totalorder %s9, 3
    %p113 = pnand %p111, %p112
    %p114 = pneg %p113
    // Predicated region
    $region9: #{deep_q_forward.6} parent=5 // pred_check
      _
    $region10: #{deep_q_forward.6} parent=5 // pred_check_branch
      %116 = sbr.rel (%p113) target = $region12
    $region11: #{deep_q_forward.6} parent=5 // pred_region
      %s117 = ssub.s32 %s9, 1
      // Predicated region
      $region13: #{deep_q_forward.6} parent=11 // pred_check
        %p118 = pneg %p56
      $region14: #{deep_q_forward.6} parent=11 // pred_check_branch
        %120 = sbr.rel (%p118) target = $region16
      $region15: #{deep_q_forward.6} parent=11 // pred_region
        _
      $region16: #{deep_q_forward.6} parent=11 // pred_fallthru
        _
      // Predicated region
      $region17: #{deep_q_forward.6} parent=11 // pred_check
        %p121 = pneg %p77
      $region18: #{deep_q_forward.6} parent=11 // pred_check_branch
        %123 = sbr.rel (%p121) target = $region20
      $region19: #{deep_q_forward.6} parent=11 // pred_region
        _
      $region20: #{deep_q_forward.6} parent=11 // pred_fallthru
        _
    $region12: #{deep_q_forward.6} parent=5 // pred_fallthru
      _
    %p124 = scmp.lt.s32.totalorder %s9, 2
    // Predicated region
    $region21: #{deep_q_forward.6} parent=5 // pred_check
      %p125 = pneg %p124
    $region22: #{deep_q_forward.6} parent=5 // pred_check_branch
      %127 = sbr.rel (%p125) target = $region24
    $region23: #{deep_q_forward.6} parent=5 // pred_region
      // Predicated region
      $region25: #{deep_q_forward.6} parent=23 // pred_check
        %p128 = pneg %p29
      $region26: #{deep_q_forward.6} parent=23 // pred_check_branch
        %130 = sbr.rel (%p128) target = $region28
      $region27: #{deep_q_forward.6} parent=23 // pred_region
        %p131 = scmp.lt.s32.totalorder %s9, 1
        %s132 = scalar_select %p131, %s9, 1
        %s133 = smul.addr %s132, 350
        %s134 = smul.addr %s133, 4
        %s135 = scalar_lea.vmem %s0, %s134
      $region28: #{deep_q_forward.6} parent=23 // pred_fallthru
        _
    $region24: #{deep_q_forward.6} parent=5 // pred_fallthru
      _
    %p136 = scmp.le.s32.totalorder 1, %s9
    %p137 = scmp.lt.s32.totalorder %s9, 3
    %p138 = pnand %p136, %p137
    %p139 = pneg %p138
    // Predicated region
    $region29: #{deep_q_forward.6} parent=5 // pred_check
      _
    $region30: #{deep_q_forward.6} parent=5 // pred_check_branch
      %141 = sbr.rel (%p138) target = $region32
    $region31: #{deep_q_forward.6} parent=5 // pred_region
      %s142 = ssub.s32 %s9, 1
      %p143 = scmp.lt.s32.totalorder %s14, 1
      %s144 = scalar_select %p143, %s14, 1
      %s145 = smul.addr %s144, 350
      %s146 = smul.addr %s145, 4
      %s147 = scalar_lea.vmem %s0, %s146
      %p148 = pneg %p35
      %p149 = pneg %p32
      %p150 = pneg %p56
      %p151 = pneg %p53
      %p152 = pneg %p77
      %p153 = pneg %p74
      %p154 = pneg %p103
      %p155 = pneg %p100
      %p156 = scmp.lt.s32.totalorder %s14, 1
      %s157 = scalar_select %p156, %s14, 1
      %s158 = smul.addr %s157, 28
      %s159 = smul.addr %s158, 4
      %s160 = scalar_lea.vmem %s3, %s159
      %p161 = scmp.lt.s32.totalorder %s14, 1
      %s162 = scalar_select %p161, %s14, 1
      %s163 = smul.addr %s162, 350
      %s164 = smul.addr %s163, 4
      %s165 = scalar_lea.vmem %s0, %s164
      %p166 = scmp.lt.s32.totalorder %s14, 1
      %s167 = scalar_select %p166, %s14, 1
      %s168 = smul.addr %s167, 28
      %s169 = smul.addr %s168, 4
      %s170 = scalar_lea.vmem %s3, %s169
      %v172 = vld [vmem:[%s1] sm:$0xff]
      %v173 = vld [vmem:[%s1 + $0x8] sm:$0xff]
      %v174 = vld [vmem:[%s1 + $0x10] sm:$0xff]
      %v175 = vld [vmem:[%s1 + $0x18] sm:$0xff]
      %v176 = vld [vmem:[%s1 + $0x20] sm:$0xff]
      %v177 = vld [vmem:[%s1 + $0x28] sm:$0xff]
      %v178 = vld [vmem:[%s1 + $0x30] sm:$0xff]
      %v179 = vld [vmem:[%s1 + $0x38] sm:$0xff]
      %v180 = vld [vmem:[%s165] sm:$0xff]
      %v181 = vld [vmem:[%s165 + $0x8] sm:$0xff]
      %v182 = vld [vmem:[%s165 + $0x10] sm:$0xff]
      %v183 = vld [vmem:[%s165 + $0x18] sm:$0xf]
      %v184 = vld [vmem:[%s165 + $0x1c] sm:$0xff]
      %v185 = vld [vmem:[%s165 + $0x24] sm:$0xff]
      %v186 = vld [vmem:[%s165 + $0x2c] sm:$0xff]
      %v187 = vld [vmem:[%s165 + $0x34] sm:$0xf]
      %v188 = vld [vmem:[%s165 + $0x38] sm:$0xff]
      %v189 = vld [vmem:[%s165 + $0x40] sm:$0xff]
      %v190 = vld [vmem:[%s165 + $0x48] sm:$0xff]
      %v191 = vld [vmem:[%s165 + $0x50] sm:$0xf]
      %v192 = vld [vmem:[%s165 + $0x54] sm:$0xff]
      %v193 = vld [vmem:[%s165 + $0x5c] sm:$0xff]
      %v194 = vld [vmem:[%s165 + $0x64] sm:$0xff]
      %v195 = vld [vmem:[%s165 + $0x6c] sm:$0xf]
      %v196 = vld [vmem:[%s165 + $0x70] sm:$0xff]
      %v197 = vld [vmem:[%s165 + $0x78] sm:$0xff]
      %v198 = vld [vmem:[%s165 + $0x80] sm:$0xff]
      %v199 = vld [vmem:[%s165 + $0x88] sm:$0xf]
      %v200 = vld [vmem:[%s165 + $0x8c] sm:$0xff]
      %v201 = vld [vmem:[%s165 + $0x94] sm:$0xff]
      %v202 = vld [vmem:[%s165 + $0x9c] sm:$0xff]
      %v203 = vld [vmem:[%s165 + $0xa4] sm:$0xf]
      %v204 = vld [vmem:[%s165 + $0xa8] sm:$0xff]
      %v205 = vld [vmem:[%s165 + $0xb0] sm:$0xff]
      %v206 = vld [vmem:[%s165 + $0xb8] sm:$0xff]
      %v207 = vld [vmem:[%s165 + $0xc0] sm:$0xf]
      %v208 = vld [vmem:[%s165 + $0xc4] sm:$0xff]
      %v209 = vld [vmem:[%s165 + $0xcc] sm:$0xff]
      %v210 = vld [vmem:[%s165 + $0xd4] sm:$0xff]
      %v211 = vld [vmem:[%s165 + $0xdc] sm:$0xf]
      %v212 = vld [vmem:[%s165 + $0xe0] sm:$0xff]
      %v213 = vld [vmem:[%s165 + $0xe8] sm:$0xff]
      %v214 = vld [vmem:[%s165 + $0xf0] sm:$0xff]
      %v215 = vld [vmem:[%s165 + $0xf8] sm:$0xf]
      %v216 = vld [vmem:[%s165 + $0xfc] sm:$0xff]
      %v217 = vld [vmem:[%s165 + $0x104] sm:$0xff]
      %v218 = vld [vmem:[%s165 + $0x10c] sm:$0xff]
      %v219 = vld [vmem:[%s165 + $0x114] sm:$0xf]
      %v220 = vld [vmem:[%s165 + $0x118] sm:$0xff]
      %v221 = vld [vmem:[%s165 + $0x120] sm:$0xff]
      %v222 = vld [vmem:[%s165 + $0x128] sm:$0xff]
      %v223 = vld [vmem:[%s165 + $0x130] sm:$0xf]
      %v224 = vld [vmem:[%s165 + $0x134] sm:$0xff]
      %v225 = vld [vmem:[%s165 + $0x13c] sm:$0xff]
      %v226 = vld [vmem:[%s165 + $0x144] sm:$0xff]
      %v227 = vld [vmem:[%s165 + $0x14c] sm:$0xf]
      %v228 = vld [vmem:[%s165 + $0x150] sm:$0xff]
      %v229 = vld [vmem:[%s165 + $0x158] sm:$0xff]
      %v230 = vld [vmem:[%s165 + $0x160] sm:$0xff]
      %v231 = vld [vmem:[%s165 + $0x168] sm:$0xf]
      %v232 = vld [vmem:[%s165 + $0x16c] sm:$0xff]
      %v233 = vld [vmem:[%s165 + $0x174] sm:$0xff]
      %v234 = vld [vmem:[%s165 + $0x17c] sm:$0xff]
      %v235 = vld [vmem:[%s165 + $0x184] sm:$0xf]
      %v236 = vld [vmem:[%s165 + $0x188] sm:$0xff]
      %v237 = vld [vmem:[%s165 + $0x190] sm:$0xff]
      %v238 = vld [vmem:[%s165 + $0x198] sm:$0xff]
      %v239 = vld [vmem:[%s165 + $0x1a0] sm:$0xf]
      %v240 = vld [vmem:[%s165 + $0x1a4] sm:$0xff]
      %v241 = vld [vmem:[%s165 + $0x1ac] sm:$0xff]
      %v242 = vld [vmem:[%s165 + $0x1b4] sm:$0xff]
      %v243 = vld [vmem:[%s165 + $0x1bc] sm:$0xf]
      %v244 = vld [vmem:[%s165 + $0x1c0] sm:$0xff]
      %v245 = vld [vmem:[%s165 + $0x1c8] sm:$0xff]
      %v246 = vld [vmem:[%s165 + $0x1d0] sm:$0xff]
      %v247 = vld [vmem:[%s165 + $0x1d8] sm:$0xf]
      %v248 = vld [vmem:[%s165 + $0x1dc] sm:$0xff]
      %v249 = vld [vmem:[%s165 + $0x1e4] sm:$0xff]
      %v250 = vld [vmem:[%s165 + $0x1ec] sm:$0xff]
      %v251 = vld [vmem:[%s165 + $0x1f4] sm:$0xf]
      %v252 = vld [vmem:[%s165 + $0x1f8] sm:$0xff]
      %v253 = vld [vmem:[%s165 + $0x200] sm:$0xff]
      %v254 = vld [vmem:[%s165 + $0x208] sm:$0xff]
      %v255 = vld [vmem:[%s165 + $0x210] sm:$0xf]
      %v256 = vld [vmem:[%s165 + $0x214] sm:$0xff]
      %v257 = vld [vmem:[%s165 + $0x21c] sm:$0xff]
      %v258 = vld [vmem:[%s165 + $0x224] sm:$0xff]
      %v259 = vld [vmem:[%s165 + $0x22c] sm:$0xf]
      %v260 = vld [vmem:[%s165 + $0x230] sm:$0xff]
      %v261 = vld [vmem:[%s165 + $0x238] sm:$0xff]
      %v262 = vld [vmem:[%s165 + $0x240] sm:$0xff]
      %v263 = vld [vmem:[%s165 + $0x248] sm:$0xf]
      %v264 = vld [vmem:[%s165 + $0x24c] sm:$0xff]
      %v265 = vld [vmem:[%s165 + $0x254] sm:$0xff]
      %v266 = vld [vmem:[%s165 + $0x25c] sm:$0xff]
      %v267 = vld [vmem:[%s165 + $0x264] sm:$0xf]
      %v268 = vld [vmem:[%s165 + $0x268] sm:$0xff]
      %v269 = vld [vmem:[%s165 + $0x270] sm:$0xff]
      %v270 = vld [vmem:[%s165 + $0x278] sm:$0xff]
      %v271 = vld [vmem:[%s165 + $0x280] sm:$0xf]
      %v272 = vld [vmem:[%s165 + $0x284] sm:$0xff]
      %v273 = vld [vmem:[%s165 + $0x28c] sm:$0xff]
      %v274 = vld [vmem:[%s165 + $0x294] sm:$0xff]
      %v275 = vld [vmem:[%s165 + $0x29c] sm:$0xf]
      %v276 = vld [vmem:[%s165 + $0x2a0] sm:$0xff]
      %v277 = vld [vmem:[%s165 + $0x2a8] sm:$0xff]
      %v278 = vld [vmem:[%s165 + $0x2b0] sm:$0xff]
      %v279 = vld [vmem:[%s165 + $0x2b8] sm:$0xf]
      %v280 = vld [vmem:[%s165 + $0x2bc] sm:$0xff]
      %v281 = vld [vmem:[%s165 + $0x2c4] sm:$0xff]
      %v282 = vld [vmem:[%s165 + $0x2cc] sm:$0xff]
      %v283 = vld [vmem:[%s165 + $0x2d4] sm:$0xf]
      %v284 = vld [vmem:[%s165 + $0x2d8] sm:$0xff]
      %v285 = vld [vmem:[%s165 + $0x2e0] sm:$0xff]
      %v286 = vld [vmem:[%s165 + $0x2e8] sm:$0xff]
      %v287 = vld [vmem:[%s165 + $0x2f0] sm:$0xf]
      %v288 = vld [vmem:[%s165 + $0x2f4] sm:$0xff]
      %v289 = vld [vmem:[%s165 + $0x2fc] sm:$0xff]
      %v290 = vld [vmem:[%s165 + $0x304] sm:$0xff]
      %v291 = vld [vmem:[%s165 + $0x30c] sm:$0xf]
      %v292 = vld [vmem:[%s165 + $0x310] sm:$0xff]
      %v293 = vld [vmem:[%s165 + $0x318] sm:$0xff]
      %v294 = vld [vmem:[%s165 + $0x320] sm:$0xff]
      %v295 = vld [vmem:[%s165 + $0x328] sm:$0xf]
      %v296 = vld [vmem:[%s165 + $0x32c] sm:$0xff]
      %v297 = vld [vmem:[%s165 + $0x334] sm:$0xff]
      %v298 = vld [vmem:[%s165 + $0x33c] sm:$0xff]
      %v299 = vld [vmem:[%s165 + $0x344] sm:$0xf]
      %v300 = vld [vmem:[%s165 + $0x348] sm:$0xff]
      %v301 = vld [vmem:[%s165 + $0x350] sm:$0xff]
      %v302 = vld [vmem:[%s165 + $0x358] sm:$0xff]
      %v303 = vld [vmem:[%s165 + $0x360] sm:$0xf]
      %v304 = vld [vmem:[%s165 + $0x364] sm:$0xff]
      %v305 = vld [vmem:[%s165 + $0x36c] sm:$0xff]
      %v306 = vld [vmem:[%s165 + $0x374] sm:$0xff]
      %v307 = vld [vmem:[%s165 + $0x37c] sm:$0xf]
      %v308 = vld [vmem:[%s165 + $0x380] sm:$0xff]
      %v309 = vld [vmem:[%s165 + $0x388] sm:$0xff]
      %v310 = vld [vmem:[%s165 + $0x390] sm:$0xff]
      %v311 = vld [vmem:[%s165 + $0x398] sm:$0xf]
      %v312 = vld [vmem:[%s165 + $0x39c] sm:$0xff]
      %v313 = vld [vmem:[%s165 + $0x3a4] sm:$0xff]
      %v314 = vld [vmem:[%s165 + $0x3ac] sm:$0xff]
      %v315 = vld [vmem:[%s165 + $0x3b4] sm:$0xf]
      %v316 = vld [vmem:[%s165 + $0x3b8] sm:$0xff]
      %v317 = vld [vmem:[%s165 + $0x3c0] sm:$0xff]
      %v318 = vld [vmem:[%s165 + $0x3c8] sm:$0xff]
      %v319 = vld [vmem:[%s165 + $0x3d0] sm:$0xf]
      %v320 = vld [vmem:[%s165 + $0x3d4] sm:$0xff]
      %v321 = vld [vmem:[%s165 + $0x3dc] sm:$0xff]
      %v322 = vld [vmem:[%s165 + $0x3e4] sm:$0xff]
      %v323 = vld [vmem:[%s165 + $0x3ec] sm:$0xf]
      %v324 = vld [vmem:[%s165 + $0x3f0] sm:$0xff]
      %v325 = vld [vmem:[%s165 + $0x3f8] sm:$0xff]
      %v326 = vld [vmem:[%s165 + $0x400] sm:$0xff]
      %v327 = vld [vmem:[%s165 + $0x408] sm:$0xf]
      %v328 = vld [vmem:[%s165 + $0x40c] sm:$0xff]
      %v329 = vld [vmem:[%s165 + $0x414] sm:$0xff]
      %v330 = vld [vmem:[%s165 + $0x41c] sm:$0xff]
      %v331 = vld [vmem:[%s165 + $0x424] sm:$0xf]
      %v332 = vld [vmem:[%s165 + $0x428] sm:$0xff]
      %v333 = vld [vmem:[%s165 + $0x430] sm:$0xff]
      %v334 = vld [vmem:[%s165 + $0x438] sm:$0xff]
      %v335 = vld [vmem:[%s165 + $0x440] sm:$0xf]
      %v336 = vld [vmem:[%s165 + $0x444] sm:$0xff]
      %v337 = vld [vmem:[%s165 + $0x44c] sm:$0xff]
      %v338 = vld [vmem:[%s165 + $0x454] sm:$0xff]
      %v339 = vld [vmem:[%s165 + $0x45c] sm:$0xf]
      %v340 = vld [vmem:[%s165 + $0x460] sm:$0xff]
      %v341 = vld [vmem:[%s165 + $0x468] sm:$0xff]
      %v342 = vld [vmem:[%s165 + $0x470] sm:$0xff]
      %v343 = vld [vmem:[%s165 + $0x478] sm:$0xf]
      %v344 = vld [vmem:[%s165 + $0x47c] sm:$0xff]
      %v345 = vld [vmem:[%s165 + $0x484] sm:$0xff]
      %v346 = vld [vmem:[%s165 + $0x48c] sm:$0xff]
      %v347 = vld [vmem:[%s165 + $0x494] sm:$0xf]
      %v348 = vld [vmem:[%s165 + $0x498] sm:$0xff]
      %v349 = vld [vmem:[%s165 + $0x4a0] sm:$0xff]
      %v350 = vld [vmem:[%s165 + $0x4a8] sm:$0xff]
      %v351 = vld [vmem:[%s165 + $0x4b0] sm:$0xf]
      %v352 = vld [vmem:[%s165 + $0x4b4] sm:$0xff]
      %v353 = vld [vmem:[%s165 + $0x4bc] sm:$0xff]
      %v354 = vld [vmem:[%s165 + $0x4c4] sm:$0xff]
      %v355 = vld [vmem:[%s165 + $0x4cc] sm:$0xf]
      %v356 = vld [vmem:[%s165 + $0x4d0] sm:$0xff]
      %v357 = vld [vmem:[%s165 + $0x4d8] sm:$0xff]
      %v358 = vld [vmem:[%s165 + $0x4e0] sm:$0xff]
      %v359 = vld [vmem:[%s165 + $0x4e8] sm:$0xf]
      %v360 = vld [vmem:[%s165 + $0x4ec] sm:$0xff]
      %v361 = vld [vmem:[%s165 + $0x4f4] sm:$0xff]
      %v362 = vld [vmem:[%s165 + $0x4fc] sm:$0xff]
      %v363 = vld [vmem:[%s165 + $0x504] sm:$0xf]
      %v364 = vld [vmem:[%s165 + $0x508] sm:$0xff]
      %v365 = vld [vmem:[%s165 + $0x510] sm:$0xff]
      %v366 = vld [vmem:[%s165 + $0x518] sm:$0xff]
      %v367 = vld [vmem:[%s165 + $0x520] sm:$0xf]
      %v368 = vld [vmem:[%s165 + $0x524] sm:$0xff]
      %v369 = vld [vmem:[%s165 + $0x52c] sm:$0xff]
      %v370 = vld [vmem:[%s165 + $0x534] sm:$0xff]
      %v371 = vld [vmem:[%s165 + $0x53c] sm:$0xf]
      %v372 = vld [vmem:[%s165 + $0x540] sm:$0xff]
      %v373 = vld [vmem:[%s165 + $0x548] sm:$0xff]
      %v374 = vld [vmem:[%s165 + $0x550] sm:$0xff]
      %v375 = vld [vmem:[%s165 + $0x558] sm:$0xf]
      %v376 = vld [vmem:[%s165 + $0x55c] sm:$0xff]
      %v377 = vld [vmem:[%s165 + $0x564] sm:$0xff]
      %v378 = vld [vmem:[%s165 + $0x56c] sm:$0xff]
      %v379 = vld [vmem:[%s165 + $0x574] sm:$0xf]
      %v380 = vld [vmem:[%s2] sm:$0xff]
      %v381 = vld [vmem:[%s2 + $0x8] sm:$0xff]
      %v382 = vld [vmem:[%s2 + $0x10] sm:$0xff]
      %v383 = vld [vmem:[%s2 + $0x18] sm:$0xff]
      %385 = vset.pattern.permute.xlu0 0
      %386 = vperm.xlu0 %385, %v380
      %v387 = vpop.permute.xlu0 %386
      %390 = vset.pattern.permute.xlu0 0
      %391 = vperm.xlu0 %390, %v381
      %v392 = vpop.permute.xlu0 %391
      %395 = vset.pattern.permute.xlu0 0
      %396 = vperm.xlu0 %395, %v382
      %v397 = vpop.permute.xlu0 %396
      %400 = vset.pattern.permute.xlu0 0
      %401 = vperm.xlu0 %400, %v383
      %v402 = vpop.permute.xlu0 %401
      %v412 = vunpack.c.l.b16 %v172
      %v413 = vunpack.c.h.b16 %v172
      %v414 = vunpack.c.l.b16 %v173
      %v415 = vunpack.c.h.b16 %v173
      %v416 = vunpack.c.l.b16 %v174
      %v417 = vunpack.c.h.b16 %v174
      %v418 = vunpack.c.l.b16 %v175
      %v419 = vunpack.c.h.b16 %v175
      %v420 = vunpack.c.l.b16 %v176
      %v421 = vunpack.c.h.b16 %v176
      %v422 = vunpack.c.l.b16 %v177
      %v423 = vunpack.c.h.b16 %v177
      %v424 = vunpack.c.l.b16 %v178
      %v425 = vunpack.c.h.b16 %v178
      %v426 = vunpack.c.l.b16 %v179
      %v427 = vunpack.c.h.b16 %v179
      %v428 = vpack.c.b16 %v416, %v412
      %v429 = vpack.c.b16 %v417, %v413
      %v430 = vpack.c.b16 %v418, %v414
      %v431 = vpack.c.b16 %v419, %v415
      %v432 = vpack.c.b16 %v424, %v420
      %v433 = vpack.c.b16 %v425, %v421
      %v434 = vpack.c.b16 %v426, %v422
      %v435 = vpack.c.b16 %v427, %v423
      %v642 = vunpack.c.l.b16 %v180
      %v643 = vunpack.c.h.b16 %v180
      %v644 = vunpack.c.l.b16 %v181
      %v645 = vunpack.c.h.b16 %v181
      %v646 = vunpack.c.l.b16 %v182
      %v647 = vunpack.c.h.b16 %v182
      %v648 = vunpack.c.l.b16 %v183
      %v649 = vunpack.c.l.b16 %v184
      %v650 = vunpack.c.h.b16 %v184
      %v651 = vunpack.c.l.b16 %v185
      %v652 = vunpack.c.h.b16 %v185
      %v653 = vunpack.c.l.b16 %v186
      %v654 = vunpack.c.h.b16 %v186
      %v655 = vunpack.c.l.b16 %v187
      %v656 = vunpack.c.l.b16 %v188
      %v657 = vunpack.c.h.b16 %v188
      %v658 = vunpack.c.l.b16 %v189
      %v659 = vunpack.c.h.b16 %v189
      %v660 = vunpack.c.l.b16 %v190
      %v661 = vunpack.c.h.b16 %v190
      %v662 = vunpack.c.l.b16 %v191
      %v663 = vunpack.c.l.b16 %v192
      %v664 = vunpack.c.h.b16 %v192
      %v665 = vunpack.c.l.b16 %v193
      %v666 = vunpack.c.h.b16 %v193
      %v667 = vunpack.c.l.b16 %v194
      %v668 = vunpack.c.h.b16 %v194
      %v669 = vunpack.c.l.b16 %v195
      %v670 = vunpack.c.l.b16 %v196
      %v671 = vunpack.c.h.b16 %v196
      %v672 = vunpack.c.l.b16 %v197
      %v673 = vunpack.c.h.b16 %v197
      %v674 = vunpack.c.l.b16 %v198
      %v675 = vunpack.c.h.b16 %v198
      %v676 = vunpack.c.l.b16 %v199
      %v677 = vunpack.c.l.b16 %v200
      %v678 = vunpack.c.h.b16 %v200
      %v679 = vunpack.c.l.b16 %v201
      %v680 = vunpack.c.h.b16 %v201
      %v681 = vunpack.c.l.b16 %v202
      %v682 = vunpack.c.h.b16 %v202
      %v683 = vunpack.c.l.b16 %v203
      %v684 = vunpack.c.l.b16 %v204
      %v685 = vunpack.c.h.b16 %v204
      %v686 = vunpack.c.l.b16 %v205
      %v687 = vunpack.c.h.b16 %v205
      %v688 = vunpack.c.l.b16 %v206
      %v689 = vunpack.c.h.b16 %v206
      %v690 = vunpack.c.l.b16 %v207
      %v691 = vunpack.c.l.b16 %v208
      %v692 = vunpack.c.h.b16 %v208
      %v693 = vunpack.c.l.b16 %v209
      %v694 = vunpack.c.h.b16 %v209
      %v695 = vunpack.c.l.b16 %v210
      %v696 = vunpack.c.h.b16 %v210
      %v697 = vunpack.c.l.b16 %v211
      %v698 = vunpack.c.l.b16 %v212
      %v699 = vunpack.c.h.b16 %v212
      %v700 = vunpack.c.l.b16 %v213
      %v701 = vunpack.c.h.b16 %v213
      %v702 = vunpack.c.l.b16 %v214
      %v703 = vunpack.c.h.b16 %v214
      %v704 = vunpack.c.l.b16 %v215
      %v705 = vunpack.c.l.b16 %v216
      %v706 = vunpack.c.h.b16 %v216
      %v707 = vunpack.c.l.b16 %v217
      %v708 = vunpack.c.h.b16 %v217
      %v709 = vunpack.c.l.b16 %v218
      %v710 = vunpack.c.h.b16 %v218
      %v711 = vunpack.c.l.b16 %v219
      %v712 = vunpack.c.l.b16 %v220
      %v713 = vunpack.c.h.b16 %v220
      %v714 = vunpack.c.l.b16 %v221
      %v715 = vunpack.c.h.b16 %v221
      %v716 = vunpack.c.l.b16 %v222
      %v717 = vunpack.c.h.b16 %v222
      %v718 = vunpack.c.l.b16 %v223
      %v719 = vunpack.c.l.b16 %v224
      %v720 = vunpack.c.h.b16 %v224
      %v721 = vunpack.c.l.b16 %v225
      %v722 = vunpack.c.h.b16 %v225
      %v723 = vunpack.c.l.b16 %v226
      %v724 = vunpack.c.h.b16 %v226
      %v725 = vunpack.c.l.b16 %v227
      %v726 = vunpack.c.l.b16 %v228
      %v727 = vunpack.c.h.b16 %v228
      %v728 = vunpack.c.l.b16 %v229
      %v729 = vunpack.c.h.b16 %v229
      %v730 = vunpack.c.l.b16 %v230
      %v731 = vunpack.c.h.b16 %v230
      %v732 = vunpack.c.l.b16 %v231
      %v733 = vunpack.c.l.b16 %v232
      %v734 = vunpack.c.h.b16 %v232
      %v735 = vunpack.c.l.b16 %v233
      %v736 = vunpack.c.h.b16 %v233
      %v737 = vunpack.c.l.b16 %v234
      %v738 = vunpack.c.h.b16 %v234
      %v739 = vunpack.c.l.b16 %v235
      %v740 = vunpack.c.l.b16 %v236
      %v741 = vunpack.c.h.b16 %v236
      %v742 = vunpack.c.l.b16 %v237
      %v743 = vunpack.c.h.b16 %v237
      %v744 = vunpack.c.l.b16 %v238
      %v745 = vunpack.c.h.b16 %v238
      %v746 = vunpack.c.l.b16 %v239
      %v747 = vunpack.c.l.b16 %v240
      %v748 = vunpack.c.h.b16 %v240
      %v749 = vunpack.c.l.b16 %v241
      %v750 = vunpack.c.h.b16 %v241
      %v751 = vunpack.c.l.b16 %v242
      %v752 = vunpack.c.h.b16 %v242
      %v753 = vunpack.c.l.b16 %v243
      %v754 = vunpack.c.l.b16 %v244
      %v755 = vunpack.c.h.b16 %v244
      %v756 = vunpack.c.l.b16 %v245
      %v757 = vunpack.c.h.b16 %v245
      %v758 = vunpack.c.l.b16 %v246
      %v759 = vunpack.c.h.b16 %v246
      %v760 = vunpack.c.l.b16 %v247
      %v761 = vunpack.c.l.b16 %v248
      %v762 = vunpack.c.h.b16 %v248
      %v763 = vunpack.c.l.b16 %v249
      %v764 = vunpack.c.h.b16 %v249
      %v765 = vunpack.c.l.b16 %v250
      %v766 = vunpack.c.h.b16 %v250
      %v767 = vunpack.c.l.b16 %v251
      %v768 = vunpack.c.l.b16 %v252
      %v769 = vunpack.c.h.b16 %v252
      %v770 = vunpack.c.l.b16 %v253
      %v771 = vunpack.c.h.b16 %v253
      %v772 = vunpack.c.l.b16 %v254
      %v773 = vunpack.c.h.b16 %v254
      %v774 = vunpack.c.l.b16 %v255
      %v775 = vunpack.c.l.b16 %v256
      %v776 = vunpack.c.h.b16 %v256
      %v777 = vunpack.c.l.b16 %v257
      %v778 = vunpack.c.h.b16 %v257
      %v779 = vunpack.c.l.b16 %v258
      %v780 = vunpack.c.h.b16 %v258
      %v781 = vunpack.c.l.b16 %v259
      %v782 = vunpack.c.l.b16 %v260
      %v783 = vunpack.c.h.b16 %v260
      %v784 = vunpack.c.l.b16 %v261
      %v785 = vunpack.c.h.b16 %v261
      %v786 = vunpack.c.l.b16 %v262
      %v787 = vunpack.c.h.b16 %v262
      %v788 = vunpack.c.l.b16 %v263
      %v789 = vunpack.c.l.b16 %v264
      %v790 = vunpack.c.h.b16 %v264
      %v791 = vunpack.c.l.b16 %v265
      %v792 = vunpack.c.h.b16 %v265
      %v793 = vunpack.c.l.b16 %v266
      %v794 = vunpack.c.h.b16 %v266
      %v795 = vunpack.c.l.b16 %v267
      %v796 = vunpack.c.l.b16 %v268
      %v797 = vunpack.c.h.b16 %v268
      %v798 = vunpack.c.l.b16 %v269
      %v799 = vunpack.c.h.b16 %v269
      %v800 = vunpack.c.l.b16 %v270
      %v801 = vunpack.c.h.b16 %v270
      %v802 = vunpack.c.l.b16 %v271
      %v803 = vunpack.c.l.b16 %v272
      %v804 = vunpack.c.h.b16 %v272
      %v805 = vunpack.c.l.b16 %v273
      %v806 = vunpack.c.h.b16 %v273
      %v807 = vunpack.c.l.b16 %v274
      %v808 = vunpack.c.h.b16 %v274
      %v809 = vunpack.c.l.b16 %v275
      %v810 = vunpack.c.l.b16 %v276
      %v811 = vunpack.c.h.b16 %v276
      %v812 = vunpack.c.l.b16 %v277
      %v813 = vunpack.c.h.b16 %v277
      %v814 = vunpack.c.l.b16 %v278
      %v815 = vunpack.c.h.b16 %v278
      %v816 = vunpack.c.l.b16 %v279
      %v817 = vunpack.c.l.b16 %v280
      %v818 = vunpack.c.h.b16 %v280
      %v819 = vunpack.c.l.b16 %v281
      %v820 = vunpack.c.h.b16 %v281
      %v821 = vunpack.c.l.b16 %v282
      %v822 = vunpack.c.h.b16 %v282
      %v823 = vunpack.c.l.b16 %v283
      %v824 = vunpack.c.l.b16 %v284
      %v825 = vunpack.c.h.b16 %v284
      %v826 = vunpack.c.l.b16 %v285
      %v827 = vunpack.c.h.b16 %v285
      %v828 = vunpack.c.l.b16 %v286
      %v829 = vunpack.c.h.b16 %v286
      %v830 = vunpack.c.l.b16 %v287
      %v831 = vunpack.c.l.b16 %v288
      %v832 = vunpack.c.h.b16 %v288
      %v833 = vunpack.c.l.b16 %v289
      %v834 = vunpack.c.h.b16 %v289
      %v835 = vunpack.c.l.b16 %v290
      %v836 = vunpack.c.h.b16 %v290
      %v837 = vunpack.c.l.b16 %v291
      %v838 = vunpack.c.l.b16 %v292
      %v839 = vunpack.c.h.b16 %v292
      %v840 = vunpack.c.l.b16 %v293
      %v841 = vunpack.c.h.b16 %v293
      %v842 = vunpack.c.l.b16 %v294
      %v843 = vunpack.c.h.b16 %v294
      %v844 = vunpack.c.l.b16 %v295
      %v845 = vunpack.c.l.b16 %v296
      %v846 = vunpack.c.h.b16 %v296
      %v847 = vunpack.c.l.b16 %v297
      %v848 = vunpack.c.h.b16 %v297
      %v849 = vunpack.c.l.b16 %v298
      %v850 = vunpack.c.h.b16 %v298
      %v851 = vunpack.c.l.b16 %v299
      %v852 = vunpack.c.l.b16 %v300
      %v853 = vunpack.c.h.b16 %v300
      %v854 = vunpack.c.l.b16 %v301
      %v855 = vunpack.c.h.b16 %v301
      %v856 = vunpack.c.l.b16 %v302
      %v857 = vunpack.c.h.b16 %v302
      %v858 = vunpack.c.l.b16 %v303
      %v859 = vunpack.c.l.b16 %v304
      %v860 = vunpack.c.h.b16 %v304
      %v861 = vunpack.c.l.b16 %v305
      %v862 = vunpack.c.h.b16 %v305
      %v863 = vunpack.c.l.b16 %v306
      %v864 = vunpack.c.h.b16 %v306
      %v865 = vunpack.c.l.b16 %v307
      %v866 = vunpack.c.l.b16 %v308
      %v867 = vunpack.c.h.b16 %v308
      %v868 = vunpack.c.l.b16 %v309
      %v869 = vunpack.c.h.b16 %v309
      %v870 = vunpack.c.l.b16 %v310
      %v871 = vunpack.c.h.b16 %v310
      %v872 = vunpack.c.l.b16 %v311
      %v873 = vunpack.c.l.b16 %v312
      %v874 = vunpack.c.h.b16 %v312
      %v875 = vunpack.c.l.b16 %v313
      %v876 = vunpack.c.h.b16 %v313
      %v877 = vunpack.c.l.b16 %v314
      %v878 = vunpack.c.h.b16 %v314
      %v879 = vunpack.c.l.b16 %v315
      %v880 = vunpack.c.l.b16 %v316
      %v881 = vunpack.c.h.b16 %v316
      %v882 = vunpack.c.l.b16 %v317
      %v883 = vunpack.c.h.b16 %v317
      %v884 = vunpack.c.l.b16 %v318
      %v885 = vunpack.c.h.b16 %v318
      %v886 = vunpack.c.l.b16 %v319
      %v887 = vunpack.c.l.b16 %v320
      %v888 = vunpack.c.h.b16 %v320
      %v889 = vunpack.c.l.b16 %v321
      %v890 = vunpack.c.h.b16 %v321
      %v891 = vunpack.c.l.b16 %v322
      %v892 = vunpack.c.h.b16 %v322
      %v893 = vunpack.c.l.b16 %v323
      %v894 = vunpack.c.l.b16 %v324
      %v895 = vunpack.c.h.b16 %v324
      %v896 = vunpack.c.l.b16 %v325
      %v897 = vunpack.c.h.b16 %v325
      %v898 = vunpack.c.l.b16 %v326
      %v899 = vunpack.c.h.b16 %v326
      %v900 = vunpack.c.l.b16 %v327
      %v901 = vunpack.c.l.b16 %v328
      %v902 = vunpack.c.h.b16 %v328
      %v903 = vunpack.c.l.b16 %v329
      %v904 = vunpack.c.h.b16 %v329
      %v905 = vunpack.c.l.b16 %v330
      %v906 = vunpack.c.h.b16 %v330
      %v907 = vunpack.c.l.b16 %v331
      %v908 = vunpack.c.l.b16 %v332
      %v909 = vunpack.c.h.b16 %v332
      %v910 = vunpack.c.l.b16 %v333
      %v911 = vunpack.c.h.b16 %v333
      %v912 = vunpack.c.l.b16 %v334
      %v913 = vunpack.c.h.b16 %v334
      %v914 = vunpack.c.l.b16 %v335
      %v915 = vunpack.c.l.b16 %v336
      %v916 = vunpack.c.h.b16 %v336
      %v917 = vunpack.c.l.b16 %v337
      %v918 = vunpack.c.h.b16 %v337
      %v919 = vunpack.c.l.b16 %v338
      %v920 = vunpack.c.h.b16 %v338
      %v921 = vunpack.c.l.b16 %v339
      %v922 = vunpack.c.l.b16 %v340
      %v923 = vunpack.c.h.b16 %v340
      %v924 = vunpack.c.l.b16 %v341
      %v925 = vunpack.c.h.b16 %v341
      %v926 = vunpack.c.l.b16 %v342
      %v927 = vunpack.c.h.b16 %v342
      %v928 = vunpack.c.l.b16 %v343
      %v929 = vunpack.c.l.b16 %v344
      %v930 = vunpack.c.h.b16 %v344
      %v931 = vunpack.c.l.b16 %v345
      %v932 = vunpack.c.h.b16 %v345
      %v933 = vunpack.c.l.b16 %v346
      %v934 = vunpack.c.h.b16 %v346
      %v935 = vunpack.c.l.b16 %v347
      %v936 = vunpack.c.l.b16 %v348
      %v937 = vunpack.c.h.b16 %v348
      %v938 = vunpack.c.l.b16 %v349
      %v939 = vunpack.c.h.b16 %v349
      %v940 = vunpack.c.l.b16 %v350
      %v941 = vunpack.c.h.b16 %v350
      %v942 = vunpack.c.l.b16 %v351
      %v943 = vunpack.c.l.b16 %v352
      %v944 = vunpack.c.h.b16 %v352
      %v945 = vunpack.c.l.b16 %v353
      %v946 = vunpack.c.h.b16 %v353
      %v947 = vunpack.c.l.b16 %v354
      %v948 = vunpack.c.h.b16 %v354
      %v949 = vunpack.c.l.b16 %v355
      %v950 = vunpack.c.l.b16 %v356
      %v951 = vunpack.c.h.b16 %v356
      %v952 = vunpack.c.l.b16 %v357
      %v953 = vunpack.c.h.b16 %v357
      %v954 = vunpack.c.l.b16 %v358
      %v955 = vunpack.c.h.b16 %v358
      %v956 = vunpack.c.l.b16 %v359
      %v957 = vunpack.c.l.b16 %v360
      %v958 = vunpack.c.h.b16 %v360
      %v959 = vunpack.c.l.b16 %v361
      %v960 = vunpack.c.h.b16 %v361
      %v961 = vunpack.c.l.b16 %v362
      %v962 = vunpack.c.h.b16 %v362
      %v963 = vunpack.c.l.b16 %v363
      %v964 = vunpack.c.l.b16 %v364
      %v965 = vunpack.c.h.b16 %v364
      %v966 = vunpack.c.l.b16 %v365
      %v967 = vunpack.c.h.b16 %v365
      %v968 = vunpack.c.l.b16 %v366
      %v969 = vunpack.c.h.b16 %v366
      %v970 = vunpack.c.l.b16 %v367
      %v971 = vunpack.c.l.b16 %v368
      %v972 = vunpack.c.h.b16 %v368
      %v973 = vunpack.c.l.b16 %v369
      %v974 = vunpack.c.h.b16 %v369
      %v975 = vunpack.c.l.b16 %v370
      %v976 = vunpack.c.h.b16 %v370
      %v977 = vunpack.c.l.b16 %v371
      %v978 = vunpack.c.l.b16 %v372
      %v979 = vunpack.c.h.b16 %v372
      %v980 = vunpack.c.l.b16 %v373
      %v981 = vunpack.c.h.b16 %v373
      %v982 = vunpack.c.l.b16 %v374
      %v983 = vunpack.c.h.b16 %v374
      %v984 = vunpack.c.l.b16 %v375
      %v985 = vunpack.c.l.b16 %v376
      %v986 = vunpack.c.h.b16 %v376
      %v987 = vunpack.c.l.b16 %v377
      %v988 = vunpack.c.h.b16 %v377
      %v989 = vunpack.c.l.b16 %v378
      %v990 = vunpack.c.h.b16 %v378
      %v991 = vunpack.c.l.b16 %v379
      %v992 = vpack.c.b16 %v649, %v642
      %v993 = vpack.c.b16 %v650, %v643
      %v994 = vpack.c.b16 %v651, %v644
      %v995 = vpack.c.b16 %v652, %v645
      %v996 = vpack.c.b16 %v653, %v646
      %v997 = vpack.c.b16 %v654, %v647
      %v998 = vpack.c.b16 %v655, %v648
      %v999 = vpack.c.b16 %v663, %v656
      %v1000 = vpack.c.b16 %v664, %v657
      %v1001 = vpack.c.b16 %v665, %v658
      %v1002 = vpack.c.b16 %v666, %v659
      %v1003 = vpack.c.b16 %v667, %v660
      %v1004 = vpack.c.b16 %v668, %v661
      %v1005 = vpack.c.b16 %v669, %v662
      %v1006 = vpack.c.b16 %v677, %v670
      %v1007 = vpack.c.b16 %v678, %v671
      %v1008 = vpack.c.b16 %v679, %v672
      %v1009 = vpack.c.b16 %v680, %v673
      %v1010 = vpack.c.b16 %v681, %v674
      %v1011 = vpack.c.b16 %v682, %v675
      %v1012 = vpack.c.b16 %v683, %v676
      %v1013 = vpack.c.b16 %v691, %v684
      %v1014 = vpack.c.b16 %v692, %v685
      %v1015 = vpack.c.b16 %v693, %v686
      %v1016 = vpack.c.b16 %v694, %v687
      %v1017 = vpack.c.b16 %v695, %v688
      %v1018 = vpack.c.b16 %v696, %v689
      %v1019 = vpack.c.b16 %v697, %v690
      %v1020 = vpack.c.b16 %v705, %v698
      %v1021 = vpack.c.b16 %v706, %v699
      %v1022 = vpack.c.b16 %v707, %v700
      %v1023 = vpack.c.b16 %v708, %v701
      %v1024 = vpack.c.b16 %v709, %v702
      %v1025 = vpack.c.b16 %v710, %v703
      %v1026 = vpack.c.b16 %v711, %v704
      %v1027 = vpack.c.b16 %v719, %v712
      %v1028 = vpack.c.b16 %v720, %v713
      %v1029 = vpack.c.b16 %v721, %v714
      %v1030 = vpack.c.b16 %v722, %v715
      %v1031 = vpack.c.b16 %v723, %v716
      %v1032 = vpack.c.b16 %v724, %v717
      %v1033 = vpack.c.b16 %v725, %v718
      %v1034 = vpack.c.b16 %v733, %v726
      %v1035 = vpack.c.b16 %v734, %v727
      %v1036 = vpack.c.b16 %v735, %v728
      %v1037 = vpack.c.b16 %v736, %v729
      %v1038 = vpack.c.b16 %v737, %v730
      %v1039 = vpack.c.b16 %v738, %v731
      %v1040 = vpack.c.b16 %v739, %v732
      %v1041 = vpack.c.b16 %v747, %v740
      %v1042 = vpack.c.b16 %v748, %v741
      %v1043 = vpack.c.b16 %v749, %v742
      %v1044 = vpack.c.b16 %v750, %v743
      %v1045 = vpack.c.b16 %v751, %v744
      %v1046 = vpack.c.b16 %v752, %v745
      %v1047 = vpack.c.b16 %v753, %v746
      %v1048 = vpack.c.b16 %v761, %v754
      %v1049 = vpack.c.b16 %v762, %v755
      %v1050 = vpack.c.b16 %v763, %v756
      %v1051 = vpack.c.b16 %v764, %v757
      %v1052 = vpack.c.b16 %v765, %v758
      %v1053 = vpack.c.b16 %v766, %v759
      %v1054 = vpack.c.b16 %v767, %v760
      %v1055 = vpack.c.b16 %v775, %v768
      %v1056 = vpack.c.b16 %v776, %v769
      %v1057 = vpack.c.b16 %v777, %v770
      %v1058 = vpack.c.b16 %v778, %v771
      %v1059 = vpack.c.b16 %v779, %v772
      %v1060 = vpack.c.b16 %v780, %v773
      %v1061 = vpack.c.b16 %v781, %v774
      %v1062 = vpack.c.b16 %v789, %v782
      %v1063 = vpack.c.b16 %v790, %v783
      %v1064 = vpack.c.b16 %v791, %v784
      %v1065 = vpack.c.b16 %v792, %v785
      %v1066 = vpack.c.b16 %v793, %v786
      %v1067 = vpack.c.b16 %v794, %v787
      %v1068 = vpack.c.b16 %v795, %v788
      %v1069 = vpack.c.b16 %v803, %v796
      %v1070 = vpack.c.b16 %v804, %v797
      %v1071 = vpack.c.b16 %v805, %v798
      %v1072 = vpack.c.b16 %v806, %v799
      %v1073 = vpack.c.b16 %v807, %v800
      %v1074 = vpack.c.b16 %v808, %v801
      %v1075 = vpack.c.b16 %v809, %v802
      %v1076 = vpack.c.b16 %v817, %v810
      %v1077 = vpack.c.b16 %v818, %v811
      %v1078 = vpack.c.b16 %v819, %v812
      %v1079 = vpack.c.b16 %v820, %v813
      %v1080 = vpack.c.b16 %v821, %v814
      %v1081 = vpack.c.b16 %v822, %v815
      %v1082 = vpack.c.b16 %v823, %v816
      %v1083 = vpack.c.b16 %v831, %v824
      %v1084 = vpack.c.b16 %v832, %v825
      %v1085 = vpack.c.b16 %v833, %v826
      %v1086 = vpack.c.b16 %v834, %v827
      %v1087 = vpack.c.b16 %v835, %v828
      %v1088 = vpack.c.b16 %v836, %v829
      %v1089 = vpack.c.b16 %v837, %v830
      %v1090 = vpack.c.b16 %v845, %v838
      %v1091 = vpack.c.b16 %v846, %v839
      %v1092 = vpack.c.b16 %v847, %v840
      %v1093 = vpack.c.b16 %v848, %v841
      %v1094 = vpack.c.b16 %v849, %v842
      %v1095 = vpack.c.b16 %v850, %v843
      %v1096 = vpack.c.b16 %v851, %v844
      %v1097 = vpack.c.b16 %v859, %v852
      %v1098 = vpack.c.b16 %v860, %v853
      %v1099 = vpack.c.b16 %v861, %v854
      %v1100 = vpack.c.b16 %v862, %v855
      %v1101 = vpack.c.b16 %v863, %v856
      %v1102 = vpack.c.b16 %v864, %v857
      %v1103 = vpack.c.b16 %v865, %v858
      %v1104 = vpack.c.b16 %v873, %v866
      %v1105 = vpack.c.b16 %v874, %v867
      %v1106 = vpack.c.b16 %v875, %v868
      %v1107 = vpack.c.b16 %v876, %v869
      %v1108 = vpack.c.b16 %v877, %v870
      %v1109 = vpack.c.b16 %v878, %v871
      %v1110 = vpack.c.b16 %v879, %v872
      %v1111 = vpack.c.b16 %v887, %v880
      %v1112 = vpack.c.b16 %v888, %v881
      %v1113 = vpack.c.b16 %v889, %v882
      %v1114 = vpack.c.b16 %v890, %v883
      %v1115 = vpack.c.b16 %v891, %v884
      %v1116 = vpack.c.b16 %v892, %v885
      %v1117 = vpack.c.b16 %v893, %v886
      %v1118 = vpack.c.b16 %v901, %v894
      %v1119 = vpack.c.b16 %v902, %v895
      %v1120 = vpack.c.b16 %v903, %v896
      %v1121 = vpack.c.b16 %v904, %v897
      %v1122 = vpack.c.b16 %v905, %v898
      %v1123 = vpack.c.b16 %v906, %v899
      %v1124 = vpack.c.b16 %v907, %v900
      %v1125 = vpack.c.b16 %v915, %v908
      %v1126 = vpack.c.b16 %v916, %v909
      %v1127 = vpack.c.b16 %v917, %v910
      %v1128 = vpack.c.b16 %v918, %v911
      %v1129 = vpack.c.b16 %v919, %v912
      %v1130 = vpack.c.b16 %v920, %v913
      %v1131 = vpack.c.b16 %v921, %v914
      %v1132 = vpack.c.b16 %v929, %v922
      %v1133 = vpack.c.b16 %v930, %v923
      %v1134 = vpack.c.b16 %v931, %v924
      %v1135 = vpack.c.b16 %v932, %v925
      %v1136 = vpack.c.b16 %v933, %v926
      %v1137 = vpack.c.b16 %v934, %v927
      %v1138 = vpack.c.b16 %v935, %v928
      %v1139 = vpack.c.b16 %v943, %v936
      %v1140 = vpack.c.b16 %v944, %v937
      %v1141 = vpack.c.b16 %v945, %v938
      %v1142 = vpack.c.b16 %v946, %v939
      %v1143 = vpack.c.b16 %v947, %v940
      %v1144 = vpack.c.b16 %v948, %v941
      %v1145 = vpack.c.b16 %v949, %v942
      %v1146 = vpack.c.b16 %v957, %v950
      %v1147 = vpack.c.b16 %v958, %v951
      %v1148 = vpack.c.b16 %v959, %v952
      %v1149 = vpack.c.b16 %v960, %v953
      %v1150 = vpack.c.b16 %v961, %v954
      %v1151 = vpack.c.b16 %v962, %v955
      %v1152 = vpack.c.b16 %v963, %v956
      %v1153 = vpack.c.b16 %v971, %v964
      %v1154 = vpack.c.b16 %v972, %v965
      %v1155 = vpack.c.b16 %v973, %v966
      %v1156 = vpack.c.b16 %v974, %v967
      %v1157 = vpack.c.b16 %v975, %v968
      %v1158 = vpack.c.b16 %v976, %v969
      %v1159 = vpack.c.b16 %v977, %v970
      %v1160 = vpack.c.b16 %v985, %v978
      %v1161 = vpack.c.b16 %v986, %v979
      %v1162 = vpack.c.b16 %v987, %v980
      %v1163 = vpack.c.b16 %v988, %v981
      %v1164 = vpack.c.b16 %v989, %v982
      %v1165 = vpack.c.b16 %v990, %v983
      %v1166 = vpack.c.b16 %v991, %v984
      %vm1342 = vcmask 130048
      %v1344 = vsel %vm1342, %v431, 0
      %v1347 = vsel %vm1342, %v435, 0
      %1349 = vmatprep.subr.bf16.mxu0 %v1042
      %1350 = vmatpush1.bf16.msra.mxu0 %v1041
      %1351 = vmatprep.subr.bf16.mxu0 %v1035
      %1352 = vmatpush1.bf16.msra.mxu0 %v1034
      %1353 = vmatprep.subr.bf16.mxu0 %v1028
      %1354 = vmatpush1.bf16.msra.mxu0 %v1027
      %1355 = vmatprep.subr.bf16.mxu0 %v1021
      %1356 = vmatpush1.bf16.msra.mxu0 %v1020
      %1357 = vmatprep.subr.bf16.mxu0 %v1014
      %1358 = vmatpush1.bf16.msra.mxu0 %v1013
      %1359 = vmatprep.subr.bf16.mxu0 %v1007
      %1360 = vmatpush1.bf16.msra.mxu0 %v1006
      %1361 = vmatprep.subr.bf16.mxu0 %v1000
      %1362 = vmatpush1.bf16.msra.mxu0 %v999
      %1363 = vmatprep.subr.bf16.mxu0 %v993
      %1364 = vmatpush1.bf16.msra.mxu0 %v992
      %1365 = vmatprep.subr.bf16.mxu0 %v1098
      %1366 = vmatpush2.bf16.msra.mxu0 %v1097
      %1367 = vmatprep.subr.bf16.mxu0 %v1091
      %1368 = vmatpush2.bf16.msra.mxu0 %v1090
      %1369 = vmatprep.subr.bf16.mxu0 %v1084
      %1370 = vmatpush2.bf16.msra.mxu0 %v1083
      %1371 = vmatprep.subr.bf16.mxu0 %v1077
      %1372 = vmatpush2.bf16.msra.mxu0 %v1076
      %1373 = vmatprep.subr.bf16.mxu0 %v1070
      %1374 = vmatpush2.bf16.msra.mxu0 %v1069
      %1375 = vmatprep.subr.bf16.mxu0 %v1063
      %1376 = vmatpush2.bf16.msra.mxu0 %v1062
      %1377 = vmatprep.subr.bf16.mxu0 %v1056
      %1378 = vmatpush2.bf16.msra.mxu0 %v1055
      %1379 = vmatprep.subr.bf16.mxu0 %v1049
      %1380 = vmatpush2.bf16.msra.mxu0 %v1048
      %1381 = vmatprep.mubr.bf16.mxu0 %v429
      %1382 = vmatmul.mubr.bf16.gmra.mxu0 %v428
      %v1383 = vpop.f32.mrf.mxu0
      %v1384 = vadd.f32 %v387, %v1383
      %v1385 = vpop.f32.mrf.mxu0
      %v1386 = vadd.f32 %v387, %v1385
      %v1387 = vpop.f32.mrf.mxu0
      %v1388 = vadd.f32 %v392, %v1387
      %v1389 = vpop.f32.mrf.mxu0
      %v1390 = vadd.f32 %v392, %v1389
      %1391 = vmatprep.mubr.bf16.mxu0 %v433
      %1392 = vmatmul.mubr.bf16.gmra.mxu0 %v432
      %v1393 = vpop.f32.mrf.mxu0
      %v1394 = vadd.f32 %v397, %v1393
      %v1395 = vpop.f32.mrf.mxu0
      %v1396 = vadd.f32 %v397, %v1395
      %v1397 = vpop.f32.mrf.mxu0
      %v1398 = vadd.f32 %v402, %v1397
      %v1399 = vpop.f32.mrf.mxu0
      %v1400 = vadd.f32 %v402, %v1399
      %1401 = vdwg.mxu0
      %1402 = vmatprep.subr.bf16.mxu0 %v1154
      %1403 = vmatpush1.bf16.msra.mxu0 %v1153
      %1404 = vmatprep.subr.bf16.mxu0 %v1147
      %1405 = vmatpush1.bf16.msra.mxu0 %v1146
      %1406 = vmatprep.subr.bf16.mxu0 %v1140
      %1407 = vmatpush1.bf16.msra.mxu0 %v1139
      %1408 = vmatprep.subr.bf16.mxu0 %v1133
      %1409 = vmatpush1.bf16.msra.mxu0 %v1132
      %1410 = vmatprep.subr.bf16.mxu0 %v1126
      %1411 = vmatpush1.bf16.msra.mxu0 %v1125
      %1412 = vmatprep.subr.bf16.mxu0 %v1119
      %1413 = vmatpush1.bf16.msra.mxu0 %v1118
      %1414 = vmatprep.subr.bf16.mxu0 %v1112
      %1415 = vmatpush1.bf16.msra.mxu0 %v1111
      %1416 = vmatprep.subr.bf16.mxu0 %v1105
      %1417 = vmatpush1.bf16.msra.mxu0 %v1104
      %1418 = vmatprep.subr.bf16.mxu0 0
      %1419 = vmatpush2.bf16.msra.mxu0 0
      %1420 = vmatprep.subr.bf16.mxu0 0
      %1421 = vmatpush2.bf16.msra.mxu0 0
      %1422 = vmatprep.subr.bf16.mxu0 0
      %1423 = vmatpush2.bf16.msra.mxu0 0
      %1424 = vmatprep.subr.bf16.mxu0 0
      %1425 = vmatpush2.bf16.msra.mxu0 0
      %1426 = vmatprep.subr.bf16.mxu0 0
      %1427 = vmatpush2.bf16.msra.mxu0 0
      %1428 = vmatprep.subr.bf16.mxu0 0
      %1429 = vmatpush2.bf16.msra.mxu0 0
      %1430 = vmatprep.subr.bf16.mxu0 0
      %1431 = vmatpush2.bf16.msra.mxu0 0
      %1432 = vmatprep.subr.bf16.mxu0 %v1161
      %1433 = vmatpush2.bf16.msra.mxu0 %v1160
      %1434 = vmatprep.mubr.bf16.mxu0 %v1344
      %1435 = vmatmul.mubr.bf16.gmra.mxu0 %v430
      %v1436 = vpop.f32.mrf.mxu0
      %v1437 = vadd.f32 %v1384, %v1436
      %v1438 = vpop.f32.mrf.mxu0
      %v1439 = vadd.f32 %v1386, %v1438
      %v1440 = vpop.f32.mrf.mxu0
      %v1441 = vadd.f32 %v1388, %v1440
      %v1442 = vpop.f32.mrf.mxu0
      %v1443 = vadd.f32 %v1390, %v1442
      %1444 = vmatprep.mubr.bf16.mxu0 %v1347
      %1445 = vmatmul.mubr.bf16.gmra.mxu0 %v434
      %v1446 = vpop.f32.mrf.mxu0
      %v1447 = vadd.f32 %v1394, %v1446
      %v1448 = vpop.f32.mrf.mxu0
      %v1449 = vadd.f32 %v1396, %v1448
      %v1450 = vpop.f32.mrf.mxu0
      %v1451 = vadd.f32 %v1398, %v1450
      %v1452 = vpop.f32.mrf.mxu0
      %v1453 = vadd.f32 %v1400, %v1452
      %1454 = vdwg.mxu0
      %1455 = vmatprep.subr.bf16.mxu0 %v1044
      %1456 = vmatpush1.bf16.msra.mxu0 %v1043
      %1457 = vmatprep.subr.bf16.mxu0 %v1037
      %1458 = vmatpush1.bf16.msra.mxu0 %v1036
      %1459 = vmatprep.subr.bf16.mxu0 %v1030
      %1460 = vmatpush1.bf16.msra.mxu0 %v1029
      %1461 = vmatprep.subr.bf16.mxu0 %v1023
      %1462 = vmatpush1.bf16.msra.mxu0 %v1022
      %1463 = vmatprep.subr.bf16.mxu0 %v1016
      %1464 = vmatpush1.bf16.msra.mxu0 %v1015
      %1465 = vmatprep.subr.bf16.mxu0 %v1009
      %1466 = vmatpush1.bf16.msra.mxu0 %v1008
      %1467 = vmatprep.subr.bf16.mxu0 %v1002
      %1468 = vmatpush1.bf16.msra.mxu0 %v1001
      %1469 = vmatprep.subr.bf16.mxu0 %v995
      %1470 = vmatpush1.bf16.msra.mxu0 %v994
      %1471 = vmatprep.subr.bf16.mxu0 %v1100
      %1472 = vmatpush2.bf16.msra.mxu0 %v1099
      %1473 = vmatprep.subr.bf16.mxu0 %v1093
      %1474 = vmatpush2.bf16.msra.mxu0 %v1092
      %1475 = vmatprep.subr.bf16.mxu0 %v1086
      %1476 = vmatpush2.bf16.msra.mxu0 %v1085
      %1477 = vmatprep.subr.bf16.mxu0 %v1079
      %1478 = vmatpush2.bf16.msra.mxu0 %v1078
      %1479 = vmatprep.subr.bf16.mxu0 %v1072
      %1480 = vmatpush2.bf16.msra.mxu0 %v1071
      %1481 = vmatprep.subr.bf16.mxu0 %v1065
      %1482 = vmatpush2.bf16.msra.mxu0 %v1064
      %1483 = vmatprep.subr.bf16.mxu0 %v1058
      %1484 = vmatpush2.bf16.msra.mxu0 %v1057
      %1485 = vmatprep.subr.bf16.mxu0 %v1051
      %1486 = vmatpush2.bf16.msra.mxu0 %v1050
      %1487 = vmatprep.mubr.bf16.mxu0 %v429
      %1488 = vmatmul.mubr.bf16.gmra.mxu0 %v428
      %v1489 = vpop.f32.mrf.mxu0
      %v1490 = vadd.f32 %v387, %v1489
      %v1491 = vpop.f32.mrf.mxu0
      %v1492 = vadd.f32 %v387, %v1491
      %v1493 = vpop.f32.mrf.mxu0
      %v1494 = vadd.f32 %v392, %v1493
      %v1495 = vpop.f32.mrf.mxu0
      %v1496 = vadd.f32 %v392, %v1495
      %1497 = vmatprep.mubr.bf16.mxu0 %v433
      %1498 = vmatmul.mubr.bf16.gmra.mxu0 %v432
      %v1499 = vpop.f32.mrf.mxu0
      %v1500 = vadd.f32 %v397, %v1499
      %v1501 = vpop.f32.mrf.mxu0
      %v1502 = vadd.f32 %v397, %v1501
      %v1503 = vpop.f32.mrf.mxu0
      %v1504 = vadd.f32 %v402, %v1503
      %v1505 = vpop.f32.mrf.mxu0
      %v1506 = vadd.f32 %v402, %v1505
      %1507 = vdwg.mxu0
      %1508 = vmatprep.subr.bf16.mxu0 %v1156
      %1509 = vmatpush1.bf16.msra.mxu0 %v1155
      %1510 = vmatprep.subr.bf16.mxu0 %v1149
      %1511 = vmatpush1.bf16.msra.mxu0 %v1148
      %1512 = vmatprep.subr.bf16.mxu0 %v1142
      %1513 = vmatpush1.bf16.msra.mxu0 %v1141
      %1514 = vmatprep.subr.bf16.mxu0 %v1135
      %1515 = vmatpush1.bf16.msra.mxu0 %v1134
      %1516 = vmatprep.subr.bf16.mxu0 %v1128
      %1517 = vmatpush1.bf16.msra.mxu0 %v1127
      %1518 = vmatprep.subr.bf16.mxu0 %v1121
      %1519 = vmatpush1.bf16.msra.mxu0 %v1120
      %1520 = vmatprep.subr.bf16.mxu0 %v1114
      %1521 = vmatpush1.bf16.msra.mxu0 %v1113
      %1522 = vmatprep.subr.bf16.mxu0 %v1107
      %1523 = vmatpush1.bf16.msra.mxu0 %v1106
      %1524 = vmatprep.subr.bf16.mxu0 0
      %1525 = vmatpush2.bf16.msra.mxu0 0
      %1526 = vmatprep.subr.bf16.mxu0 0
      %1527 = vmatpush2.bf16.msra.mxu0 0
      %1528 = vmatprep.subr.bf16.mxu0 0
      %1529 = vmatpush2.bf16.msra.mxu0 0
      %1530 = vmatprep.subr.bf16.mxu0 0
      %1531 = vmatpush2.bf16.msra.mxu0 0
      %1532 = vmatprep.subr.bf16.mxu0 0
      %1533 = vmatpush2.bf16.msra.mxu0 0
      %1534 = vmatprep.subr.bf16.mxu0 0
      %1535 = vmatpush2.bf16.msra.mxu0 0
      %1536 = vmatprep.subr.bf16.mxu0 0
      %1537 = vmatpush2.bf16.msra.mxu0 0
      %1538 = vmatprep.subr.bf16.mxu0 %v1163
      %1539 = vmatpush2.bf16.msra.mxu0 %v1162
      %1540 = vmatprep.mubr.bf16.mxu0 %v1344
      %1541 = vmatmul.mubr.bf16.gmra.mxu0 %v430
      %v1542 = vpop.f32.mrf.mxu0
      %v1543 = vadd.f32 %v1490, %v1542
      %v1544 = vpop.f32.mrf.mxu0
      %v1545 = vadd.f32 %v1492, %v1544
      %v1546 = vpop.f32.mrf.mxu0
      %v1547 = vadd.f32 %v1494, %v1546
      %v1548 = vpop.f32.mrf.mxu0
      %v1549 = vadd.f32 %v1496, %v1548
      %1550 = vmatprep.mubr.bf16.mxu0 %v1347
      %1551 = vmatmul.mubr.bf16.gmra.mxu0 %v434
      %v1552 = vpop.f32.mrf.mxu0
      %v1553 = vadd.f32 %v1500, %v1552
      %v1554 = vpop.f32.mrf.mxu0
      %v1555 = vadd.f32 %v1502, %v1554
      %v1556 = vpop.f32.mrf.mxu0
      %v1557 = vadd.f32 %v1504, %v1556
      %v1558 = vpop.f32.mrf.mxu0
      %v1559 = vadd.f32 %v1506, %v1558
      %1560 = vdwg.mxu0
      %1561 = vmatprep.subr.bf16.mxu0 %v1046
      %1562 = vmatpush1.bf16.msra.mxu0 %v1045
      %1563 = vmatprep.subr.bf16.mxu0 %v1039
      %1564 = vmatpush1.bf16.msra.mxu0 %v1038
      %1565 = vmatprep.subr.bf16.mxu0 %v1032
      %1566 = vmatpush1.bf16.msra.mxu0 %v1031
      %1567 = vmatprep.subr.bf16.mxu0 %v1025
      %1568 = vmatpush1.bf16.msra.mxu0 %v1024
      %1569 = vmatprep.subr.bf16.mxu0 %v1018
      %1570 = vmatpush1.bf16.msra.mxu0 %v1017
      %1571 = vmatprep.subr.bf16.mxu0 %v1011
      %1572 = vmatpush1.bf16.msra.mxu0 %v1010
      %1573 = vmatprep.subr.bf16.mxu0 %v1004
      %1574 = vmatpush1.bf16.msra.mxu0 %v1003
      %1575 = vmatprep.subr.bf16.mxu0 %v997
      %1576 = vmatpush1.bf16.msra.mxu0 %v996
      %1577 = vmatprep.subr.bf16.mxu0 %v1102
      %1578 = vmatpush2.bf16.msra.mxu0 %v1101
      %1579 = vmatprep.subr.bf16.mxu0 %v1095
      %1580 = vmatpush2.bf16.msra.mxu0 %v1094
      %1581 = vmatprep.subr.bf16.mxu0 %v1088
      %1582 = vmatpush2.bf16.msra.mxu0 %v1087
      %1583 = vmatprep.subr.bf16.mxu0 %v1081
      %1584 = vmatpush2.bf16.msra.mxu0 %v1080
      %1585 = vmatprep.subr.bf16.mxu0 %v1074
      %1586 = vmatpush2.bf16.msra.mxu0 %v1073
      %1587 = vmatprep.subr.bf16.mxu0 %v1067
      %1588 = vmatpush2.bf16.msra.mxu0 %v1066
      %1589 = vmatprep.subr.bf16.mxu0 %v1060
      %1590 = vmatpush2.bf16.msra.mxu0 %v1059
      %1591 = vmatprep.subr.bf16.mxu0 %v1053
      %1592 = vmatpush2.bf16.msra.mxu0 %v1052
      %1593 = vmatprep.mubr.bf16.mxu0 %v429
      %1594 = vmatmul.mubr.bf16.gmra.mxu0 %v428
      %v1595 = vpop.f32.mrf.mxu0
      %v1596 = vadd.f32 %v387, %v1595
      %v1597 = vpop.f32.mrf.mxu0
      %v1598 = vadd.f32 %v387, %v1597
      %v1599 = vpop.f32.mrf.mxu0
      %v1600 = vadd.f32 %v392, %v1599
      %v1601 = vpop.f32.mrf.mxu0
      %v1602 = vadd.f32 %v392, %v1601
      %1603 = vmatprep.mubr.bf16.mxu0 %v433
      %1604 = vmatmul.mubr.bf16.gmra.mxu0 %v432
      %v1605 = vpop.f32.mrf.mxu0
      %v1606 = vadd.f32 %v397, %v1605
      %v1607 = vpop.f32.mrf.mxu0
      %v1608 = vadd.f32 %v397, %v1607
      %v1609 = vpop.f32.mrf.mxu0
      %v1610 = vadd.f32 %v402, %v1609
      %v1611 = vpop.f32.mrf.mxu0
      %v1612 = vadd.f32 %v402, %v1611
      %1613 = vdwg.mxu0
      %1614 = vmatprep.subr.bf16.mxu0 %v1158
      %1615 = vmatpush1.bf16.msra.mxu0 %v1157
      %1616 = vmatprep.subr.bf16.mxu0 %v1151
      %1617 = vmatpush1.bf16.msra.mxu0 %v1150
      %1618 = vmatprep.subr.bf16.mxu0 %v1144
      %1619 = vmatpush1.bf16.msra.mxu0 %v1143
      %1620 = vmatprep.subr.bf16.mxu0 %v1137
      %1621 = vmatpush1.bf16.msra.mxu0 %v1136
      %1622 = vmatprep.subr.bf16.mxu0 %v1130
      %1623 = vmatpush1.bf16.msra.mxu0 %v1129
      %1624 = vmatprep.subr.bf16.mxu0 %v1123
      %1625 = vmatpush1.bf16.msra.mxu0 %v1122
      %1626 = vmatprep.subr.bf16.mxu0 %v1116
      %1627 = vmatpush1.bf16.msra.mxu0 %v1115
      %1628 = vmatprep.subr.bf16.mxu0 %v1109
      %1629 = vmatpush1.bf16.msra.mxu0 %v1108
      %1630 = vmatprep.subr.bf16.mxu0 0
      %1631 = vmatpush2.bf16.msra.mxu0 0
      %1632 = vmatprep.subr.bf16.mxu0 0
      %1633 = vmatpush2.bf16.msra.mxu0 0
      %1634 = vmatprep.subr.bf16.mxu0 0
      %1635 = vmatpush2.bf16.msra.mxu0 0
      %1636 = vmatprep.subr.bf16.mxu0 0
      %1637 = vmatpush2.bf16.msra.mxu0 0
      %1638 = vmatprep.subr.bf16.mxu0 0
      %1639 = vmatpush2.bf16.msra.mxu0 0
      %1640 = vmatprep.subr.bf16.mxu0 0
      %1641 = vmatpush2.bf16.msra.mxu0 0
      %1642 = vmatprep.subr.bf16.mxu0 0
      %1643 = vmatpush2.bf16.msra.mxu0 0
      %1644 = vmatprep.subr.bf16.mxu0 %v1165
      %1645 = vmatpush2.bf16.msra.mxu0 %v1164
      %1646 = vmatprep.mubr.bf16.mxu0 %v1344
      %1647 = vmatmul.mubr.bf16.gmra.mxu0 %v430
      %v1648 = vpop.f32.mrf.mxu0
      %v1649 = vadd.f32 %v1596, %v1648
      %v1650 = vpop.f32.mrf.mxu0
      %v1651 = vadd.f32 %v1598, %v1650
      %v1652 = vpop.f32.mrf.mxu0
      %v1653 = vadd.f32 %v1600, %v1652
      %v1654 = vpop.f32.mrf.mxu0
      %v1655 = vadd.f32 %v1602, %v1654
      %1656 = vmatprep.mubr.bf16.mxu0 %v1347
      %1657 = vmatmul.mubr.bf16.gmra.mxu0 %v434
      %v1658 = vpop.f32.mrf.mxu0
      %v1659 = vadd.f32 %v1606, %v1658
      %v1660 = vpop.f32.mrf.mxu0
      %v1661 = vadd.f32 %v1608, %v1660
      %v1662 = vpop.f32.mrf.mxu0
      %v1663 = vadd.f32 %v1610, %v1662
      %v1664 = vpop.f32.mrf.mxu0
      %v1665 = vadd.f32 %v1612, %v1664
      %1666 = vdwg.mxu0
      %1667 = vmatprep.subr.bf16.mxu0 0
      %1668 = vmatpush1.bf16.msra.mxu0 %v1047
      %1669 = vmatprep.subr.bf16.mxu0 0
      %1670 = vmatpush1.bf16.msra.mxu0 %v1040
      %1671 = vmatprep.subr.bf16.mxu0 0
      %1672 = vmatpush1.bf16.msra.mxu0 %v1033
      %1673 = vmatprep.subr.bf16.mxu0 0
      %1674 = vmatpush1.bf16.msra.mxu0 %v1026
      %1675 = vmatprep.subr.bf16.mxu0 0
      %1676 = vmatpush1.bf16.msra.mxu0 %v1019
      %1677 = vmatprep.subr.bf16.mxu0 0
      %1678 = vmatpush1.bf16.msra.mxu0 %v1012
      %1679 = vmatprep.subr.bf16.mxu0 0
      %1680 = vmatpush1.bf16.msra.mxu0 %v1005
      %1681 = vmatprep.subr.bf16.mxu0 0
      %1682 = vmatpush1.bf16.msra.mxu0 %v998
      %1683 = vmatprep.subr.bf16.mxu0 0
      %1684 = vmatpush2.bf16.msra.mxu0 %v1103
      %1685 = vmatprep.subr.bf16.mxu0 0
      %1686 = vmatpush2.bf16.msra.mxu0 %v1096
      %1687 = vmatprep.subr.bf16.mxu0 0
      %1688 = vmatpush2.bf16.msra.mxu0 %v1089
      %1689 = vmatprep.subr.bf16.mxu0 0
      %1690 = vmatpush2.bf16.msra.mxu0 %v1082
      %1691 = vmatprep.subr.bf16.mxu0 0
      %1692 = vmatpush2.bf16.msra.mxu0 %v1075
      %1693 = vmatprep.subr.bf16.mxu0 0
      %1694 = vmatpush2.bf16.msra.mxu0 %v1068
      %1695 = vmatprep.subr.bf16.mxu0 0
      %1696 = vmatpush2.bf16.msra.mxu0 %v1061
      %1697 = vmatprep.subr.bf16.mxu0 0
      %1698 = vmatpush2.bf16.msra.mxu0 %v1054
      %1699 = vmatprep.mubr.bf16.mxu0 %v429
      %1700 = vmatmul.mubr.bf16.gmra.mxu0 %v428
      %v1701 = vpop.f32.mrf.mxu0
      %v1702 = vadd.f32 %v387, %v1701
      %v1703 = vpop.f32.mrf.mxu0
      %v1704 = vpop.f32.mrf.mxu0
      %v1705 = vadd.f32 %v392, %v1704
      %v1706 = vpop.f32.mrf.mxu0
      %1707 = vmatprep.mubr.bf16.mxu0 %v433
      %1708 = vmatmul.mubr.bf16.gmra.mxu0 %v432
      %v1709 = vpop.f32.mrf.mxu0
      %v1710 = vadd.f32 %v397, %v1709
      %v1711 = vpop.f32.mrf.mxu0
      %v1712 = vpop.f32.mrf.mxu0
      %v1713 = vadd.f32 %v402, %v1712
      %v1714 = vpop.f32.mrf.mxu0
      %1715 = vdwg.mxu0
      %1716 = vmatprep.subr.bf16.mxu0 0
      %1717 = vmatpush1.bf16.msra.mxu0 %v1159
      %1718 = vmatprep.subr.bf16.mxu0 0
      %1719 = vmatpush1.bf16.msra.mxu0 %v1152
      %1720 = vmatprep.subr.bf16.mxu0 0
      %1721 = vmatpush1.bf16.msra.mxu0 %v1145
      %1722 = vmatprep.subr.bf16.mxu0 0
      %1723 = vmatpush1.bf16.msra.mxu0 %v1138
      %1724 = vmatprep.subr.bf16.mxu0 0
      %1725 = vmatpush1.bf16.msra.mxu0 %v1131
      %1726 = vmatprep.subr.bf16.mxu0 0
      %1727 = vmatpush1.bf16.msra.mxu0 %v1124
      %1728 = vmatprep.subr.bf16.mxu0 0
      %1729 = vmatpush1.bf16.msra.mxu0 %v1117
      %1730 = vmatprep.subr.bf16.mxu0 0
      %1731 = vmatpush1.bf16.msra.mxu0 %v1110
      %1732 = vmatprep.subr.bf16.mxu0 0
      %1733 = vmatpush2.bf16.msra.mxu0 0
      %1734 = vmatprep.subr.bf16.mxu0 0
      %1735 = vmatpush2.bf16.msra.mxu0 0
      %1736 = vmatprep.subr.bf16.mxu0 0
      %1737 = vmatpush2.bf16.msra.mxu0 0
      %1738 = vmatprep.subr.bf16.mxu0 0
      %1739 = vmatpush2.bf16.msra.mxu0 0
      %1740 = vmatprep.subr.bf16.mxu0 0
      %1741 = vmatpush2.bf16.msra.mxu0 0
      %1742 = vmatprep.subr.bf16.mxu0 0
      %1743 = vmatpush2.bf16.msra.mxu0 0
      %1744 = vmatprep.subr.bf16.mxu0 0
      %1745 = vmatpush2.bf16.msra.mxu0 0
      %1746 = vmatprep.subr.bf16.mxu0 0
      %1747 = vmatpush2.bf16.msra.mxu0 %v1166
      %1748 = vmatprep.mubr.bf16.mxu0 %v1344
      %1749 = vmatmul.mubr.bf16.gmra.mxu0 %v430
      %v1750 = vpop.f32.mrf.mxu0
      %v1751 = vadd.f32 %v1702, %v1750
      %v1752 = vpop.f32.mrf.mxu0
      %v1753 = vpop.f32.mrf.mxu0
      %v1754 = vadd.f32 %v1705, %v1753
      %v1755 = vpop.f32.mrf.mxu0
      %1756 = vmatprep.mubr.bf16.mxu0 %v1347
      %1757 = vmatmul.mubr.bf16.gmra.mxu0 %v434
      %v1758 = vpop.f32.mrf.mxu0
      %v1759 = vadd.f32 %v1710, %v1758
      %v1760 = vpop.f32.mrf.mxu0
      %v1761 = vpop.f32.mrf.mxu0
      %v1762 = vadd.f32 %v1713, %v1761
      %v1763 = vpop.f32.mrf.mxu0
      %1764 = vdwg.mxu0
      %v1765 = vmax.f32 %v1437, 0.0
      %v1766 = vmax.f32 %v1439, 0.0
      %v1767 = vmax.f32 %v1543, 0.0
      %v1768 = vmax.f32 %v1545, 0.0
      %v1769 = vmax.f32 %v1649, 0.0
      %v1770 = vmax.f32 %v1651, 0.0
      %v1771 = vmax.f32 %v1751, 0.0
      %v1772 = vmax.f32 %v1441, 0.0
      %v1773 = vmax.f32 %v1443, 0.0
      %v1774 = vmax.f32 %v1547, 0.0
      %v1775 = vmax.f32 %v1549, 0.0
      %v1776 = vmax.f32 %v1653, 0.0
      %v1777 = vmax.f32 %v1655, 0.0
      %v1778 = vmax.f32 %v1754, 0.0
      %v1779 = vmax.f32 %v1447, 0.0
      %v1780 = vmax.f32 %v1449, 0.0
      %v1781 = vmax.f32 %v1553, 0.0
      %v1782 = vmax.f32 %v1555, 0.0
      %v1783 = vmax.f32 %v1659, 0.0
      %v1784 = vmax.f32 %v1661, 0.0
      %v1785 = vmax.f32 %v1759, 0.0
      %v1786 = vmax.f32 %v1451, 0.0
      %v1787 = vmax.f32 %v1453, 0.0
      %v1788 = vmax.f32 %v1557, 0.0
      %v1789 = vmax.f32 %v1559, 0.0
      %v1790 = vmax.f32 %v1663, 0.0
      %v1791 = vmax.f32 %v1665, 0.0
      %v1792 = vmax.f32 %v1762, 0.0
      %v1793 = vpack.c.bf16 %v1772, %v1765
      %v1794 = vpack.c.bf16 %v1773, %v1766
      %v1795 = vpack.c.bf16 %v1774, %v1767
      %v1796 = vpack.c.bf16 %v1775, %v1768
      %v1797 = vpack.c.bf16 %v1776, %v1769
      %v1798 = vpack.c.bf16 %v1777, %v1770
      %v1799 = vpack.c.bf16 %v1778, %v1771
      %v1800 = vpack.c.bf16 %v1786, %v1779
      %v1801 = vpack.c.bf16 %v1787, %v1780
      %v1802 = vpack.c.bf16 %v1788, %v1781
      %v1803 = vpack.c.bf16 %v1789, %v1782
      %v1804 = vpack.c.bf16 %v1790, %v1783
      %v1805 = vpack.c.bf16 %v1791, %v1784
      %v1806 = vpack.c.bf16 %v1792, %v1785
      %v1821 = vunpack.c.l.b16 %v1793
      %v1822 = vunpack.c.l.b16 %v1794
      %v1823 = vunpack.c.l.b16 %v1795
      %v1824 = vunpack.c.l.b16 %v1796
      %v1825 = vunpack.c.l.b16 %v1797
      %v1826 = vunpack.c.l.b16 %v1798
      %v1827 = vunpack.c.l.b16 %v1799
      %v1828 = vunpack.c.h.b16 %v1793
      %v1829 = vunpack.c.h.b16 %v1794
      %v1830 = vunpack.c.h.b16 %v1795
      %v1831 = vunpack.c.h.b16 %v1796
      %v1832 = vunpack.c.h.b16 %v1797
      %v1833 = vunpack.c.h.b16 %v1798
      %v1834 = vunpack.c.h.b16 %v1799
      %v1835 = vunpack.c.l.b16 %v1800
      %v1836 = vunpack.c.l.b16 %v1801
      %v1837 = vunpack.c.l.b16 %v1802
      %v1838 = vunpack.c.l.b16 %v1803
      %v1839 = vunpack.c.l.b16 %v1804
      %v1840 = vunpack.c.l.b16 %v1805
      %v1841 = vunpack.c.l.b16 %v1806
      %v1842 = vunpack.c.h.b16 %v1800
      %v1843 = vunpack.c.h.b16 %v1801
      %v1844 = vunpack.c.h.b16 %v1802
      %v1845 = vunpack.c.h.b16 %v1803
      %v1846 = vunpack.c.h.b16 %v1804
      %v1847 = vunpack.c.h.b16 %v1805
      %v1848 = vunpack.c.h.b16 %v1806
      %v1849 = vpack.c.b16 %v1822, %v1821
      %v1850 = vpack.c.b16 %v1824, %v1823
      %v1851 = vpack.c.b16 %v1826, %v1825
      %v1852 = vpack.c.b16 %v1827, %v1827
      %v1853 = vpack.c.b16 %v1829, %v1828
      %v1854 = vpack.c.b16 %v1831, %v1830
      %v1855 = vpack.c.b16 %v1833, %v1832
      %v1856 = vpack.c.b16 %v1834, %v1834
      %v1857 = vpack.c.b16 %v1836, %v1835
      %v1858 = vpack.c.b16 %v1838, %v1837
      %v1859 = vpack.c.b16 %v1840, %v1839
      %v1860 = vpack.c.b16 %v1841, %v1841
      %v1861 = vpack.c.b16 %v1843, %v1842
      %v1862 = vpack.c.b16 %v1845, %v1844
      %v1863 = vpack.c.b16 %v1847, %v1846
      %v1864 = vpack.c.b16 %v1848, %v1848
      %1881 = vst [vmem:[%s170] sm:$0xff] %v1849
      %1882 = vst [vmem:[%s170 + $0x8] sm:$0xff] %v1850
      %1883 = vst [vmem:[%s170 + $0x10] sm:$0xff] %v1851
      %vm1884 = vcmask 551936
      %1885 = vst.msk [vmem:[%s170 + $0x18] sm:$0xf] %vm1884, %v1852
      %1886 = vst [vmem:[%s170 + $0x1c] sm:$0xff] %v1853
      %1887 = vst [vmem:[%s170 + $0x24] sm:$0xff] %v1854
      %1888 = vst [vmem:[%s170 + $0x2c] sm:$0xff] %v1855
      %1889 = vst.msk [vmem:[%s170 + $0x34] sm:$0xf] %vm1884, %v1856
      %1890 = vst [vmem:[%s170 + $0x38] sm:$0xff] %v1857
      %1891 = vst [vmem:[%s170 + $0x40] sm:$0xff] %v1858
      %1892 = vst [vmem:[%s170 + $0x48] sm:$0xff] %v1859
      %1893 = vst.msk [vmem:[%s170 + $0x50] sm:$0xf] %vm1884, %v1860
      %1894 = vst [vmem:[%s170 + $0x54] sm:$0xff] %v1861
      %1895 = vst [vmem:[%s170 + $0x5c] sm:$0xff] %v1862
      %1896 = vst [vmem:[%s170 + $0x64] sm:$0xff] %v1863
      %1897 = vst.msk [vmem:[%s170 + $0x6c] sm:$0xf] %vm1884, %v1864
      %p1898 = scmp.lt.s32.totalorder %s14, 1
      %s1899 = scalar_select %p1898, %s14, 1
      %s1900 = smul.addr %s1899, 28
      %s1901 = smul.addr %s1900, 4
      %s1902 = scalar_lea.vmem %s3, %s1901
      // Predicated region
      $region33: #{deep_q_forward.6} parent=31 // pred_check
        %p1903 = pneg %p100
      $region34: #{deep_q_forward.6} parent=31 // pred_check_branch
        %1905 = sbr.rel (%p1903) target = $region36
      $region35: #{deep_q_forward.6} parent=31 // pred_region
        _
      $region36: #{deep_q_forward.6} parent=31 // pred_fallthru
        _
    $region32: #{deep_q_forward.6} parent=5 // pred_fallthru
      _
    %p1906 = scmp.le.s32.totalorder 2, %s9
    // Predicated region
    $region37: #{deep_q_forward.6} parent=5 // pred_check
      %p1907 = pneg %p1906
    $region38: #{deep_q_forward.6} parent=5 // pred_check_branch
      %1909 = sbr.rel (%p1907) target = $region40
    $region39: #{deep_q_forward.6} parent=5 // pred_region
      %s1910 = ssub.s32 %s9, 2
      // Predicated region
      $region41: #{deep_q_forward.6} parent=39 // pred_check
        %p1911 = pneg %p106
      $region42: #{deep_q_forward.6} parent=39 // pred_check_branch
        %1913 = sbr.rel (%p1911) target = $region44
      $region43: #{deep_q_forward.6} parent=39 // pred_region
        %p1914 = scmp.lt.s32.totalorder %s15, 1
        %s1915 = scalar_select %p1914, %s15, 1
        %s1916 = smul.addr %s1915, 28
        %s1917 = smul.addr %s1916, 4
        %s1918 = scalar_lea.vmem %s3, %s1917
      $region44: #{deep_q_forward.6} parent=39 // pred_fallthru
        _
    $region40: #{deep_q_forward.6} parent=5 // pred_fallthru
      _
  $region6: #{deep_q_forward.6} parent=0 // loop_footer
    %s13 = sadd.s32 1, %s9
  $region7: #{deep_q_forward.6} parent=0 // loop_footer_branch
    %8 = sbr.rel target = $region3
  $region8: #{deep_q_forward.6} parent=0 // loop_exit
    _

// kernel: deep_q_forward.7
$region0: #{deep_q_forward.7}
  #allocation0 [shape = 'u32[]', space=smem, size = 0x4, offset = 0x4, fixed_abs, tag = 'smem constant byte address 0x4 - core index']
  #allocation1 [shape = 'u32[144,128]{1,0:T(1,128)}', space=vmem, size = 0x12000, scoped, tag = 'internal scratch']
  %s0 = inlined_call_operand.vmem [shape: bf16[2,512,180], index: 0, kind: input, shape index: {}]
  %s1 = inlined_call_operand.vmem [shape: bf16[64,512], index: 1, kind: input, shape index: {}]
  %s2 = inlined_call_operand.vmem [shape: f32[64,1], index: 2, kind: input, shape index: {}]
  %s3 = inlined_call_operand.vmem [shape: bf16[2,64,180], index: 3, kind: output, shape index: {}]
  %s4 = sld [smem:[#allocation0]]
  $region45: #{deep_q_forward.7} parent=0
    _
  %s6 = ssub.s32 1, %s4
  %s7 = scalar_select 0, %s6, %s4
  loop: start=0, step=1, limit=4
  $region2: #{deep_q_forward.7} parent=0 // loop_pre_header
    _
  $region3: #{deep_q_forward.7} parent=0 // loop_header
    %s9 = sphi 0, %s13
    %p10 = scmp.ge.s32.totalorder %s9, 4
    %s19 = sphi 0, %s21
    %s22 = sphi 0, %s19
    %s23 = sphi 0, %s22
    %s39 = sphi 0, %s23
    %s43 = sphi 0, %s43
    %s45 = sphi 0, %s43
    %s46 = sphi 0, %s45
    %s60 = sphi 0, %s46
    %s64 = sphi 0, %s64
    %s66 = sphi 0, %s64
    %s67 = sphi 0, %s66
    %s81 = sphi 0, %s67
    %s87 = sphi 0, %s89
    %s90 = sphi 0, %s87
    %s91 = sphi 0, %s90
    %s107 = sphi 0, %s91
  $region4: #{deep_q_forward.7} parent=0 // loop_header_branch
    %12 = sbr.rel (%p10) target = $region8
  $region5: #{deep_q_forward.7} parent=0 // loop_body
    %s14 = ssub.s32 %s9, 1
    %s15 = ssub.s32 %s9, 2
    %s16 = sadd.s32 %s9, 1
    %s17 = ssub.s32 %s9, %s16
    %p18 = scmp.eq.s32.totalorder %s17, 0
    %s20 = sadd.s32 %s19, 1
    %s21 = scalar_select %p18, %s19, %s20
    %p24 = pneg %p18
    %p25 = scmp.eq.s32.totalorder %s9, 1
    %p26 = por %p24, %p25
    %p27 = scmp.ne.s32.totalorder %s19, %s22
    %p28 = scmp.eq.s32.totalorder %s9, 0
    %p29 = por %p27, %p28
    %p30 = scmp.ne.s32.totalorder %s19, %s22
    %p31 = scmp.eq.s32.totalorder %s14, 1
    %p32 = por %p30, %p31
    %p33 = scmp.ne.s32.totalorder %s22, %s23
    %p34 = scmp.eq.s32.totalorder %s14, 0
    %p35 = por %p33, %p34
    %p36 = scmp.ne.s32.totalorder %s22, %s23
    %p37 = scmp.eq.s32.totalorder %s15, 1
    %p38 = por %p36, %p37
    %p40 = scmp.ne.s32.totalorder %s23, %s39
    %p41 = scmp.eq.s32.totalorder %s15, 0
    %p42 = por %p40, %p41
    %s44 = sadd.s32 %s43, 1
    %p47 = scmp.eq.s32.totalorder %s9, 1
    %p48 = scmp.ne.s32.totalorder %s43, %s45
    %p49 = scmp.eq.s32.totalorder %s9, 0
    %p50 = por %p48, %p49
    %p51 = scmp.ne.s32.totalorder %s43, %s45
    %p52 = scmp.eq.s32.totalorder %s14, 1
    %p53 = por %p51, %p52
    %p54 = scmp.ne.s32.totalorder %s45, %s46
    %p55 = scmp.eq.s32.totalorder %s14, 0
    %p56 = por %p54, %p55
    %p57 = scmp.ne.s32.totalorder %s45, %s46
    %p58 = scmp.eq.s32.totalorder %s15, 1
    %p59 = por %p57, %p58
    %p61 = scmp.ne.s32.totalorder %s46, %s60
    %p62 = scmp.eq.s32.totalorder %s15, 0
    %p63 = por %p61, %p62
    %s65 = sadd.s32 %s64, 1
    %p68 = scmp.eq.s32.totalorder %s9, 1
    %p69 = scmp.ne.s32.totalorder %s64, %s66
    %p70 = scmp.eq.s32.totalorder %s9, 0
    %p71 = por %p69, %p70
    %p72 = scmp.ne.s32.totalorder %s64, %s66
    %p73 = scmp.eq.s32.totalorder %s14, 1
    %p74 = por %p72, %p73
    %p75 = scmp.ne.s32.totalorder %s66, %s67
    %p76 = scmp.eq.s32.totalorder %s14, 0
    %p77 = por %p75, %p76
    %p78 = scmp.ne.s32.totalorder %s66, %s67
    %p79 = scmp.eq.s32.totalorder %s15, 1
    %p80 = por %p78, %p79
    %p82 = scmp.ne.s32.totalorder %s67, %s81
    %p83 = scmp.eq.s32.totalorder %s15, 0
    %p84 = por %p82, %p83
    %s85 = ssub.s32 %s9, %s16
    %p86 = scmp.eq.s32.totalorder %s85, 0
    %s88 = sadd.s32 %s87, 1
    %s89 = scalar_select %p86, %s87, %s88
    %p92 = pneg %p86
    %p93 = scmp.eq.s32.totalorder %s9, 1
    %p94 = por %p92, %p93
    %p95 = scmp.ne.s32.totalorder %s87, %s90
    %p96 = scmp.eq.s32.totalorder %s9, 0
    %p97 = por %p95, %p96
    %p98 = scmp.ne.s32.totalorder %s87, %s90
    %p99 = scmp.eq.s32.totalorder %s14, 1
    %p100 = por %p98, %p99
    %p101 = scmp.ne.s32.totalorder %s90, %s91
    %p102 = scmp.eq.s32.totalorder %s14, 0
    %p103 = por %p101, %p102
    %p104 = scmp.ne.s32.totalorder %s90, %s91
    %p105 = scmp.eq.s32.totalorder %s15, 1
    %p106 = por %p104, %p105
    %p108 = scmp.ne.s32.totalorder %s91, %s107
    %p109 = scmp.eq.s32.totalorder %s15, 0
    %p110 = por %p108, %p109
    %p111 = scmp.le.s32.totalorder 1, %s9
    %p112 = scmp.lt.s32.totalorder %s9, 3
    %p113 = pnand %p111, %p112
    %p114 = pneg %p113
    // Predicated region
    $region9: #{deep_q_forward.7} parent=5 // pred_check
      _
    $region10: #{deep_q_forward.7} parent=5 // pred_check_branch
      %116 = sbr.rel (%p113) target = $region12
    $region11: #{deep_q_forward.7} parent=5 // pred_region
      %s117 = ssub.s32 %s9, 1
      // Predicated region
      $region13: #{deep_q_forward.7} parent=11 // pred_check
        %p118 = pneg %p56
      $region14: #{deep_q_forward.7} parent=11 // pred_check_branch
        %120 = sbr.rel (%p118) target = $region16
      $region15: #{deep_q_forward.7} parent=11 // pred_region
        _
      $region16: #{deep_q_forward.7} parent=11 // pred_fallthru
        _
      // Predicated region
      $region17: #{deep_q_forward.7} parent=11 // pred_check
        %p121 = pneg %p77
      $region18: #{deep_q_forward.7} parent=11 // pred_check_branch
        %123 = sbr.rel (%p121) target = $region20
      $region19: #{deep_q_forward.7} parent=11 // pred_region
        _
      $region20: #{deep_q_forward.7} parent=11 // pred_fallthru
        _
    $region12: #{deep_q_forward.7} parent=5 // pred_fallthru
      _
    %p124 = scmp.lt.s32.totalorder %s9, 2
    // Predicated region
    $region21: #{deep_q_forward.7} parent=5 // pred_check
      %p125 = pneg %p124
    $region22: #{deep_q_forward.7} parent=5 // pred_check_branch
      %127 = sbr.rel (%p125) target = $region24
    $region23: #{deep_q_forward.7} parent=5 // pred_region
      // Predicated region
      $region25: #{deep_q_forward.7} parent=23 // pred_check
        %p128 = pneg %p29
      $region26: #{deep_q_forward.7} parent=23 // pred_check_branch
        %130 = sbr.rel (%p128) target = $region28
      $region27: #{deep_q_forward.7} parent=23 // pred_region
        %p131 = scmp.lt.s32.totalorder %s9, 1
        %s132 = scalar_select %p131, %s9, 1
        %s133 = smul.addr %s132, 128
        %s134 = smul.addr %s133, 4
        %s135 = scalar_lea.vmem %s0, %s134
      $region28: #{deep_q_forward.7} parent=23 // pred_fallthru
        _
    $region24: #{deep_q_forward.7} parent=5 // pred_fallthru
      _
    %p136 = scmp.le.s32.totalorder 1, %s9
    %p137 = scmp.lt.s32.totalorder %s9, 3
    %p138 = pnand %p136, %p137
    %p139 = pneg %p138
    // Predicated region
    $region29: #{deep_q_forward.7} parent=5 // pred_check
      _
    $region30: #{deep_q_forward.7} parent=5 // pred_check_branch
      %141 = sbr.rel (%p138) target = $region32
    $region31: #{deep_q_forward.7} parent=5 // pred_region
      %s142 = ssub.s32 %s9, 1
      %p143 = scmp.lt.s32.totalorder %s14, 1
      %s144 = scalar_select %p143, %s14, 1
      %s145 = smul.addr %s144, 128
      %s146 = smul.addr %s145, 4
      %s147 = scalar_lea.vmem %s0, %s146
      %p148 = pneg %p35
      %p149 = pneg %p32
      %p150 = pneg %p56
      %p151 = pneg %p53
      %p152 = pneg %p77
      %p153 = pneg %p74
      %p154 = pneg %p103
      %p155 = pneg %p100
      %p156 = scmp.lt.s32.totalorder %s14, 1
      %s157 = scalar_select %p156, %s14, 1
      %s158 = smul.addr %s157, 16
      %s159 = smul.addr %s158, 4
      %s160 = scalar_lea.vmem %s3, %s159
      %p161 = scmp.lt.s32.totalorder %s14, 1
      %s162 = scalar_select %p161, %s14, 1
      %s163 = smul.addr %s162, 128
      %s164 = smul.addr %s163, 4
      %s165 = scalar_lea.vmem %s0, %s164
      %p166 = scmp.lt.s32.totalorder %s14, 1
      %s167 = scalar_select %p166, %s14, 1
      %s168 = smul.addr %s167, 16
      %s169 = smul.addr %s168, 4
      %s170 = scalar_lea.vmem %s3, %s169
      %v171 = vld [vmem:[%s1] sm:$0xff]
      %v172 = vld [vmem:[%s1 + $0x8] sm:$0xff]
      %v173 = vld [vmem:[%s1 + $0x10] sm:$0xff]
      %v174 = vld [vmem:[%s1 + $0x18] sm:$0xff]
      %v175 = vld [vmem:[%s1 + $0x20] sm:$0xff]
      %v176 = vld [vmem:[%s1 + $0x28] sm:$0xff]
      %v177 = vld [vmem:[%s1 + $0x30] sm:$0xff]
      %v178 = vld [vmem:[%s1 + $0x38] sm:$0xff]
      %v179 = vld [vmem:[%s1 + $0x40] sm:$0xff]
      %v180 = vld [vmem:[%s1 + $0x48] sm:$0xff]
      %v181 = vld [vmem:[%s1 + $0x50] sm:$0xff]
      %v182 = vld [vmem:[%s1 + $0x58] sm:$0xff]
      %v183 = vld [vmem:[%s1 + $0x60] sm:$0xff]
      %v184 = vld [vmem:[%s1 + $0x68] sm:$0xff]
      %v185 = vld [vmem:[%s1 + $0x70] sm:$0xff]
      %v186 = vld [vmem:[%s1 + $0x78] sm:$0xff]
      %v187 = vld [vmem:[%s165] sm:$0xff]
      %v188 = vld [vmem:[%s165 + $0x8] sm:$0xff]
      %v189 = vld [vmem:[%s165 + $0x10] sm:$0xff]
      %v190 = vld [vmem:[%s165 + $0x18] sm:$0xff]
      %v191 = vld [vmem:[%s165 + $0x20] sm:$0xff]
      %v192 = vld [vmem:[%s165 + $0x28] sm:$0xff]
      %v193 = vld [vmem:[%s165 + $0x30] sm:$0xff]
      %v194 = vld [vmem:[%s165 + $0x38] sm:$0xff]
      %v195 = vld [vmem:[%s165 + $0x40] sm:$0xff]
      %v196 = vld [vmem:[%s165 + $0x48] sm:$0xff]
      %v197 = vld [vmem:[%s165 + $0x50] sm:$0xff]
      %v198 = vld [vmem:[%s165 + $0x58] sm:$0xff]
      %v199 = vld [vmem:[%s165 + $0x60] sm:$0xff]
      %v200 = vld [vmem:[%s165 + $0x68] sm:$0xff]
      %v201 = vld [vmem:[%s165 + $0x70] sm:$0xff]
      %v202 = vld [vmem:[%s165 + $0x78] sm:$0xff]
      %v203 = vld [vmem:[%s165 + $0x80] sm:$0xff]
      %v204 = vld [vmem:[%s165 + $0x88] sm:$0xff]
      %v205 = vld [vmem:[%s165 + $0x90] sm:$0xff]
      %v206 = vld [vmem:[%s165 + $0x98] sm:$0xff]
      %v207 = vld [vmem:[%s165 + $0xa0] sm:$0xff]
      %v208 = vld [vmem:[%s165 + $0xa8] sm:$0xff]
      %v209 = vld [vmem:[%s165 + $0xb0] sm:$0xff]
      %v210 = vld [vmem:[%s165 + $0xb8] sm:$0xff]
      %v211 = vld [vmem:[%s165 + $0xc0] sm:$0xff]
      %v212 = vld [vmem:[%s165 + $0xc8] sm:$0xff]
      %v213 = vld [vmem:[%s165 + $0xd0] sm:$0xff]
      %v214 = vld [vmem:[%s165 + $0xd8] sm:$0xff]
      %v215 = vld [vmem:[%s165 + $0xe0] sm:$0xff]
      %v216 = vld [vmem:[%s165 + $0xe8] sm:$0xff]
      %v217 = vld [vmem:[%s165 + $0xf0] sm:$0xff]
      %v218 = vld [vmem:[%s165 + $0xf8] sm:$0xff]
      %v219 = vld [vmem:[%s165 + $0x100] sm:$0xff]
      %v220 = vld [vmem:[%s165 + $0x108] sm:$0xff]
      %v221 = vld [vmem:[%s165 + $0x110] sm:$0xff]
      %v222 = vld [vmem:[%s165 + $0x118] sm:$0xff]
      %v223 = vld [vmem:[%s165 + $0x120] sm:$0xff]
      %v224 = vld [vmem:[%s165 + $0x128] sm:$0xff]
      %v225 = vld [vmem:[%s165 + $0x130] sm:$0xff]
      %v226 = vld [vmem:[%s165 + $0x138] sm:$0xff]
      %v227 = vld [vmem:[%s165 + $0x140] sm:$0xff]
      %v228 = vld [vmem:[%s165 + $0x148] sm:$0xff]
      %v229 = vld [vmem:[%s165 + $0x150] sm:$0xff]
      %v230 = vld [vmem:[%s165 + $0x158] sm:$0xff]
      %v231 = vld [vmem:[%s165 + $0x160] sm:$0xff]
      %v232 = vld [vmem:[%s165 + $0x168] sm:$0xff]
      %v233 = vld [vmem:[%s165 + $0x170] sm:$0xff]
      %v234 = vld [vmem:[%s165 + $0x178] sm:$0xff]
      %v235 = vld [vmem:[%s165 + $0x180] sm:$0xff]
      %v236 = vld [vmem:[%s165 + $0x188] sm:$0xff]
      %v237 = vld [vmem:[%s165 + $0x190] sm:$0xff]
      %v238 = vld [vmem:[%s165 + $0x198] sm:$0xff]
      %v239 = vld [vmem:[%s165 + $0x1a0] sm:$0xff]
      %v240 = vld [vmem:[%s165 + $0x1a8] sm:$0xff]
      %v241 = vld [vmem:[%s165 + $0x1b0] sm:$0xff]
      %v242 = vld [vmem:[%s165 + $0x1b8] sm:$0xff]
      %v243 = vld [vmem:[%s165 + $0x1c0] sm:$0xff]
      %v244 = vld [vmem:[%s165 + $0x1c8] sm:$0xff]
      %v245 = vld [vmem:[%s165 + $0x1d0] sm:$0xff]
      %v246 = vld [vmem:[%s165 + $0x1d8] sm:$0xff]
      %v247 = vld [vmem:[%s165 + $0x1e0] sm:$0xff]
      %v248 = vld [vmem:[%s165 + $0x1e8] sm:$0xff]
      %v249 = vld [vmem:[%s165 + $0x1f0] sm:$0xff]
      %v250 = vld [vmem:[%s165 + $0x1f8] sm:$0xff]
      %v251 = vld [vmem:[%s2] sm:$0xff]
      %v252 = vld [vmem:[%s2 + $0x8] sm:$0xff]
      %v253 = vld [vmem:[%s2 + $0x10] sm:$0xff]
      %v254 = vld [vmem:[%s2 + $0x18] sm:$0xff]
      %v255 = vld [vmem:[%s2 + $0x20] sm:$0xff]
      %v256 = vld [vmem:[%s2 + $0x28] sm:$0xff]
      %v257 = vld [vmem:[%s2 + $0x30] sm:$0xff]
      %v258 = vld [vmem:[%s2 + $0x38] sm:$0xff]
      %260 = vset.pattern.permute.xlu0 0
      %261 = vperm.xlu0 %260, %v251
      %v262 = vpop.permute.xlu0 %261
      %265 = vset.pattern.permute.xlu0 0
      %266 = vperm.xlu0 %265, %v252
      %v267 = vpop.permute.xlu0 %266
      %270 = vset.pattern.permute.xlu0 0
      %271 = vperm.xlu0 %270, %v253
      %v272 = vpop.permute.xlu0 %271
      %275 = vset.pattern.permute.xlu0 0
      %276 = vperm.xlu0 %275, %v254
      %v277 = vpop.permute.xlu0 %276
      %280 = vset.pattern.permute.xlu0 0
      %281 = vperm.xlu0 %280, %v255
      %v282 = vpop.permute.xlu0 %281
      %285 = vset.pattern.permute.xlu0 0
      %286 = vperm.xlu0 %285, %v256
      %v287 = vpop.permute.xlu0 %286
      %290 = vset.pattern.permute.xlu0 0
      %291 = vperm.xlu0 %290, %v257
      %v292 = vpop.permute.xlu0 %291
      %295 = vset.pattern.permute.xlu0 0
      %296 = vperm.xlu0 %295, %v258
      %v297 = vpop.permute.xlu0 %296
      %v315 = vunpack.c.l.b16 %v171
      %v316 = vunpack.c.h.b16 %v171
      %v317 = vunpack.c.l.b16 %v172
      %v318 = vunpack.c.h.b16 %v172
      %v319 = vunpack.c.l.b16 %v173
      %v320 = vunpack.c.h.b16 %v173
      %v321 = vunpack.c.l.b16 %v174
      %v322 = vunpack.c.h.b16 %v174
      %v323 = vunpack.c.l.b16 %v175
      %v324 = vunpack.c.h.b16 %v175
      %v325 = vunpack.c.l.b16 %v176
      %v326 = vunpack.c.h.b16 %v176
      %v327 = vunpack.c.l.b16 %v177
      %v328 = vunpack.c.h.b16 %v177
      %v329 = vunpack.c.l.b16 %v178
      %v330 = vunpack.c.h.b16 %v178
      %v331 = vunpack.c.l.b16 %v179
      %v332 = vunpack.c.h.b16 %v179
      %v333 = vunpack.c.l.b16 %v180
      %v334 = vunpack.c.h.b16 %v180
      %v335 = vunpack.c.l.b16 %v181
      %v336 = vunpack.c.h.b16 %v181
      %v337 = vunpack.c.l.b16 %v182
      %v338 = vunpack.c.h.b16 %v182
      %v339 = vunpack.c.l.b16 %v183
      %v340 = vunpack.c.h.b16 %v183
      %v341 = vunpack.c.l.b16 %v184
      %v342 = vunpack.c.h.b16 %v184
      %v343 = vunpack.c.l.b16 %v185
      %v344 = vunpack.c.h.b16 %v185
      %v345 = vunpack.c.l.b16 %v186
      %v346 = vunpack.c.h.b16 %v186
      %v347 = vpack.c.b16 %v319, %v315
      %v348 = vpack.c.b16 %v320, %v316
      %v349 = vpack.c.b16 %v321, %v317
      %v350 = vpack.c.b16 %v322, %v318
      %v351 = vpack.c.b16 %v327, %v323
      %v352 = vpack.c.b16 %v328, %v324
      %v353 = vpack.c.b16 %v329, %v325
      %v354 = vpack.c.b16 %v330, %v326
      %v355 = vpack.c.b16 %v335, %v331
      %v356 = vpack.c.b16 %v336, %v332
      %v357 = vpack.c.b16 %v337, %v333
      %v358 = vpack.c.b16 %v338, %v334
      %v359 = vpack.c.b16 %v343, %v339
      %v360 = vpack.c.b16 %v344, %v340
      %v361 = vpack.c.b16 %v345, %v341
      %v362 = vpack.c.b16 %v346, %v342
      %v443 = vunpack.c.l.b16 %v187
      %v444 = vunpack.c.h.b16 %v187
      %v445 = vunpack.c.l.b16 %v188
      %v446 = vunpack.c.h.b16 %v188
      %v447 = vunpack.c.l.b16 %v189
      %v448 = vunpack.c.h.b16 %v189
      %v449 = vunpack.c.l.b16 %v190
      %v450 = vunpack.c.h.b16 %v190
      %v451 = vunpack.c.l.b16 %v191
      %v452 = vunpack.c.h.b16 %v191
      %v453 = vunpack.c.l.b16 %v192
      %v454 = vunpack.c.h.b16 %v192
      %v455 = vunpack.c.l.b16 %v193
      %v456 = vunpack.c.h.b16 %v193
      %v457 = vunpack.c.l.b16 %v194
      %v458 = vunpack.c.h.b16 %v194
      %v459 = vunpack.c.l.b16 %v195
      %v460 = vunpack.c.h.b16 %v195
      %v461 = vunpack.c.l.b16 %v196
      %v462 = vunpack.c.h.b16 %v196
      %v463 = vunpack.c.l.b16 %v197
      %v464 = vunpack.c.h.b16 %v197
      %v465 = vunpack.c.l.b16 %v198
      %v466 = vunpack.c.h.b16 %v198
      %v467 = vunpack.c.l.b16 %v199
      %v468 = vunpack.c.h.b16 %v199
      %v469 = vunpack.c.l.b16 %v200
      %v470 = vunpack.c.h.b16 %v200
      %v471 = vunpack.c.l.b16 %v201
      %v472 = vunpack.c.h.b16 %v201
      %v473 = vunpack.c.l.b16 %v202
      %v474 = vunpack.c.h.b16 %v202
      %v475 = vunpack.c.l.b16 %v203
      %v476 = vunpack.c.h.b16 %v203
      %v477 = vunpack.c.l.b16 %v204
      %v478 = vunpack.c.h.b16 %v204
      %v479 = vunpack.c.l.b16 %v205
      %v480 = vunpack.c.h.b16 %v205
      %v481 = vunpack.c.l.b16 %v206
      %v482 = vunpack.c.h.b16 %v206
      %v483 = vunpack.c.l.b16 %v207
      %v484 = vunpack.c.h.b16 %v207
      %v485 = vunpack.c.l.b16 %v208
      %v486 = vunpack.c.h.b16 %v208
      %v487 = vunpack.c.l.b16 %v209
      %v488 = vunpack.c.h.b16 %v209
      %v489 = vunpack.c.l.b16 %v210
      %v490 = vunpack.c.h.b16 %v210
      %v491 = vunpack.c.l.b16 %v211
      %v492 = vunpack.c.h.b16 %v211
      %v493 = vunpack.c.l.b16 %v212
      %v494 = vunpack.c.h.b16 %v212
      %v495 = vunpack.c.l.b16 %v213
      %v496 = vunpack.c.h.b16 %v213
      %v497 = vunpack.c.l.b16 %v214
      %v498 = vunpack.c.h.b16 %v214
      %v499 = vunpack.c.l.b16 %v215
      %v500 = vunpack.c.h.b16 %v215
      %v501 = vunpack.c.l.b16 %v216
      %v502 = vunpack.c.h.b16 %v216
      %v503 = vunpack.c.l.b16 %v217
      %v504 = vunpack.c.h.b16 %v217
      %v505 = vunpack.c.l.b16 %v218
      %v506 = vunpack.c.h.b16 %v218
      %v507 = vunpack.c.l.b16 %v219
      %v508 = vunpack.c.h.b16 %v219
      %v509 = vunpack.c.l.b16 %v220
      %v510 = vunpack.c.h.b16 %v220
      %v511 = vunpack.c.l.b16 %v221
      %v512 = vunpack.c.h.b16 %v221
      %v513 = vunpack.c.l.b16 %v222
      %v514 = vunpack.c.h.b16 %v222
      %v515 = vunpack.c.l.b16 %v223
      %v516 = vunpack.c.h.b16 %v223
      %v517 = vunpack.c.l.b16 %v224
      %v518 = vunpack.c.h.b16 %v224
      %v519 = vunpack.c.l.b16 %v225
      %v520 = vunpack.c.h.b16 %v225
      %v521 = vunpack.c.l.b16 %v226
      %v522 = vunpack.c.h.b16 %v226
      %v523 = vunpack.c.l.b16 %v227
      %v524 = vunpack.c.h.b16 %v227
      %v525 = vunpack.c.l.b16 %v228
      %v526 = vunpack.c.h.b16 %v228
      %v527 = vunpack.c.l.b16 %v229
      %v528 = vunpack.c.h.b16 %v229
      %v529 = vunpack.c.l.b16 %v230
      %v530 = vunpack.c.h.b16 %v230
      %v531 = vunpack.c.l.b16 %v231
      %v532 = vunpack.c.h.b16 %v231
      %v533 = vunpack.c.l.b16 %v232
      %v534 = vunpack.c.h.b16 %v232
      %v535 = vunpack.c.l.b16 %v233
      %v536 = vunpack.c.h.b16 %v233
      %v537 = vunpack.c.l.b16 %v234
      %v538 = vunpack.c.h.b16 %v234
      %v539 = vunpack.c.l.b16 %v235
      %v540 = vunpack.c.h.b16 %v235
      %v541 = vunpack.c.l.b16 %v236
      %v542 = vunpack.c.h.b16 %v236
      %v543 = vunpack.c.l.b16 %v237
      %v544 = vunpack.c.h.b16 %v237
      %v545 = vunpack.c.l.b16 %v238
      %v546 = vunpack.c.h.b16 %v238
      %v547 = vunpack.c.l.b16 %v239
      %v548 = vunpack.c.h.b16 %v239
      %v549 = vunpack.c.l.b16 %v240
      %v550 = vunpack.c.h.b16 %v240
      %v551 = vunpack.c.l.b16 %v241
      %v552 = vunpack.c.h.b16 %v241
      %v553 = vunpack.c.l.b16 %v242
      %v554 = vunpack.c.h.b16 %v242
      %v555 = vunpack.c.l.b16 %v243
      %v556 = vunpack.c.h.b16 %v243
      %v557 = vunpack.c.l.b16 %v244
      %v558 = vunpack.c.h.b16 %v244
      %v559 = vunpack.c.l.b16 %v245
      %v560 = vunpack.c.h.b16 %v245
      %v561 = vunpack.c.l.b16 %v246
      %v562 = vunpack.c.h.b16 %v246
      %v563 = vunpack.c.l.b16 %v247
      %v564 = vunpack.c.h.b16 %v247
      %v565 = vunpack.c.l.b16 %v248
      %v566 = vunpack.c.h.b16 %v248
      %v567 = vunpack.c.l.b16 %v249
      %v568 = vunpack.c.h.b16 %v249
      %v569 = vunpack.c.l.b16 %v250
      %v570 = vunpack.c.h.b16 %v250
      %v571 = vpack.c.b16 %v445, %v443
      %v572 = vpack.c.b16 %v446, %v444
      %v573 = vpack.c.b16 %v449, %v447
      %v574 = vpack.c.b16 %v450, %v448
      %v575 = vpack.c.b16 %v453, %v451
      %v576 = vpack.c.b16 %v454, %v452
      %v577 = vpack.c.b16 %v457, %v455
      %v578 = vpack.c.b16 %v458, %v456
      %v579 = vpack.c.b16 %v461, %v459
      %v580 = vpack.c.b16 %v462, %v460
      %v581 = vpack.c.b16 %v465, %v463
      %v582 = vpack.c.b16 %v466, %v464
      %v583 = vpack.c.b16 %v469, %v467
      %v584 = vpack.c.b16 %v470, %v468
      %v585 = vpack.c.b16 %v473, %v471
      %v586 = vpack.c.b16 %v474, %v472
      %v587 = vpack.c.b16 %v477, %v475
      %v588 = vpack.c.b16 %v478, %v476
      %v589 = vpack.c.b16 %v481, %v479
      %v590 = vpack.c.b16 %v482, %v480
      %v591 = vpack.c.b16 %v485, %v483
      %v592 = vpack.c.b16 %v486, %v484
      %v593 = vpack.c.b16 %v489, %v487
      %v594 = vpack.c.b16 %v490, %v488
      %v595 = vpack.c.b16 %v493, %v491
      %v596 = vpack.c.b16 %v494, %v492
      %v597 = vpack.c.b16 %v497, %v495
      %v598 = vpack.c.b16 %v498, %v496
      %v599 = vpack.c.b16 %v501, %v499
      %v600 = vpack.c.b16 %v502, %v500
      %v601 = vpack.c.b16 %v505, %v503
      %v602 = vpack.c.b16 %v506, %v504
      %v603 = vpack.c.b16 %v509, %v507
      %v604 = vpack.c.b16 %v510, %v508
      %v605 = vpack.c.b16 %v513, %v511
      %v606 = vpack.c.b16 %v514, %v512
      %v607 = vpack.c.b16 %v517, %v515
      %v608 = vpack.c.b16 %v518, %v516
      %v609 = vpack.c.b16 %v521, %v519
      %v610 = vpack.c.b16 %v522, %v520
      %v611 = vpack.c.b16 %v525, %v523
      %v612 = vpack.c.b16 %v526, %v524
      %v613 = vpack.c.b16 %v529, %v527
      %v614 = vpack.c.b16 %v530, %v528
      %v615 = vpack.c.b16 %v533, %v531
      %v616 = vpack.c.b16 %v534, %v532
      %v617 = vpack.c.b16 %v537, %v535
      %v618 = vpack.c.b16 %v538, %v536
      %v619 = vpack.c.b16 %v541, %v539
      %v620 = vpack.c.b16 %v542, %v540
      %v621 = vpack.c.b16 %v545, %v543
      %v622 = vpack.c.b16 %v546, %v544
      %v623 = vpack.c.b16 %v549, %v547
      %v624 = vpack.c.b16 %v550, %v548
      %v625 = vpack.c.b16 %v553, %v551
      %v626 = vpack.c.b16 %v554, %v552
      %v627 = vpack.c.b16 %v557, %v555
      %v628 = vpack.c.b16 %v558, %v556
      %v629 = vpack.c.b16 %v561, %v559
      %v630 = vpack.c.b16 %v562, %v560
      %v631 = vpack.c.b16 %v565, %v563
      %v632 = vpack.c.b16 %v566, %v564
      %v633 = vpack.c.b16 %v569, %v567
      %v634 = vpack.c.b16 %v570, %v568
      %699 = vmatprep.subr.bf16.mxu0 %v586
      %700 = vmatpush1.bf16.msra.mxu0 %v585
      %701 = vmatprep.subr.bf16.mxu0 %v584
      %702 = vmatpush1.bf16.msra.mxu0 %v583
      %703 = vmatprep.subr.bf16.mxu0 %v582
      %704 = vmatpush1.bf16.msra.mxu0 %v581
      %705 = vmatprep.subr.bf16.mxu0 %v580
      %706 = vmatpush1.bf16.msra.mxu0 %v579
      %707 = vmatprep.subr.bf16.mxu0 %v578
      %708 = vmatpush1.bf16.msra.mxu0 %v577
      %709 = vmatprep.subr.bf16.mxu0 %v576
      %710 = vmatpush1.bf16.msra.mxu0 %v575
      %711 = vmatprep.subr.bf16.mxu0 %v574
      %712 = vmatpush1.bf16.msra.mxu0 %v573
      %713 = vmatprep.subr.bf16.mxu0 %v572
      %714 = vmatpush1.bf16.msra.mxu0 %v571
      %715 = vmatprep.subr.bf16.mxu0 %v602
      %716 = vmatpush2.bf16.msra.mxu0 %v601
      %717 = vmatprep.subr.bf16.mxu0 %v600
      %718 = vmatpush2.bf16.msra.mxu0 %v599
      %719 = vmatprep.subr.bf16.mxu0 %v598
      %720 = vmatpush2.bf16.msra.mxu0 %v597
      %721 = vmatprep.subr.bf16.mxu0 %v596
      %722 = vmatpush2.bf16.msra.mxu0 %v595
      %723 = vmatprep.subr.bf16.mxu0 %v594
      %724 = vmatpush2.bf16.msra.mxu0 %v593
      %725 = vmatprep.subr.bf16.mxu0 %v592
      %726 = vmatpush2.bf16.msra.mxu0 %v591
      %727 = vmatprep.subr.bf16.mxu0 %v590
      %728 = vmatpush2.bf16.msra.mxu0 %v589
      %729 = vmatprep.subr.bf16.mxu0 %v588
      %730 = vmatpush2.bf16.msra.mxu0 %v587
      %731 = vmatprep.mubr.bf16.mxu0 %v348
      %732 = vmatmul.mubr.bf16.gmra.mxu0 %v347
      %v733 = vpop.f32.mrf.mxu0
      %v734 = vadd.f32 %v262, %v733
      %v735 = vpop.f32.mrf.mxu0
      %v736 = vadd.f32 %v262, %v735
      %v737 = vpop.f32.mrf.mxu0
      %v738 = vadd.f32 %v267, %v737
      %v739 = vpop.f32.mrf.mxu0
      %v740 = vadd.f32 %v267, %v739
      %741 = vmatprep.mubr.bf16.mxu0 %v352
      %742 = vmatmul.mubr.bf16.gmra.mxu0 %v351
      %v743 = vpop.f32.mrf.mxu0
      %v744 = vadd.f32 %v272, %v743
      %v745 = vpop.f32.mrf.mxu0
      %v746 = vadd.f32 %v272, %v745
      %v747 = vpop.f32.mrf.mxu0
      %v748 = vadd.f32 %v277, %v747
      %v749 = vpop.f32.mrf.mxu0
      %v750 = vadd.f32 %v277, %v749
      %751 = vmatprep.mubr.bf16.mxu0 %v356
      %752 = vmatmul.mubr.bf16.gmra.mxu0 %v355
      %v753 = vpop.f32.mrf.mxu0
      %v754 = vadd.f32 %v282, %v753
      %v755 = vpop.f32.mrf.mxu0
      %v756 = vadd.f32 %v282, %v755
      %v757 = vpop.f32.mrf.mxu0
      %v758 = vadd.f32 %v287, %v757
      %v759 = vpop.f32.mrf.mxu0
      %v760 = vadd.f32 %v287, %v759
      %761 = vmatprep.mubr.bf16.mxu0 %v360
      %762 = vmatmul.mubr.bf16.gmra.mxu0 %v359
      %v763 = vpop.f32.mrf.mxu0
      %v764 = vadd.f32 %v292, %v763
      %v765 = vpop.f32.mrf.mxu0
      %v766 = vadd.f32 %v292, %v765
      %v767 = vpop.f32.mrf.mxu0
      %v768 = vadd.f32 %v297, %v767
      %v769 = vpop.f32.mrf.mxu0
      %v770 = vadd.f32 %v297, %v769
      %771 = vdwg.mxu0
      %772 = vmatprep.subr.bf16.mxu0 %v618
      %773 = vmatpush1.bf16.msra.mxu0 %v617
      %774 = vmatprep.subr.bf16.mxu0 %v616
      %775 = vmatpush1.bf16.msra.mxu0 %v615
      %776 = vmatprep.subr.bf16.mxu0 %v614
      %777 = vmatpush1.bf16.msra.mxu0 %v613
      %778 = vmatprep.subr.bf16.mxu0 %v612
      %779 = vmatpush1.bf16.msra.mxu0 %v611
      %780 = vmatprep.subr.bf16.mxu0 %v610
      %781 = vmatpush1.bf16.msra.mxu0 %v609
      %782 = vmatprep.subr.bf16.mxu0 %v608
      %783 = vmatpush1.bf16.msra.mxu0 %v607
      %784 = vmatprep.subr.bf16.mxu0 %v606
      %785 = vmatpush1.bf16.msra.mxu0 %v605
      %786 = vmatprep.subr.bf16.mxu0 %v604
      %787 = vmatpush1.bf16.msra.mxu0 %v603
      %788 = vmatprep.subr.bf16.mxu0 %v634
      %789 = vmatpush2.bf16.msra.mxu0 %v633
      %790 = vmatprep.subr.bf16.mxu0 %v632
      %791 = vmatpush2.bf16.msra.mxu0 %v631
      %792 = vmatprep.subr.bf16.mxu0 %v630
      %793 = vmatpush2.bf16.msra.mxu0 %v629
      %794 = vmatprep.subr.bf16.mxu0 %v628
      %795 = vmatpush2.bf16.msra.mxu0 %v627
      %796 = vmatprep.subr.bf16.mxu0 %v626
      %797 = vmatpush2.bf16.msra.mxu0 %v625
      %798 = vmatprep.subr.bf16.mxu0 %v624
      %799 = vmatpush2.bf16.msra.mxu0 %v623
      %800 = vmatprep.subr.bf16.mxu0 %v622
      %801 = vmatpush2.bf16.msra.mxu0 %v621
      %802 = vmatprep.subr.bf16.mxu0 %v620
      %803 = vmatpush2.bf16.msra.mxu0 %v619
      %804 = vmatprep.mubr.bf16.mxu0 %v350
      %805 = vmatmul.mubr.bf16.gmra.mxu0 %v349
      %v806 = vpop.f32.mrf.mxu0
      %v807 = vadd.f32 %v734, %v806
      %v808 = vpop.f32.mrf.mxu0
      %v809 = vadd.f32 %v736, %v808
      %v810 = vpop.f32.mrf.mxu0
      %v811 = vadd.f32 %v738, %v810
      %v812 = vpop.f32.mrf.mxu0
      %v813 = vadd.f32 %v740, %v812
      %814 = vmatprep.mubr.bf16.mxu0 %v354
      %815 = vmatmul.mubr.bf16.gmra.mxu0 %v353
      %v816 = vpop.f32.mrf.mxu0
      %v817 = vadd.f32 %v744, %v816
      %v818 = vpop.f32.mrf.mxu0
      %v819 = vadd.f32 %v746, %v818
      %v820 = vpop.f32.mrf.mxu0
      %v821 = vadd.f32 %v748, %v820
      %v822 = vpop.f32.mrf.mxu0
      %v823 = vadd.f32 %v750, %v822
      %824 = vmatprep.mubr.bf16.mxu0 %v358
      %825 = vmatmul.mubr.bf16.gmra.mxu0 %v357
      %v826 = vpop.f32.mrf.mxu0
      %v827 = vadd.f32 %v754, %v826
      %v828 = vpop.f32.mrf.mxu0
      %v829 = vadd.f32 %v756, %v828
      %v830 = vpop.f32.mrf.mxu0
      %v831 = vadd.f32 %v758, %v830
      %v832 = vpop.f32.mrf.mxu0
      %v833 = vadd.f32 %v760, %v832
      %834 = vmatprep.mubr.bf16.mxu0 %v362
      %835 = vmatmul.mubr.bf16.gmra.mxu0 %v361
      %v836 = vpop.f32.mrf.mxu0
      %v837 = vadd.f32 %v764, %v836
      %v838 = vpop.f32.mrf.mxu0
      %v839 = vadd.f32 %v766, %v838
      %v840 = vpop.f32.mrf.mxu0
      %v841 = vadd.f32 %v768, %v840
      %v842 = vpop.f32.mrf.mxu0
      %v843 = vadd.f32 %v770, %v842
      %844 = vdwg.mxu0
      %vm845 = vcmask 424960
      %v846 = vsel %vm845, %v809, 0.0
      %v847 = vadd.f32 %v807, %v846
      %v848 = vadd.f32 %v847, %v811
      %v849 = vsel %vm845, %v813, 0.0
      %v850 = vadd.f32 %v848, %v849
      %v851 = vadd.f32 %v850, %v817
      %v852 = vsel %vm845, %v819, 0.0
      %v853 = vadd.f32 %v851, %v852
      %v854 = vadd.f32 %v853, %v821
      %v855 = vsel %vm845, %v823, 0.0
      %v856 = vadd.f32 %v854, %v855
      %v857 = vadd.f32 %v856, %v827
      %v858 = vsel %vm845, %v829, 0.0
      %v859 = vadd.f32 %v857, %v858
      %v860 = vadd.f32 %v859, %v831
      %v861 = vsel %vm845, %v833, 0.0
      %v862 = vadd.f32 %v860, %v861
      %v863 = vadd.f32 %v862, %v837
      %v864 = vsel %vm845, %v839, 0.0
      %v865 = vadd.f32 %v863, %v864
      %v866 = vadd.f32 %v865, %v841
      %v867 = vsel %vm845, %v843, 0.0
      %v868 = vadd.f32 %v866, %v867
      %869 = vadd.xlane.f32.xlu0 %v868
      %v870 = vpop.xlane.xlu0 %869
      %v871 = vrot.slane %v870, 4
      %v872 = vadd.f32 %v870, %v871
      %v873 = vrot.slane %v872, 2
      %v874 = vadd.f32 %v872, %v873
      %v875 = vrot.slane %v874, 1
      %v876 = vadd.f32 %v874, %v875
      %s877 = vtos %v876
      %v878 = vrcp.pop 11520.0
      %s879 = vtos %v878
      %s880 = smul.f32 %s877, %s879
      %v881 = vstv %s880
      %v882 = vsub.f32 %v807, %v881
      %v883 = vsub.f32 %v809, %v881
      %v884 = vsub.f32 %v811, %v881
      %v885 = vsub.f32 %v813, %v881
      %v886 = vsub.f32 %v817, %v881
      %v887 = vsub.f32 %v819, %v881
      %v888 = vsub.f32 %v821, %v881
      %v889 = vsub.f32 %v823, %v881
      %v890 = vsub.f32 %v827, %v881
      %v891 = vsub.f32 %v829, %v881
      %v892 = vsub.f32 %v831, %v881
      %v893 = vsub.f32 %v833, %v881
      %v894 = vsub.f32 %v837, %v881
      %v895 = vsub.f32 %v839, %v881
      %v896 = vsub.f32 %v841, %v881
      %v897 = vsub.f32 %v843, %v881
      %v898 = vmul.f32 %v882, %v882
      %v899 = vmul.f32 %v883, %v883
      %v900 = vmul.f32 %v884, %v884
      %v901 = vmul.f32 %v885, %v885
      %v902 = vmul.f32 %v886, %v886
      %v903 = vmul.f32 %v887, %v887
      %v904 = vmul.f32 %v888, %v888
      %v905 = vmul.f32 %v889, %v889
      %v906 = vmul.f32 %v890, %v890
      %v907 = vmul.f32 %v891, %v891
      %v908 = vmul.f32 %v892, %v892
      %v909 = vmul.f32 %v893, %v893
      %v910 = vmul.f32 %v894, %v894
      %v911 = vmul.f32 %v895, %v895
      %v912 = vmul.f32 %v896, %v896
      %v913 = vmul.f32 %v897, %v897
      %v914 = vsel %vm845, %v899, 0.0
      %v915 = vadd.f32 %v898, %v914
      %v916 = vadd.f32 %v915, %v900
      %v917 = vsel %vm845, %v901, 0.0
      %v918 = vadd.f32 %v916, %v917
      %v919 = vadd.f32 %v918, %v902
      %v920 = vsel %vm845, %v903, 0.0
      %v921 = vadd.f32 %v919, %v920
      %v922 = vadd.f32 %v921, %v904
      %v923 = vsel %vm845, %v905, 0.0
      %v924 = vadd.f32 %v922, %v923
      %v925 = vadd.f32 %v924, %v906
      %v926 = vsel %vm845, %v907, 0.0
      %v927 = vadd.f32 %v925, %v926
      %v928 = vadd.f32 %v927, %v908
      %v929 = vsel %vm845, %v909, 0.0
      %v930 = vadd.f32 %v928, %v929
      %v931 = vadd.f32 %v930, %v910
      %v932 = vsel %vm845, %v911, 0.0
      %v933 = vadd.f32 %v931, %v932
      %v934 = vadd.f32 %v933, %v912
      %v935 = vsel %vm845, %v913, 0.0
      %v936 = vadd.f32 %v934, %v935
      %937 = vadd.xlane.f32.xlu0 %v936
      %v938 = vpop.xlane.xlu0 %937
      %v939 = vrot.slane %v938, 4
      %v940 = vadd.f32 %v938, %v939
      %v941 = vrot.slane %v940, 2
      %v942 = vadd.f32 %v940, %v941
      %v943 = vrot.slane %v942, 1
      %v944 = vadd.f32 %v942, %v943
      %s945 = vtos %v944
      %v946 = vrcp.pop 11520.0
      %s947 = vtos %v946
      %s948 = smul.f32 %s945, %s947
      %s949 = sadd.f32 %s948, 1e-05
      %v950 = vstv %s949
      %v951 = vrsqrt.pop %v950
      %s952 = vtos %v951
      %v953 = vstv %s952
      %v954 = vmul.f32 %v882, %v953
      %v955 = vmul.f32 %v883, %v953
      %v956 = vmul.f32 %v884, %v953
      %v957 = vmul.f32 %v885, %v953
      %v958 = vmul.f32 %v886, %v953
      %v959 = vmul.f32 %v887, %v953
      %v960 = vmul.f32 %v888, %v953
      %v961 = vmul.f32 %v889, %v953
      %v962 = vmul.f32 %v890, %v953
      %v963 = vmul.f32 %v891, %v953
      %v964 = vmul.f32 %v892, %v953
      %v965 = vmul.f32 %v893, %v953
      %v966 = vmul.f32 %v894, %v953
      %v967 = vmul.f32 %v895, %v953
      %v968 = vmul.f32 %v896, %v953
      %v969 = vmul.f32 %v897, %v953
      %v970 = vmax.f32 %v954, 0.0
      %v971 = vmax.f32 %v955, 0.0
      %v972 = vmax.f32 %v956, 0.0
      %v973 = vmax.f32 %v957, 0.0
      %v974 = vmax.f32 %v958, 0.0
      %v975 = vmax.f32 %v959, 0.0
      %v976 = vmax.f32 %v960, 0.0
      %v977 = vmax.f32 %v961, 0.0
      %v978 = vmax.f32 %v962, 0.0
      %v979 = vmax.f32 %v963, 0.0
      %v980 = vmax.f32 %v964, 0.0
      %v981 = vmax.f32 %v965, 0.0
      %v982 = vmax.f32 %v966, 0.0
      %v983 = vmax.f32 %v967, 0.0
      %v984 = vmax.f32 %v968, 0.0
      %v985 = vmax.f32 %v969, 0.0
      %v986 = vpack.c.bf16 %v972, %v970
      %v987 = vpack.c.bf16 %v973, %v971
      %v988 = vpack.c.bf16 %v976, %v974
      %v989 = vpack.c.bf16 %v977, %v975
      %v990 = vpack.c.bf16 %v980, %v978
      %v991 = vpack.c.bf16 %v981, %v979
      %v992 = vpack.c.bf16 %v984, %v982
      %v993 = vpack.c.bf16 %v985, %v983
      %v1002 = vunpack.c.l.b16 %v986
      %v1003 = vunpack.c.l.b16 %v987
      %v1004 = vunpack.c.h.b16 %v986
      %v1005 = vunpack.c.h.b16 %v987
      %v1006 = vunpack.c.l.b16 %v988
      %v1007 = vunpack.c.l.b16 %v989
      %v1008 = vunpack.c.h.b16 %v988
      %v1009 = vunpack.c.h.b16 %v989
      %v1010 = vunpack.c.l.b16 %v990
      %v1011 = vunpack.c.l.b16 %v991
      %v1012 = vunpack.c.h.b16 %v990
      %v1013 = vunpack.c.h.b16 %v991
      %v1014 = vunpack.c.l.b16 %v992
      %v1015 = vunpack.c.l.b16 %v993
      %v1016 = vunpack.c.h.b16 %v992
      %v1017 = vunpack.c.h.b16 %v993
      %v1018 = vpack.c.b16 %v1003, %v1002
      %v1019 = vpack.c.b16 %v1005, %v1004
      %v1020 = vpack.c.b16 %v1007, %v1006
      %v1021 = vpack.c.b16 %v1009, %v1008
      %v1022 = vpack.c.b16 %v1011, %v1010
      %v1023 = vpack.c.b16 %v1013, %v1012
      %v1024 = vpack.c.b16 %v1015, %v1014
      %v1025 = vpack.c.b16 %v1017, %v1016
      %vm1034 = vcmask 1043456
      %vm1035 = vcmask 424964
      %vm1036 = vmor %vm1035, %vm1034
      %1037 = vst.msk [vmem:[%s170] sm:$0xff] %vm1036, %v1018
      %1038 = vst.msk [vmem:[%s170 + $0x8] sm:$0xff] %vm1036, %v1019
      %1039 = vst.msk [vmem:[%s170 + $0x10] sm:$0xff] %vm1036, %v1020
      %1040 = vst.msk [vmem:[%s170 + $0x18] sm:$0xff] %vm1036, %v1021
      %1041 = vst.msk [vmem:[%s170 + $0x20] sm:$0xff] %vm1036, %v1022
      %1042 = vst.msk [vmem:[%s170 + $0x28] sm:$0xff] %vm1036, %v1023
      %1043 = vst.msk [vmem:[%s170 + $0x30] sm:$0xff] %vm1036, %v1024
      %1044 = vst.msk [vmem:[%s170 + $0x38] sm:$0xff] %vm1036, %v1025
      %p1045 = scmp.lt.s32.totalorder %s14, 1
      %s1046 = scalar_select %p1045, %s14, 1
      %s1047 = smul.addr %s1046, 16
      %s1048 = smul.addr %s1047, 4
      %s1049 = scalar_lea.vmem %s3, %s1048
      // Predicated region
      $region33: #{deep_q_forward.7} parent=31 // pred_check
        %p1050 = pneg %p100
      $region34: #{deep_q_forward.7} parent=31 // pred_check_branch
        %1052 = sbr.rel (%p1050) target = $region36
      $region35: #{deep_q_forward.7} parent=31 // pred_region
        _
      $region36: #{deep_q_forward.7} parent=31 // pred_fallthru
        _
    $region32: #{deep_q_forward.7} parent=5 // pred_fallthru
      _
    %p1053 = scmp.le.s32.totalorder 2, %s9
    // Predicated region
    $region37: #{deep_q_forward.7} parent=5 // pred_check
      %p1054 = pneg %p1053
    $region38: #{deep_q_forward.7} parent=5 // pred_check_branch
      %1056 = sbr.rel (%p1054) target = $region40
    $region39: #{deep_q_forward.7} parent=5 // pred_region
      %s1057 = ssub.s32 %s9, 2
      // Predicated region
      $region41: #{deep_q_forward.7} parent=39 // pred_check
        %p1058 = pneg %p106
      $region42: #{deep_q_forward.7} parent=39 // pred_check_branch
        %1060 = sbr.rel (%p1058) target = $region44
      $region43: #{deep_q_forward.7} parent=39 // pred_region
        %p1061 = scmp.lt.s32.totalorder %s15, 1
        %s1062 = scalar_select %p1061, %s15, 1
        %s1063 = smul.addr %s1062, 16
        %s1064 = smul.addr %s1063, 4
        %s1065 = scalar_lea.vmem %s3, %s1064
      $region44: #{deep_q_forward.7} parent=39 // pred_fallthru
        _
    $region40: #{deep_q_forward.7} parent=5 // pred_fallthru
      _
  $region6: #{deep_q_forward.7} parent=0 // loop_footer
    %s13 = sadd.s32 1, %s9
  $region7: #{deep_q_forward.7} parent=0 // loop_footer_branch
    %8 = sbr.rel target = $region3
  $region8: #{deep_q_forward.7} parent=0 // loop_exit
    _

// kernel: deep_q_forward.8
$region0: #{deep_q_forward.8}
  #allocation0 [shape = 'u32[]', space=smem, size = 0x4, offset = 0x4, fixed_abs, tag = 'smem constant byte address 0x4 - core index']
  #allocation1 [shape = 'u32[144,128]{1,0:T(1,128)}', space=vmem, size = 0x12000, scoped, tag = 'internal scratch']
  %s0 = inlined_call_operand.vmem [shape: bf16[2,576,128], index: 0, kind: input, shape index: {}]
  %s1 = inlined_call_operand.vmem [shape: bf16[64,576], index: 1, kind: input, shape index: {}]
  %s2 = inlined_call_operand.vmem [shape: f32[64,1], index: 2, kind: input, shape index: {}]
  %s3 = inlined_call_operand.vmem [shape: bf16[2,64,128], index: 3, kind: output, shape index: {}]
  %s4 = sld [smem:[#allocation0]]
  $region45: #{deep_q_forward.8} parent=0
    _
  %s6 = ssub.s32 1, %s4
  %s7 = scalar_select 0, %s6, %s4
  loop: start=0, step=1, limit=4
  $region2: #{deep_q_forward.8} parent=0 // loop_pre_header
    _
  $region3: #{deep_q_forward.8} parent=0 // loop_header
    %s9 = sphi 0, %s13
    %p10 = scmp.ge.s32.totalorder %s9, 4
    %s19 = sphi 0, %s21
    %s22 = sphi 0, %s19
    %s23 = sphi 0, %s22
    %s39 = sphi 0, %s23
    %s43 = sphi 0, %s43
    %s45 = sphi 0, %s43
    %s46 = sphi 0, %s45
    %s60 = sphi 0, %s46
    %s64 = sphi 0, %s64
    %s66 = sphi 0, %s64
    %s67 = sphi 0, %s66
    %s81 = sphi 0, %s67
    %s87 = sphi 0, %s89
    %s90 = sphi 0, %s87
    %s91 = sphi 0, %s90
    %s107 = sphi 0, %s91
  $region4: #{deep_q_forward.8} parent=0 // loop_header_branch
    %12 = sbr.rel (%p10) target = $region8
  $region5: #{deep_q_forward.8} parent=0 // loop_body
    %s14 = ssub.s32 %s9, 1
    %s15 = ssub.s32 %s9, 2
    %s16 = sadd.s32 %s9, 1
    %s17 = ssub.s32 %s9, %s16
    %p18 = scmp.eq.s32.totalorder %s17, 0
    %s20 = sadd.s32 %s19, 1
    %s21 = scalar_select %p18, %s19, %s20
    %p24 = pneg %p18
    %p25 = scmp.eq.s32.totalorder %s9, 1
    %p26 = por %p24, %p25
    %p27 = scmp.ne.s32.totalorder %s19, %s22
    %p28 = scmp.eq.s32.totalorder %s9, 0
    %p29 = por %p27, %p28
    %p30 = scmp.ne.s32.totalorder %s19, %s22
    %p31 = scmp.eq.s32.totalorder %s14, 1
    %p32 = por %p30, %p31
    %p33 = scmp.ne.s32.totalorder %s22, %s23
    %p34 = scmp.eq.s32.totalorder %s14, 0
    %p35 = por %p33, %p34
    %p36 = scmp.ne.s32.totalorder %s22, %s23
    %p37 = scmp.eq.s32.totalorder %s15, 1
    %p38 = por %p36, %p37
    %p40 = scmp.ne.s32.totalorder %s23, %s39
    %p41 = scmp.eq.s32.totalorder %s15, 0
    %p42 = por %p40, %p41
    %s44 = sadd.s32 %s43, 1
    %p47 = scmp.eq.s32.totalorder %s9, 1
    %p48 = scmp.ne.s32.totalorder %s43, %s45
    %p49 = scmp.eq.s32.totalorder %s9, 0
    %p50 = por %p48, %p49
    %p51 = scmp.ne.s32.totalorder %s43, %s45
    %p52 = scmp.eq.s32.totalorder %s14, 1
    %p53 = por %p51, %p52
    %p54 = scmp.ne.s32.totalorder %s45, %s46
    %p55 = scmp.eq.s32.totalorder %s14, 0
    %p56 = por %p54, %p55
    %p57 = scmp.ne.s32.totalorder %s45, %s46
    %p58 = scmp.eq.s32.totalorder %s15, 1
    %p59 = por %p57, %p58
    %p61 = scmp.ne.s32.totalorder %s46, %s60
    %p62 = scmp.eq.s32.totalorder %s15, 0
    %p63 = por %p61, %p62
    %s65 = sadd.s32 %s64, 1
    %p68 = scmp.eq.s32.totalorder %s9, 1
    %p69 = scmp.ne.s32.totalorder %s64, %s66
    %p70 = scmp.eq.s32.totalorder %s9, 0
    %p71 = por %p69, %p70
    %p72 = scmp.ne.s32.totalorder %s64, %s66
    %p73 = scmp.eq.s32.totalorder %s14, 1
    %p74 = por %p72, %p73
    %p75 = scmp.ne.s32.totalorder %s66, %s67
    %p76 = scmp.eq.s32.totalorder %s14, 0
    %p77 = por %p75, %p76
    %p78 = scmp.ne.s32.totalorder %s66, %s67
    %p79 = scmp.eq.s32.totalorder %s15, 1
    %p80 = por %p78, %p79
    %p82 = scmp.ne.s32.totalorder %s67, %s81
    %p83 = scmp.eq.s32.totalorder %s15, 0
    %p84 = por %p82, %p83
    %s85 = ssub.s32 %s9, %s16
    %p86 = scmp.eq.s32.totalorder %s85, 0
    %s88 = sadd.s32 %s87, 1
    %s89 = scalar_select %p86, %s87, %s88
    %p92 = pneg %p86
    %p93 = scmp.eq.s32.totalorder %s9, 1
    %p94 = por %p92, %p93
    %p95 = scmp.ne.s32.totalorder %s87, %s90
    %p96 = scmp.eq.s32.totalorder %s9, 0
    %p97 = por %p95, %p96
    %p98 = scmp.ne.s32.totalorder %s87, %s90
    %p99 = scmp.eq.s32.totalorder %s14, 1
    %p100 = por %p98, %p99
    %p101 = scmp.ne.s32.totalorder %s90, %s91
    %p102 = scmp.eq.s32.totalorder %s14, 0
    %p103 = por %p101, %p102
    %p104 = scmp.ne.s32.totalorder %s90, %s91
    %p105 = scmp.eq.s32.totalorder %s15, 1
    %p106 = por %p104, %p105
    %p108 = scmp.ne.s32.totalorder %s91, %s107
    %p109 = scmp.eq.s32.totalorder %s15, 0
    %p110 = por %p108, %p109
    %p111 = scmp.le.s32.totalorder 1, %s9
    %p112 = scmp.lt.s32.totalorder %s9, 3
    %p113 = pnand %p111, %p112
    %p114 = pneg %p113
    // Predicated region
    $region9: #{deep_q_forward.8} parent=5 // pred_check
      _
    $region10: #{deep_q_forward.8} parent=5 // pred_check_branch
      %116 = sbr.rel (%p113) target = $region12
    $region11: #{deep_q_forward.8} parent=5 // pred_region
      %s117 = ssub.s32 %s9, 1
      // Predicated region
      $region13: #{deep_q_forward.8} parent=11 // pred_check
        %p118 = pneg %p56
      $region14: #{deep_q_forward.8} parent=11 // pred_check_branch
        %120 = sbr.rel (%p118) target = $region16
      $region15: #{deep_q_forward.8} parent=11 // pred_region
        _
      $region16: #{deep_q_forward.8} parent=11 // pred_fallthru
        _
      // Predicated region
      $region17: #{deep_q_forward.8} parent=11 // pred_check
        %p121 = pneg %p77
      $region18: #{deep_q_forward.8} parent=11 // pred_check_branch
        %123 = sbr.rel (%p121) target = $region20
      $region19: #{deep_q_forward.8} parent=11 // pred_region
        _
      $region20: #{deep_q_forward.8} parent=11 // pred_fallthru
        _
    $region12: #{deep_q_forward.8} parent=5 // pred_fallthru
      _
    %p124 = scmp.lt.s32.totalorder %s9, 2
    // Predicated region
    $region21: #{deep_q_forward.8} parent=5 // pred_check
      %p125 = pneg %p124
    $region22: #{deep_q_forward.8} parent=5 // pred_check_branch
      %127 = sbr.rel (%p125) target = $region24
    $region23: #{deep_q_forward.8} parent=5 // pred_region
      // Predicated region
      $region25: #{deep_q_forward.8} parent=23 // pred_check
        %p128 = pneg %p29
      $region26: #{deep_q_forward.8} parent=23 // pred_check_branch
        %130 = sbr.rel (%p128) target = $region28
      $region27: #{deep_q_forward.8} parent=23 // pred_region
        %p131 = scmp.lt.s32.totalorder %s9, 1
        %s132 = scalar_select %p131, %s9, 1
        %s133 = smul.addr %s132, 72
        %s134 = smul.addr %s133, 4
        %s135 = scalar_lea.vmem %s0, %s134
      $region28: #{deep_q_forward.8} parent=23 // pred_fallthru
        _
    $region24: #{deep_q_forward.8} parent=5 // pred_fallthru
      _
    %p136 = scmp.le.s32.totalorder 1, %s9
    %p137 = scmp.lt.s32.totalorder %s9, 3
    %p138 = pnand %p136, %p137
    %p139 = pneg %p138
    // Predicated region
    $region29: #{deep_q_forward.8} parent=5 // pred_check
      _
    $region30: #{deep_q_forward.8} parent=5 // pred_check_branch
      %141 = sbr.rel (%p138) target = $region32
    $region31: #{deep_q_forward.8} parent=5 // pred_region
      %s142 = ssub.s32 %s9, 1
      %p143 = scmp.lt.s32.totalorder %s14, 1
      %s144 = scalar_select %p143, %s14, 1
      %s145 = smul.addr %s144, 72
      %s146 = smul.addr %s145, 4
      %s147 = scalar_lea.vmem %s0, %s146
      %p148 = pneg %p35
      %p149 = pneg %p32
      %p150 = pneg %p56
      %p151 = pneg %p53
      %p152 = pneg %p77
      %p153 = pneg %p74
      %p154 = pneg %p103
      %p155 = pneg %p100
      %p156 = scmp.lt.s32.totalorder %s14, 1
      %s157 = scalar_select %p156, %s14, 1
      %s158 = smul.addr %s157, 8
      %s159 = smul.addr %s158, 4
      %s160 = scalar_lea.vmem %s3, %s159
      %p161 = scmp.lt.s32.totalorder %s14, 1
      %s162 = scalar_select %p161, %s14, 1
      %s163 = smul.addr %s162, 72
      %s164 = smul.addr %s163, 4
      %s165 = scalar_lea.vmem %s0, %s164
      %p166 = scmp.lt.s32.totalorder %s14, 1
      %s167 = scalar_select %p166, %s14, 1
      %s168 = smul.addr %s167, 8
      %s169 = smul.addr %s168, 4
      %s170 = scalar_lea.vmem %s3, %s169
      %v172 = vld [vmem:[%s1] sm:$0xff]
      %v173 = vld [vmem:[%s1 + $0x8] sm:$0xff]
      %v174 = vld [vmem:[%s1 + $0x10] sm:$0xf]
      %v175 = vld [vmem:[%s1 + $0x14] sm:$0xff]
      %v176 = vld [vmem:[%s1 + $0x1c] sm:$0xff]
      %v177 = vld [vmem:[%s1 + $0x24] sm:$0xf]
      %v178 = vld [vmem:[%s1 + $0x28] sm:$0xff]
      %v179 = vld [vmem:[%s1 + $0x30] sm:$0xff]
      %v180 = vld [vmem:[%s1 + $0x38] sm:$0xf]
      %v181 = vld [vmem:[%s1 + $0x3c] sm:$0xff]
      %v182 = vld [vmem:[%s1 + $0x44] sm:$0xff]
      %v183 = vld [vmem:[%s1 + $0x4c] sm:$0xf]
      %v184 = vld [vmem:[%s1 + $0x50] sm:$0xff]
      %v185 = vld [vmem:[%s1 + $0x58] sm:$0xff]
      %v186 = vld [vmem:[%s1 + $0x60] sm:$0xf]
      %v187 = vld [vmem:[%s1 + $0x64] sm:$0xff]
      %v188 = vld [vmem:[%s1 + $0x6c] sm:$0xff]
      %v189 = vld [vmem:[%s1 + $0x74] sm:$0xf]
      %v190 = vld [vmem:[%s1 + $0x78] sm:$0xff]
      %v191 = vld [vmem:[%s1 + $0x80] sm:$0xff]
      %v192 = vld [vmem:[%s1 + $0x88] sm:$0xf]
      %v193 = vld [vmem:[%s1 + $0x8c] sm:$0xff]
      %v194 = vld [vmem:[%s1 + $0x94] sm:$0xff]
      %v195 = vld [vmem:[%s1 + $0x9c] sm:$0xf]
      %v196 = vld [vmem:[%s165] sm:$0xf]
      %v197 = vld [vmem:[%s165 + $0x4] sm:$0xf]
      %v198 = vld [vmem:[%s165 + $0x8] sm:$0xf]
      %v199 = vld [vmem:[%s165 + $0xc] sm:$0xf]
      %v200 = vld [vmem:[%s165 + $0x10] sm:$0xf]
      %v201 = vld [vmem:[%s165 + $0x14] sm:$0xf]
      %v202 = vld [vmem:[%s165 + $0x18] sm:$0xf]
      %v203 = vld [vmem:[%s165 + $0x1c] sm:$0xf]
      %v204 = vld [vmem:[%s165 + $0x20] sm:$0xf]
      %v205 = vld [vmem:[%s165 + $0x24] sm:$0xf]
      %v206 = vld [vmem:[%s165 + $0x28] sm:$0xf]
      %v207 = vld [vmem:[%s165 + $0x2c] sm:$0xf]
      %v208 = vld [vmem:[%s165 + $0x30] sm:$0xf]
      %v209 = vld [vmem:[%s165 + $0x34] sm:$0xf]
      %v210 = vld [vmem:[%s165 + $0x38] sm:$0xf]
      %v211 = vld [vmem:[%s165 + $0x3c] sm:$0xf]
      %v212 = vld [vmem:[%s165 + $0x40] sm:$0xf]
      %v213 = vld [vmem:[%s165 + $0x44] sm:$0xf]
      %v214 = vld [vmem:[%s165 + $0x48] sm:$0xf]
      %v215 = vld [vmem:[%s165 + $0x4c] sm:$0xf]
      %v216 = vld [vmem:[%s165 + $0x50] sm:$0xf]
      %v217 = vld [vmem:[%s165 + $0x54] sm:$0xf]
      %v218 = vld [vmem:[%s165 + $0x58] sm:$0xf]
      %v219 = vld [vmem:[%s165 + $0x5c] sm:$0xf]
      %v220 = vld [vmem:[%s165 + $0x60] sm:$0xf]
      %v221 = vld [vmem:[%s165 + $0x64] sm:$0xf]
      %v222 = vld [vmem:[%s165 + $0x68] sm:$0xf]
      %v223 = vld [vmem:[%s165 + $0x6c] sm:$0xf]
      %v224 = vld [vmem:[%s165 + $0x70] sm:$0xf]
      %v225 = vld [vmem:[%s165 + $0x74] sm:$0xf]
      %v226 = vld [vmem:[%s165 + $0x78] sm:$0xf]
      %v227 = vld [vmem:[%s165 + $0x7c] sm:$0xf]
      %v228 = vld [vmem:[%s165 + $0x80] sm:$0xf]
      %v229 = vld [vmem:[%s165 + $0x84] sm:$0xf]
      %v230 = vld [vmem:[%s165 + $0x88] sm:$0xf]
      %v231 = vld [vmem:[%s165 + $0x8c] sm:$0xf]
      %v232 = vld [vmem:[%s165 + $0x90] sm:$0xf]
      %v233 = vld [vmem:[%s165 + $0x94] sm:$0xf]
      %v234 = vld [vmem:[%s165 + $0x98] sm:$0xf]
      %v235 = vld [vmem:[%s165 + $0x9c] sm:$0xf]
      %v236 = vld [vmem:[%s165 + $0xa0] sm:$0xf]
      %v237 = vld [vmem:[%s165 + $0xa4] sm:$0xf]
      %v238 = vld [vmem:[%s165 + $0xa8] sm:$0xf]
      %v239 = vld [vmem:[%s165 + $0xac] sm:$0xf]
      %v240 = vld [vmem:[%s165 + $0xb0] sm:$0xf]
      %v241 = vld [vmem:[%s165 + $0xb4] sm:$0xf]
      %v242 = vld [vmem:[%s165 + $0xb8] sm:$0xf]
      %v243 = vld [vmem:[%s165 + $0xbc] sm:$0xf]
      %v244 = vld [vmem:[%s165 + $0xc0] sm:$0xf]
      %v245 = vld [vmem:[%s165 + $0xc4] sm:$0xf]
      %v246 = vld [vmem:[%s165 + $0xc8] sm:$0xf]
      %v247 = vld [vmem:[%s165 + $0xcc] sm:$0xf]
      %v248 = vld [vmem:[%s165 + $0xd0] sm:$0xf]
      %v249 = vld [vmem:[%s165 + $0xd4] sm:$0xf]
      %v250 = vld [vmem:[%s165 + $0xd8] sm:$0xf]
      %v251 = vld [vmem:[%s165 + $0xdc] sm:$0xf]
      %v252 = vld [vmem:[%s165 + $0xe0] sm:$0xf]
      %v253 = vld [vmem:[%s165 + $0xe4] sm:$0xf]
      %v254 = vld [vmem:[%s165 + $0xe8] sm:$0xf]
      %v255 = vld [vmem:[%s165 + $0xec] sm:$0xf]
      %v256 = vld [vmem:[%s165 + $0xf0] sm:$0xf]
      %v257 = vld [vmem:[%s165 + $0xf4] sm:$0xf]
      %v258 = vld [vmem:[%s165 + $0xf8] sm:$0xf]
      %v259 = vld [vmem:[%s165 + $0xfc] sm:$0xf]
      %v260 = vld [vmem:[%s165 + $0x100] sm:$0xf]
      %v261 = vld [vmem:[%s165 + $0x104] sm:$0xf]
      %v262 = vld [vmem:[%s165 + $0x108] sm:$0xf]
      %v263 = vld [vmem:[%s165 + $0x10c] sm:$0xf]
      %v264 = vld [vmem:[%s165 + $0x110] sm:$0xf]
      %v265 = vld [vmem:[%s165 + $0x114] sm:$0xf]
      %v266 = vld [vmem:[%s165 + $0x118] sm:$0xf]
      %v267 = vld [vmem:[%s165 + $0x11c] sm:$0xf]
      %v268 = vld [vmem:[%s2] sm:$0xff]
      %v269 = vld [vmem:[%s2 + $0x8] sm:$0xff]
      %v270 = vld [vmem:[%s2 + $0x10] sm:$0xff]
      %v271 = vld [vmem:[%s2 + $0x18] sm:$0xff]
      %v272 = vld [vmem:[%s2 + $0x20] sm:$0xff]
      %v273 = vld [vmem:[%s2 + $0x28] sm:$0xff]
      %v274 = vld [vmem:[%s2 + $0x30] sm:$0xff]
      %v275 = vld [vmem:[%s2 + $0x38] sm:$0xff]
      %277 = vset.pattern.permute.xlu0 0
      %278 = vperm.xlu0 %277, %v268
      %v279 = vpop.permute.xlu0 %278
      %282 = vset.pattern.permute.xlu0 0
      %283 = vperm.xlu0 %282, %v269
      %v284 = vpop.permute.xlu0 %283
      %287 = vset.pattern.permute.xlu0 0
      %288 = vperm.xlu0 %287, %v270
      %v289 = vpop.permute.xlu0 %288
      %292 = vset.pattern.permute.xlu0 0
      %293 = vperm.xlu0 %292, %v271
      %v294 = vpop.permute.xlu0 %293
      %297 = vset.pattern.permute.xlu0 0
      %298 = vperm.xlu0 %297, %v272
      %v299 = vpop.permute.xlu0 %298
      %302 = vset.pattern.permute.xlu0 0
      %303 = vperm.xlu0 %302, %v273
      %v304 = vpop.permute.xlu0 %303
      %307 = vset.pattern.permute.xlu0 0
      %308 = vperm.xlu0 %307, %v274
      %v309 = vpop.permute.xlu0 %308
      %312 = vset.pattern.permute.xlu0 0
      %313 = vperm.xlu0 %312, %v275
      %v314 = vpop.permute.xlu0 %313
      %v340 = vunpack.c.l.b16 %v172
      %v341 = vunpack.c.h.b16 %v172
      %v342 = vunpack.c.l.b16 %v173
      %v343 = vunpack.c.h.b16 %v173
      %v344 = vunpack.c.l.b16 %v174
      %v345 = vunpack.c.l.b16 %v175
      %v346 = vunpack.c.h.b16 %v175
      %v347 = vunpack.c.l.b16 %v176
      %v348 = vunpack.c.h.b16 %v176
      %v349 = vunpack.c.l.b16 %v177
      %v350 = vunpack.c.l.b16 %v178
      %v351 = vunpack.c.h.b16 %v178
      %v352 = vunpack.c.l.b16 %v179
      %v353 = vunpack.c.h.b16 %v179
      %v354 = vunpack.c.l.b16 %v180
      %v355 = vunpack.c.l.b16 %v181
      %v356 = vunpack.c.h.b16 %v181
      %v357 = vunpack.c.l.b16 %v182
      %v358 = vunpack.c.h.b16 %v182
      %v359 = vunpack.c.l.b16 %v183
      %v360 = vunpack.c.l.b16 %v184
      %v361 = vunpack.c.h.b16 %v184
      %v362 = vunpack.c.l.b16 %v185
      %v363 = vunpack.c.h.b16 %v185
      %v364 = vunpack.c.l.b16 %v186
      %v365 = vunpack.c.l.b16 %v187
      %v366 = vunpack.c.h.b16 %v187
      %v367 = vunpack.c.l.b16 %v188
      %v368 = vunpack.c.h.b16 %v188
      %v369 = vunpack.c.l.b16 %v189
      %v370 = vunpack.c.l.b16 %v190
      %v371 = vunpack.c.h.b16 %v190
      %v372 = vunpack.c.l.b16 %v191
      %v373 = vunpack.c.h.b16 %v191
      %v374 = vunpack.c.l.b16 %v192
      %v375 = vunpack.c.l.b16 %v193
      %v376 = vunpack.c.h.b16 %v193
      %v377 = vunpack.c.l.b16 %v194
      %v378 = vunpack.c.h.b16 %v194
      %v379 = vunpack.c.l.b16 %v195
      %v380 = vpack.c.b16 %v345, %v340
      %v381 = vpack.c.b16 %v346, %v341
      %v382 = vpack.c.b16 %v347, %v342
      %v383 = vpack.c.b16 %v348, %v343
      %v384 = vpack.c.b16 %v349, %v344
      %v385 = vpack.c.b16 %v355, %v350
      %v386 = vpack.c.b16 %v356, %v351
      %v387 = vpack.c.b16 %v357, %v352
      %v388 = vpack.c.b16 %v358, %v353
      %v389 = vpack.c.b16 %v359, %v354
      %v390 = vpack.c.b16 %v365, %v360
      %v391 = vpack.c.b16 %v366, %v361
      %v392 = vpack.c.b16 %v367, %v362
      %v393 = vpack.c.b16 %v368, %v363
      %v394 = vpack.c.b16 %v369, %v364
      %v395 = vpack.c.b16 %v375, %v370
      %v396 = vpack.c.b16 %v376, %v371
      %v397 = vpack.c.b16 %v377, %v372
      %v398 = vpack.c.b16 %v378, %v373
      %v399 = vpack.c.b16 %v379, %v374
      %v488 = vunpack.c.l.b16 %v196
      %v489 = vunpack.c.l.b16 %v197
      %v490 = vunpack.c.l.b16 %v198
      %v491 = vunpack.c.l.b16 %v199
      %v492 = vunpack.c.l.b16 %v200
      %v493 = vunpack.c.l.b16 %v201
      %v494 = vunpack.c.l.b16 %v202
      %v495 = vunpack.c.l.b16 %v203
      %v496 = vunpack.c.l.b16 %v204
      %v497 = vunpack.c.l.b16 %v205
      %v498 = vunpack.c.l.b16 %v206
      %v499 = vunpack.c.l.b16 %v207
      %v500 = vunpack.c.l.b16 %v208
      %v501 = vunpack.c.l.b16 %v209
      %v502 = vunpack.c.l.b16 %v210
      %v503 = vunpack.c.l.b16 %v211
      %v504 = vunpack.c.l.b16 %v212
      %v505 = vunpack.c.l.b16 %v213
      %v506 = vunpack.c.l.b16 %v214
      %v507 = vunpack.c.l.b16 %v215
      %v508 = vunpack.c.l.b16 %v216
      %v509 = vunpack.c.l.b16 %v217
      %v510 = vunpack.c.l.b16 %v218
      %v511 = vunpack.c.l.b16 %v219
      %v512 = vunpack.c.l.b16 %v220
      %v513 = vunpack.c.l.b16 %v221
      %v514 = vunpack.c.l.b16 %v222
      %v515 = vunpack.c.l.b16 %v223
      %v516 = vunpack.c.l.b16 %v224
      %v517 = vunpack.c.l.b16 %v225
      %v518 = vunpack.c.l.b16 %v226
      %v519 = vunpack.c.l.b16 %v227
      %v520 = vunpack.c.l.b16 %v228
      %v521 = vunpack.c.l.b16 %v229
      %v522 = vunpack.c.l.b16 %v230
      %v523 = vunpack.c.l.b16 %v231
      %v524 = vunpack.c.l.b16 %v232
      %v525 = vunpack.c.l.b16 %v233
      %v526 = vunpack.c.l.b16 %v234
      %v527 = vunpack.c.l.b16 %v235
      %v528 = vunpack.c.l.b16 %v236
      %v529 = vunpack.c.l.b16 %v237
      %v530 = vunpack.c.l.b16 %v238
      %v531 = vunpack.c.l.b16 %v239
      %v532 = vunpack.c.l.b16 %v240
      %v533 = vunpack.c.l.b16 %v241
      %v534 = vunpack.c.l.b16 %v242
      %v535 = vunpack.c.l.b16 %v243
      %v536 = vunpack.c.l.b16 %v244
      %v537 = vunpack.c.l.b16 %v245
      %v538 = vunpack.c.l.b16 %v246
      %v539 = vunpack.c.l.b16 %v247
      %v540 = vunpack.c.l.b16 %v248
      %v541 = vunpack.c.l.b16 %v249
      %v542 = vunpack.c.l.b16 %v250
      %v543 = vunpack.c.l.b16 %v251
      %v544 = vunpack.c.l.b16 %v252
      %v545 = vunpack.c.l.b16 %v253
      %v546 = vunpack.c.l.b16 %v254
      %v547 = vunpack.c.l.b16 %v255
      %v548 = vunpack.c.l.b16 %v256
      %v549 = vunpack.c.l.b16 %v257
      %v550 = vunpack.c.l.b16 %v258
      %v551 = vunpack.c.l.b16 %v259
      %v552 = vunpack.c.l.b16 %v260
      %v553 = vunpack.c.l.b16 %v261
      %v554 = vunpack.c.l.b16 %v262
      %v555 = vunpack.c.l.b16 %v263
      %v556 = vunpack.c.l.b16 %v264
      %v557 = vunpack.c.l.b16 %v265
      %v558 = vunpack.c.l.b16 %v266
      %v559 = vunpack.c.l.b16 %v267
      %v560 = vpack.c.b16 %v489, %v488
      %v561 = vpack.c.b16 %v491, %v490
      %v562 = vpack.c.b16 %v493, %v492
      %v563 = vpack.c.b16 %v495, %v494
      %v564 = vpack.c.b16 %v497, %v496
      %v565 = vpack.c.b16 %v499, %v498
      %v566 = vpack.c.b16 %v501, %v500
      %v567 = vpack.c.b16 %v503, %v502
      %v568 = vpack.c.b16 %v505, %v504
      %v569 = vpack.c.b16 %v507, %v506
      %v570 = vpack.c.b16 %v509, %v508
      %v571 = vpack.c.b16 %v511, %v510
      %v572 = vpack.c.b16 %v513, %v512
      %v573 = vpack.c.b16 %v515, %v514
      %v574 = vpack.c.b16 %v517, %v516
      %v575 = vpack.c.b16 %v519, %v518
      %v576 = vpack.c.b16 %v521, %v520
      %v577 = vpack.c.b16 %v523, %v522
      %v578 = vpack.c.b16 %v525, %v524
      %v579 = vpack.c.b16 %v527, %v526
      %v580 = vpack.c.b16 %v529, %v528
      %v581 = vpack.c.b16 %v531, %v530
      %v582 = vpack.c.b16 %v533, %v532
      %v583 = vpack.c.b16 %v535, %v534
      %v584 = vpack.c.b16 %v537, %v536
      %v585 = vpack.c.b16 %v539, %v538
      %v586 = vpack.c.b16 %v541, %v540
      %v587 = vpack.c.b16 %v543, %v542
      %v588 = vpack.c.b16 %v545, %v544
      %v589 = vpack.c.b16 %v547, %v546
      %v590 = vpack.c.b16 %v549, %v548
      %v591 = vpack.c.b16 %v551, %v550
      %v592 = vpack.c.b16 %v553, %v552
      %v593 = vpack.c.b16 %v555, %v554
      %v594 = vpack.c.b16 %v557, %v556
      %v595 = vpack.c.b16 %v559, %v558
      %vm632 = vcmask 523264
      %v634 = vsel %vm632, %v384, 0
      %v637 = vsel %vm632, %v389, 0
      %v640 = vsel %vm632, %v394, 0
      %v643 = vsel %vm632, %v399, 0
      %645 = vmatprep.subr.bf16.mxu0 0
      %646 = vmatpush1.bf16.msra.mxu0 %v567
      %647 = vmatprep.subr.bf16.mxu0 0
      %648 = vmatpush1.bf16.msra.mxu0 %v566
      %649 = vmatprep.subr.bf16.mxu0 0
      %650 = vmatpush1.bf16.msra.mxu0 %v565
      %651 = vmatprep.subr.bf16.mxu0 0
      %652 = vmatpush1.bf16.msra.mxu0 %v564
      %653 = vmatprep.subr.bf16.mxu0 0
      %654 = vmatpush1.bf16.msra.mxu0 %v563
      %655 = vmatprep.subr.bf16.mxu0 0
      %656 = vmatpush1.bf16.msra.mxu0 %v562
      %657 = vmatprep.subr.bf16.mxu0 0
      %658 = vmatpush1.bf16.msra.mxu0 %v561
      %659 = vmatprep.subr.bf16.mxu0 0
      %660 = vmatpush1.bf16.msra.mxu0 %v560
      %661 = vmatprep.subr.bf16.mxu0 0
      %662 = vmatpush2.bf16.msra.mxu0 %v575
      %663 = vmatprep.subr.bf16.mxu0 0
      %664 = vmatpush2.bf16.msra.mxu0 %v574
      %665 = vmatprep.subr.bf16.mxu0 0
      %666 = vmatpush2.bf16.msra.mxu0 %v573
      %667 = vmatprep.subr.bf16.mxu0 0
      %668 = vmatpush2.bf16.msra.mxu0 %v572
      %669 = vmatprep.subr.bf16.mxu0 0
      %670 = vmatpush2.bf16.msra.mxu0 %v571
      %671 = vmatprep.subr.bf16.mxu0 0
      %672 = vmatpush2.bf16.msra.mxu0 %v570
      %673 = vmatprep.subr.bf16.mxu0 0
      %674 = vmatpush2.bf16.msra.mxu0 %v569
      %675 = vmatprep.subr.bf16.mxu0 0
      %676 = vmatpush2.bf16.msra.mxu0 %v568
      %677 = vmatprep.mubr.bf16.mxu0 %v381
      %678 = vmatmul.mubr.bf16.gmra.mxu0 %v380
      %v679 = vpop.f32.mrf.mxu0
      %v680 = vadd.f32 %v279, %v679
      %v681 = vpop.f32.mrf.mxu0
      %v682 = vpop.f32.mrf.mxu0
      %v683 = vadd.f32 %v284, %v682
      %v684 = vpop.f32.mrf.mxu0
      %685 = vmatprep.mubr.bf16.mxu0 %v386
      %686 = vmatmul.mubr.bf16.gmra.mxu0 %v385
      %v687 = vpop.f32.mrf.mxu0
      %v688 = vadd.f32 %v289, %v687
      %v689 = vpop.f32.mrf.mxu0
      %v690 = vpop.f32.mrf.mxu0
      %v691 = vadd.f32 %v294, %v690
      %v692 = vpop.f32.mrf.mxu0
      %693 = vmatprep.mubr.bf16.mxu0 %v391
      %694 = vmatmul.mubr.bf16.gmra.mxu0 %v390
      %v695 = vpop.f32.mrf.mxu0
      %v696 = vadd.f32 %v299, %v695
      %v697 = vpop.f32.mrf.mxu0
      %v698 = vpop.f32.mrf.mxu0
      %v699 = vadd.f32 %v304, %v698
      %v700 = vpop.f32.mrf.mxu0
      %701 = vmatprep.mubr.bf16.mxu0 %v396
      %702 = vmatmul.mubr.bf16.gmra.mxu0 %v395
      %v703 = vpop.f32.mrf.mxu0
      %v704 = vadd.f32 %v309, %v703
      %v705 = vpop.f32.mrf.mxu0
      %v706 = vpop.f32.mrf.mxu0
      %v707 = vadd.f32 %v314, %v706
      %v708 = vpop.f32.mrf.mxu0
      %709 = vdwg.mxu0
      %710 = vmatprep.subr.bf16.mxu0 0
      %711 = vmatpush1.bf16.msra.mxu0 %v583
      %712 = vmatprep.subr.bf16.mxu0 0
      %713 = vmatpush1.bf16.msra.mxu0 %v582
      %714 = vmatprep.subr.bf16.mxu0 0
      %715 = vmatpush1.bf16.msra.mxu0 %v581
      %716 = vmatprep.subr.bf16.mxu0 0
      %717 = vmatpush1.bf16.msra.mxu0 %v580
      %718 = vmatprep.subr.bf16.mxu0 0
      %719 = vmatpush1.bf16.msra.mxu0 %v579
      %720 = vmatprep.subr.bf16.mxu0 0
      %721 = vmatpush1.bf16.msra.mxu0 %v578
      %722 = vmatprep.subr.bf16.mxu0 0
      %723 = vmatpush1.bf16.msra.mxu0 %v577
      %724 = vmatprep.subr.bf16.mxu0 0
      %725 = vmatpush1.bf16.msra.mxu0 %v576
      %726 = vmatprep.subr.bf16.mxu0 0
      %727 = vmatpush2.bf16.msra.mxu0 %v591
      %728 = vmatprep.subr.bf16.mxu0 0
      %729 = vmatpush2.bf16.msra.mxu0 %v590
      %730 = vmatprep.subr.bf16.mxu0 0
      %731 = vmatpush2.bf16.msra.mxu0 %v589
      %732 = vmatprep.subr.bf16.mxu0 0
      %733 = vmatpush2.bf16.msra.mxu0 %v588
      %734 = vmatprep.subr.bf16.mxu0 0
      %735 = vmatpush2.bf16.msra.mxu0 %v587
      %736 = vmatprep.subr.bf16.mxu0 0
      %737 = vmatpush2.bf16.msra.mxu0 %v586
      %738 = vmatprep.subr.bf16.mxu0 0
      %739 = vmatpush2.bf16.msra.mxu0 %v585
      %740 = vmatprep.subr.bf16.mxu0 0
      %741 = vmatpush2.bf16.msra.mxu0 %v584
      %742 = vmatprep.mubr.bf16.mxu0 %v383
      %743 = vmatmul.mubr.bf16.gmra.mxu0 %v382
      %v744 = vpop.f32.mrf.mxu0
      %v745 = vadd.f32 %v680, %v744
      %v746 = vpop.f32.mrf.mxu0
      %v747 = vpop.f32.mrf.mxu0
      %v748 = vadd.f32 %v683, %v747
      %v749 = vpop.f32.mrf.mxu0
      %750 = vmatprep.mubr.bf16.mxu0 %v388
      %751 = vmatmul.mubr.bf16.gmra.mxu0 %v387
      %v752 = vpop.f32.mrf.mxu0
      %v753 = vadd.f32 %v688, %v752
      %v754 = vpop.f32.mrf.mxu0
      %v755 = vpop.f32.mrf.mxu0
      %v756 = vadd.f32 %v691, %v755
      %v757 = vpop.f32.mrf.mxu0
      %758 = vmatprep.mubr.bf16.mxu0 %v393
      %759 = vmatmul.mubr.bf16.gmra.mxu0 %v392
      %v760 = vpop.f32.mrf.mxu0
      %v761 = vadd.f32 %v696, %v760
      %v762 = vpop.f32.mrf.mxu0
      %v763 = vpop.f32.mrf.mxu0
      %v764 = vadd.f32 %v699, %v763
      %v765 = vpop.f32.mrf.mxu0
      %766 = vmatprep.mubr.bf16.mxu0 %v398
      %767 = vmatmul.mubr.bf16.gmra.mxu0 %v397
      %v768 = vpop.f32.mrf.mxu0
      %v769 = vadd.f32 %v704, %v768
      %v770 = vpop.f32.mrf.mxu0
      %v771 = vpop.f32.mrf.mxu0
      %v772 = vadd.f32 %v707, %v771
      %v773 = vpop.f32.mrf.mxu0
      %774 = vdwg.mxu0
      %775 = vmatprep.subr.bf16.mxu0 0
      %776 = vmatpush1.bf16.msra.mxu0 0
      %777 = vmatprep.subr.bf16.mxu0 0
      %778 = vmatpush1.bf16.msra.mxu0 0
      %779 = vmatprep.subr.bf16.mxu0 0
      %780 = vmatpush1.bf16.msra.mxu0 0
      %781 = vmatprep.subr.bf16.mxu0 0
      %782 = vmatpush1.bf16.msra.mxu0 0
      %783 = vmatprep.subr.bf16.mxu0 0
      %784 = vmatpush1.bf16.msra.mxu0 %v595
      %785 = vmatprep.subr.bf16.mxu0 0
      %786 = vmatpush1.bf16.msra.mxu0 %v594
      %787 = vmatprep.subr.bf16.mxu0 0
      %788 = vmatpush1.bf16.msra.mxu0 %v593
      %789 = vmatprep.subr.bf16.mxu0 0
      %790 = vmatpush1.bf16.msra.mxu0 %v592
      %791 = vmatprep.subr.bf16.mxu0 0
      %792 = vmatpush2.bf16.msra.mxu0 0
      %793 = vmatprep.subr.bf16.mxu0 0
      %794 = vmatpush2.bf16.msra.mxu0 0
      %795 = vmatprep.subr.bf16.mxu0 0
      %796 = vmatpush2.bf16.msra.mxu0 0
      %797 = vmatprep.subr.bf16.mxu0 0
      %798 = vmatpush2.bf16.msra.mxu0 0
      %799 = vmatprep.subr.bf16.mxu0 0
      %800 = vmatpush2.bf16.msra.mxu0 0
      %801 = vmatprep.subr.bf16.mxu0 0
      %802 = vmatpush2.bf16.msra.mxu0 0
      %803 = vmatprep.subr.bf16.mxu0 0
      %804 = vmatpush2.bf16.msra.mxu0 0
      %805 = vmatprep.subr.bf16.mxu0 0
      %806 = vmatpush2.bf16.msra.mxu0 0
      %807 = vmatprep.mubr.bf16.mxu0 0
      %808 = vmatmul.mubr.bf16.gmra.mxu0 %v634
      %v809 = vpop.f32.mrf.mxu0
      %v810 = vadd.f32 %v745, %v809
      %v811 = vpop.f32.mrf.mxu0
      %v812 = vpop.f32.mrf.mxu0
      %v813 = vadd.f32 %v748, %v812
      %v814 = vpop.f32.mrf.mxu0
      %815 = vmatprep.mubr.bf16.mxu0 0
      %816 = vmatmul.mubr.bf16.gmra.mxu0 %v637
      %v817 = vpop.f32.mrf.mxu0
      %v818 = vadd.f32 %v753, %v817
      %v819 = vpop.f32.mrf.mxu0
      %v820 = vpop.f32.mrf.mxu0
      %v821 = vadd.f32 %v756, %v820
      %v822 = vpop.f32.mrf.mxu0
      %823 = vmatprep.mubr.bf16.mxu0 0
      %824 = vmatmul.mubr.bf16.gmra.mxu0 %v640
      %v825 = vpop.f32.mrf.mxu0
      %v826 = vadd.f32 %v761, %v825
      %v827 = vpop.f32.mrf.mxu0
      %v828 = vpop.f32.mrf.mxu0
      %v829 = vadd.f32 %v764, %v828
      %v830 = vpop.f32.mrf.mxu0
      %831 = vmatprep.mubr.bf16.mxu0 0
      %832 = vmatmul.mubr.bf16.gmra.mxu0 %v643
      %v833 = vpop.f32.mrf.mxu0
      %v834 = vadd.f32 %v769, %v833
      %v835 = vpop.f32.mrf.mxu0
      %v836 = vpop.f32.mrf.mxu0
      %v837 = vadd.f32 %v772, %v836
      %v838 = vpop.f32.mrf.mxu0
      %839 = vdwg.mxu0
      %v840 = vadd.f32 %v810, %v813
      %v841 = vadd.f32 %v840, %v818
      %v842 = vadd.f32 %v841, %v821
      %v843 = vadd.f32 %v842, %v826
      %v844 = vadd.f32 %v843, %v829
      %v845 = vadd.f32 %v844, %v834
      %v846 = vadd.f32 %v845, %v837
      %847 = vadd.xlane.f32.xlu0 %v846
      %v848 = vpop.xlane.xlu0 %847
      %v849 = vrot.slane %v848, 4
      %v850 = vadd.f32 %v848, %v849
      %v851 = vrot.slane %v850, 2
      %v852 = vadd.f32 %v850, %v851
      %v853 = vrot.slane %v852, 1
      %v854 = vadd.f32 %v852, %v853
      %s855 = vtos %v854
      %v856 = vrcp.pop 8192.0
      %s857 = vtos %v856
      %s858 = smul.f32 %s855, %s857
      %v859 = vstv %s858
      %v860 = vsub.f32 %v810, %v859
      %v861 = vsub.f32 %v813, %v859
      %v862 = vsub.f32 %v818, %v859
      %v863 = vsub.f32 %v821, %v859
      %v864 = vsub.f32 %v826, %v859
      %v865 = vsub.f32 %v829, %v859
      %v866 = vsub.f32 %v834, %v859
      %v867 = vsub.f32 %v837, %v859
      %v868 = vmul.f32 %v860, %v860
      %v869 = vmul.f32 %v861, %v861
      %v870 = vmul.f32 %v862, %v862
      %v871 = vmul.f32 %v863, %v863
      %v872 = vmul.f32 %v864, %v864
      %v873 = vmul.f32 %v865, %v865
      %v874 = vmul.f32 %v866, %v866
      %v875 = vmul.f32 %v867, %v867
      %v876 = vadd.f32 %v868, %v869
      %v877 = vadd.f32 %v876, %v870
      %v878 = vadd.f32 %v877, %v871
      %v879 = vadd.f32 %v878, %v872
      %v880 = vadd.f32 %v879, %v873
      %v881 = vadd.f32 %v880, %v874
      %v882 = vadd.f32 %v881, %v875
      %883 = vadd.xlane.f32.xlu0 %v882
      %v884 = vpop.xlane.xlu0 %883
      %v885 = vrot.slane %v884, 4
      %v886 = vadd.f32 %v884, %v885
      %v887 = vrot.slane %v886, 2
      %v888 = vadd.f32 %v886, %v887
      %v889 = vrot.slane %v888, 1
      %v890 = vadd.f32 %v888, %v889
      %s891 = vtos %v890
      %v892 = vrcp.pop 8192.0
      %s893 = vtos %v892
      %s894 = smul.f32 %s891, %s893
      %s895 = sadd.f32 %s894, 1e-05
      %v896 = vstv %s895
      %v897 = vrsqrt.pop %v896
      %s898 = vtos %v897
      %v899 = vstv %s898
      %v900 = vmul.f32 %v860, %v899
      %v901 = vmul.f32 %v861, %v899
      %v902 = vmul.f32 %v862, %v899
      %v903 = vmul.f32 %v863, %v899
      %v904 = vmul.f32 %v864, %v899
      %v905 = vmul.f32 %v865, %v899
      %v906 = vmul.f32 %v866, %v899
      %v907 = vmul.f32 %v867, %v899
      %v908 = vmax.f32 %v900, 0.0
      %v909 = vmax.f32 %v901, 0.0
      %v910 = vmax.f32 %v902, 0.0
      %v911 = vmax.f32 %v903, 0.0
      %v912 = vmax.f32 %v904, 0.0
      %v913 = vmax.f32 %v905, 0.0
      %v914 = vmax.f32 %v906, 0.0
      %v915 = vmax.f32 %v907, 0.0
      %v916 = vpack.c.bf16 %v909, %v908
      %v917 = vpack.c.bf16 %v911, %v910
      %v918 = vpack.c.bf16 %v913, %v912
      %v919 = vpack.c.bf16 %v915, %v914
      %v924 = vunpack.c.l.b16 %v916
      %v925 = vunpack.c.h.b16 %v916
      %v926 = vunpack.c.l.b16 %v917
      %v927 = vunpack.c.h.b16 %v917
      %v928 = vunpack.c.l.b16 %v918
      %v929 = vunpack.c.h.b16 %v918
      %v930 = vunpack.c.l.b16 %v919
      %v931 = vunpack.c.h.b16 %v919
      %v932 = vpack.c.b16 %v924, %v924
      %v933 = vpack.c.b16 %v925, %v925
      %v934 = vpack.c.b16 %v926, %v926
      %v935 = vpack.c.b16 %v927, %v927
      %v936 = vpack.c.b16 %v928, %v928
      %v937 = vpack.c.b16 %v929, %v929
      %v938 = vpack.c.b16 %v930, %v930
      %v939 = vpack.c.b16 %v931, %v931
      %948 = vst [vmem:[%s170] sm:$0xf] %v932
      %949 = vst [vmem:[%s170 + $0x4] sm:$0xf] %v933
      %950 = vst [vmem:[%s170 + $0x8] sm:$0xf] %v934
      %951 = vst [vmem:[%s170 + $0xc] sm:$0xf] %v935
      %952 = vst [vmem:[%s170 + $0x10] sm:$0xf] %v936
      %953 = vst [vmem:[%s170 + $0x14] sm:$0xf] %v937
      %954 = vst [vmem:[%s170 + $0x18] sm:$0xf] %v938
      %955 = vst [vmem:[%s170 + $0x1c] sm:$0xf] %v939
      %p956 = scmp.lt.s32.totalorder %s14, 1
      %s957 = scalar_select %p956, %s14, 1
      %s958 = smul.addr %s957, 8
      %s959 = smul.addr %s958, 4
      %s960 = scalar_lea.vmem %s3, %s959
      // Predicated region
      $region33: #{deep_q_forward.8} parent=31 // pred_check
        %p961 = pneg %p100
      $region34: #{deep_q_forward.8} parent=31 // pred_check_branch
        %963 = sbr.rel (%p961) target = $region36
      $region35: #{deep_q_forward.8} parent=31 // pred_region
        _
      $region36: #{deep_q_forward.8} parent=31 // pred_fallthru
        _
    $region32: #{deep_q_forward.8} parent=5 // pred_fallthru
      _
    %p964 = scmp.le.s32.totalorder 2, %s9
    // Predicated region
    $region37: #{deep_q_forward.8} parent=5 // pred_check
      %p965 = pneg %p964
    $region38: #{deep_q_forward.8} parent=5 // pred_check_branch
      %967 = sbr.rel (%p965) target = $region40
    $region39: #{deep_q_forward.8} parent=5 // pred_region
      %s968 = ssub.s32 %s9, 2
      // Predicated region
      $region41: #{deep_q_forward.8} parent=39 // pred_check
        %p969 = pneg %p106
      $region42: #{deep_q_forward.8} parent=39 // pred_check_branch
        %971 = sbr.rel (%p969) target = $region44
      $region43: #{deep_q_forward.8} parent=39 // pred_region
        %p972 = scmp.lt.s32.totalorder %s15, 1
        %s973 = scalar_select %p972, %s15, 1
        %s974 = smul.addr %s973, 8
        %s975 = smul.addr %s974, 4
        %s976 = scalar_lea.vmem %s3, %s975
      $region44: #{deep_q_forward.8} parent=39 // pred_fallthru
        _
    $region40: #{deep_q_forward.8} parent=5 // pred_fallthru
      _
  $region6: #{deep_q_forward.8} parent=0 // loop_footer
    %s13 = sadd.s32 1, %s9
  $region7: #{deep_q_forward.8} parent=0 // loop_footer_branch
    %8 = sbr.rel target = $region3
  $region8: #{deep_q_forward.8} parent=0 // loop_exit
    _

// kernel: deep_q_forward.9
$region0: #{deep_q_forward.9}
  #allocation0 [shape = 'u32[]', space=smem, size = 0x4, offset = 0x4, fixed_abs, tag = 'smem constant byte address 0x4 - core index']
  #allocation1 [shape = 'u32[144,128]{1,0:T(1,128)}', space=vmem, size = 0x12000, scoped, tag = 'internal scratch']
  %s0 = inlined_call_operand.vmem [shape: bf16[2,8192], index: 0, kind: input, shape index: {}]
  %s1 = inlined_call_operand.vmem [shape: bf16[8192,7], index: 1, kind: input, shape index: {}]
  %s2 = inlined_call_operand.vmem [shape: f32[1,7], index: 2, kind: input, shape index: {}]
  %s3 = inlined_call_operand.hbm [shape: f32[2,6], index: 3, kind: output, shape index: {}]
  %s4 = sld [smem:[#allocation0]]
  $region22: #{deep_q_forward.9} parent=0
    _
  %s6 = ssub.s32 1, %s4
  %s7 = scalar_select 0, %s6, %s4
  $region1: #{deep_q_forward.9} parent=0
    #allocation2 [shape = 'u8[1024]{0}', space=vmem, size = 0x400, scoped, tag = 'output window, operand 0, single buffered']
    #allocation3 [shape = 's32[1]{0}', space=sflag, size = 0x4, scoped, tag = 'scoped memory for deep_q_forward.9']
    %8 = vsyncpa [#allocation3], 0
    // Predicated region
    $region2: #{deep_q_forward.9} parent=1 // pred_check
      _
    $region3: #{deep_q_forward.9} parent=1 // pred_check_branch
      %10 = sbr.rel (0) target = $region5
    $region4: #{deep_q_forward.9} parent=1 // pred_region
      _
    $region5: #{deep_q_forward.9} parent=1 // pred_fallthru
      _
    // Predicated region
    $region6: #{deep_q_forward.9} parent=1 // pred_check
      _
    $region7: #{deep_q_forward.9} parent=1 // pred_check_branch
      %12 = sbr.rel (0) target = $region9
    $region8: #{deep_q_forward.9} parent=1 // pred_region
      _
    $region9: #{deep_q_forward.9} parent=1 // pred_fallthru
      _
    // Predicated region
    $region10: #{deep_q_forward.9} parent=1 // pred_check
      _
    $region11: #{deep_q_forward.9} parent=1 // pred_check_branch
      %14 = sbr.rel (0) target = $region13
    $region12: #{deep_q_forward.9} parent=1 // pred_region
      _
    $region13: #{deep_q_forward.9} parent=1 // pred_fallthru
      _
    %v16 = vld [vmem:[%s0] sm:$0xff]
    %v17 = vld [vmem:[%s0 + $0x8] sm:$0xff]
    %v18 = vld [vmem:[%s0 + $0x10] sm:$0xff]
    %v19 = vld [vmem:[%s0 + $0x18] sm:$0xff]
    %v20 = vld [vmem:[%s0 + $0x20] sm:$0xff]
    %v21 = vld [vmem:[%s0 + $0x28] sm:$0xff]
    %v22 = vld [vmem:[%s0 + $0x30] sm:$0xff]
    %v23 = vld [vmem:[%s0 + $0x38] sm:$0xff]
    %v24 = vld [vmem:[%s1] sm:$0xf]
    %v25 = vld [vmem:[%s1 + $0x4] sm:$0xf]
    %v26 = vld [vmem:[%s1 + $0x8] sm:$0xf]
    %v27 = vld [vmem:[%s1 + $0xc] sm:$0xf]
    %v28 = vld [vmem:[%s1 + $0x10] sm:$0xf]
    %v29 = vld [vmem:[%s1 + $0x14] sm:$0xf]
    %v30 = vld [vmem:[%s1 + $0x18] sm:$0xf]
    %v31 = vld [vmem:[%s1 + $0x1c] sm:$0xf]
    %v32 = vld [vmem:[%s1 + $0x20] sm:$0xf]
    %v33 = vld [vmem:[%s1 + $0x24] sm:$0xf]
    %v34 = vld [vmem:[%s1 + $0x28] sm:$0xf]
    %v35 = vld [vmem:[%s1 + $0x2c] sm:$0xf]
    %v36 = vld [vmem:[%s1 + $0x30] sm:$0xf]
    %v37 = vld [vmem:[%s1 + $0x34] sm:$0xf]
    %v38 = vld [vmem:[%s1 + $0x38] sm:$0xf]
    %v39 = vld [vmem:[%s1 + $0x3c] sm:$0xf]
    %v40 = vld [vmem:[%s1 + $0x40] sm:$0xf]
    %v41 = vld [vmem:[%s1 + $0x44] sm:$0xf]
    %v42 = vld [vmem:[%s1 + $0x48] sm:$0xf]
    %v43 = vld [vmem:[%s1 + $0x4c] sm:$0xf]
    %v44 = vld [vmem:[%s1 + $0x50] sm:$0xf]
    %v45 = vld [vmem:[%s1 + $0x54] sm:$0xf]
    %v46 = vld [vmem:[%s1 + $0x58] sm:$0xf]
    %v47 = vld [vmem:[%s1 + $0x5c] sm:$0xf]
    %v48 = vld [vmem:[%s1 + $0x60] sm:$0xf]
    %v49 = vld [vmem:[%s1 + $0x64] sm:$0xf]
    %v50 = vld [vmem:[%s1 + $0x68] sm:$0xf]
    %v51 = vld [vmem:[%s1 + $0x6c] sm:$0xf]
    %v52 = vld [vmem:[%s1 + $0x70] sm:$0xf]
    %v53 = vld [vmem:[%s1 + $0x74] sm:$0xf]
    %v54 = vld [vmem:[%s1 + $0x78] sm:$0xf]
    %v55 = vld [vmem:[%s1 + $0x7c] sm:$0xf]
    %v56 = vld [vmem:[%s1 + $0x80] sm:$0xf]
    %v57 = vld [vmem:[%s1 + $0x84] sm:$0xf]
    %v58 = vld [vmem:[%s1 + $0x88] sm:$0xf]
    %v59 = vld [vmem:[%s1 + $0x8c] sm:$0xf]
    %v60 = vld [vmem:[%s1 + $0x90] sm:$0xf]
    %v61 = vld [vmem:[%s1 + $0x94] sm:$0xf]
    %v62 = vld [vmem:[%s1 + $0x98] sm:$0xf]
    %v63 = vld [vmem:[%s1 + $0x9c] sm:$0xf]
    %v64 = vld [vmem:[%s1 + $0xa0] sm:$0xf]
    %v65 = vld [vmem:[%s1 + $0xa4] sm:$0xf]
    %v66 = vld [vmem:[%s1 + $0xa8] sm:$0xf]
    %v67 = vld [vmem:[%s1 + $0xac] sm:$0xf]
    %v68 = vld [vmem:[%s1 + $0xb0] sm:$0xf]
    %v69 = vld [vmem:[%s1 + $0xb4] sm:$0xf]
    %v70 = vld [vmem:[%s1 + $0xb8] sm:$0xf]
    %v71 = vld [vmem:[%s1 + $0xbc] sm:$0xf]
    %v72 = vld [vmem:[%s1 + $0xc0] sm:$0xf]
    %v73 = vld [vmem:[%s1 + $0xc4] sm:$0xf]
    %v74 = vld [vmem:[%s1 + $0xc8] sm:$0xf]
    %v75 = vld [vmem:[%s1 + $0xcc] sm:$0xf]
    %v76 = vld [vmem:[%s1 + $0xd0] sm:$0xf]
    %v77 = vld [vmem:[%s1 + $0xd4] sm:$0xf]
    %v78 = vld [vmem:[%s1 + $0xd8] sm:$0xf]
    %v79 = vld [vmem:[%s1 + $0xdc] sm:$0xf]
    %v80 = vld [vmem:[%s1 + $0xe0] sm:$0xf]
    %v81 = vld [vmem:[%s1 + $0xe4] sm:$0xf]
    %v82 = vld [vmem:[%s1 + $0xe8] sm:$0xf]
    %v83 = vld [vmem:[%s1 + $0xec] sm:$0xf]
    %v84 = vld [vmem:[%s1 + $0xf0] sm:$0xf]
    %v85 = vld [vmem:[%s1 + $0xf4] sm:$0xf]
    %v86 = vld [vmem:[%s1 + $0xf8] sm:$0xf]
    %v87 = vld [vmem:[%s1 + $0xfc] sm:$0xf]
    %v88 = vld [vmem:[%s1 + $0x100] sm:$0xf]
    %v89 = vld [vmem:[%s1 + $0x104] sm:$0xf]
    %v90 = vld [vmem:[%s1 + $0x108] sm:$0xf]
    %v91 = vld [vmem:[%s1 + $0x10c] sm:$0xf]
    %v92 = vld [vmem:[%s1 + $0x110] sm:$0xf]
    %v93 = vld [vmem:[%s1 + $0x114] sm:$0xf]
    %v94 = vld [vmem:[%s1 + $0x118] sm:$0xf]
    %v95 = vld [vmem:[%s1 + $0x11c] sm:$0xf]
    %v96 = vld [vmem:[%s1 + $0x120] sm:$0xf]
    %v97 = vld [vmem:[%s1 + $0x124] sm:$0xf]
    %v98 = vld [vmem:[%s1 + $0x128] sm:$0xf]
    %v99 = vld [vmem:[%s1 + $0x12c] sm:$0xf]
    %v100 = vld [vmem:[%s1 + $0x130] sm:$0xf]
    %v101 = vld [vmem:[%s1 + $0x134] sm:$0xf]
    %v102 = vld [vmem:[%s1 + $0x138] sm:$0xf]
    %v103 = vld [vmem:[%s1 + $0x13c] sm:$0xf]
    %v104 = vld [vmem:[%s1 + $0x140] sm:$0xf]
    %v105 = vld [vmem:[%s1 + $0x144] sm:$0xf]
    %v106 = vld [vmem:[%s1 + $0x148] sm:$0xf]
    %v107 = vld [vmem:[%s1 + $0x14c] sm:$0xf]
    %v108 = vld [vmem:[%s1 + $0x150] sm:$0xf]
    %v109 = vld [vmem:[%s1 + $0x154] sm:$0xf]
    %v110 = vld [vmem:[%s1 + $0x158] sm:$0xf]
    %v111 = vld [vmem:[%s1 + $0x15c] sm:$0xf]
    %v112 = vld [vmem:[%s1 + $0x160] sm:$0xf]
    %v113 = vld [vmem:[%s1 + $0x164] sm:$0xf]
    %v114 = vld [vmem:[%s1 + $0x168] sm:$0xf]
    %v115 = vld [vmem:[%s1 + $0x16c] sm:$0xf]
    %v116 = vld [vmem:[%s1 + $0x170] sm:$0xf]
    %v117 = vld [vmem:[%s1 + $0x174] sm:$0xf]
    %v118 = vld [vmem:[%s1 + $0x178] sm:$0xf]
    %v119 = vld [vmem:[%s1 + $0x17c] sm:$0xf]
    %v120 = vld [vmem:[%s1 + $0x180] sm:$0xf]
    %v121 = vld [vmem:[%s1 + $0x184] sm:$0xf]
    %v122 = vld [vmem:[%s1 + $0x188] sm:$0xf]
    %v123 = vld [vmem:[%s1 + $0x18c] sm:$0xf]
    %v124 = vld [vmem:[%s1 + $0x190] sm:$0xf]
    %v125 = vld [vmem:[%s1 + $0x194] sm:$0xf]
    %v126 = vld [vmem:[%s1 + $0x198] sm:$0xf]
    %v127 = vld [vmem:[%s1 + $0x19c] sm:$0xf]
    %v128 = vld [vmem:[%s1 + $0x1a0] sm:$0xf]
    %v129 = vld [vmem:[%s1 + $0x1a4] sm:$0xf]
    %v130 = vld [vmem:[%s1 + $0x1a8] sm:$0xf]
    %v131 = vld [vmem:[%s1 + $0x1ac] sm:$0xf]
    %v132 = vld [vmem:[%s1 + $0x1b0] sm:$0xf]
    %v133 = vld [vmem:[%s1 + $0x1b4] sm:$0xf]
    %v134 = vld [vmem:[%s1 + $0x1b8] sm:$0xf]
    %v135 = vld [vmem:[%s1 + $0x1bc] sm:$0xf]
    %v136 = vld [vmem:[%s1 + $0x1c0] sm:$0xf]
    %v137 = vld [vmem:[%s1 + $0x1c4] sm:$0xf]
    %v138 = vld [vmem:[%s1 + $0x1c8] sm:$0xf]
    %v139 = vld [vmem:[%s1 + $0x1cc] sm:$0xf]
    %v140 = vld [vmem:[%s1 + $0x1d0] sm:$0xf]
    %v141 = vld [vmem:[%s1 + $0x1d4] sm:$0xf]
    %v142 = vld [vmem:[%s1 + $0x1d8] sm:$0xf]
    %v143 = vld [vmem:[%s1 + $0x1dc] sm:$0xf]
    %v144 = vld [vmem:[%s1 + $0x1e0] sm:$0xf]
    %v145 = vld [vmem:[%s1 + $0x1e4] sm:$0xf]
    %v146 = vld [vmem:[%s1 + $0x1e8] sm:$0xf]
    %v147 = vld [vmem:[%s1 + $0x1ec] sm:$0xf]
    %v148 = vld [vmem:[%s1 + $0x1f0] sm:$0xf]
    %v149 = vld [vmem:[%s1 + $0x1f4] sm:$0xf]
    %v150 = vld [vmem:[%s1 + $0x1f8] sm:$0xf]
    %v151 = vld [vmem:[%s1 + $0x1fc] sm:$0xf]
    %v152 = vld [vmem:[%s1 + $0x200] sm:$0xf]
    %v153 = vld [vmem:[%s1 + $0x204] sm:$0xf]
    %v154 = vld [vmem:[%s1 + $0x208] sm:$0xf]
    %v155 = vld [vmem:[%s1 + $0x20c] sm:$0xf]
    %v156 = vld [vmem:[%s1 + $0x210] sm:$0xf]
    %v157 = vld [vmem:[%s1 + $0x214] sm:$0xf]
    %v158 = vld [vmem:[%s1 + $0x218] sm:$0xf]
    %v159 = vld [vmem:[%s1 + $0x21c] sm:$0xf]
    %v160 = vld [vmem:[%s1 + $0x220] sm:$0xf]
    %v161 = vld [vmem:[%s1 + $0x224] sm:$0xf]
    %v162 = vld [vmem:[%s1 + $0x228] sm:$0xf]
    %v163 = vld [vmem:[%s1 + $0x22c] sm:$0xf]
    %v164 = vld [vmem:[%s1 + $0x230] sm:$0xf]
    %v165 = vld [vmem:[%s1 + $0x234] sm:$0xf]
    %v166 = vld [vmem:[%s1 + $0x238] sm:$0xf]
    %v167 = vld [vmem:[%s1 + $0x23c] sm:$0xf]
    %v168 = vld [vmem:[%s1 + $0x240] sm:$0xf]
    %v169 = vld [vmem:[%s1 + $0x244] sm:$0xf]
    %v170 = vld [vmem:[%s1 + $0x248] sm:$0xf]
    %v171 = vld [vmem:[%s1 + $0x24c] sm:$0xf]
    %v172 = vld [vmem:[%s1 + $0x250] sm:$0xf]
    %v173 = vld [vmem:[%s1 + $0x254] sm:$0xf]
    %v174 = vld [vmem:[%s1 + $0x258] sm:$0xf]
    %v175 = vld [vmem:[%s1 + $0x25c] sm:$0xf]
    %v176 = vld [vmem:[%s1 + $0x260] sm:$0xf]
    %v177 = vld [vmem:[%s1 + $0x264] sm:$0xf]
    %v178 = vld [vmem:[%s1 + $0x268] sm:$0xf]
    %v179 = vld [vmem:[%s1 + $0x26c] sm:$0xf]
    %v180 = vld [vmem:[%s1 + $0x270] sm:$0xf]
    %v181 = vld [vmem:[%s1 + $0x274] sm:$0xf]
    %v182 = vld [vmem:[%s1 + $0x278] sm:$0xf]
    %v183 = vld [vmem:[%s1 + $0x27c] sm:$0xf]
    %v184 = vld [vmem:[%s1 + $0x280] sm:$0xf]
    %v185 = vld [vmem:[%s1 + $0x284] sm:$0xf]
    %v186 = vld [vmem:[%s1 + $0x288] sm:$0xf]
    %v187 = vld [vmem:[%s1 + $0x28c] sm:$0xf]
    %v188 = vld [vmem:[%s1 + $0x290] sm:$0xf]
    %v189 = vld [vmem:[%s1 + $0x294] sm:$0xf]
    %v190 = vld [vmem:[%s1 + $0x298] sm:$0xf]
    %v191 = vld [vmem:[%s1 + $0x29c] sm:$0xf]
    %v192 = vld [vmem:[%s1 + $0x2a0] sm:$0xf]
    %v193 = vld [vmem:[%s1 + $0x2a4] sm:$0xf]
    %v194 = vld [vmem:[%s1 + $0x2a8] sm:$0xf]
    %v195 = vld [vmem:[%s1 + $0x2ac] sm:$0xf]
    %v196 = vld [vmem:[%s1 + $0x2b0] sm:$0xf]
    %v197 = vld [vmem:[%s1 + $0x2b4] sm:$0xf]
    %v198 = vld [vmem:[%s1 + $0x2b8] sm:$0xf]
    %v199 = vld [vmem:[%s1 + $0x2bc] sm:$0xf]
    %v200 = vld [vmem:[%s1 + $0x2c0] sm:$0xf]
    %v201 = vld [vmem:[%s1 + $0x2c4] sm:$0xf]
    %v202 = vld [vmem:[%s1 + $0x2c8] sm:$0xf]
    %v203 = vld [vmem:[%s1 + $0x2cc] sm:$0xf]
    %v204 = vld [vmem:[%s1 + $0x2d0] sm:$0xf]
    %v205 = vld [vmem:[%s1 + $0x2d4] sm:$0xf]
    %v206 = vld [vmem:[%s1 + $0x2d8] sm:$0xf]
    %v207 = vld [vmem:[%s1 + $0x2dc] sm:$0xf]
    %v208 = vld [vmem:[%s1 + $0x2e0] sm:$0xf]
    %v209 = vld [vmem:[%s1 + $0x2e4] sm:$0xf]
    %v210 = vld [vmem:[%s1 + $0x2e8] sm:$0xf]
    %v211 = vld [vmem:[%s1 + $0x2ec] sm:$0xf]
    %v212 = vld [vmem:[%s1 + $0x2f0] sm:$0xf]
    %v213 = vld [vmem:[%s1 + $0x2f4] sm:$0xf]
    %v214 = vld [vmem:[%s1 + $0x2f8] sm:$0xf]
    %v215 = vld [vmem:[%s1 + $0x2fc] sm:$0xf]
    %v216 = vld [vmem:[%s1 + $0x300] sm:$0xf]
    %v217 = vld [vmem:[%s1 + $0x304] sm:$0xf]
    %v218 = vld [vmem:[%s1 + $0x308] sm:$0xf]
    %v219 = vld [vmem:[%s1 + $0x30c] sm:$0xf]
    %v220 = vld [vmem:[%s1 + $0x310] sm:$0xf]
    %v221 = vld [vmem:[%s1 + $0x314] sm:$0xf]
    %v222 = vld [vmem:[%s1 + $0x318] sm:$0xf]
    %v223 = vld [vmem:[%s1 + $0x31c] sm:$0xf]
    %v224 = vld [vmem:[%s1 + $0x320] sm:$0xf]
    %v225 = vld [vmem:[%s1 + $0x324] sm:$0xf]
    %v226 = vld [vmem:[%s1 + $0x328] sm:$0xf]
    %v227 = vld [vmem:[%s1 + $0x32c] sm:$0xf]
    %v228 = vld [vmem:[%s1 + $0x330] sm:$0xf]
    %v229 = vld [vmem:[%s1 + $0x334] sm:$0xf]
    %v230 = vld [vmem:[%s1 + $0x338] sm:$0xf]
    %v231 = vld [vmem:[%s1 + $0x33c] sm:$0xf]
    %v232 = vld [vmem:[%s1 + $0x340] sm:$0xf]
    %v233 = vld [vmem:[%s1 + $0x344] sm:$0xf]
    %v234 = vld [vmem:[%s1 + $0x348] sm:$0xf]
    %v235 = vld [vmem:[%s1 + $0x34c] sm:$0xf]
    %v236 = vld [vmem:[%s1 + $0x350] sm:$0xf]
    %v237 = vld [vmem:[%s1 + $0x354] sm:$0xf]
    %v238 = vld [vmem:[%s1 + $0x358] sm:$0xf]
    %v239 = vld [vmem:[%s1 + $0x35c] sm:$0xf]
    %v240 = vld [vmem:[%s1 + $0x360] sm:$0xf]
    %v241 = vld [vmem:[%s1 + $0x364] sm:$0xf]
    %v242 = vld [vmem:[%s1 + $0x368] sm:$0xf]
    %v243 = vld [vmem:[%s1 + $0x36c] sm:$0xf]
    %v244 = vld [vmem:[%s1 + $0x370] sm:$0xf]
    %v245 = vld [vmem:[%s1 + $0x374] sm:$0xf]
    %v246 = vld [vmem:[%s1 + $0x378] sm:$0xf]
    %v247 = vld [vmem:[%s1 + $0x37c] sm:$0xf]
    %v248 = vld [vmem:[%s1 + $0x380] sm:$0xf]
    %v249 = vld [vmem:[%s1 + $0x384] sm:$0xf]
    %v250 = vld [vmem:[%s1 + $0x388] sm:$0xf]
    %v251 = vld [vmem:[%s1 + $0x38c] sm:$0xf]
    %v252 = vld [vmem:[%s1 + $0x390] sm:$0xf]
    %v253 = vld [vmem:[%s1 + $0x394] sm:$0xf]
    %v254 = vld [vmem:[%s1 + $0x398] sm:$0xf]
    %v255 = vld [vmem:[%s1 + $0x39c] sm:$0xf]
    %v256 = vld [vmem:[%s1 + $0x3a0] sm:$0xf]
    %v257 = vld [vmem:[%s1 + $0x3a4] sm:$0xf]
    %v258 = vld [vmem:[%s1 + $0x3a8] sm:$0xf]
    %v259 = vld [vmem:[%s1 + $0x3ac] sm:$0xf]
    %v260 = vld [vmem:[%s1 + $0x3b0] sm:$0xf]
    %v261 = vld [vmem:[%s1 + $0x3b4] sm:$0xf]
    %v262 = vld [vmem:[%s1 + $0x3b8] sm:$0xf]
    %v263 = vld [vmem:[%s1 + $0x3bc] sm:$0xf]
    %v264 = vld [vmem:[%s1 + $0x3c0] sm:$0xf]
    %v265 = vld [vmem:[%s1 + $0x3c4] sm:$0xf]
    %v266 = vld [vmem:[%s1 + $0x3c8] sm:$0xf]
    %v267 = vld [vmem:[%s1 + $0x3cc] sm:$0xf]
    %v268 = vld [vmem:[%s1 + $0x3d0] sm:$0xf]
    %v269 = vld [vmem:[%s1 + $0x3d4] sm:$0xf]
    %v270 = vld [vmem:[%s1 + $0x3d8] sm:$0xf]
    %v271 = vld [vmem:[%s1 + $0x3dc] sm:$0xf]
    %v272 = vld [vmem:[%s1 + $0x3e0] sm:$0xf]
    %v273 = vld [vmem:[%s1 + $0x3e4] sm:$0xf]
    %v274 = vld [vmem:[%s1 + $0x3e8] sm:$0xf]
    %v275 = vld [vmem:[%s1 + $0x3ec] sm:$0xf]
    %v276 = vld [vmem:[%s1 + $0x3f0] sm:$0xf]
    %v277 = vld [vmem:[%s1 + $0x3f4] sm:$0xf]
    %v278 = vld [vmem:[%s1 + $0x3f8] sm:$0xf]
    %v279 = vld [vmem:[%s1 + $0x3fc] sm:$0xf]
    %v280 = vld [vmem:[%s1 + $0x400] sm:$0xf]
    %v281 = vld [vmem:[%s1 + $0x404] sm:$0xf]
    %v282 = vld [vmem:[%s1 + $0x408] sm:$0xf]
    %v283 = vld [vmem:[%s1 + $0x40c] sm:$0xf]
    %v284 = vld [vmem:[%s1 + $0x410] sm:$0xf]
    %v285 = vld [vmem:[%s1 + $0x414] sm:$0xf]
    %v286 = vld [vmem:[%s1 + $0x418] sm:$0xf]
    %v287 = vld [vmem:[%s1 + $0x41c] sm:$0xf]
    %v288 = vld [vmem:[%s1 + $0x420] sm:$0xf]
    %v289 = vld [vmem:[%s1 + $0x424] sm:$0xf]
    %v290 = vld [vmem:[%s1 + $0x428] sm:$0xf]
    %v291 = vld [vmem:[%s1 + $0x42c] sm:$0xf]
    %v292 = vld [vmem:[%s1 + $0x430] sm:$0xf]
    %v293 = vld [vmem:[%s1 + $0x434] sm:$0xf]
    %v294 = vld [vmem:[%s1 + $0x438] sm:$0xf]
    %v295 = vld [vmem:[%s1 + $0x43c] sm:$0xf]
    %v296 = vld [vmem:[%s1 + $0x440] sm:$0xf]
    %v297 = vld [vmem:[%s1 + $0x444] sm:$0xf]
    %v298 = vld [vmem:[%s1 + $0x448] sm:$0xf]
    %v299 = vld [vmem:[%s1 + $0x44c] sm:$0xf]
    %v300 = vld [vmem:[%s1 + $0x450] sm:$0xf]
    %v301 = vld [vmem:[%s1 + $0x454] sm:$0xf]
    %v302 = vld [vmem:[%s1 + $0x458] sm:$0xf]
    %v303 = vld [vmem:[%s1 + $0x45c] sm:$0xf]
    %v304 = vld [vmem:[%s1 + $0x460] sm:$0xf]
    %v305 = vld [vmem:[%s1 + $0x464] sm:$0xf]
    %v306 = vld [vmem:[%s1 + $0x468] sm:$0xf]
    %v307 = vld [vmem:[%s1 + $0x46c] sm:$0xf]
    %v308 = vld [vmem:[%s1 + $0x470] sm:$0xf]
    %v309 = vld [vmem:[%s1 + $0x474] sm:$0xf]
    %v310 = vld [vmem:[%s1 + $0x478] sm:$0xf]
    %v311 = vld [vmem:[%s1 + $0x47c] sm:$0xf]
    %v312 = vld [vmem:[%s1 + $0x480] sm:$0xf]
    %v313 = vld [vmem:[%s1 + $0x484] sm:$0xf]
    %v314 = vld [vmem:[%s1 + $0x488] sm:$0xf]
    %v315 = vld [vmem:[%s1 + $0x48c] sm:$0xf]
    %v316 = vld [vmem:[%s1 + $0x490] sm:$0xf]
    %v317 = vld [vmem:[%s1 + $0x494] sm:$0xf]
    %v318 = vld [vmem:[%s1 + $0x498] sm:$0xf]
    %v319 = vld [vmem:[%s1 + $0x49c] sm:$0xf]
    %v320 = vld [vmem:[%s1 + $0x4a0] sm:$0xf]
    %v321 = vld [vmem:[%s1 + $0x4a4] sm:$0xf]
    %v322 = vld [vmem:[%s1 + $0x4a8] sm:$0xf]
    %v323 = vld [vmem:[%s1 + $0x4ac] sm:$0xf]
    %v324 = vld [vmem:[%s1 + $0x4b0] sm:$0xf]
    %v325 = vld [vmem:[%s1 + $0x4b4] sm:$0xf]
    %v326 = vld [vmem:[%s1 + $0x4b8] sm:$0xf]
    %v327 = vld [vmem:[%s1 + $0x4bc] sm:$0xf]
    %v328 = vld [vmem:[%s1 + $0x4c0] sm:$0xf]
    %v329 = vld [vmem:[%s1 + $0x4c4] sm:$0xf]
    %v330 = vld [vmem:[%s1 + $0x4c8] sm:$0xf]
    %v331 = vld [vmem:[%s1 + $0x4cc] sm:$0xf]
    %v332 = vld [vmem:[%s1 + $0x4d0] sm:$0xf]
    %v333 = vld [vmem:[%s1 + $0x4d4] sm:$0xf]
    %v334 = vld [vmem:[%s1 + $0x4d8] sm:$0xf]
    %v335 = vld [vmem:[%s1 + $0x4dc] sm:$0xf]
    %v336 = vld [vmem:[%s1 + $0x4e0] sm:$0xf]
    %v337 = vld [vmem:[%s1 + $0x4e4] sm:$0xf]
    %v338 = vld [vmem:[%s1 + $0x4e8] sm:$0xf]
    %v339 = vld [vmem:[%s1 + $0x4ec] sm:$0xf]
    %v340 = vld [vmem:[%s1 + $0x4f0] sm:$0xf]
    %v341 = vld [vmem:[%s1 + $0x4f4] sm:$0xf]
    %v342 = vld [vmem:[%s1 + $0x4f8] sm:$0xf]
    %v343 = vld [vmem:[%s1 + $0x4fc] sm:$0xf]
    %v344 = vld [vmem:[%s1 + $0x500] sm:$0xf]
    %v345 = vld [vmem:[%s1 + $0x504] sm:$0xf]
    %v346 = vld [vmem:[%s1 + $0x508] sm:$0xf]
    %v347 = vld [vmem:[%s1 + $0x50c] sm:$0xf]
    %v348 = vld [vmem:[%s1 + $0x510] sm:$0xf]
    %v349 = vld [vmem:[%s1 + $0x514] sm:$0xf]
    %v350 = vld [vmem:[%s1 + $0x518] sm:$0xf]
    %v351 = vld [vmem:[%s1 + $0x51c] sm:$0xf]
    %v352 = vld [vmem:[%s1 + $0x520] sm:$0xf]
    %v353 = vld [vmem:[%s1 + $0x524] sm:$0xf]
    %v354 = vld [vmem:[%s1 + $0x528] sm:$0xf]
    %v355 = vld [vmem:[%s1 + $0x52c] sm:$0xf]
    %v356 = vld [vmem:[%s1 + $0x530] sm:$0xf]
    %v357 = vld [vmem:[%s1 + $0x534] sm:$0xf]
    %v358 = vld [vmem:[%s1 + $0x538] sm:$0xf]
    %v359 = vld [vmem:[%s1 + $0x53c] sm:$0xf]
    %v360 = vld [vmem:[%s1 + $0x540] sm:$0xf]
    %v361 = vld [vmem:[%s1 + $0x544] sm:$0xf]
    %v362 = vld [vmem:[%s1 + $0x548] sm:$0xf]
    %v363 = vld [vmem:[%s1 + $0x54c] sm:$0xf]
    %v364 = vld [vmem:[%s1 + $0x550] sm:$0xf]
    %v365 = vld [vmem:[%s1 + $0x554] sm:$0xf]
    %v366 = vld [vmem:[%s1 + $0x558] sm:$0xf]
    %v367 = vld [vmem:[%s1 + $0x55c] sm:$0xf]
    %v368 = vld [vmem:[%s1 + $0x560] sm:$0xf]
    %v369 = vld [vmem:[%s1 + $0x564] sm:$0xf]
    %v370 = vld [vmem:[%s1 + $0x568] sm:$0xf]
    %v371 = vld [vmem:[%s1 + $0x56c] sm:$0xf]
    %v372 = vld [vmem:[%s1 + $0x570] sm:$0xf]
    %v373 = vld [vmem:[%s1 + $0x574] sm:$0xf]
    %v374 = vld [vmem:[%s1 + $0x578] sm:$0xf]
    %v375 = vld [vmem:[%s1 + $0x57c] sm:$0xf]
    %v376 = vld [vmem:[%s1 + $0x580] sm:$0xf]
    %v377 = vld [vmem:[%s1 + $0x584] sm:$0xf]
    %v378 = vld [vmem:[%s1 + $0x588] sm:$0xf]
    %v379 = vld [vmem:[%s1 + $0x58c] sm:$0xf]
    %v380 = vld [vmem:[%s1 + $0x590] sm:$0xf]
    %v381 = vld [vmem:[%s1 + $0x594] sm:$0xf]
    %v382 = vld [vmem:[%s1 + $0x598] sm:$0xf]
    %v383 = vld [vmem:[%s1 + $0x59c] sm:$0xf]
    %v384 = vld [vmem:[%s1 + $0x5a0] sm:$0xf]
    %v385 = vld [vmem:[%s1 + $0x5a4] sm:$0xf]
    %v386 = vld [vmem:[%s1 + $0x5a8] sm:$0xf]
    %v387 = vld [vmem:[%s1 + $0x5ac] sm:$0xf]
    %v388 = vld [vmem:[%s1 + $0x5b0] sm:$0xf]
    %v389 = vld [vmem:[%s1 + $0x5b4] sm:$0xf]
    %v390 = vld [vmem:[%s1 + $0x5b8] sm:$0xf]
    %v391 = vld [vmem:[%s1 + $0x5bc] sm:$0xf]
    %v392 = vld [vmem:[%s1 + $0x5c0] sm:$0xf]
    %v393 = vld [vmem:[%s1 + $0x5c4] sm:$0xf]
    %v394 = vld [vmem:[%s1 + $0x5c8] sm:$0xf]
    %v395 = vld [vmem:[%s1 + $0x5cc] sm:$0xf]
    %v396 = vld [vmem:[%s1 + $0x5d0] sm:$0xf]
    %v397 = vld [vmem:[%s1 + $0x5d4] sm:$0xf]
    %v398 = vld [vmem:[%s1 + $0x5d8] sm:$0xf]
    %v399 = vld [vmem:[%s1 + $0x5dc] sm:$0xf]
    %v400 = vld [vmem:[%s1 + $0x5e0] sm:$0xf]
    %v401 = vld [vmem:[%s1 + $0x5e4] sm:$0xf]
    %v402 = vld [vmem:[%s1 + $0x5e8] sm:$0xf]
    %v403 = vld [vmem:[%s1 + $0x5ec] sm:$0xf]
    %v404 = vld [vmem:[%s1 + $0x5f0] sm:$0xf]
    %v405 = vld [vmem:[%s1 + $0x5f4] sm:$0xf]
    %v406 = vld [vmem:[%s1 + $0x5f8] sm:$0xf]
    %v407 = vld [vmem:[%s1 + $0x5fc] sm:$0xf]
    %v408 = vld [vmem:[%s1 + $0x600] sm:$0xf]
    %v409 = vld [vmem:[%s1 + $0x604] sm:$0xf]
    %v410 = vld [vmem:[%s1 + $0x608] sm:$0xf]
    %v411 = vld [vmem:[%s1 + $0x60c] sm:$0xf]
    %v412 = vld [vmem:[%s1 + $0x610] sm:$0xf]
    %v413 = vld [vmem:[%s1 + $0x614] sm:$0xf]
    %v414 = vld [vmem:[%s1 + $0x618] sm:$0xf]
    %v415 = vld [vmem:[%s1 + $0x61c] sm:$0xf]
    %v416 = vld [vmem:[%s1 + $0x620] sm:$0xf]
    %v417 = vld [vmem:[%s1 + $0x624] sm:$0xf]
    %v418 = vld [vmem:[%s1 + $0x628] sm:$0xf]
    %v419 = vld [vmem:[%s1 + $0x62c] sm:$0xf]
    %v420 = vld [vmem:[%s1 + $0x630] sm:$0xf]
    %v421 = vld [vmem:[%s1 + $0x634] sm:$0xf]
    %v422 = vld [vmem:[%s1 + $0x638] sm:$0xf]
    %v423 = vld [vmem:[%s1 + $0x63c] sm:$0xf]
    %v424 = vld [vmem:[%s1 + $0x640] sm:$0xf]
    %v425 = vld [vmem:[%s1 + $0x644] sm:$0xf]
    %v426 = vld [vmem:[%s1 + $0x648] sm:$0xf]
    %v427 = vld [vmem:[%s1 + $0x64c] sm:$0xf]
    %v428 = vld [vmem:[%s1 + $0x650] sm:$0xf]
    %v429 = vld [vmem:[%s1 + $0x654] sm:$0xf]
    %v430 = vld [vmem:[%s1 + $0x658] sm:$0xf]
    %v431 = vld [vmem:[%s1 + $0x65c] sm:$0xf]
    %v432 = vld [vmem:[%s1 + $0x660] sm:$0xf]
    %v433 = vld [vmem:[%s1 + $0x664] sm:$0xf]
    %v434 = vld [vmem:[%s1 + $0x668] sm:$0xf]
    %v435 = vld [vmem:[%s1 + $0x66c] sm:$0xf]
    %v436 = vld [vmem:[%s1 + $0x670] sm:$0xf]
    %v437 = vld [vmem:[%s1 + $0x674] sm:$0xf]
    %v438 = vld [vmem:[%s1 + $0x678] sm:$0xf]
    %v439 = vld [vmem:[%s1 + $0x67c] sm:$0xf]
    %v440 = vld [vmem:[%s1 + $0x680] sm:$0xf]
    %v441 = vld [vmem:[%s1 + $0x684] sm:$0xf]
    %v442 = vld [vmem:[%s1 + $0x688] sm:$0xf]
    %v443 = vld [vmem:[%s1 + $0x68c] sm:$0xf]
    %v444 = vld [vmem:[%s1 + $0x690] sm:$0xf]
    %v445 = vld [vmem:[%s1 + $0x694] sm:$0xf]
    %v446 = vld [vmem:[%s1 + $0x698] sm:$0xf]
    %v447 = vld [vmem:[%s1 + $0x69c] sm:$0xf]
    %v448 = vld [vmem:[%s1 + $0x6a0] sm:$0xf]
    %v449 = vld [vmem:[%s1 + $0x6a4] sm:$0xf]
    %v450 = vld [vmem:[%s1 + $0x6a8] sm:$0xf]
    %v451 = vld [vmem:[%s1 + $0x6ac] sm:$0xf]
    %v452 = vld [vmem:[%s1 + $0x6b0] sm:$0xf]
    %v453 = vld [vmem:[%s1 + $0x6b4] sm:$0xf]
    %v454 = vld [vmem:[%s1 + $0x6b8] sm:$0xf]
    %v455 = vld [vmem:[%s1 + $0x6bc] sm:$0xf]
    %v456 = vld [vmem:[%s1 + $0x6c0] sm:$0xf]
    %v457 = vld [vmem:[%s1 + $0x6c4] sm:$0xf]
    %v458 = vld [vmem:[%s1 + $0x6c8] sm:$0xf]
    %v459 = vld [vmem:[%s1 + $0x6cc] sm:$0xf]
    %v460 = vld [vmem:[%s1 + $0x6d0] sm:$0xf]
    %v461 = vld [vmem:[%s1 + $0x6d4] sm:$0xf]
    %v462 = vld [vmem:[%s1 + $0x6d8] sm:$0xf]
    %v463 = vld [vmem:[%s1 + $0x6dc] sm:$0xf]
    %v464 = vld [vmem:[%s1 + $0x6e0] sm:$0xf]
    %v465 = vld [vmem:[%s1 + $0x6e4] sm:$0xf]
    %v466 = vld [vmem:[%s1 + $0x6e8] sm:$0xf]
    %v467 = vld [vmem:[%s1 + $0x6ec] sm:$0xf]
    %v468 = vld [vmem:[%s1 + $0x6f0] sm:$0xf]
    %v469 = vld [vmem:[%s1 + $0x6f4] sm:$0xf]
    %v470 = vld [vmem:[%s1 + $0x6f8] sm:$0xf]
    %v471 = vld [vmem:[%s1 + $0x6fc] sm:$0xf]
    %v472 = vld [vmem:[%s1 + $0x700] sm:$0xf]
    %v473 = vld [vmem:[%s1 + $0x704] sm:$0xf]
    %v474 = vld [vmem:[%s1 + $0x708] sm:$0xf]
    %v475 = vld [vmem:[%s1 + $0x70c] sm:$0xf]
    %v476 = vld [vmem:[%s1 + $0x710] sm:$0xf]
    %v477 = vld [vmem:[%s1 + $0x714] sm:$0xf]
    %v478 = vld [vmem:[%s1 + $0x718] sm:$0xf]
    %v479 = vld [vmem:[%s1 + $0x71c] sm:$0xf]
    %v480 = vld [vmem:[%s1 + $0x720] sm:$0xf]
    %v481 = vld [vmem:[%s1 + $0x724] sm:$0xf]
    %v482 = vld [vmem:[%s1 + $0x728] sm:$0xf]
    %v483 = vld [vmem:[%s1 + $0x72c] sm:$0xf]
    %v484 = vld [vmem:[%s1 + $0x730] sm:$0xf]
    %v485 = vld [vmem:[%s1 + $0x734] sm:$0xf]
    %v486 = vld [vmem:[%s1 + $0x738] sm:$0xf]
    %v487 = vld [vmem:[%s1 + $0x73c] sm:$0xf]
    %v488 = vld [vmem:[%s1 + $0x740] sm:$0xf]
    %v489 = vld [vmem:[%s1 + $0x744] sm:$0xf]
    %v490 = vld [vmem:[%s1 + $0x748] sm:$0xf]
    %v491 = vld [vmem:[%s1 + $0x74c] sm:$0xf]
    %v492 = vld [vmem:[%s1 + $0x750] sm:$0xf]
    %v493 = vld [vmem:[%s1 + $0x754] sm:$0xf]
    %v494 = vld [vmem:[%s1 + $0x758] sm:$0xf]
    %v495 = vld [vmem:[%s1 + $0x75c] sm:$0xf]
    %v496 = vld [vmem:[%s1 + $0x760] sm:$0xf]
    %v497 = vld [vmem:[%s1 + $0x764] sm:$0xf]
    %v498 = vld [vmem:[%s1 + $0x768] sm:$0xf]
    %v499 = vld [vmem:[%s1 + $0x76c] sm:$0xf]
    %v500 = vld [vmem:[%s1 + $0x770] sm:$0xf]
    %v501 = vld [vmem:[%s1 + $0x774] sm:$0xf]
    %v502 = vld [vmem:[%s1 + $0x778] sm:$0xf]
    %v503 = vld [vmem:[%s1 + $0x77c] sm:$0xf]
    %v504 = vld [vmem:[%s1 + $0x780] sm:$0xf]
    %v505 = vld [vmem:[%s1 + $0x784] sm:$0xf]
    %v506 = vld [vmem:[%s1 + $0x788] sm:$0xf]
    %v507 = vld [vmem:[%s1 + $0x78c] sm:$0xf]
    %v508 = vld [vmem:[%s1 + $0x790] sm:$0xf]
    %v509 = vld [vmem:[%s1 + $0x794] sm:$0xf]
    %v510 = vld [vmem:[%s1 + $0x798] sm:$0xf]
    %v511 = vld [vmem:[%s1 + $0x79c] sm:$0xf]
    %v512 = vld [vmem:[%s1 + $0x7a0] sm:$0xf]
    %v513 = vld [vmem:[%s1 + $0x7a4] sm:$0xf]
    %v514 = vld [vmem:[%s1 + $0x7a8] sm:$0xf]
    %v515 = vld [vmem:[%s1 + $0x7ac] sm:$0xf]
    %v516 = vld [vmem:[%s1 + $0x7b0] sm:$0xf]
    %v517 = vld [vmem:[%s1 + $0x7b4] sm:$0xf]
    %v518 = vld [vmem:[%s1 + $0x7b8] sm:$0xf]
    %v519 = vld [vmem:[%s1 + $0x7bc] sm:$0xf]
    %v520 = vld [vmem:[%s1 + $0x7c0] sm:$0xf]
    %v521 = vld [vmem:[%s1 + $0x7c4] sm:$0xf]
    %v522 = vld [vmem:[%s1 + $0x7c8] sm:$0xf]
    %v523 = vld [vmem:[%s1 + $0x7cc] sm:$0xf]
    %v524 = vld [vmem:[%s1 + $0x7d0] sm:$0xf]
    %v525 = vld [vmem:[%s1 + $0x7d4] sm:$0xf]
    %v526 = vld [vmem:[%s1 + $0x7d8] sm:$0xf]
    %v527 = vld [vmem:[%s1 + $0x7dc] sm:$0xf]
    %v528 = vld [vmem:[%s1 + $0x7e0] sm:$0xf]
    %v529 = vld [vmem:[%s1 + $0x7e4] sm:$0xf]
    %v530 = vld [vmem:[%s1 + $0x7e8] sm:$0xf]
    %v531 = vld [vmem:[%s1 + $0x7ec] sm:$0xf]
    %v532 = vld [vmem:[%s1 + $0x7f0] sm:$0xf]
    %v533 = vld [vmem:[%s1 + $0x7f4] sm:$0xf]
    %v534 = vld [vmem:[%s1 + $0x7f8] sm:$0xf]
    %v535 = vld [vmem:[%s1 + $0x7fc] sm:$0xf]
    %v536 = vld [vmem:[%s1 + $0x800] sm:$0xf]
    %v537 = vld [vmem:[%s1 + $0x804] sm:$0xf]
    %v538 = vld [vmem:[%s1 + $0x808] sm:$0xf]
    %v539 = vld [vmem:[%s1 + $0x80c] sm:$0xf]
    %v540 = vld [vmem:[%s1 + $0x810] sm:$0xf]
    %v541 = vld [vmem:[%s1 + $0x814] sm:$0xf]
    %v542 = vld [vmem:[%s1 + $0x818] sm:$0xf]
    %v543 = vld [vmem:[%s1 + $0x81c] sm:$0xf]
    %v544 = vld [vmem:[%s1 + $0x820] sm:$0xf]
    %v545 = vld [vmem:[%s1 + $0x824] sm:$0xf]
    %v546 = vld [vmem:[%s1 + $0x828] sm:$0xf]
    %v547 = vld [vmem:[%s1 + $0x82c] sm:$0xf]
    %v548 = vld [vmem:[%s1 + $0x830] sm:$0xf]
    %v549 = vld [vmem:[%s1 + $0x834] sm:$0xf]
    %v550 = vld [vmem:[%s1 + $0x838] sm:$0xf]
    %v551 = vld [vmem:[%s1 + $0x83c] sm:$0xf]
    %v552 = vld [vmem:[%s1 + $0x840] sm:$0xf]
    %v553 = vld [vmem:[%s1 + $0x844] sm:$0xf]
    %v554 = vld [vmem:[%s1 + $0x848] sm:$0xf]
    %v555 = vld [vmem:[%s1 + $0x84c] sm:$0xf]
    %v556 = vld [vmem:[%s1 + $0x850] sm:$0xf]
    %v557 = vld [vmem:[%s1 + $0x854] sm:$0xf]
    %v558 = vld [vmem:[%s1 + $0x858] sm:$0xf]
    %v559 = vld [vmem:[%s1 + $0x85c] sm:$0xf]
    %v560 = vld [vmem:[%s1 + $0x860] sm:$0xf]
    %v561 = vld [vmem:[%s1 + $0x864] sm:$0xf]
    %v562 = vld [vmem:[%s1 + $0x868] sm:$0xf]
    %v563 = vld [vmem:[%s1 + $0x86c] sm:$0xf]
    %v564 = vld [vmem:[%s1 + $0x870] sm:$0xf]
    %v565 = vld [vmem:[%s1 + $0x874] sm:$0xf]
    %v566 = vld [vmem:[%s1 + $0x878] sm:$0xf]
    %v567 = vld [vmem:[%s1 + $0x87c] sm:$0xf]
    %v568 = vld [vmem:[%s1 + $0x880] sm:$0xf]
    %v569 = vld [vmem:[%s1 + $0x884] sm:$0xf]
    %v570 = vld [vmem:[%s1 + $0x888] sm:$0xf]
    %v571 = vld [vmem:[%s1 + $0x88c] sm:$0xf]
    %v572 = vld [vmem:[%s1 + $0x890] sm:$0xf]
    %v573 = vld [vmem:[%s1 + $0x894] sm:$0xf]
    %v574 = vld [vmem:[%s1 + $0x898] sm:$0xf]
    %v575 = vld [vmem:[%s1 + $0x89c] sm:$0xf]
    %v576 = vld [vmem:[%s1 + $0x8a0] sm:$0xf]
    %v577 = vld [vmem:[%s1 + $0x8a4] sm:$0xf]
    %v578 = vld [vmem:[%s1 + $0x8a8] sm:$0xf]
    %v579 = vld [vmem:[%s1 + $0x8ac] sm:$0xf]
    %v580 = vld [vmem:[%s1 + $0x8b0] sm:$0xf]
    %v581 = vld [vmem:[%s1 + $0x8b4] sm:$0xf]
    %v582 = vld [vmem:[%s1 + $0x8b8] sm:$0xf]
    %v583 = vld [vmem:[%s1 + $0x8bc] sm:$0xf]
    %v584 = vld [vmem:[%s1 + $0x8c0] sm:$0xf]
    %v585 = vld [vmem:[%s1 + $0x8c4] sm:$0xf]
    %v586 = vld [vmem:[%s1 + $0x8c8] sm:$0xf]
    %v587 = vld [vmem:[%s1 + $0x8cc] sm:$0xf]
    %v588 = vld [vmem:[%s1 + $0x8d0] sm:$0xf]
    %v589 = vld [vmem:[%s1 + $0x8d4] sm:$0xf]
    %v590 = vld [vmem:[%s1 + $0x8d8] sm:$0xf]
    %v591 = vld [vmem:[%s1 + $0x8dc] sm:$0xf]
    %v592 = vld [vmem:[%s1 + $0x8e0] sm:$0xf]
    %v593 = vld [vmem:[%s1 + $0x8e4] sm:$0xf]
    %v594 = vld [vmem:[%s1 + $0x8e8] sm:$0xf]
    %v595 = vld [vmem:[%s1 + $0x8ec] sm:$0xf]
    %v596 = vld [vmem:[%s1 + $0x8f0] sm:$0xf]
    %v597 = vld [vmem:[%s1 + $0x8f4] sm:$0xf]
    %v598 = vld [vmem:[%s1 + $0x8f8] sm:$0xf]
    %v599 = vld [vmem:[%s1 + $0x8fc] sm:$0xf]
    %v600 = vld [vmem:[%s1 + $0x900] sm:$0xf]
    %v601 = vld [vmem:[%s1 + $0x904] sm:$0xf]
    %v602 = vld [vmem:[%s1 + $0x908] sm:$0xf]
    %v603 = vld [vmem:[%s1 + $0x90c] sm:$0xf]
    %v604 = vld [vmem:[%s1 + $0x910] sm:$0xf]
    %v605 = vld [vmem:[%s1 + $0x914] sm:$0xf]
    %v606 = vld [vmem:[%s1 + $0x918] sm:$0xf]
    %v607 = vld [vmem:[%s1 + $0x91c] sm:$0xf]
    %v608 = vld [vmem:[%s1 + $0x920] sm:$0xf]
    %v609 = vld [vmem:[%s1 + $0x924] sm:$0xf]
    %v610 = vld [vmem:[%s1 + $0x928] sm:$0xf]
    %v611 = vld [vmem:[%s1 + $0x92c] sm:$0xf]
    %v612 = vld [vmem:[%s1 + $0x930] sm:$0xf]
    %v613 = vld [vmem:[%s1 + $0x934] sm:$0xf]
    %v614 = vld [vmem:[%s1 + $0x938] sm:$0xf]
    %v615 = vld [vmem:[%s1 + $0x93c] sm:$0xf]
    %v616 = vld [vmem:[%s1 + $0x940] sm:$0xf]
    %v617 = vld [vmem:[%s1 + $0x944] sm:$0xf]
    %v618 = vld [vmem:[%s1 + $0x948] sm:$0xf]
    %v619 = vld [vmem:[%s1 + $0x94c] sm:$0xf]
    %v620 = vld [vmem:[%s1 + $0x950] sm:$0xf]
    %v621 = vld [vmem:[%s1 + $0x954] sm:$0xf]
    %v622 = vld [vmem:[%s1 + $0x958] sm:$0xf]
    %v623 = vld [vmem:[%s1 + $0x95c] sm:$0xf]
    %v624 = vld [vmem:[%s1 + $0x960] sm:$0xf]
    %v625 = vld [vmem:[%s1 + $0x964] sm:$0xf]
    %v626 = vld [vmem:[%s1 + $0x968] sm:$0xf]
    %v627 = vld [vmem:[%s1 + $0x96c] sm:$0xf]
    %v628 = vld [vmem:[%s1 + $0x970] sm:$0xf]
    %v629 = vld [vmem:[%s1 + $0x974] sm:$0xf]
    %v630 = vld [vmem:[%s1 + $0x978] sm:$0xf]
    %v631 = vld [vmem:[%s1 + $0x97c] sm:$0xf]
    %v632 = vld [vmem:[%s1 + $0x980] sm:$0xf]
    %v633 = vld [vmem:[%s1 + $0x984] sm:$0xf]
    %v634 = vld [vmem:[%s1 + $0x988] sm:$0xf]
    %v635 = vld [vmem:[%s1 + $0x98c] sm:$0xf]
    %v636 = vld [vmem:[%s1 + $0x990] sm:$0xf]
    %v637 = vld [vmem:[%s1 + $0x994] sm:$0xf]
    %v638 = vld [vmem:[%s1 + $0x998] sm:$0xf]
    %v639 = vld [vmem:[%s1 + $0x99c] sm:$0xf]
    %v640 = vld [vmem:[%s1 + $0x9a0] sm:$0xf]
    %v641 = vld [vmem:[%s1 + $0x9a4] sm:$0xf]
    %v642 = vld [vmem:[%s1 + $0x9a8] sm:$0xf]
    %v643 = vld [vmem:[%s1 + $0x9ac] sm:$0xf]
    %v644 = vld [vmem:[%s1 + $0x9b0] sm:$0xf]
    %v645 = vld [vmem:[%s1 + $0x9b4] sm:$0xf]
    %v646 = vld [vmem:[%s1 + $0x9b8] sm:$0xf]
    %v647 = vld [vmem:[%s1 + $0x9bc] sm:$0xf]
    %v648 = vld [vmem:[%s1 + $0x9c0] sm:$0xf]
    %v649 = vld [vmem:[%s1 + $0x9c4] sm:$0xf]
    %v650 = vld [vmem:[%s1 + $0x9c8] sm:$0xf]
    %v651 = vld [vmem:[%s1 + $0x9cc] sm:$0xf]
    %v652 = vld [vmem:[%s1 + $0x9d0] sm:$0xf]
    %v653 = vld [vmem:[%s1 + $0x9d4] sm:$0xf]
    %v654 = vld [vmem:[%s1 + $0x9d8] sm:$0xf]
    %v655 = vld [vmem:[%s1 + $0x9dc] sm:$0xf]
    %v656 = vld [vmem:[%s1 + $0x9e0] sm:$0xf]
    %v657 = vld [vmem:[%s1 + $0x9e4] sm:$0xf]
    %v658 = vld [vmem:[%s1 + $0x9e8] sm:$0xf]
    %v659 = vld [vmem:[%s1 + $0x9ec] sm:$0xf]
    %v660 = vld [vmem:[%s1 + $0x9f0] sm:$0xf]
    %v661 = vld [vmem:[%s1 + $0x9f4] sm:$0xf]
    %v662 = vld [vmem:[%s1 + $0x9f8] sm:$0xf]
    %v663 = vld [vmem:[%s1 + $0x9fc] sm:$0xf]
    %v664 = vld [vmem:[%s1 + $0xa00] sm:$0xf]
    %v665 = vld [vmem:[%s1 + $0xa04] sm:$0xf]
    %v666 = vld [vmem:[%s1 + $0xa08] sm:$0xf]
    %v667 = vld [vmem:[%s1 + $0xa0c] sm:$0xf]
    %v668 = vld [vmem:[%s1 + $0xa10] sm:$0xf]
    %v669 = vld [vmem:[%s1 + $0xa14] sm:$0xf]
    %v670 = vld [vmem:[%s1 + $0xa18] sm:$0xf]
    %v671 = vld [vmem:[%s1 + $0xa1c] sm:$0xf]
    %v672 = vld [vmem:[%s1 + $0xa20] sm:$0xf]
    %v673 = vld [vmem:[%s1 + $0xa24] sm:$0xf]
    %v674 = vld [vmem:[%s1 + $0xa28] sm:$0xf]
    %v675 = vld [vmem:[%s1 + $0xa2c] sm:$0xf]
    %v676 = vld [vmem:[%s1 + $0xa30] sm:$0xf]
    %v677 = vld [vmem:[%s1 + $0xa34] sm:$0xf]
    %v678 = vld [vmem:[%s1 + $0xa38] sm:$0xf]
    %v679 = vld [vmem:[%s1 + $0xa3c] sm:$0xf]
    %v680 = vld [vmem:[%s1 + $0xa40] sm:$0xf]
    %v681 = vld [vmem:[%s1 + $0xa44] sm:$0xf]
    %v682 = vld [vmem:[%s1 + $0xa48] sm:$0xf]
    %v683 = vld [vmem:[%s1 + $0xa4c] sm:$0xf]
    %v684 = vld [vmem:[%s1 + $0xa50] sm:$0xf]
    %v685 = vld [vmem:[%s1 + $0xa54] sm:$0xf]
    %v686 = vld [vmem:[%s1 + $0xa58] sm:$0xf]
    %v687 = vld [vmem:[%s1 + $0xa5c] sm:$0xf]
    %v688 = vld [vmem:[%s1 + $0xa60] sm:$0xf]
    %v689 = vld [vmem:[%s1 + $0xa64] sm:$0xf]
    %v690 = vld [vmem:[%s1 + $0xa68] sm:$0xf]
    %v691 = vld [vmem:[%s1 + $0xa6c] sm:$0xf]
    %v692 = vld [vmem:[%s1 + $0xa70] sm:$0xf]
    %v693 = vld [vmem:[%s1 + $0xa74] sm:$0xf]
    %v694 = vld [vmem:[%s1 + $0xa78] sm:$0xf]
    %v695 = vld [vmem:[%s1 + $0xa7c] sm:$0xf]
    %v696 = vld [vmem:[%s1 + $0xa80] sm:$0xf]
    %v697 = vld [vmem:[%s1 + $0xa84] sm:$0xf]
    %v698 = vld [vmem:[%s1 + $0xa88] sm:$0xf]
    %v699 = vld [vmem:[%s1 + $0xa8c] sm:$0xf]
    %v700 = vld [vmem:[%s1 + $0xa90] sm:$0xf]
    %v701 = vld [vmem:[%s1 + $0xa94] sm:$0xf]
    %v702 = vld [vmem:[%s1 + $0xa98] sm:$0xf]
    %v703 = vld [vmem:[%s1 + $0xa9c] sm:$0xf]
    %v704 = vld [vmem:[%s1 + $0xaa0] sm:$0xf]
    %v705 = vld [vmem:[%s1 + $0xaa4] sm:$0xf]
    %v706 = vld [vmem:[%s1 + $0xaa8] sm:$0xf]
    %v707 = vld [vmem:[%s1 + $0xaac] sm:$0xf]
    %v708 = vld [vmem:[%s1 + $0xab0] sm:$0xf]
    %v709 = vld [vmem:[%s1 + $0xab4] sm:$0xf]
    %v710 = vld [vmem:[%s1 + $0xab8] sm:$0xf]
    %v711 = vld [vmem:[%s1 + $0xabc] sm:$0xf]
    %v712 = vld [vmem:[%s1 + $0xac0] sm:$0xf]
    %v713 = vld [vmem:[%s1 + $0xac4] sm:$0xf]
    %v714 = vld [vmem:[%s1 + $0xac8] sm:$0xf]
    %v715 = vld [vmem:[%s1 + $0xacc] sm:$0xf]
    %v716 = vld [vmem:[%s1 + $0xad0] sm:$0xf]
    %v717 = vld [vmem:[%s1 + $0xad4] sm:$0xf]
    %v718 = vld [vmem:[%s1 + $0xad8] sm:$0xf]
    %v719 = vld [vmem:[%s1 + $0xadc] sm:$0xf]
    %v720 = vld [vmem:[%s1 + $0xae0] sm:$0xf]
    %v721 = vld [vmem:[%s1 + $0xae4] sm:$0xf]
    %v722 = vld [vmem:[%s1 + $0xae8] sm:$0xf]
    %v723 = vld [vmem:[%s1 + $0xaec] sm:$0xf]
    %v724 = vld [vmem:[%s1 + $0xaf0] sm:$0xf]
    %v725 = vld [vmem:[%s1 + $0xaf4] sm:$0xf]
    %v726 = vld [vmem:[%s1 + $0xaf8] sm:$0xf]
    %v727 = vld [vmem:[%s1 + $0xafc] sm:$0xf]
    %v728 = vld [vmem:[%s1 + $0xb00] sm:$0xf]
    %v729 = vld [vmem:[%s1 + $0xb04] sm:$0xf]
    %v730 = vld [vmem:[%s1 + $0xb08] sm:$0xf]
    %v731 = vld [vmem:[%s1 + $0xb0c] sm:$0xf]
    %v732 = vld [vmem:[%s1 + $0xb10] sm:$0xf]
    %v733 = vld [vmem:[%s1 + $0xb14] sm:$0xf]
    %v734 = vld [vmem:[%s1 + $0xb18] sm:$0xf]
    %v735 = vld [vmem:[%s1 + $0xb1c] sm:$0xf]
    %v736 = vld [vmem:[%s1 + $0xb20] sm:$0xf]
    %v737 = vld [vmem:[%s1 + $0xb24] sm:$0xf]
    %v738 = vld [vmem:[%s1 + $0xb28] sm:$0xf]
    %v739 = vld [vmem:[%s1 + $0xb2c] sm:$0xf]
    %v740 = vld [vmem:[%s1 + $0xb30] sm:$0xf]
    %v741 = vld [vmem:[%s1 + $0xb34] sm:$0xf]
    %v742 = vld [vmem:[%s1 + $0xb38] sm:$0xf]
    %v743 = vld [vmem:[%s1 + $0xb3c] sm:$0xf]
    %v744 = vld [vmem:[%s1 + $0xb40] sm:$0xf]
    %v745 = vld [vmem:[%s1 + $0xb44] sm:$0xf]
    %v746 = vld [vmem:[%s1 + $0xb48] sm:$0xf]
    %v747 = vld [vmem:[%s1 + $0xb4c] sm:$0xf]
    %v748 = vld [vmem:[%s1 + $0xb50] sm:$0xf]
    %v749 = vld [vmem:[%s1 + $0xb54] sm:$0xf]
    %v750 = vld [vmem:[%s1 + $0xb58] sm:$0xf]
    %v751 = vld [vmem:[%s1 + $0xb5c] sm:$0xf]
    %v752 = vld [vmem:[%s1 + $0xb60] sm:$0xf]
    %v753 = vld [vmem:[%s1 + $0xb64] sm:$0xf]
    %v754 = vld [vmem:[%s1 + $0xb68] sm:$0xf]
    %v755 = vld [vmem:[%s1 + $0xb6c] sm:$0xf]
    %v756 = vld [vmem:[%s1 + $0xb70] sm:$0xf]
    %v757 = vld [vmem:[%s1 + $0xb74] sm:$0xf]
    %v758 = vld [vmem:[%s1 + $0xb78] sm:$0xf]
    %v759 = vld [vmem:[%s1 + $0xb7c] sm:$0xf]
    %v760 = vld [vmem:[%s1 + $0xb80] sm:$0xf]
    %v761 = vld [vmem:[%s1 + $0xb84] sm:$0xf]
    %v762 = vld [vmem:[%s1 + $0xb88] sm:$0xf]
    %v763 = vld [vmem:[%s1 + $0xb8c] sm:$0xf]
    %v764 = vld [vmem:[%s1 + $0xb90] sm:$0xf]
    %v765 = vld [vmem:[%s1 + $0xb94] sm:$0xf]
    %v766 = vld [vmem:[%s1 + $0xb98] sm:$0xf]
    %v767 = vld [vmem:[%s1 + $0xb9c] sm:$0xf]
    %v768 = vld [vmem:[%s1 + $0xba0] sm:$0xf]
    %v769 = vld [vmem:[%s1 + $0xba4] sm:$0xf]
    %v770 = vld [vmem:[%s1 + $0xba8] sm:$0xf]
    %v771 = vld [vmem:[%s1 + $0xbac] sm:$0xf]
    %v772 = vld [vmem:[%s1 + $0xbb0] sm:$0xf]
    %v773 = vld [vmem:[%s1 + $0xbb4] sm:$0xf]
    %v774 = vld [vmem:[%s1 + $0xbb8] sm:$0xf]
    %v775 = vld [vmem:[%s1 + $0xbbc] sm:$0xf]
    %v776 = vld [vmem:[%s1 + $0xbc0] sm:$0xf]
    %v777 = vld [vmem:[%s1 + $0xbc4] sm:$0xf]
    %v778 = vld [vmem:[%s1 + $0xbc8] sm:$0xf]
    %v779 = vld [vmem:[%s1 + $0xbcc] sm:$0xf]
    %v780 = vld [vmem:[%s1 + $0xbd0] sm:$0xf]
    %v781 = vld [vmem:[%s1 + $0xbd4] sm:$0xf]
    %v782 = vld [vmem:[%s1 + $0xbd8] sm:$0xf]
    %v783 = vld [vmem:[%s1 + $0xbdc] sm:$0xf]
    %v784 = vld [vmem:[%s1 + $0xbe0] sm:$0xf]
    %v785 = vld [vmem:[%s1 + $0xbe4] sm:$0xf]
    %v786 = vld [vmem:[%s1 + $0xbe8] sm:$0xf]
    %v787 = vld [vmem:[%s1 + $0xbec] sm:$0xf]
    %v788 = vld [vmem:[%s1 + $0xbf0] sm:$0xf]
    %v789 = vld [vmem:[%s1 + $0xbf4] sm:$0xf]
    %v790 = vld [vmem:[%s1 + $0xbf8] sm:$0xf]
    %v791 = vld [vmem:[%s1 + $0xbfc] sm:$0xf]
    %v792 = vld [vmem:[%s1 + $0xc00] sm:$0xf]
    %v793 = vld [vmem:[%s1 + $0xc04] sm:$0xf]
    %v794 = vld [vmem:[%s1 + $0xc08] sm:$0xf]
    %v795 = vld [vmem:[%s1 + $0xc0c] sm:$0xf]
    %v796 = vld [vmem:[%s1 + $0xc10] sm:$0xf]
    %v797 = vld [vmem:[%s1 + $0xc14] sm:$0xf]
    %v798 = vld [vmem:[%s1 + $0xc18] sm:$0xf]
    %v799 = vld [vmem:[%s1 + $0xc1c] sm:$0xf]
    %v800 = vld [vmem:[%s1 + $0xc20] sm:$0xf]
    %v801 = vld [vmem:[%s1 + $0xc24] sm:$0xf]
    %v802 = vld [vmem:[%s1 + $0xc28] sm:$0xf]
    %v803 = vld [vmem:[%s1 + $0xc2c] sm:$0xf]
    %v804 = vld [vmem:[%s1 + $0xc30] sm:$0xf]
    %v805 = vld [vmem:[%s1 + $0xc34] sm:$0xf]
    %v806 = vld [vmem:[%s1 + $0xc38] sm:$0xf]
    %v807 = vld [vmem:[%s1 + $0xc3c] sm:$0xf]
    %v808 = vld [vmem:[%s1 + $0xc40] sm:$0xf]
    %v809 = vld [vmem:[%s1 + $0xc44] sm:$0xf]
    %v810 = vld [vmem:[%s1 + $0xc48] sm:$0xf]
    %v811 = vld [vmem:[%s1 + $0xc4c] sm:$0xf]
    %v812 = vld [vmem:[%s1 + $0xc50] sm:$0xf]
    %v813 = vld [vmem:[%s1 + $0xc54] sm:$0xf]
    %v814 = vld [vmem:[%s1 + $0xc58] sm:$0xf]
    %v815 = vld [vmem:[%s1 + $0xc5c] sm:$0xf]
    %v816 = vld [vmem:[%s1 + $0xc60] sm:$0xf]
    %v817 = vld [vmem:[%s1 + $0xc64] sm:$0xf]
    %v818 = vld [vmem:[%s1 + $0xc68] sm:$0xf]
    %v819 = vld [vmem:[%s1 + $0xc6c] sm:$0xf]
    %v820 = vld [vmem:[%s1 + $0xc70] sm:$0xf]
    %v821 = vld [vmem:[%s1 + $0xc74] sm:$0xf]
    %v822 = vld [vmem:[%s1 + $0xc78] sm:$0xf]
    %v823 = vld [vmem:[%s1 + $0xc7c] sm:$0xf]
    %v824 = vld [vmem:[%s1 + $0xc80] sm:$0xf]
    %v825 = vld [vmem:[%s1 + $0xc84] sm:$0xf]
    %v826 = vld [vmem:[%s1 + $0xc88] sm:$0xf]
    %v827 = vld [vmem:[%s1 + $0xc8c] sm:$0xf]
    %v828 = vld [vmem:[%s1 + $0xc90] sm:$0xf]
    %v829 = vld [vmem:[%s1 + $0xc94] sm:$0xf]
    %v830 = vld [vmem:[%s1 + $0xc98] sm:$0xf]
    %v831 = vld [vmem:[%s1 + $0xc9c] sm:$0xf]
    %v832 = vld [vmem:[%s1 + $0xca0] sm:$0xf]
    %v833 = vld [vmem:[%s1 + $0xca4] sm:$0xf]
    %v834 = vld [vmem:[%s1 + $0xca8] sm:$0xf]
    %v835 = vld [vmem:[%s1 + $0xcac] sm:$0xf]
    %v836 = vld [vmem:[%s1 + $0xcb0] sm:$0xf]
    %v837 = vld [vmem:[%s1 + $0xcb4] sm:$0xf]
    %v838 = vld [vmem:[%s1 + $0xcb8] sm:$0xf]
    %v839 = vld [vmem:[%s1 + $0xcbc] sm:$0xf]
    %v840 = vld [vmem:[%s1 + $0xcc0] sm:$0xf]
    %v841 = vld [vmem:[%s1 + $0xcc4] sm:$0xf]
    %v842 = vld [vmem:[%s1 + $0xcc8] sm:$0xf]
    %v843 = vld [vmem:[%s1 + $0xccc] sm:$0xf]
    %v844 = vld [vmem:[%s1 + $0xcd0] sm:$0xf]
    %v845 = vld [vmem:[%s1 + $0xcd4] sm:$0xf]
    %v846 = vld [vmem:[%s1 + $0xcd8] sm:$0xf]
    %v847 = vld [vmem:[%s1 + $0xcdc] sm:$0xf]
    %v848 = vld [vmem:[%s1 + $0xce0] sm:$0xf]
    %v849 = vld [vmem:[%s1 + $0xce4] sm:$0xf]
    %v850 = vld [vmem:[%s1 + $0xce8] sm:$0xf]
    %v851 = vld [vmem:[%s1 + $0xcec] sm:$0xf]
    %v852 = vld [vmem:[%s1 + $0xcf0] sm:$0xf]
    %v853 = vld [vmem:[%s1 + $0xcf4] sm:$0xf]
    %v854 = vld [vmem:[%s1 + $0xcf8] sm:$0xf]
    %v855 = vld [vmem:[%s1 + $0xcfc] sm:$0xf]
    %v856 = vld [vmem:[%s1 + $0xd00] sm:$0xf]
    %v857 = vld [vmem:[%s1 + $0xd04] sm:$0xf]
    %v858 = vld [vmem:[%s1 + $0xd08] sm:$0xf]
    %v859 = vld [vmem:[%s1 + $0xd0c] sm:$0xf]
    %v860 = vld [vmem:[%s1 + $0xd10] sm:$0xf]
    %v861 = vld [vmem:[%s1 + $0xd14] sm:$0xf]
    %v862 = vld [vmem:[%s1 + $0xd18] sm:$0xf]
    %v863 = vld [vmem:[%s1 + $0xd1c] sm:$0xf]
    %v864 = vld [vmem:[%s1 + $0xd20] sm:$0xf]
    %v865 = vld [vmem:[%s1 + $0xd24] sm:$0xf]
    %v866 = vld [vmem:[%s1 + $0xd28] sm:$0xf]
    %v867 = vld [vmem:[%s1 + $0xd2c] sm:$0xf]
    %v868 = vld [vmem:[%s1 + $0xd30] sm:$0xf]
    %v869 = vld [vmem:[%s1 + $0xd34] sm:$0xf]
    %v870 = vld [vmem:[%s1 + $0xd38] sm:$0xf]
    %v871 = vld [vmem:[%s1 + $0xd3c] sm:$0xf]
    %v872 = vld [vmem:[%s1 + $0xd40] sm:$0xf]
    %v873 = vld [vmem:[%s1 + $0xd44] sm:$0xf]
    %v874 = vld [vmem:[%s1 + $0xd48] sm:$0xf]
    %v875 = vld [vmem:[%s1 + $0xd4c] sm:$0xf]
    %v876 = vld [vmem:[%s1 + $0xd50] sm:$0xf]
    %v877 = vld [vmem:[%s1 + $0xd54] sm:$0xf]
    %v878 = vld [vmem:[%s1 + $0xd58] sm:$0xf]
    %v879 = vld [vmem:[%s1 + $0xd5c] sm:$0xf]
    %v880 = vld [vmem:[%s1 + $0xd60] sm:$0xf]
    %v881 = vld [vmem:[%s1 + $0xd64] sm:$0xf]
    %v882 = vld [vmem:[%s1 + $0xd68] sm:$0xf]
    %v883 = vld [vmem:[%s1 + $0xd6c] sm:$0xf]
    %v884 = vld [vmem:[%s1 + $0xd70] sm:$0xf]
    %v885 = vld [vmem:[%s1 + $0xd74] sm:$0xf]
    %v886 = vld [vmem:[%s1 + $0xd78] sm:$0xf]
    %v887 = vld [vmem:[%s1 + $0xd7c] sm:$0xf]
    %v888 = vld [vmem:[%s1 + $0xd80] sm:$0xf]
    %v889 = vld [vmem:[%s1 + $0xd84] sm:$0xf]
    %v890 = vld [vmem:[%s1 + $0xd88] sm:$0xf]
    %v891 = vld [vmem:[%s1 + $0xd8c] sm:$0xf]
    %v892 = vld [vmem:[%s1 + $0xd90] sm:$0xf]
    %v893 = vld [vmem:[%s1 + $0xd94] sm:$0xf]
    %v894 = vld [vmem:[%s1 + $0xd98] sm:$0xf]
    %v895 = vld [vmem:[%s1 + $0xd9c] sm:$0xf]
    %v896 = vld [vmem:[%s1 + $0xda0] sm:$0xf]
    %v897 = vld [vmem:[%s1 + $0xda4] sm:$0xf]
    %v898 = vld [vmem:[%s1 + $0xda8] sm:$0xf]
    %v899 = vld [vmem:[%s1 + $0xdac] sm:$0xf]
    %v900 = vld [vmem:[%s1 + $0xdb0] sm:$0xf]
    %v901 = vld [vmem:[%s1 + $0xdb4] sm:$0xf]
    %v902 = vld [vmem:[%s1 + $0xdb8] sm:$0xf]
    %v903 = vld [vmem:[%s1 + $0xdbc] sm:$0xf]
    %v904 = vld [vmem:[%s1 + $0xdc0] sm:$0xf]
    %v905 = vld [vmem:[%s1 + $0xdc4] sm:$0xf]
    %v906 = vld [vmem:[%s1 + $0xdc8] sm:$0xf]
    %v907 = vld [vmem:[%s1 + $0xdcc] sm:$0xf]
    %v908 = vld [vmem:[%s1 + $0xdd0] sm:$0xf]
    %v909 = vld [vmem:[%s1 + $0xdd4] sm:$0xf]
    %v910 = vld [vmem:[%s1 + $0xdd8] sm:$0xf]
    %v911 = vld [vmem:[%s1 + $0xddc] sm:$0xf]
    %v912 = vld [vmem:[%s1 + $0xde0] sm:$0xf]
    %v913 = vld [vmem:[%s1 + $0xde4] sm:$0xf]
    %v914 = vld [vmem:[%s1 + $0xde8] sm:$0xf]
    %v915 = vld [vmem:[%s1 + $0xdec] sm:$0xf]
    %v916 = vld [vmem:[%s1 + $0xdf0] sm:$0xf]
    %v917 = vld [vmem:[%s1 + $0xdf4] sm:$0xf]
    %v918 = vld [vmem:[%s1 + $0xdf8] sm:$0xf]
    %v919 = vld [vmem:[%s1 + $0xdfc] sm:$0xf]
    %v920 = vld [vmem:[%s1 + $0xe00] sm:$0xf]
    %v921 = vld [vmem:[%s1 + $0xe04] sm:$0xf]
    %v922 = vld [vmem:[%s1 + $0xe08] sm:$0xf]
    %v923 = vld [vmem:[%s1 + $0xe0c] sm:$0xf]
    %v924 = vld [vmem:[%s1 + $0xe10] sm:$0xf]
    %v925 = vld [vmem:[%s1 + $0xe14] sm:$0xf]
    %v926 = vld [vmem:[%s1 + $0xe18] sm:$0xf]
    %v927 = vld [vmem:[%s1 + $0xe1c] sm:$0xf]
    %v928 = vld [vmem:[%s1 + $0xe20] sm:$0xf]
    %v929 = vld [vmem:[%s1 + $0xe24] sm:$0xf]
    %v930 = vld [vmem:[%s1 + $0xe28] sm:$0xf]
    %v931 = vld [vmem:[%s1 + $0xe2c] sm:$0xf]
    %v932 = vld [vmem:[%s1 + $0xe30] sm:$0xf]
    %v933 = vld [vmem:[%s1 + $0xe34] sm:$0xf]
    %v934 = vld [vmem:[%s1 + $0xe38] sm:$0xf]
    %v935 = vld [vmem:[%s1 + $0xe3c] sm:$0xf]
    %v936 = vld [vmem:[%s1 + $0xe40] sm:$0xf]
    %v937 = vld [vmem:[%s1 + $0xe44] sm:$0xf]
    %v938 = vld [vmem:[%s1 + $0xe48] sm:$0xf]
    %v939 = vld [vmem:[%s1 + $0xe4c] sm:$0xf]
    %v940 = vld [vmem:[%s1 + $0xe50] sm:$0xf]
    %v941 = vld [vmem:[%s1 + $0xe54] sm:$0xf]
    %v942 = vld [vmem:[%s1 + $0xe58] sm:$0xf]
    %v943 = vld [vmem:[%s1 + $0xe5c] sm:$0xf]
    %v944 = vld [vmem:[%s1 + $0xe60] sm:$0xf]
    %v945 = vld [vmem:[%s1 + $0xe64] sm:$0xf]
    %v946 = vld [vmem:[%s1 + $0xe68] sm:$0xf]
    %v947 = vld [vmem:[%s1 + $0xe6c] sm:$0xf]
    %v948 = vld [vmem:[%s1 + $0xe70] sm:$0xf]
    %v949 = vld [vmem:[%s1 + $0xe74] sm:$0xf]
    %v950 = vld [vmem:[%s1 + $0xe78] sm:$0xf]
    %v951 = vld [vmem:[%s1 + $0xe7c] sm:$0xf]
    %v952 = vld [vmem:[%s1 + $0xe80] sm:$0xf]
    %v953 = vld [vmem:[%s1 + $0xe84] sm:$0xf]
    %v954 = vld [vmem:[%s1 + $0xe88] sm:$0xf]
    %v955 = vld [vmem:[%s1 + $0xe8c] sm:$0xf]
    %v956 = vld [vmem:[%s1 + $0xe90] sm:$0xf]
    %v957 = vld [vmem:[%s1 + $0xe94] sm:$0xf]
    %v958 = vld [vmem:[%s1 + $0xe98] sm:$0xf]
    %v959 = vld [vmem:[%s1 + $0xe9c] sm:$0xf]
    %v960 = vld [vmem:[%s1 + $0xea0] sm:$0xf]
    %v961 = vld [vmem:[%s1 + $0xea4] sm:$0xf]
    %v962 = vld [vmem:[%s1 + $0xea8] sm:$0xf]
    %v963 = vld [vmem:[%s1 + $0xeac] sm:$0xf]
    %v964 = vld [vmem:[%s1 + $0xeb0] sm:$0xf]
    %v965 = vld [vmem:[%s1 + $0xeb4] sm:$0xf]
    %v966 = vld [vmem:[%s1 + $0xeb8] sm:$0xf]
    %v967 = vld [vmem:[%s1 + $0xebc] sm:$0xf]
    %v968 = vld [vmem:[%s1 + $0xec0] sm:$0xf]
    %v969 = vld [vmem:[%s1 + $0xec4] sm:$0xf]
    %v970 = vld [vmem:[%s1 + $0xec8] sm:$0xf]
    %v971 = vld [vmem:[%s1 + $0xecc] sm:$0xf]
    %v972 = vld [vmem:[%s1 + $0xed0] sm:$0xf]
    %v973 = vld [vmem:[%s1 + $0xed4] sm:$0xf]
    %v974 = vld [vmem:[%s1 + $0xed8] sm:$0xf]
    %v975 = vld [vmem:[%s1 + $0xedc] sm:$0xf]
    %v976 = vld [vmem:[%s1 + $0xee0] sm:$0xf]
    %v977 = vld [vmem:[%s1 + $0xee4] sm:$0xf]
    %v978 = vld [vmem:[%s1 + $0xee8] sm:$0xf]
    %v979 = vld [vmem:[%s1 + $0xeec] sm:$0xf]
    %v980 = vld [vmem:[%s1 + $0xef0] sm:$0xf]
    %v981 = vld [vmem:[%s1 + $0xef4] sm:$0xf]
    %v982 = vld [vmem:[%s1 + $0xef8] sm:$0xf]
    %v983 = vld [vmem:[%s1 + $0xefc] sm:$0xf]
    %v984 = vld [vmem:[%s1 + $0xf00] sm:$0xf]
    %v985 = vld [vmem:[%s1 + $0xf04] sm:$0xf]
    %v986 = vld [vmem:[%s1 + $0xf08] sm:$0xf]
    %v987 = vld [vmem:[%s1 + $0xf0c] sm:$0xf]
    %v988 = vld [vmem:[%s1 + $0xf10] sm:$0xf]
    %v989 = vld [vmem:[%s1 + $0xf14] sm:$0xf]
    %v990 = vld [vmem:[%s1 + $0xf18] sm:$0xf]
    %v991 = vld [vmem:[%s1 + $0xf1c] sm:$0xf]
    %v992 = vld [vmem:[%s1 + $0xf20] sm:$0xf]
    %v993 = vld [vmem:[%s1 + $0xf24] sm:$0xf]
    %v994 = vld [vmem:[%s1 + $0xf28] sm:$0xf]
    %v995 = vld [vmem:[%s1 + $0xf2c] sm:$0xf]
    %v996 = vld [vmem:[%s1 + $0xf30] sm:$0xf]
    %v997 = vld [vmem:[%s1 + $0xf34] sm:$0xf]
    %v998 = vld [vmem:[%s1 + $0xf38] sm:$0xf]
    %v999 = vld [vmem:[%s1 + $0xf3c] sm:$0xf]
    %v1000 = vld [vmem:[%s1 + $0xf40] sm:$0xf]
    %v1001 = vld [vmem:[%s1 + $0xf44] sm:$0xf]
    %v1002 = vld [vmem:[%s1 + $0xf48] sm:$0xf]
    %v1003 = vld [vmem:[%s1 + $0xf4c] sm:$0xf]
    %v1004 = vld [vmem:[%s1 + $0xf50] sm:$0xf]
    %v1005 = vld [vmem:[%s1 + $0xf54] sm:$0xf]
    %v1006 = vld [vmem:[%s1 + $0xf58] sm:$0xf]
    %v1007 = vld [vmem:[%s1 + $0xf5c] sm:$0xf]
    %v1008 = vld [vmem:[%s1 + $0xf60] sm:$0xf]
    %v1009 = vld [vmem:[%s1 + $0xf64] sm:$0xf]
    %v1010 = vld [vmem:[%s1 + $0xf68] sm:$0xf]
    %v1011 = vld [vmem:[%s1 + $0xf6c] sm:$0xf]
    %v1012 = vld [vmem:[%s1 + $0xf70] sm:$0xf]
    %v1013 = vld [vmem:[%s1 + $0xf74] sm:$0xf]
    %v1014 = vld [vmem:[%s1 + $0xf78] sm:$0xf]
    %v1015 = vld [vmem:[%s1 + $0xf7c] sm:$0xf]
    %v1016 = vld [vmem:[%s1 + $0xf80] sm:$0xf]
    %v1017 = vld [vmem:[%s1 + $0xf84] sm:$0xf]
    %v1018 = vld [vmem:[%s1 + $0xf88] sm:$0xf]
    %v1019 = vld [vmem:[%s1 + $0xf8c] sm:$0xf]
    %v1020 = vld [vmem:[%s1 + $0xf90] sm:$0xf]
    %v1021 = vld [vmem:[%s1 + $0xf94] sm:$0xf]
    %v1022 = vld [vmem:[%s1 + $0xf98] sm:$0xf]
    %v1023 = vld [vmem:[%s1 + $0xf9c] sm:$0xf]
    %v1024 = vld [vmem:[%s1 + $0xfa0] sm:$0xf]
    %v1025 = vld [vmem:[%s1 + $0xfa4] sm:$0xf]
    %v1026 = vld [vmem:[%s1 + $0xfa8] sm:$0xf]
    %v1027 = vld [vmem:[%s1 + $0xfac] sm:$0xf]
    %v1028 = vld [vmem:[%s1 + $0xfb0] sm:$0xf]
    %v1029 = vld [vmem:[%s1 + $0xfb4] sm:$0xf]
    %v1030 = vld [vmem:[%s1 + $0xfb8] sm:$0xf]
    %v1031 = vld [vmem:[%s1 + $0xfbc] sm:$0xf]
    %v1032 = vld [vmem:[%s1 + $0xfc0] sm:$0xf]
    %v1033 = vld [vmem:[%s1 + $0xfc4] sm:$0xf]
    %v1034 = vld [vmem:[%s1 + $0xfc8] sm:$0xf]
    %v1035 = vld [vmem:[%s1 + $0xfcc] sm:$0xf]
    %v1036 = vld [vmem:[%s1 + $0xfd0] sm:$0xf]
    %v1037 = vld [vmem:[%s1 + $0xfd4] sm:$0xf]
    %v1038 = vld [vmem:[%s1 + $0xfd8] sm:$0xf]
    %v1039 = vld [vmem:[%s1 + $0xfdc] sm:$0xf]
    %v1040 = vld [vmem:[%s1 + $0xfe0] sm:$0xf]
    %v1041 = vld [vmem:[%s1 + $0xfe4] sm:$0xf]
    %v1042 = vld [vmem:[%s1 + $0xfe8] sm:$0xf]
    %v1043 = vld [vmem:[%s1 + $0xfec] sm:$0xf]
    %v1044 = vld [vmem:[%s1 + $0xff0] sm:$0xf]
    %v1045 = vld [vmem:[%s1 + $0xff4] sm:$0xf]
    %v1046 = vld [vmem:[%s1 + $0xff8] sm:$0xf]
    %v1047 = vld [vmem:[%s1 + $0xffc] sm:$0xf]
    %v1048 = vld [vmem:[%s2] sm:$0x1]
    %v1050 = vlaneseq
    %v1051 = vshrl.u32 %v1050, 7
    %v1052 = vsub.s32 0, %v1051
    %v1053 = vrot.slane %v1048, %v1052
    %v1063 = vcombine.high %v16, %v16
    %v1065 = vunpack.c.l.s4 1966171168
    %v1066 = vunpack.c.0.s8 %v1065
    %v1067 = vlaneseq
    %v1068 = vshrl.u32 %v1067, 7
    %v1069 = vsub.s32 %v1066, %v1068
    %v1070 = vrot.slane %v16, %v1069
    %v1072 = vunpack.c.l.s4 1966171168
    %v1073 = vunpack.c.0.s8 %v1072
    %v1074 = vlaneseq
    %v1075 = vshrl.u32 %v1074, 7
    %v1076 = vsub.s32 %v1073, %v1075
    %v1077 = vrot.slane %v1063, %v1076
    %v1078 = vcombine.high %v1070, %v1070
    %v1079 = vcombine.high %v1077, %v1077
    %v1081 = vunpack.c.l.s4 1966171168
    %v1082 = vunpack.c.0.s8 %v1081
    %v1083 = vlaneseq
    %v1084 = vshrl.u32 %v1083, 7
    %v1085 = vsub.s32 %v1082, %v1084
    %v1086 = vrot.slane %v1070, %v1085
    %v1088 = vunpack.c.l.s4 1966171168
    %v1089 = vunpack.c.0.s8 %v1088
    %v1090 = vlaneseq
    %v1091 = vshrl.u32 %v1090, 7
    %v1092 = vsub.s32 %v1089, %v1091
    %v1093 = vrot.slane %v1077, %v1092
    %v1095 = vunpack.c.l.s4 1966171168
    %v1096 = vunpack.c.0.s8 %v1095
    %v1097 = vlaneseq
    %v1098 = vshrl.u32 %v1097, 7
    %v1099 = vsub.s32 %v1096, %v1098
    %v1100 = vrot.slane %v1078, %v1099
    %v1102 = vunpack.c.l.s4 1966171168
    %v1103 = vunpack.c.0.s8 %v1102
    %v1104 = vlaneseq
    %v1105 = vshrl.u32 %v1104, 7
    %v1106 = vsub.s32 %v1103, %v1105
    %v1107 = vrot.slane %v1079, %v1106
    %v1108 = vcombine.high %v1086, %v1086
    %v1109 = vcombine.high %v1093, %v1093
    %v1110 = vcombine.high %v1100, %v1100
    %v1111 = vcombine.high %v1107, %v1107
    %v1112 = vcombine.high %v17, %v17
    %v1114 = vunpack.c.l.s4 1966171168
    %v1115 = vunpack.c.0.s8 %v1114
    %v1116 = vlaneseq
    %v1117 = vshrl.u32 %v1116, 7
    %v1118 = vsub.s32 %v1115, %v1117
    %v1119 = vrot.slane %v17, %v1118
    %v1121 = vunpack.c.l.s4 1966171168
    %v1122 = vunpack.c.0.s8 %v1121
    %v1123 = vlaneseq
    %v1124 = vshrl.u32 %v1123, 7
    %v1125 = vsub.s32 %v1122, %v1124
    %v1126 = vrot.slane %v1112, %v1125
    %v1127 = vcombine.high %v1119, %v1119
    %v1128 = vcombine.high %v1126, %v1126
    %v1130 = vunpack.c.l.s4 1966171168
    %v1131 = vunpack.c.0.s8 %v1130
    %v1132 = vlaneseq
    %v1133 = vshrl.u32 %v1132, 7
    %v1134 = vsub.s32 %v1131, %v1133
    %v1135 = vrot.slane %v1119, %v1134
    %v1137 = vunpack.c.l.s4 1966171168
    %v1138 = vunpack.c.0.s8 %v1137
    %v1139 = vlaneseq
    %v1140 = vshrl.u32 %v1139, 7
    %v1141 = vsub.s32 %v1138, %v1140
    %v1142 = vrot.slane %v1126, %v1141
    %v1144 = vunpack.c.l.s4 1966171168
    %v1145 = vunpack.c.0.s8 %v1144
    %v1146 = vlaneseq
    %v1147 = vshrl.u32 %v1146, 7
    %v1148 = vsub.s32 %v1145, %v1147
    %v1149 = vrot.slane %v1127, %v1148
    %v1151 = vunpack.c.l.s4 1966171168
    %v1152 = vunpack.c.0.s8 %v1151
    %v1153 = vlaneseq
    %v1154 = vshrl.u32 %v1153, 7
    %v1155 = vsub.s32 %v1152, %v1154
    %v1156 = vrot.slane %v1128, %v1155
    %v1157 = vcombine.high %v1135, %v1135
    %v1158 = vcombine.high %v1142, %v1142
    %v1159 = vcombine.high %v1149, %v1149
    %v1160 = vcombine.high %v1156, %v1156
    %v1161 = vcombine.high %v18, %v18
    %v1163 = vunpack.c.l.s4 1966171168
    %v1164 = vunpack.c.0.s8 %v1163
    %v1165 = vlaneseq
    %v1166 = vshrl.u32 %v1165, 7
    %v1167 = vsub.s32 %v1164, %v1166
    %v1168 = vrot.slane %v18, %v1167
    %v1170 = vunpack.c.l.s4 1966171168
    %v1171 = vunpack.c.0.s8 %v1170
    %v1172 = vlaneseq
    %v1173 = vshrl.u32 %v1172, 7
    %v1174 = vsub.s32 %v1171, %v1173
    %v1175 = vrot.slane %v1161, %v1174
    %v1176 = vcombine.high %v1168, %v1168
    %v1177 = vcombine.high %v1175, %v1175
    %v1179 = vunpack.c.l.s4 1966171168
    %v1180 = vunpack.c.0.s8 %v1179
    %v1181 = vlaneseq
    %v1182 = vshrl.u32 %v1181, 7
    %v1183 = vsub.s32 %v1180, %v1182
    %v1184 = vrot.slane %v1168, %v1183
    %v1186 = vunpack.c.l.s4 1966171168
    %v1187 = vunpack.c.0.s8 %v1186
    %v1188 = vlaneseq
    %v1189 = vshrl.u32 %v1188, 7
    %v1190 = vsub.s32 %v1187, %v1189
    %v1191 = vrot.slane %v1175, %v1190
    %v1193 = vunpack.c.l.s4 1966171168
    %v1194 = vunpack.c.0.s8 %v1193
    %v1195 = vlaneseq
    %v1196 = vshrl.u32 %v1195, 7
    %v1197 = vsub.s32 %v1194, %v1196
    %v1198 = vrot.slane %v1176, %v1197
    %v1200 = vunpack.c.l.s4 1966171168
    %v1201 = vunpack.c.0.s8 %v1200
    %v1202 = vlaneseq
    %v1203 = vshrl.u32 %v1202, 7
    %v1204 = vsub.s32 %v1201, %v1203
    %v1205 = vrot.slane %v1177, %v1204
    %v1206 = vcombine.high %v1184, %v1184
    %v1207 = vcombine.high %v1191, %v1191
    %v1208 = vcombine.high %v1198, %v1198
    %v1209 = vcombine.high %v1205, %v1205
    %v1210 = vcombine.high %v19, %v19
    %v1212 = vunpack.c.l.s4 1966171168
    %v1213 = vunpack.c.0.s8 %v1212
    %v1214 = vlaneseq
    %v1215 = vshrl.u32 %v1214, 7
    %v1216 = vsub.s32 %v1213, %v1215
    %v1217 = vrot.slane %v19, %v1216
    %v1219 = vunpack.c.l.s4 1966171168
    %v1220 = vunpack.c.0.s8 %v1219
    %v1221 = vlaneseq
    %v1222 = vshrl.u32 %v1221, 7
    %v1223 = vsub.s32 %v1220, %v1222
    %v1224 = vrot.slane %v1210, %v1223
    %v1225 = vcombine.high %v1217, %v1217
    %v1226 = vcombine.high %v1224, %v1224
    %v1228 = vunpack.c.l.s4 1966171168
    %v1229 = vunpack.c.0.s8 %v1228
    %v1230 = vlaneseq
    %v1231 = vshrl.u32 %v1230, 7
    %v1232 = vsub.s32 %v1229, %v1231
    %v1233 = vrot.slane %v1217, %v1232
    %v1235 = vunpack.c.l.s4 1966171168
    %v1236 = vunpack.c.0.s8 %v1235
    %v1237 = vlaneseq
    %v1238 = vshrl.u32 %v1237, 7
    %v1239 = vsub.s32 %v1236, %v1238
    %v1240 = vrot.slane %v1224, %v1239
    %v1242 = vunpack.c.l.s4 1966171168
    %v1243 = vunpack.c.0.s8 %v1242
    %v1244 = vlaneseq
    %v1245 = vshrl.u32 %v1244, 7
    %v1246 = vsub.s32 %v1243, %v1245
    %v1247 = vrot.slane %v1225, %v1246
    %v1249 = vunpack.c.l.s4 1966171168
    %v1250 = vunpack.c.0.s8 %v1249
    %v1251 = vlaneseq
    %v1252 = vshrl.u32 %v1251, 7
    %v1253 = vsub.s32 %v1250, %v1252
    %v1254 = vrot.slane %v1226, %v1253
    %v1255 = vcombine.high %v1233, %v1233
    %v1256 = vcombine.high %v1240, %v1240
    %v1257 = vcombine.high %v1247, %v1247
    %v1258 = vcombine.high %v1254, %v1254
    %v1259 = vcombine.high %v20, %v20
    %v1261 = vunpack.c.l.s4 1966171168
    %v1262 = vunpack.c.0.s8 %v1261
    %v1263 = vlaneseq
    %v1264 = vshrl.u32 %v1263, 7
    %v1265 = vsub.s32 %v1262, %v1264
    %v1266 = vrot.slane %v20, %v1265
    %v1268 = vunpack.c.l.s4 1966171168
    %v1269 = vunpack.c.0.s8 %v1268
    %v1270 = vlaneseq
    %v1271 = vshrl.u32 %v1270, 7
    %v1272 = vsub.s32 %v1269, %v1271
    %v1273 = vrot.slane %v1259, %v1272
    %v1274 = vcombine.high %v1266, %v1266
    %v1275 = vcombine.high %v1273, %v1273
    %v1277 = vunpack.c.l.s4 1966171168
    %v1278 = vunpack.c.0.s8 %v1277
    %v1279 = vlaneseq
    %v1280 = vshrl.u32 %v1279, 7
    %v1281 = vsub.s32 %v1278, %v1280
    %v1282 = vrot.slane %v1266, %v1281
    %v1284 = vunpack.c.l.s4 1966171168
    %v1285 = vunpack.c.0.s8 %v1284
    %v1286 = vlaneseq
    %v1287 = vshrl.u32 %v1286, 7
    %v1288 = vsub.s32 %v1285, %v1287
    %v1289 = vrot.slane %v1273, %v1288
    %v1291 = vunpack.c.l.s4 1966171168
    %v1292 = vunpack.c.0.s8 %v1291
    %v1293 = vlaneseq
    %v1294 = vshrl.u32 %v1293, 7
    %v1295 = vsub.s32 %v1292, %v1294
    %v1296 = vrot.slane %v1274, %v1295
    %v1298 = vunpack.c.l.s4 1966171168
    %v1299 = vunpack.c.0.s8 %v1298
    %v1300 = vlaneseq
    %v1301 = vshrl.u32 %v1300, 7
    %v1302 = vsub.s32 %v1299, %v1301
    %v1303 = vrot.slane %v1275, %v1302
    %v1304 = vcombine.high %v1282, %v1282
    %v1305 = vcombine.high %v1289, %v1289
    %v1306 = vcombine.high %v1296, %v1296
    %v1307 = vcombine.high %v1303, %v1303
    %v1308 = vcombine.high %v21, %v21
    %v1310 = vunpack.c.l.s4 1966171168
    %v1311 = vunpack.c.0.s8 %v1310
    %v1312 = vlaneseq
    %v1313 = vshrl.u32 %v1312, 7
    %v1314 = vsub.s32 %v1311, %v1313
    %v1315 = vrot.slane %v21, %v1314
    %v1317 = vunpack.c.l.s4 1966171168
    %v1318 = vunpack.c.0.s8 %v1317
    %v1319 = vlaneseq
    %v1320 = vshrl.u32 %v1319, 7
    %v1321 = vsub.s32 %v1318, %v1320
    %v1322 = vrot.slane %v1308, %v1321
    %v1323 = vcombine.high %v1315, %v1315
    %v1324 = vcombine.high %v1322, %v1322
    %v1326 = vunpack.c.l.s4 1966171168
    %v1327 = vunpack.c.0.s8 %v1326
    %v1328 = vlaneseq
    %v1329 = vshrl.u32 %v1328, 7
    %v1330 = vsub.s32 %v1327, %v1329
    %v1331 = vrot.slane %v1315, %v1330
    %v1333 = vunpack.c.l.s4 1966171168
    %v1334 = vunpack.c.0.s8 %v1333
    %v1335 = vlaneseq
    %v1336 = vshrl.u32 %v1335, 7
    %v1337 = vsub.s32 %v1334, %v1336
    %v1338 = vrot.slane %v1322, %v1337
    %v1340 = vunpack.c.l.s4 1966171168
    %v1341 = vunpack.c.0.s8 %v1340
    %v1342 = vlaneseq
    %v1343 = vshrl.u32 %v1342, 7
    %v1344 = vsub.s32 %v1341, %v1343
    %v1345 = vrot.slane %v1323, %v1344
    %v1347 = vunpack.c.l.s4 1966171168
    %v1348 = vunpack.c.0.s8 %v1347
    %v1349 = vlaneseq
    %v1350 = vshrl.u32 %v1349, 7
    %v1351 = vsub.s32 %v1348, %v1350
    %v1352 = vrot.slane %v1324, %v1351
    %v1353 = vcombine.high %v1331, %v1331
    %v1354 = vcombine.high %v1338, %v1338
    %v1355 = vcombine.high %v1345, %v1345
    %v1356 = vcombine.high %v1352, %v1352
    %v1357 = vcombine.high %v22, %v22
    %v1359 = vunpack.c.l.s4 1966171168
    %v1360 = vunpack.c.0.s8 %v1359
    %v1361 = vlaneseq
    %v1362 = vshrl.u32 %v1361, 7
    %v1363 = vsub.s32 %v1360, %v1362
    %v1364 = vrot.slane %v22, %v1363
    %v1366 = vunpack.c.l.s4 1966171168
    %v1367 = vunpack.c.0.s8 %v1366
    %v1368 = vlaneseq
    %v1369 = vshrl.u32 %v1368, 7
    %v1370 = vsub.s32 %v1367, %v1369
    %v1371 = vrot.slane %v1357, %v1370
    %v1372 = vcombine.high %v1364, %v1364
    %v1373 = vcombine.high %v1371, %v1371
    %v1375 = vunpack.c.l.s4 1966171168
    %v1376 = vunpack.c.0.s8 %v1375
    %v1377 = vlaneseq
    %v1378 = vshrl.u32 %v1377, 7
    %v1379 = vsub.s32 %v1376, %v1378
    %v1380 = vrot.slane %v1364, %v1379
    %v1382 = vunpack.c.l.s4 1966171168
    %v1383 = vunpack.c.0.s8 %v1382
    %v1384 = vlaneseq
    %v1385 = vshrl.u32 %v1384, 7
    %v1386 = vsub.s32 %v1383, %v1385
    %v1387 = vrot.slane %v1371, %v1386
    %v1389 = vunpack.c.l.s4 1966171168
    %v1390 = vunpack.c.0.s8 %v1389
    %v1391 = vlaneseq
    %v1392 = vshrl.u32 %v1391, 7
    %v1393 = vsub.s32 %v1390, %v1392
    %v1394 = vrot.slane %v1372, %v1393
    %v1396 = vunpack.c.l.s4 1966171168
    %v1397 = vunpack.c.0.s8 %v1396
    %v1398 = vlaneseq
    %v1399 = vshrl.u32 %v1398, 7
    %v1400 = vsub.s32 %v1397, %v1399
    %v1401 = vrot.slane %v1373, %v1400
    %v1402 = vcombine.high %v1380, %v1380
    %v1403 = vcombine.high %v1387, %v1387
    %v1404 = vcombine.high %v1394, %v1394
    %v1405 = vcombine.high %v1401, %v1401
    %v1406 = vcombine.high %v23, %v23
    %v1408 = vunpack.c.l.s4 1966171168
    %v1409 = vunpack.c.0.s8 %v1408
    %v1410 = vlaneseq
    %v1411 = vshrl.u32 %v1410, 7
    %v1412 = vsub.s32 %v1409, %v1411
    %v1413 = vrot.slane %v23, %v1412
    %v1415 = vunpack.c.l.s4 1966171168
    %v1416 = vunpack.c.0.s8 %v1415
    %v1417 = vlaneseq
    %v1418 = vshrl.u32 %v1417, 7
    %v1419 = vsub.s32 %v1416, %v1418
    %v1420 = vrot.slane %v1406, %v1419
    %v1421 = vcombine.high %v1413, %v1413
    %v1422 = vcombine.high %v1420, %v1420
    %v1424 = vunpack.c.l.s4 1966171168
    %v1425 = vunpack.c.0.s8 %v1424
    %v1426 = vlaneseq
    %v1427 = vshrl.u32 %v1426, 7
    %v1428 = vsub.s32 %v1425, %v1427
    %v1429 = vrot.slane %v1413, %v1428
    %v1431 = vunpack.c.l.s4 1966171168
    %v1432 = vunpack.c.0.s8 %v1431
    %v1433 = vlaneseq
    %v1434 = vshrl.u32 %v1433, 7
    %v1435 = vsub.s32 %v1432, %v1434
    %v1436 = vrot.slane %v1420, %v1435
    %v1438 = vunpack.c.l.s4 1966171168
    %v1439 = vunpack.c.0.s8 %v1438
    %v1440 = vlaneseq
    %v1441 = vshrl.u32 %v1440, 7
    %v1442 = vsub.s32 %v1439, %v1441
    %v1443 = vrot.slane %v1421, %v1442
    %v1445 = vunpack.c.l.s4 1966171168
    %v1446 = vunpack.c.0.s8 %v1445
    %v1447 = vlaneseq
    %v1448 = vshrl.u32 %v1447, 7
    %v1449 = vsub.s32 %v1446, %v1448
    %v1450 = vrot.slane %v1422, %v1449
    %v1451 = vcombine.high %v1429, %v1429
    %v1452 = vcombine.high %v1436, %v1436
    %v1453 = vcombine.high %v1443, %v1443
    %v1454 = vcombine.high %v1450, %v1450
    %v2543 = vunpack.c.l.b16 %v24
    %v2544 = vunpack.c.l.b16 %v25
    %v2545 = vunpack.c.l.b16 %v26
    %v2546 = vunpack.c.l.b16 %v27
    %v2547 = vunpack.c.l.b16 %v28
    %v2548 = vunpack.c.l.b16 %v29
    %v2549 = vunpack.c.l.b16 %v30
    %v2550 = vunpack.c.l.b16 %v31
    %v2551 = vunpack.c.l.b16 %v32
    %v2552 = vunpack.c.l.b16 %v33
    %v2553 = vunpack.c.l.b16 %v34
    %v2554 = vunpack.c.l.b16 %v35
    %v2555 = vunpack.c.l.b16 %v36
    %v2556 = vunpack.c.l.b16 %v37
    %v2557 = vunpack.c.l.b16 %v38
    %v2558 = vunpack.c.l.b16 %v39
    %v2559 = vunpack.c.l.b16 %v40
    %v2560 = vunpack.c.l.b16 %v41
    %v2561 = vunpack.c.l.b16 %v42
    %v2562 = vunpack.c.l.b16 %v43
    %v2563 = vunpack.c.l.b16 %v44
    %v2564 = vunpack.c.l.b16 %v45
    %v2565 = vunpack.c.l.b16 %v46
    %v2566 = vunpack.c.l.b16 %v47
    %v2567 = vunpack.c.l.b16 %v48
    %v2568 = vunpack.c.l.b16 %v49
    %v2569 = vunpack.c.l.b16 %v50
    %v2570 = vunpack.c.l.b16 %v51
    %v2571 = vunpack.c.l.b16 %v52
    %v2572 = vunpack.c.l.b16 %v53
    %v2573 = vunpack.c.l.b16 %v54
    %v2574 = vunpack.c.l.b16 %v55
    %v2575 = vunpack.c.l.b16 %v56
    %v2576 = vunpack.c.l.b16 %v57
    %v2577 = vunpack.c.l.b16 %v58
    %v2578 = vunpack.c.l.b16 %v59
    %v2579 = vunpack.c.l.b16 %v60
    %v2580 = vunpack.c.l.b16 %v61
    %v2581 = vunpack.c.l.b16 %v62
    %v2582 = vunpack.c.l.b16 %v63
    %v2583 = vunpack.c.l.b16 %v64
    %v2584 = vunpack.c.l.b16 %v65
    %v2585 = vunpack.c.l.b16 %v66
    %v2586 = vunpack.c.l.b16 %v67
    %v2587 = vunpack.c.l.b16 %v68
    %v2588 = vunpack.c.l.b16 %v69
    %v2589 = vunpack.c.l.b16 %v70
    %v2590 = vunpack.c.l.b16 %v71
    %v2591 = vunpack.c.l.b16 %v72
    %v2592 = vunpack.c.l.b16 %v73
    %v2593 = vunpack.c.l.b16 %v74
    %v2594 = vunpack.c.l.b16 %v75
    %v2595 = vunpack.c.l.b16 %v76
    %v2596 = vunpack.c.l.b16 %v77
    %v2597 = vunpack.c.l.b16 %v78
    %v2598 = vunpack.c.l.b16 %v79
    %v2599 = vunpack.c.l.b16 %v80
    %v2600 = vunpack.c.l.b16 %v81
    %v2601 = vunpack.c.l.b16 %v82
    %v2602 = vunpack.c.l.b16 %v83
    %v2603 = vunpack.c.l.b16 %v84
    %v2604 = vunpack.c.l.b16 %v85
    %v2605 = vunpack.c.l.b16 %v86
    %v2606 = vunpack.c.l.b16 %v87
    %v2607 = vunpack.c.l.b16 %v88
    %v2608 = vunpack.c.l.b16 %v89
    %v2609 = vunpack.c.l.b16 %v90
    %v2610 = vunpack.c.l.b16 %v91
    %v2611 = vunpack.c.l.b16 %v92
    %v2612 = vunpack.c.l.b16 %v93
    %v2613 = vunpack.c.l.b16 %v94
    %v2614 = vunpack.c.l.b16 %v95
    %v2615 = vunpack.c.l.b16 %v96
    %v2616 = vunpack.c.l.b16 %v97
    %v2617 = vunpack.c.l.b16 %v98
    %v2618 = vunpack.c.l.b16 %v99
    %v2619 = vunpack.c.l.b16 %v100
    %v2620 = vunpack.c.l.b16 %v101
    %v2621 = vunpack.c.l.b16 %v102
    %v2622 = vunpack.c.l.b16 %v103
    %v2623 = vunpack.c.l.b16 %v104
    %v2624 = vunpack.c.l.b16 %v105
    %v2625 = vunpack.c.l.b16 %v106
    %v2626 = vunpack.c.l.b16 %v107
    %v2627 = vunpack.c.l.b16 %v108
    %v2628 = vunpack.c.l.b16 %v109
    %v2629 = vunpack.c.l.b16 %v110
    %v2630 = vunpack.c.l.b16 %v111
    %v2631 = vunpack.c.l.b16 %v112
    %v2632 = vunpack.c.l.b16 %v113
    %v2633 = vunpack.c.l.b16 %v114
    %v2634 = vunpack.c.l.b16 %v115
    %v2635 = vunpack.c.l.b16 %v116
    %v2636 = vunpack.c.l.b16 %v117
    %v2637 = vunpack.c.l.b16 %v118
    %v2638 = vunpack.c.l.b16 %v119
    %v2639 = vunpack.c.l.b16 %v120
    %v2640 = vunpack.c.l.b16 %v121
    %v2641 = vunpack.c.l.b16 %v122
    %v2642 = vunpack.c.l.b16 %v123
    %v2643 = vunpack.c.l.b16 %v124
    %v2644 = vunpack.c.l.b16 %v125
    %v2645 = vunpack.c.l.b16 %v126
    %v2646 = vunpack.c.l.b16 %v127
    %v2647 = vunpack.c.l.b16 %v128
    %v2648 = vunpack.c.l.b16 %v129
    %v2649 = vunpack.c.l.b16 %v130
    %v2650 = vunpack.c.l.b16 %v131
    %v2651 = vunpack.c.l.b16 %v132
    %v2652 = vunpack.c.l.b16 %v133
    %v2653 = vunpack.c.l.b16 %v134
    %v2654 = vunpack.c.l.b16 %v135
    %v2655 = vunpack.c.l.b16 %v136
    %v2656 = vunpack.c.l.b16 %v137
    %v2657 = vunpack.c.l.b16 %v138
    %v2658 = vunpack.c.l.b16 %v139
    %v2659 = vunpack.c.l.b16 %v140
    %v2660 = vunpack.c.l.b16 %v141
    %v2661 = vunpack.c.l.b16 %v142
    %v2662 = vunpack.c.l.b16 %v143
    %v2663 = vunpack.c.l.b16 %v144
    %v2664 = vunpack.c.l.b16 %v145
    %v2665 = vunpack.c.l.b16 %v146
    %v2666 = vunpack.c.l.b16 %v147
    %v2667 = vunpack.c.l.b16 %v148
    %v2668 = vunpack.c.l.b16 %v149
    %v2669 = vunpack.c.l.b16 %v150
    %v2670 = vunpack.c.l.b16 %v151
    %v2671 = vunpack.c.l.b16 %v152
    %v2672 = vunpack.c.l.b16 %v153
    %v2673 = vunpack.c.l.b16 %v154
    %v2674 = vunpack.c.l.b16 %v155
    %v2675 = vunpack.c.l.b16 %v156
    %v2676 = vunpack.c.l.b16 %v157
    %v2677 = vunpack.c.l.b16 %v158
    %v2678 = vunpack.c.l.b16 %v159
    %v2679 = vunpack.c.l.b16 %v160
    %v2680 = vunpack.c.l.b16 %v161
    %v2681 = vunpack.c.l.b16 %v162
    %v2682 = vunpack.c.l.b16 %v163
    %v2683 = vunpack.c.l.b16 %v164
    %v2684 = vunpack.c.l.b16 %v165
    %v2685 = vunpack.c.l.b16 %v166
    %v2686 = vunpack.c.l.b16 %v167
    %v2687 = vunpack.c.l.b16 %v168
    %v2688 = vunpack.c.l.b16 %v169
    %v2689 = vunpack.c.l.b16 %v170
    %v2690 = vunpack.c.l.b16 %v171
    %v2691 = vunpack.c.l.b16 %v172
    %v2692 = vunpack.c.l.b16 %v173
    %v2693 = vunpack.c.l.b16 %v174
    %v2694 = vunpack.c.l.b16 %v175
    %v2695 = vunpack.c.l.b16 %v176
    %v2696 = vunpack.c.l.b16 %v177
    %v2697 = vunpack.c.l.b16 %v178
    %v2698 = vunpack.c.l.b16 %v179
    %v2699 = vunpack.c.l.b16 %v180
    %v2700 = vunpack.c.l.b16 %v181
    %v2701 = vunpack.c.l.b16 %v182
    %v2702 = vunpack.c.l.b16 %v183
    %v2703 = vunpack.c.l.b16 %v184
    %v2704 = vunpack.c.l.b16 %v185
    %v2705 = vunpack.c.l.b16 %v186
    %v2706 = vunpack.c.l.b16 %v187
    %v2707 = vunpack.c.l.b16 %v188
    %v2708 = vunpack.c.l.b16 %v189
    %v2709 = vunpack.c.l.b16 %v190
    %v2710 = vunpack.c.l.b16 %v191
    %v2711 = vunpack.c.l.b16 %v192
    %v2712 = vunpack.c.l.b16 %v193
    %v2713 = vunpack.c.l.b16 %v194
    %v2714 = vunpack.c.l.b16 %v195
    %v2715 = vunpack.c.l.b16 %v196
    %v2716 = vunpack.c.l.b16 %v197
    %v2717 = vunpack.c.l.b16 %v198
    %v2718 = vunpack.c.l.b16 %v199
    %v2719 = vunpack.c.l.b16 %v200
    %v2720 = vunpack.c.l.b16 %v201
    %v2721 = vunpack.c.l.b16 %v202
    %v2722 = vunpack.c.l.b16 %v203
    %v2723 = vunpack.c.l.b16 %v204
    %v2724 = vunpack.c.l.b16 %v205
    %v2725 = vunpack.c.l.b16 %v206
    %v2726 = vunpack.c.l.b16 %v207
    %v2727 = vunpack.c.l.b16 %v208
    %v2728 = vunpack.c.l.b16 %v209
    %v2729 = vunpack.c.l.b16 %v210
    %v2730 = vunpack.c.l.b16 %v211
    %v2731 = vunpack.c.l.b16 %v212
    %v2732 = vunpack.c.l.b16 %v213
    %v2733 = vunpack.c.l.b16 %v214
    %v2734 = vunpack.c.l.b16 %v215
    %v2735 = vunpack.c.l.b16 %v216
    %v2736 = vunpack.c.l.b16 %v217
    %v2737 = vunpack.c.l.b16 %v218
    %v2738 = vunpack.c.l.b16 %v219
    %v2739 = vunpack.c.l.b16 %v220
    %v2740 = vunpack.c.l.b16 %v221
    %v2741 = vunpack.c.l.b16 %v222
    %v2742 = vunpack.c.l.b16 %v223
    %v2743 = vunpack.c.l.b16 %v224
    %v2744 = vunpack.c.l.b16 %v225
    %v2745 = vunpack.c.l.b16 %v226
    %v2746 = vunpack.c.l.b16 %v227
    %v2747 = vunpack.c.l.b16 %v228
    %v2748 = vunpack.c.l.b16 %v229
    %v2749 = vunpack.c.l.b16 %v230
    %v2750 = vunpack.c.l.b16 %v231
    %v2751 = vunpack.c.l.b16 %v232
    %v2752 = vunpack.c.l.b16 %v233
    %v2753 = vunpack.c.l.b16 %v234
    %v2754 = vunpack.c.l.b16 %v235
    %v2755 = vunpack.c.l.b16 %v236
    %v2756 = vunpack.c.l.b16 %v237
    %v2757 = vunpack.c.l.b16 %v238
    %v2758 = vunpack.c.l.b16 %v239
    %v2759 = vunpack.c.l.b16 %v240
    %v2760 = vunpack.c.l.b16 %v241
    %v2761 = vunpack.c.l.b16 %v242
    %v2762 = vunpack.c.l.b16 %v243
    %v2763 = vunpack.c.l.b16 %v244
    %v2764 = vunpack.c.l.b16 %v245
    %v2765 = vunpack.c.l.b16 %v246
    %v2766 = vunpack.c.l.b16 %v247
    %v2767 = vunpack.c.l.b16 %v248
    %v2768 = vunpack.c.l.b16 %v249
    %v2769 = vunpack.c.l.b16 %v250
    %v2770 = vunpack.c.l.b16 %v251
    %v2771 = vunpack.c.l.b16 %v252
    %v2772 = vunpack.c.l.b16 %v253
    %v2773 = vunpack.c.l.b16 %v254
    %v2774 = vunpack.c.l.b16 %v255
    %v2775 = vunpack.c.l.b16 %v256
    %v2776 = vunpack.c.l.b16 %v257
    %v2777 = vunpack.c.l.b16 %v258
    %v2778 = vunpack.c.l.b16 %v259
    %v2779 = vunpack.c.l.b16 %v260
    %v2780 = vunpack.c.l.b16 %v261
    %v2781 = vunpack.c.l.b16 %v262
    %v2782 = vunpack.c.l.b16 %v263
    %v2783 = vunpack.c.l.b16 %v264
    %v2784 = vunpack.c.l.b16 %v265
    %v2785 = vunpack.c.l.b16 %v266
    %v2786 = vunpack.c.l.b16 %v267
    %v2787 = vunpack.c.l.b16 %v268
    %v2788 = vunpack.c.l.b16 %v269
    %v2789 = vunpack.c.l.b16 %v270
    %v2790 = vunpack.c.l.b16 %v271
    %v2791 = vunpack.c.l.b16 %v272
    %v2792 = vunpack.c.l.b16 %v273
    %v2793 = vunpack.c.l.b16 %v274
    %v2794 = vunpack.c.l.b16 %v275
    %v2795 = vunpack.c.l.b16 %v276
    %v2796 = vunpack.c.l.b16 %v277
    %v2797 = vunpack.c.l.b16 %v278
    %v2798 = vunpack.c.l.b16 %v279
    %v2799 = vunpack.c.l.b16 %v280
    %v2800 = vunpack.c.l.b16 %v281
    %v2801 = vunpack.c.l.b16 %v282
    %v2802 = vunpack.c.l.b16 %v283
    %v2803 = vunpack.c.l.b16 %v284
    %v2804 = vunpack.c.l.b16 %v285
    %v2805 = vunpack.c.l.b16 %v286
    %v2806 = vunpack.c.l.b16 %v287
    %v2807 = vunpack.c.l.b16 %v288
    %v2808 = vunpack.c.l.b16 %v289
    %v2809 = vunpack.c.l.b16 %v290
    %v2810 = vunpack.c.l.b16 %v291
    %v2811 = vunpack.c.l.b16 %v292
    %v2812 = vunpack.c.l.b16 %v293
    %v2813 = vunpack.c.l.b16 %v294
    %v2814 = vunpack.c.l.b16 %v295
    %v2815 = vunpack.c.l.b16 %v296
    %v2816 = vunpack.c.l.b16 %v297
    %v2817 = vunpack.c.l.b16 %v298
    %v2818 = vunpack.c.l.b16 %v299
    %v2819 = vunpack.c.l.b16 %v300
    %v2820 = vunpack.c.l.b16 %v301
    %v2821 = vunpack.c.l.b16 %v302
    %v2822 = vunpack.c.l.b16 %v303
    %v2823 = vunpack.c.l.b16 %v304
    %v2824 = vunpack.c.l.b16 %v305
    %v2825 = vunpack.c.l.b16 %v306
    %v2826 = vunpack.c.l.b16 %v307
    %v2827 = vunpack.c.l.b16 %v308
    %v2828 = vunpack.c.l.b16 %v309
    %v2829 = vunpack.c.l.b16 %v310
    %v2830 = vunpack.c.l.b16 %v311
    %v2831 = vunpack.c.l.b16 %v312
    %v2832 = vunpack.c.l.b16 %v313
    %v2833 = vunpack.c.l.b16 %v314
    %v2834 = vunpack.c.l.b16 %v315
    %v2835 = vunpack.c.l.b16 %v316
    %v2836 = vunpack.c.l.b16 %v317
    %v2837 = vunpack.c.l.b16 %v318
    %v2838 = vunpack.c.l.b16 %v319
    %v2839 = vunpack.c.l.b16 %v320
    %v2840 = vunpack.c.l.b16 %v321
    %v2841 = vunpack.c.l.b16 %v322
    %v2842 = vunpack.c.l.b16 %v323
    %v2843 = vunpack.c.l.b16 %v324
    %v2844 = vunpack.c.l.b16 %v325
    %v2845 = vunpack.c.l.b16 %v326
    %v2846 = vunpack.c.l.b16 %v327
    %v2847 = vunpack.c.l.b16 %v328
    %v2848 = vunpack.c.l.b16 %v329
    %v2849 = vunpack.c.l.b16 %v330
    %v2850 = vunpack.c.l.b16 %v331
    %v2851 = vunpack.c.l.b16 %v332
    %v2852 = vunpack.c.l.b16 %v333
    %v2853 = vunpack.c.l.b16 %v334
    %v2854 = vunpack.c.l.b16 %v335
    %v2855 = vunpack.c.l.b16 %v336
    %v2856 = vunpack.c.l.b16 %v337
    %v2857 = vunpack.c.l.b16 %v338
    %v2858 = vunpack.c.l.b16 %v339
    %v2859 = vunpack.c.l.b16 %v340
    %v2860 = vunpack.c.l.b16 %v341
    %v2861 = vunpack.c.l.b16 %v342
    %v2862 = vunpack.c.l.b16 %v343
    %v2863 = vunpack.c.l.b16 %v344
    %v2864 = vunpack.c.l.b16 %v345
    %v2865 = vunpack.c.l.b16 %v346
    %v2866 = vunpack.c.l.b16 %v347
    %v2867 = vunpack.c.l.b16 %v348
    %v2868 = vunpack.c.l.b16 %v349
    %v2869 = vunpack.c.l.b16 %v350
    %v2870 = vunpack.c.l.b16 %v351
    %v2871 = vunpack.c.l.b16 %v352
    %v2872 = vunpack.c.l.b16 %v353
    %v2873 = vunpack.c.l.b16 %v354
    %v2874 = vunpack.c.l.b16 %v355
    %v2875 = vunpack.c.l.b16 %v356
    %v2876 = vunpack.c.l.b16 %v357
    %v2877 = vunpack.c.l.b16 %v358
    %v2878 = vunpack.c.l.b16 %v359
    %v2879 = vunpack.c.l.b16 %v360
    %v2880 = vunpack.c.l.b16 %v361
    %v2881 = vunpack.c.l.b16 %v362
    %v2882 = vunpack.c.l.b16 %v363
    %v2883 = vunpack.c.l.b16 %v364
    %v2884 = vunpack.c.l.b16 %v365
    %v2885 = vunpack.c.l.b16 %v366
    %v2886 = vunpack.c.l.b16 %v367
    %v2887 = vunpack.c.l.b16 %v368
    %v2888 = vunpack.c.l.b16 %v369
    %v2889 = vunpack.c.l.b16 %v370
    %v2890 = vunpack.c.l.b16 %v371
    %v2891 = vunpack.c.l.b16 %v372
    %v2892 = vunpack.c.l.b16 %v373
    %v2893 = vunpack.c.l.b16 %v374
    %v2894 = vunpack.c.l.b16 %v375
    %v2895 = vunpack.c.l.b16 %v376
    %v2896 = vunpack.c.l.b16 %v377
    %v2897 = vunpack.c.l.b16 %v378
    %v2898 = vunpack.c.l.b16 %v379
    %v2899 = vunpack.c.l.b16 %v380
    %v2900 = vunpack.c.l.b16 %v381
    %v2901 = vunpack.c.l.b16 %v382
    %v2902 = vunpack.c.l.b16 %v383
    %v2903 = vunpack.c.l.b16 %v384
    %v2904 = vunpack.c.l.b16 %v385
    %v2905 = vunpack.c.l.b16 %v386
    %v2906 = vunpack.c.l.b16 %v387
    %v2907 = vunpack.c.l.b16 %v388
    %v2908 = vunpack.c.l.b16 %v389
    %v2909 = vunpack.c.l.b16 %v390
    %v2910 = vunpack.c.l.b16 %v391
    %v2911 = vunpack.c.l.b16 %v392
    %v2912 = vunpack.c.l.b16 %v393
    %v2913 = vunpack.c.l.b16 %v394
    %v2914 = vunpack.c.l.b16 %v395
    %v2915 = vunpack.c.l.b16 %v396
    %v2916 = vunpack.c.l.b16 %v397
    %v2917 = vunpack.c.l.b16 %v398
    %v2918 = vunpack.c.l.b16 %v399
    %v2919 = vunpack.c.l.b16 %v400
    %v2920 = vunpack.c.l.b16 %v401
    %v2921 = vunpack.c.l.b16 %v402
    %v2922 = vunpack.c.l.b16 %v403
    %v2923 = vunpack.c.l.b16 %v404
    %v2924 = vunpack.c.l.b16 %v405
    %v2925 = vunpack.c.l.b16 %v406
    %v2926 = vunpack.c.l.b16 %v407
    %v2927 = vunpack.c.l.b16 %v408
    %v2928 = vunpack.c.l.b16 %v409
    %v2929 = vunpack.c.l.b16 %v410
    %v2930 = vunpack.c.l.b16 %v411
    %v2931 = vunpack.c.l.b16 %v412
    %v2932 = vunpack.c.l.b16 %v413
    %v2933 = vunpack.c.l.b16 %v414
    %v2934 = vunpack.c.l.b16 %v415
    %v2935 = vunpack.c.l.b16 %v416
    %v2936 = vunpack.c.l.b16 %v417
    %v2937 = vunpack.c.l.b16 %v418
    %v2938 = vunpack.c.l.b16 %v419
    %v2939 = vunpack.c.l.b16 %v420
    %v2940 = vunpack.c.l.b16 %v421
    %v2941 = vunpack.c.l.b16 %v422
    %v2942 = vunpack.c.l.b16 %v423
    %v2943 = vunpack.c.l.b16 %v424
    %v2944 = vunpack.c.l.b16 %v425
    %v2945 = vunpack.c.l.b16 %v426
    %v2946 = vunpack.c.l.b16 %v427
    %v2947 = vunpack.c.l.b16 %v428
    %v2948 = vunpack.c.l.b16 %v429
    %v2949 = vunpack.c.l.b16 %v430
    %v2950 = vunpack.c.l.b16 %v431
    %v2951 = vunpack.c.l.b16 %v432
    %v2952 = vunpack.c.l.b16 %v433
    %v2953 = vunpack.c.l.b16 %v434
    %v2954 = vunpack.c.l.b16 %v435
    %v2955 = vunpack.c.l.b16 %v436
    %v2956 = vunpack.c.l.b16 %v437
    %v2957 = vunpack.c.l.b16 %v438
    %v2958 = vunpack.c.l.b16 %v439
    %v2959 = vunpack.c.l.b16 %v440
    %v2960 = vunpack.c.l.b16 %v441
    %v2961 = vunpack.c.l.b16 %v442
    %v2962 = vunpack.c.l.b16 %v443
    %v2963 = vunpack.c.l.b16 %v444
    %v2964 = vunpack.c.l.b16 %v445
    %v2965 = vunpack.c.l.b16 %v446
    %v2966 = vunpack.c.l.b16 %v447
    %v2967 = vunpack.c.l.b16 %v448
    %v2968 = vunpack.c.l.b16 %v449
    %v2969 = vunpack.c.l.b16 %v450
    %v2970 = vunpack.c.l.b16 %v451
    %v2971 = vunpack.c.l.b16 %v452
    %v2972 = vunpack.c.l.b16 %v453
    %v2973 = vunpack.c.l.b16 %v454
    %v2974 = vunpack.c.l.b16 %v455
    %v2975 = vunpack.c.l.b16 %v456
    %v2976 = vunpack.c.l.b16 %v457
    %v2977 = vunpack.c.l.b16 %v458
    %v2978 = vunpack.c.l.b16 %v459
    %v2979 = vunpack.c.l.b16 %v460
    %v2980 = vunpack.c.l.b16 %v461
    %v2981 = vunpack.c.l.b16 %v462
    %v2982 = vunpack.c.l.b16 %v463
    %v2983 = vunpack.c.l.b16 %v464
    %v2984 = vunpack.c.l.b16 %v465
    %v2985 = vunpack.c.l.b16 %v466
    %v2986 = vunpack.c.l.b16 %v467
    %v2987 = vunpack.c.l.b16 %v468
    %v2988 = vunpack.c.l.b16 %v469
    %v2989 = vunpack.c.l.b16 %v470
    %v2990 = vunpack.c.l.b16 %v471
    %v2991 = vunpack.c.l.b16 %v472
    %v2992 = vunpack.c.l.b16 %v473
    %v2993 = vunpack.c.l.b16 %v474
    %v2994 = vunpack.c.l.b16 %v475
    %v2995 = vunpack.c.l.b16 %v476
    %v2996 = vunpack.c.l.b16 %v477
    %v2997 = vunpack.c.l.b16 %v478
    %v2998 = vunpack.c.l.b16 %v479
    %v2999 = vunpack.c.l.b16 %v480
    %v3000 = vunpack.c.l.b16 %v481
    %v3001 = vunpack.c.l.b16 %v482
    %v3002 = vunpack.c.l.b16 %v483
    %v3003 = vunpack.c.l.b16 %v484
    %v3004 = vunpack.c.l.b16 %v485
    %v3005 = vunpack.c.l.b16 %v486
    %v3006 = vunpack.c.l.b16 %v487
    %v3007 = vunpack.c.l.b16 %v488
    %v3008 = vunpack.c.l.b16 %v489
    %v3009 = vunpack.c.l.b16 %v490
    %v3010 = vunpack.c.l.b16 %v491
    %v3011 = vunpack.c.l.b16 %v492
    %v3012 = vunpack.c.l.b16 %v493
    %v3013 = vunpack.c.l.b16 %v494
    %v3014 = vunpack.c.l.b16 %v495
    %v3015 = vunpack.c.l.b16 %v496
    %v3016 = vunpack.c.l.b16 %v497
    %v3017 = vunpack.c.l.b16 %v498
    %v3018 = vunpack.c.l.b16 %v499
    %v3019 = vunpack.c.l.b16 %v500
    %v3020 = vunpack.c.l.b16 %v501
    %v3021 = vunpack.c.l.b16 %v502
    %v3022 = vunpack.c.l.b16 %v503
    %v3023 = vunpack.c.l.b16 %v504
    %v3024 = vunpack.c.l.b16 %v505
    %v3025 = vunpack.c.l.b16 %v506
    %v3026 = vunpack.c.l.b16 %v507
    %v3027 = vunpack.c.l.b16 %v508
    %v3028 = vunpack.c.l.b16 %v509
    %v3029 = vunpack.c.l.b16 %v510
    %v3030 = vunpack.c.l.b16 %v511
    %v3031 = vunpack.c.l.b16 %v512
    %v3032 = vunpack.c.l.b16 %v513
    %v3033 = vunpack.c.l.b16 %v514
    %v3034 = vunpack.c.l.b16 %v515
    %v3035 = vunpack.c.l.b16 %v516
    %v3036 = vunpack.c.l.b16 %v517
    %v3037 = vunpack.c.l.b16 %v518
    %v3038 = vunpack.c.l.b16 %v519
    %v3039 = vunpack.c.l.b16 %v520
    %v3040 = vunpack.c.l.b16 %v521
    %v3041 = vunpack.c.l.b16 %v522
    %v3042 = vunpack.c.l.b16 %v523
    %v3043 = vunpack.c.l.b16 %v524
    %v3044 = vunpack.c.l.b16 %v525
    %v3045 = vunpack.c.l.b16 %v526
    %v3046 = vunpack.c.l.b16 %v527
    %v3047 = vunpack.c.l.b16 %v528
    %v3048 = vunpack.c.l.b16 %v529
    %v3049 = vunpack.c.l.b16 %v530
    %v3050 = vunpack.c.l.b16 %v531
    %v3051 = vunpack.c.l.b16 %v532
    %v3052 = vunpack.c.l.b16 %v533
    %v3053 = vunpack.c.l.b16 %v534
    %v3054 = vunpack.c.l.b16 %v535
    %v3055 = vunpack.c.l.b16 %v536
    %v3056 = vunpack.c.l.b16 %v537
    %v3057 = vunpack.c.l.b16 %v538
    %v3058 = vunpack.c.l.b16 %v539
    %v3059 = vunpack.c.l.b16 %v540
    %v3060 = vunpack.c.l.b16 %v541
    %v3061 = vunpack.c.l.b16 %v542
    %v3062 = vunpack.c.l.b16 %v543
    %v3063 = vunpack.c.l.b16 %v544
    %v3064 = vunpack.c.l.b16 %v545
    %v3065 = vunpack.c.l.b16 %v546
    %v3066 = vunpack.c.l.b16 %v547
    %v3067 = vunpack.c.l.b16 %v548
    %v3068 = vunpack.c.l.b16 %v549
    %v3069 = vunpack.c.l.b16 %v550
    %v3070 = vunpack.c.l.b16 %v551
    %v3071 = vunpack.c.l.b16 %v552
    %v3072 = vunpack.c.l.b16 %v553
    %v3073 = vunpack.c.l.b16 %v554
    %v3074 = vunpack.c.l.b16 %v555
    %v3075 = vunpack.c.l.b16 %v556
    %v3076 = vunpack.c.l.b16 %v557
    %v3077 = vunpack.c.l.b16 %v558
    %v3078 = vunpack.c.l.b16 %v559
    %v3079 = vunpack.c.l.b16 %v560
    %v3080 = vunpack.c.l.b16 %v561
    %v3081 = vunpack.c.l.b16 %v562
    %v3082 = vunpack.c.l.b16 %v563
    %v3083 = vunpack.c.l.b16 %v564
    %v3084 = vunpack.c.l.b16 %v565
    %v3085 = vunpack.c.l.b16 %v566
    %v3086 = vunpack.c.l.b16 %v567
    %v3087 = vunpack.c.l.b16 %v568
    %v3088 = vunpack.c.l.b16 %v569
    %v3089 = vunpack.c.l.b16 %v570
    %v3090 = vunpack.c.l.b16 %v571
    %v3091 = vunpack.c.l.b16 %v572
    %v3092 = vunpack.c.l.b16 %v573
    %v3093 = vunpack.c.l.b16 %v574
    %v3094 = vunpack.c.l.b16 %v575
    %v3095 = vunpack.c.l.b16 %v576
    %v3096 = vunpack.c.l.b16 %v577
    %v3097 = vunpack.c.l.b16 %v578
    %v3098 = vunpack.c.l.b16 %v579
    %v3099 = vunpack.c.l.b16 %v580
    %v3100 = vunpack.c.l.b16 %v581
    %v3101 = vunpack.c.l.b16 %v582
    %v3102 = vunpack.c.l.b16 %v583
    %v3103 = vunpack.c.l.b16 %v584
    %v3104 = vunpack.c.l.b16 %v585
    %v3105 = vunpack.c.l.b16 %v586
    %v3106 = vunpack.c.l.b16 %v587
    %v3107 = vunpack.c.l.b16 %v588
    %v3108 = vunpack.c.l.b16 %v589
    %v3109 = vunpack.c.l.b16 %v590
    %v3110 = vunpack.c.l.b16 %v591
    %v3111 = vunpack.c.l.b16 %v592
    %v3112 = vunpack.c.l.b16 %v593
    %v3113 = vunpack.c.l.b16 %v594
    %v3114 = vunpack.c.l.b16 %v595
    %v3115 = vunpack.c.l.b16 %v596
    %v3116 = vunpack.c.l.b16 %v597
    %v3117 = vunpack.c.l.b16 %v598
    %v3118 = vunpack.c.l.b16 %v599
    %v3119 = vunpack.c.l.b16 %v600
    %v3120 = vunpack.c.l.b16 %v601
    %v3121 = vunpack.c.l.b16 %v602
    %v3122 = vunpack.c.l.b16 %v603
    %v3123 = vunpack.c.l.b16 %v604
    %v3124 = vunpack.c.l.b16 %v605
    %v3125 = vunpack.c.l.b16 %v606
    %v3126 = vunpack.c.l.b16 %v607
    %v3127 = vunpack.c.l.b16 %v608
    %v3128 = vunpack.c.l.b16 %v609
    %v3129 = vunpack.c.l.b16 %v610
    %v3130 = vunpack.c.l.b16 %v611
    %v3131 = vunpack.c.l.b16 %v612
    %v3132 = vunpack.c.l.b16 %v613
    %v3133 = vunpack.c.l.b16 %v614
    %v3134 = vunpack.c.l.b16 %v615
    %v3135 = vunpack.c.l.b16 %v616
    %v3136 = vunpack.c.l.b16 %v617
    %v3137 = vunpack.c.l.b16 %v618
    %v3138 = vunpack.c.l.b16 %v619
    %v3139 = vunpack.c.l.b16 %v620
    %v3140 = vunpack.c.l.b16 %v621
    %v3141 = vunpack.c.l.b16 %v622
    %v3142 = vunpack.c.l.b16 %v623
    %v3143 = vunpack.c.l.b16 %v624
    %v3144 = vunpack.c.l.b16 %v625
    %v3145 = vunpack.c.l.b16 %v626
    %v3146 = vunpack.c.l.b16 %v627
    %v3147 = vunpack.c.l.b16 %v628
    %v3148 = vunpack.c.l.b16 %v629
    %v3149 = vunpack.c.l.b16 %v630
    %v3150 = vunpack.c.l.b16 %v631
    %v3151 = vunpack.c.l.b16 %v632
    %v3152 = vunpack.c.l.b16 %v633
    %v3153 = vunpack.c.l.b16 %v634
    %v3154 = vunpack.c.l.b16 %v635
    %v3155 = vunpack.c.l.b16 %v636
    %v3156 = vunpack.c.l.b16 %v637
    %v3157 = vunpack.c.l.b16 %v638
    %v3158 = vunpack.c.l.b16 %v639
    %v3159 = vunpack.c.l.b16 %v640
    %v3160 = vunpack.c.l.b16 %v641
    %v3161 = vunpack.c.l.b16 %v642
    %v3162 = vunpack.c.l.b16 %v643
    %v3163 = vunpack.c.l.b16 %v644
    %v3164 = vunpack.c.l.b16 %v645
    %v3165 = vunpack.c.l.b16 %v646
    %v3166 = vunpack.c.l.b16 %v647
    %v3167 = vunpack.c.l.b16 %v648
    %v3168 = vunpack.c.l.b16 %v649
    %v3169 = vunpack.c.l.b16 %v650
    %v3170 = vunpack.c.l.b16 %v651
    %v3171 = vunpack.c.l.b16 %v652
    %v3172 = vunpack.c.l.b16 %v653
    %v3173 = vunpack.c.l.b16 %v654
    %v3174 = vunpack.c.l.b16 %v655
    %v3175 = vunpack.c.l.b16 %v656
    %v3176 = vunpack.c.l.b16 %v657
    %v3177 = vunpack.c.l.b16 %v658
    %v3178 = vunpack.c.l.b16 %v659
    %v3179 = vunpack.c.l.b16 %v660
    %v3180 = vunpack.c.l.b16 %v661
    %v3181 = vunpack.c.l.b16 %v662
    %v3182 = vunpack.c.l.b16 %v663
    %v3183 = vunpack.c.l.b16 %v664
    %v3184 = vunpack.c.l.b16 %v665
    %v3185 = vunpack.c.l.b16 %v666
    %v3186 = vunpack.c.l.b16 %v667
    %v3187 = vunpack.c.l.b16 %v668
    %v3188 = vunpack.c.l.b16 %v669
    %v3189 = vunpack.c.l.b16 %v670
    %v3190 = vunpack.c.l.b16 %v671
    %v3191 = vunpack.c.l.b16 %v672
    %v3192 = vunpack.c.l.b16 %v673
    %v3193 = vunpack.c.l.b16 %v674
    %v3194 = vunpack.c.l.b16 %v675
    %v3195 = vunpack.c.l.b16 %v676
    %v3196 = vunpack.c.l.b16 %v677
    %v3197 = vunpack.c.l.b16 %v678
    %v3198 = vunpack.c.l.b16 %v679
    %v3199 = vunpack.c.l.b16 %v680
    %v3200 = vunpack.c.l.b16 %v681
    %v3201 = vunpack.c.l.b16 %v682
    %v3202 = vunpack.c.l.b16 %v683
    %v3203 = vunpack.c.l.b16 %v684
    %v3204 = vunpack.c.l.b16 %v685
    %v3205 = vunpack.c.l.b16 %v686
    %v3206 = vunpack.c.l.b16 %v687
    %v3207 = vunpack.c.l.b16 %v688
    %v3208 = vunpack.c.l.b16 %v689
    %v3209 = vunpack.c.l.b16 %v690
    %v3210 = vunpack.c.l.b16 %v691
    %v3211 = vunpack.c.l.b16 %v692
    %v3212 = vunpack.c.l.b16 %v693
    %v3213 = vunpack.c.l.b16 %v694
    %v3214 = vunpack.c.l.b16 %v695
    %v3215 = vunpack.c.l.b16 %v696
    %v3216 = vunpack.c.l.b16 %v697
    %v3217 = vunpack.c.l.b16 %v698
    %v3218 = vunpack.c.l.b16 %v699
    %v3219 = vunpack.c.l.b16 %v700
    %v3220 = vunpack.c.l.b16 %v701
    %v3221 = vunpack.c.l.b16 %v702
    %v3222 = vunpack.c.l.b16 %v703
    %v3223 = vunpack.c.l.b16 %v704
    %v3224 = vunpack.c.l.b16 %v705
    %v3225 = vunpack.c.l.b16 %v706
    %v3226 = vunpack.c.l.b16 %v707
    %v3227 = vunpack.c.l.b16 %v708
    %v3228 = vunpack.c.l.b16 %v709
    %v3229 = vunpack.c.l.b16 %v710
    %v3230 = vunpack.c.l.b16 %v711
    %v3231 = vunpack.c.l.b16 %v712
    %v3232 = vunpack.c.l.b16 %v713
    %v3233 = vunpack.c.l.b16 %v714
    %v3234 = vunpack.c.l.b16 %v715
    %v3235 = vunpack.c.l.b16 %v716
    %v3236 = vunpack.c.l.b16 %v717
    %v3237 = vunpack.c.l.b16 %v718
    %v3238 = vunpack.c.l.b16 %v719
    %v3239 = vunpack.c.l.b16 %v720
    %v3240 = vunpack.c.l.b16 %v721
    %v3241 = vunpack.c.l.b16 %v722
    %v3242 = vunpack.c.l.b16 %v723
    %v3243 = vunpack.c.l.b16 %v724
    %v3244 = vunpack.c.l.b16 %v725
    %v3245 = vunpack.c.l.b16 %v726
    %v3246 = vunpack.c.l.b16 %v727
    %v3247 = vunpack.c.l.b16 %v728
    %v3248 = vunpack.c.l.b16 %v729
    %v3249 = vunpack.c.l.b16 %v730
    %v3250 = vunpack.c.l.b16 %v731
    %v3251 = vunpack.c.l.b16 %v732
    %v3252 = vunpack.c.l.b16 %v733
    %v3253 = vunpack.c.l.b16 %v734
    %v3254 = vunpack.c.l.b16 %v735
    %v3255 = vunpack.c.l.b16 %v736
    %v3256 = vunpack.c.l.b16 %v737
    %v3257 = vunpack.c.l.b16 %v738
    %v3258 = vunpack.c.l.b16 %v739
    %v3259 = vunpack.c.l.b16 %v740
    %v3260 = vunpack.c.l.b16 %v741
    %v3261 = vunpack.c.l.b16 %v742
    %v3262 = vunpack.c.l.b16 %v743
    %v3263 = vunpack.c.l.b16 %v744
    %v3264 = vunpack.c.l.b16 %v745
    %v3265 = vunpack.c.l.b16 %v746
    %v3266 = vunpack.c.l.b16 %v747
    %v3267 = vunpack.c.l.b16 %v748
    %v3268 = vunpack.c.l.b16 %v749
    %v3269 = vunpack.c.l.b16 %v750
    %v3270 = vunpack.c.l.b16 %v751
    %v3271 = vunpack.c.l.b16 %v752
    %v3272 = vunpack.c.l.b16 %v753
    %v3273 = vunpack.c.l.b16 %v754
    %v3274 = vunpack.c.l.b16 %v755
    %v3275 = vunpack.c.l.b16 %v756
    %v3276 = vunpack.c.l.b16 %v757
    %v3277 = vunpack.c.l.b16 %v758
    %v3278 = vunpack.c.l.b16 %v759
    %v3279 = vunpack.c.l.b16 %v760
    %v3280 = vunpack.c.l.b16 %v761
    %v3281 = vunpack.c.l.b16 %v762
    %v3282 = vunpack.c.l.b16 %v763
    %v3283 = vunpack.c.l.b16 %v764
    %v3284 = vunpack.c.l.b16 %v765
    %v3285 = vunpack.c.l.b16 %v766
    %v3286 = vunpack.c.l.b16 %v767
    %v3287 = vunpack.c.l.b16 %v768
    %v3288 = vunpack.c.l.b16 %v769
    %v3289 = vunpack.c.l.b16 %v770
    %v3290 = vunpack.c.l.b16 %v771
    %v3291 = vunpack.c.l.b16 %v772
    %v3292 = vunpack.c.l.b16 %v773
    %v3293 = vunpack.c.l.b16 %v774
    %v3294 = vunpack.c.l.b16 %v775
    %v3295 = vunpack.c.l.b16 %v776
    %v3296 = vunpack.c.l.b16 %v777
    %v3297 = vunpack.c.l.b16 %v778
    %v3298 = vunpack.c.l.b16 %v779
    %v3299 = vunpack.c.l.b16 %v780
    %v3300 = vunpack.c.l.b16 %v781
    %v3301 = vunpack.c.l.b16 %v782
    %v3302 = vunpack.c.l.b16 %v783
    %v3303 = vunpack.c.l.b16 %v784
    %v3304 = vunpack.c.l.b16 %v785
    %v3305 = vunpack.c.l.b16 %v786
    %v3306 = vunpack.c.l.b16 %v787
    %v3307 = vunpack.c.l.b16 %v788
    %v3308 = vunpack.c.l.b16 %v789
    %v3309 = vunpack.c.l.b16 %v790
    %v3310 = vunpack.c.l.b16 %v791
    %v3311 = vunpack.c.l.b16 %v792
    %v3312 = vunpack.c.l.b16 %v793
    %v3313 = vunpack.c.l.b16 %v794
    %v3314 = vunpack.c.l.b16 %v795
    %v3315 = vunpack.c.l.b16 %v796
    %v3316 = vunpack.c.l.b16 %v797
    %v3317 = vunpack.c.l.b16 %v798
    %v3318 = vunpack.c.l.b16 %v799
    %v3319 = vunpack.c.l.b16 %v800
    %v3320 = vunpack.c.l.b16 %v801
    %v3321 = vunpack.c.l.b16 %v802
    %v3322 = vunpack.c.l.b16 %v803
    %v3323 = vunpack.c.l.b16 %v804
    %v3324 = vunpack.c.l.b16 %v805
    %v3325 = vunpack.c.l.b16 %v806
    %v3326 = vunpack.c.l.b16 %v807
    %v3327 = vunpack.c.l.b16 %v808
    %v3328 = vunpack.c.l.b16 %v809
    %v3329 = vunpack.c.l.b16 %v810
    %v3330 = vunpack.c.l.b16 %v811
    %v3331 = vunpack.c.l.b16 %v812
    %v3332 = vunpack.c.l.b16 %v813
    %v3333 = vunpack.c.l.b16 %v814
    %v3334 = vunpack.c.l.b16 %v815
    %v3335 = vunpack.c.l.b16 %v816
    %v3336 = vunpack.c.l.b16 %v817
    %v3337 = vunpack.c.l.b16 %v818
    %v3338 = vunpack.c.l.b16 %v819
    %v3339 = vunpack.c.l.b16 %v820
    %v3340 = vunpack.c.l.b16 %v821
    %v3341 = vunpack.c.l.b16 %v822
    %v3342 = vunpack.c.l.b16 %v823
    %v3343 = vunpack.c.l.b16 %v824
    %v3344 = vunpack.c.l.b16 %v825
    %v3345 = vunpack.c.l.b16 %v826
    %v3346 = vunpack.c.l.b16 %v827
    %v3347 = vunpack.c.l.b16 %v828
    %v3348 = vunpack.c.l.b16 %v829
    %v3349 = vunpack.c.l.b16 %v830
    %v3350 = vunpack.c.l.b16 %v831
    %v3351 = vunpack.c.l.b16 %v832
    %v3352 = vunpack.c.l.b16 %v833
    %v3353 = vunpack.c.l.b16 %v834
    %v3354 = vunpack.c.l.b16 %v835
    %v3355 = vunpack.c.l.b16 %v836
    %v3356 = vunpack.c.l.b16 %v837
    %v3357 = vunpack.c.l.b16 %v838
    %v3358 = vunpack.c.l.b16 %v839
    %v3359 = vunpack.c.l.b16 %v840
    %v3360 = vunpack.c.l.b16 %v841
    %v3361 = vunpack.c.l.b16 %v842
    %v3362 = vunpack.c.l.b16 %v843
    %v3363 = vunpack.c.l.b16 %v844
    %v3364 = vunpack.c.l.b16 %v845
    %v3365 = vunpack.c.l.b16 %v846
    %v3366 = vunpack.c.l.b16 %v847
    %v3367 = vunpack.c.l.b16 %v848
    %v3368 = vunpack.c.l.b16 %v849
    %v3369 = vunpack.c.l.b16 %v850
    %v3370 = vunpack.c.l.b16 %v851
    %v3371 = vunpack.c.l.b16 %v852
    %v3372 = vunpack.c.l.b16 %v853
    %v3373 = vunpack.c.l.b16 %v854
    %v3374 = vunpack.c.l.b16 %v855
    %v3375 = vunpack.c.l.b16 %v856
    %v3376 = vunpack.c.l.b16 %v857
    %v3377 = vunpack.c.l.b16 %v858
    %v3378 = vunpack.c.l.b16 %v859
    %v3379 = vunpack.c.l.b16 %v860
    %v3380 = vunpack.c.l.b16 %v861
    %v3381 = vunpack.c.l.b16 %v862
    %v3382 = vunpack.c.l.b16 %v863
    %v3383 = vunpack.c.l.b16 %v864
    %v3384 = vunpack.c.l.b16 %v865
    %v3385 = vunpack.c.l.b16 %v866
    %v3386 = vunpack.c.l.b16 %v867
    %v3387 = vunpack.c.l.b16 %v868
    %v3388 = vunpack.c.l.b16 %v869
    %v3389 = vunpack.c.l.b16 %v870
    %v3390 = vunpack.c.l.b16 %v871
    %v3391 = vunpack.c.l.b16 %v872
    %v3392 = vunpack.c.l.b16 %v873
    %v3393 = vunpack.c.l.b16 %v874
    %v3394 = vunpack.c.l.b16 %v875
    %v3395 = vunpack.c.l.b16 %v876
    %v3396 = vunpack.c.l.b16 %v877
    %v3397 = vunpack.c.l.b16 %v878
    %v3398 = vunpack.c.l.b16 %v879
    %v3399 = vunpack.c.l.b16 %v880
    %v3400 = vunpack.c.l.b16 %v881
    %v3401 = vunpack.c.l.b16 %v882
    %v3402 = vunpack.c.l.b16 %v883
    %v3403 = vunpack.c.l.b16 %v884
    %v3404 = vunpack.c.l.b16 %v885
    %v3405 = vunpack.c.l.b16 %v886
    %v3406 = vunpack.c.l.b16 %v887
    %v3407 = vunpack.c.l.b16 %v888
    %v3408 = vunpack.c.l.b16 %v889
    %v3409 = vunpack.c.l.b16 %v890
    %v3410 = vunpack.c.l.b16 %v891
    %v3411 = vunpack.c.l.b16 %v892
    %v3412 = vunpack.c.l.b16 %v893
    %v3413 = vunpack.c.l.b16 %v894
    %v3414 = vunpack.c.l.b16 %v895
    %v3415 = vunpack.c.l.b16 %v896
    %v3416 = vunpack.c.l.b16 %v897
    %v3417 = vunpack.c.l.b16 %v898
    %v3418 = vunpack.c.l.b16 %v899
    %v3419 = vunpack.c.l.b16 %v900
    %v3420 = vunpack.c.l.b16 %v901
    %v3421 = vunpack.c.l.b16 %v902
    %v3422 = vunpack.c.l.b16 %v903
    %v3423 = vunpack.c.l.b16 %v904
    %v3424 = vunpack.c.l.b16 %v905
    %v3425 = vunpack.c.l.b16 %v906
    %v3426 = vunpack.c.l.b16 %v907
    %v3427 = vunpack.c.l.b16 %v908
    %v3428 = vunpack.c.l.b16 %v909
    %v3429 = vunpack.c.l.b16 %v910
    %v3430 = vunpack.c.l.b16 %v911
    %v3431 = vunpack.c.l.b16 %v912
    %v3432 = vunpack.c.l.b16 %v913
    %v3433 = vunpack.c.l.b16 %v914
    %v3434 = vunpack.c.l.b16 %v915
    %v3435 = vunpack.c.l.b16 %v916
    %v3436 = vunpack.c.l.b16 %v917
    %v3437 = vunpack.c.l.b16 %v918
    %v3438 = vunpack.c.l.b16 %v919
    %v3439 = vunpack.c.l.b16 %v920
    %v3440 = vunpack.c.l.b16 %v921
    %v3441 = vunpack.c.l.b16 %v922
    %v3442 = vunpack.c.l.b16 %v923
    %v3443 = vunpack.c.l.b16 %v924
    %v3444 = vunpack.c.l.b16 %v925
    %v3445 = vunpack.c.l.b16 %v926
    %v3446 = vunpack.c.l.b16 %v927
    %v3447 = vunpack.c.l.b16 %v928
    %v3448 = vunpack.c.l.b16 %v929
    %v3449 = vunpack.c.l.b16 %v930
    %v3450 = vunpack.c.l.b16 %v931
    %v3451 = vunpack.c.l.b16 %v932
    %v3452 = vunpack.c.l.b16 %v933
    %v3453 = vunpack.c.l.b16 %v934
    %v3454 = vunpack.c.l.b16 %v935
    %v3455 = vunpack.c.l.b16 %v936
    %v3456 = vunpack.c.l.b16 %v937
    %v3457 = vunpack.c.l.b16 %v938
    %v3458 = vunpack.c.l.b16 %v939
    %v3459 = vunpack.c.l.b16 %v940
    %v3460 = vunpack.c.l.b16 %v941
    %v3461 = vunpack.c.l.b16 %v942
    %v3462 = vunpack.c.l.b16 %v943
    %v3463 = vunpack.c.l.b16 %v944
    %v3464 = vunpack.c.l.b16 %v945
    %v3465 = vunpack.c.l.b16 %v946
    %v3466 = vunpack.c.l.b16 %v947
    %v3467 = vunpack.c.l.b16 %v948
    %v3468 = vunpack.c.l.b16 %v949
    %v3469 = vunpack.c.l.b16 %v950
    %v3470 = vunpack.c.l.b16 %v951
    %v3471 = vunpack.c.l.b16 %v952
    %v3472 = vunpack.c.l.b16 %v953
    %v3473 = vunpack.c.l.b16 %v954
    %v3474 = vunpack.c.l.b16 %v955
    %v3475 = vunpack.c.l.b16 %v956
    %v3476 = vunpack.c.l.b16 %v957
    %v3477 = vunpack.c.l.b16 %v958
    %v3478 = vunpack.c.l.b16 %v959
    %v3479 = vunpack.c.l.b16 %v960
    %v3480 = vunpack.c.l.b16 %v961
    %v3481 = vunpack.c.l.b16 %v962
    %v3482 = vunpack.c.l.b16 %v963
    %v3483 = vunpack.c.l.b16 %v964
    %v3484 = vunpack.c.l.b16 %v965
    %v3485 = vunpack.c.l.b16 %v966
    %v3486 = vunpack.c.l.b16 %v967
    %v3487 = vunpack.c.l.b16 %v968
    %v3488 = vunpack.c.l.b16 %v969
    %v3489 = vunpack.c.l.b16 %v970
    %v3490 = vunpack.c.l.b16 %v971
    %v3491 = vunpack.c.l.b16 %v972
    %v3492 = vunpack.c.l.b16 %v973
    %v3493 = vunpack.c.l.b16 %v974
    %v3494 = vunpack.c.l.b16 %v975
    %v3495 = vunpack.c.l.b16 %v976
    %v3496 = vunpack.c.l.b16 %v977
    %v3497 = vunpack.c.l.b16 %v978
    %v3498 = vunpack.c.l.b16 %v979
    %v3499 = vunpack.c.l.b16 %v980
    %v3500 = vunpack.c.l.b16 %v981
    %v3501 = vunpack.c.l.b16 %v982
    %v3502 = vunpack.c.l.b16 %v983
    %v3503 = vunpack.c.l.b16 %v984
    %v3504 = vunpack.c.l.b16 %v985
    %v3505 = vunpack.c.l.b16 %v986
    %v3506 = vunpack.c.l.b16 %v987
    %v3507 = vunpack.c.l.b16 %v988
    %v3508 = vunpack.c.l.b16 %v989
    %v3509 = vunpack.c.l.b16 %v990
    %v3510 = vunpack.c.l.b16 %v991
    %v3511 = vunpack.c.l.b16 %v992
    %v3512 = vunpack.c.l.b16 %v993
    %v3513 = vunpack.c.l.b16 %v994
    %v3514 = vunpack.c.l.b16 %v995
    %v3515 = vunpack.c.l.b16 %v996
    %v3516 = vunpack.c.l.b16 %v997
    %v3517 = vunpack.c.l.b16 %v998
    %v3518 = vunpack.c.l.b16 %v999
    %v3519 = vunpack.c.l.b16 %v1000
    %v3520 = vunpack.c.l.b16 %v1001
    %v3521 = vunpack.c.l.b16 %v1002
    %v3522 = vunpack.c.l.b16 %v1003
    %v3523 = vunpack.c.l.b16 %v1004
    %v3524 = vunpack.c.l.b16 %v1005
    %v3525 = vunpack.c.l.b16 %v1006
    %v3526 = vunpack.c.l.b16 %v1007
    %v3527 = vunpack.c.l.b16 %v1008
    %v3528 = vunpack.c.l.b16 %v1009
    %v3529 = vunpack.c.l.b16 %v1010
    %v3530 = vunpack.c.l.b16 %v1011
    %v3531 = vunpack.c.l.b16 %v1012
    %v3532 = vunpack.c.l.b16 %v1013
    %v3533 = vunpack.c.l.b16 %v1014
    %v3534 = vunpack.c.l.b16 %v1015
    %v3535 = vunpack.c.l.b16 %v1016
    %v3536 = vunpack.c.l.b16 %v1017
    %v3537 = vunpack.c.l.b16 %v1018
    %v3538 = vunpack.c.l.b16 %v1019
    %v3539 = vunpack.c.l.b16 %v1020
    %v3540 = vunpack.c.l.b16 %v1021
    %v3541 = vunpack.c.l.b16 %v1022
    %v3542 = vunpack.c.l.b16 %v1023
    %v3543 = vunpack.c.l.b16 %v1024
    %v3544 = vunpack.c.l.b16 %v1025
    %v3545 = vunpack.c.l.b16 %v1026
    %v3546 = vunpack.c.l.b16 %v1027
    %v3547 = vunpack.c.l.b16 %v1028
    %v3548 = vunpack.c.l.b16 %v1029
    %v3549 = vunpack.c.l.b16 %v1030
    %v3550 = vunpack.c.l.b16 %v1031
    %v3551 = vunpack.c.l.b16 %v1032
    %v3552 = vunpack.c.l.b16 %v1033
    %v3553 = vunpack.c.l.b16 %v1034
    %v3554 = vunpack.c.l.b16 %v1035
    %v3555 = vunpack.c.l.b16 %v1036
    %v3556 = vunpack.c.l.b16 %v1037
    %v3557 = vunpack.c.l.b16 %v1038
    %v3558 = vunpack.c.l.b16 %v1039
    %v3559 = vunpack.c.l.b16 %v1040
    %v3560 = vunpack.c.l.b16 %v1041
    %v3561 = vunpack.c.l.b16 %v1042
    %v3562 = vunpack.c.l.b16 %v1043
    %v3563 = vunpack.c.l.b16 %v1044
    %v3564 = vunpack.c.l.b16 %v1045
    %v3565 = vunpack.c.l.b16 %v1046
    %v3566 = vunpack.c.l.b16 %v1047
    %v3567 = vpack.c.b16 %v2544, %v2543
    %v3568 = vpack.c.b16 %v2546, %v2545
    %v3569 = vpack.c.b16 %v2548, %v2547
    %v3570 = vpack.c.b16 %v2550, %v2549
    %v3571 = vpack.c.b16 %v2552, %v2551
    %v3572 = vpack.c.b16 %v2554, %v2553
    %v3573 = vpack.c.b16 %v2556, %v2555
    %v3574 = vpack.c.b16 %v2558, %v2557
    %v3575 = vpack.c.b16 %v2560, %v2559
    %v3576 = vpack.c.b16 %v2562, %v2561
    %v3577 = vpack.c.b16 %v2564, %v2563
    %v3578 = vpack.c.b16 %v2566, %v2565
    %v3579 = vpack.c.b16 %v2568, %v2567
    %v3580 = vpack.c.b16 %v2570, %v2569
    %v3581 = vpack.c.b16 %v2572, %v2571
    %v3582 = vpack.c.b16 %v2574, %v2573
    %v3583 = vpack.c.b16 %v2576, %v2575
    %v3584 = vpack.c.b16 %v2578, %v2577
    %v3585 = vpack.c.b16 %v2580, %v2579
    %v3586 = vpack.c.b16 %v2582, %v2581
    %v3587 = vpack.c.b16 %v2584, %v2583
    %v3588 = vpack.c.b16 %v2586, %v2585
    %v3589 = vpack.c.b16 %v2588, %v2587
    %v3590 = vpack.c.b16 %v2590, %v2589
    %v3591 = vpack.c.b16 %v2592, %v2591
    %v3592 = vpack.c.b16 %v2594, %v2593
    %v3593 = vpack.c.b16 %v2596, %v2595
    %v3594 = vpack.c.b16 %v2598, %v2597
    %v3595 = vpack.c.b16 %v2600, %v2599
    %v3596 = vpack.c.b16 %v2602, %v2601
    %v3597 = vpack.c.b16 %v2604, %v2603
    %v3598 = vpack.c.b16 %v2606, %v2605
    %v3599 = vpack.c.b16 %v2608, %v2607
    %v3600 = vpack.c.b16 %v2610, %v2609
    %v3601 = vpack.c.b16 %v2612, %v2611
    %v3602 = vpack.c.b16 %v2614, %v2613
    %v3603 = vpack.c.b16 %v2616, %v2615
    %v3604 = vpack.c.b16 %v2618, %v2617
    %v3605 = vpack.c.b16 %v2620, %v2619
    %v3606 = vpack.c.b16 %v2622, %v2621
    %v3607 = vpack.c.b16 %v2624, %v2623
    %v3608 = vpack.c.b16 %v2626, %v2625
    %v3609 = vpack.c.b16 %v2628, %v2627
    %v3610 = vpack.c.b16 %v2630, %v2629
    %v3611 = vpack.c.b16 %v2632, %v2631
    %v3612 = vpack.c.b16 %v2634, %v2633
    %v3613 = vpack.c.b16 %v2636, %v2635
    %v3614 = vpack.c.b16 %v2638, %v2637
    %v3615 = vpack.c.b16 %v2640, %v2639
    %v3616 = vpack.c.b16 %v2642, %v2641
    %v3617 = vpack.c.b16 %v2644, %v2643
    %v3618 = vpack.c.b16 %v2646, %v2645
    %v3619 = vpack.c.b16 %v2648, %v2647
    %v3620 = vpack.c.b16 %v2650, %v2649
    %v3621 = vpack.c.b16 %v2652, %v2651
    %v3622 = vpack.c.b16 %v2654, %v2653
    %v3623 = vpack.c.b16 %v2656, %v2655
    %v3624 = vpack.c.b16 %v2658, %v2657
    %v3625 = vpack.c.b16 %v2660, %v2659
    %v3626 = vpack.c.b16 %v2662, %v2661
    %v3627 = vpack.c.b16 %v2664, %v2663
    %v3628 = vpack.c.b16 %v2666, %v2665
    %v3629 = vpack.c.b16 %v2668, %v2667
    %v3630 = vpack.c.b16 %v2670, %v2669
    %v3631 = vpack.c.b16 %v2672, %v2671
    %v3632 = vpack.c.b16 %v2674, %v2673
    %v3633 = vpack.c.b16 %v2676, %v2675
    %v3634 = vpack.c.b16 %v2678, %v2677
    %v3635 = vpack.c.b16 %v2680, %v2679
    %v3636 = vpack.c.b16 %v2682, %v2681
    %v3637 = vpack.c.b16 %v2684, %v2683
    %v3638 = vpack.c.b16 %v2686, %v2685
    %v3639 = vpack.c.b16 %v2688, %v2687
    %v3640 = vpack.c.b16 %v2690, %v2689
    %v3641 = vpack.c.b16 %v2692, %v2691
    %v3642 = vpack.c.b16 %v2694, %v2693
    %v3643 = vpack.c.b16 %v2696, %v2695
    %v3644 = vpack.c.b16 %v2698, %v2697
    %v3645 = vpack.c.b16 %v2700, %v2699
    %v3646 = vpack.c.b16 %v2702, %v2701
    %v3647 = vpack.c.b16 %v2704, %v2703
    %v3648 = vpack.c.b16 %v2706, %v2705
    %v3649 = vpack.c.b16 %v2708, %v2707
    %v3650 = vpack.c.b16 %v2710, %v2709
    %v3651 = vpack.c.b16 %v2712, %v2711
    %v3652 = vpack.c.b16 %v2714, %v2713
    %v3653 = vpack.c.b16 %v2716, %v2715
    %v3654 = vpack.c.b16 %v2718, %v2717
    %v3655 = vpack.c.b16 %v2720, %v2719
    %v3656 = vpack.c.b16 %v2722, %v2721
    %v3657 = vpack.c.b16 %v2724, %v2723
    %v3658 = vpack.c.b16 %v2726, %v2725
    %v3659 = vpack.c.b16 %v2728, %v2727
    %v3660 = vpack.c.b16 %v2730, %v2729
    %v3661 = vpack.c.b16 %v2732, %v2731
    %v3662 = vpack.c.b16 %v2734, %v2733
    %v3663 = vpack.c.b16 %v2736, %v2735
    %v3664 = vpack.c.b16 %v2738, %v2737
    %v3665 = vpack.c.b16 %v2740, %v2739
    %v3666 = vpack.c.b16 %v2742, %v2741
    %v3667 = vpack.c.b16 %v2744, %v2743
    %v3668 = vpack.c.b16 %v2746, %v2745
    %v3669 = vpack.c.b16 %v2748, %v2747
    %v3670 = vpack.c.b16 %v2750, %v2749
    %v3671 = vpack.c.b16 %v2752, %v2751
    %v3672 = vpack.c.b16 %v2754, %v2753
    %v3673 = vpack.c.b16 %v2756, %v2755
    %v3674 = vpack.c.b16 %v2758, %v2757
    %v3675 = vpack.c.b16 %v2760, %v2759
    %v3676 = vpack.c.b16 %v2762, %v2761
    %v3677 = vpack.c.b16 %v2764, %v2763
    %v3678 = vpack.c.b16 %v2766, %v2765
    %v3679 = vpack.c.b16 %v2768, %v2767
    %v3680 = vpack.c.b16 %v2770, %v2769
    %v3681 = vpack.c.b16 %v2772, %v2771
    %v3682 = vpack.c.b16 %v2774, %v2773
    %v3683 = vpack.c.b16 %v2776, %v2775
    %v3684 = vpack.c.b16 %v2778, %v2777
    %v3685 = vpack.c.b16 %v2780, %v2779
    %v3686 = vpack.c.b16 %v2782, %v2781
    %v3687 = vpack.c.b16 %v2784, %v2783
    %v3688 = vpack.c.b16 %v2786, %v2785
    %v3689 = vpack.c.b16 %v2788, %v2787
    %v3690 = vpack.c.b16 %v2790, %v2789
    %v3691 = vpack.c.b16 %v2792, %v2791
    %v3692 = vpack.c.b16 %v2794, %v2793
    %v3693 = vpack.c.b16 %v2796, %v2795
    %v3694 = vpack.c.b16 %v2798, %v2797
    %v3695 = vpack.c.b16 %v2800, %v2799
    %v3696 = vpack.c.b16 %v2802, %v2801
    %v3697 = vpack.c.b16 %v2804, %v2803
    %v3698 = vpack.c.b16 %v2806, %v2805
    %v3699 = vpack.c.b16 %v2808, %v2807
    %v3700 = vpack.c.b16 %v2810, %v2809
    %v3701 = vpack.c.b16 %v2812, %v2811
    %v3702 = vpack.c.b16 %v2814, %v2813
    %v3703 = vpack.c.b16 %v2816, %v2815
    %v3704 = vpack.c.b16 %v2818, %v2817
    %v3705 = vpack.c.b16 %v2820, %v2819
    %v3706 = vpack.c.b16 %v2822, %v2821
    %v3707 = vpack.c.b16 %v2824, %v2823
    %v3708 = vpack.c.b16 %v2826, %v2825
    %v3709 = vpack.c.b16 %v2828, %v2827
    %v3710 = vpack.c.b16 %v2830, %v2829
    %v3711 = vpack.c.b16 %v2832, %v2831
    %v3712 = vpack.c.b16 %v2834, %v2833
    %v3713 = vpack.c.b16 %v2836, %v2835
    %v3714 = vpack.c.b16 %v2838, %v2837
    %v3715 = vpack.c.b16 %v2840, %v2839
    %v3716 = vpack.c.b16 %v2842, %v2841
    %v3717 = vpack.c.b16 %v2844, %v2843
    %v3718 = vpack.c.b16 %v2846, %v2845
    %v3719 = vpack.c.b16 %v2848, %v2847
    %v3720 = vpack.c.b16 %v2850, %v2849
    %v3721 = vpack.c.b16 %v2852, %v2851
    %v3722 = vpack.c.b16 %v2854, %v2853
    %v3723 = vpack.c.b16 %v2856, %v2855
    %v3724 = vpack.c.b16 %v2858, %v2857
    %v3725 = vpack.c.b16 %v2860, %v2859
    %v3726 = vpack.c.b16 %v2862, %v2861
    %v3727 = vpack.c.b16 %v2864, %v2863
    %v3728 = vpack.c.b16 %v2866, %v2865
    %v3729 = vpack.c.b16 %v2868, %v2867
    %v3730 = vpack.c.b16 %v2870, %v2869
    %v3731 = vpack.c.b16 %v2872, %v2871
    %v3732 = vpack.c.b16 %v2874, %v2873
    %v3733 = vpack.c.b16 %v2876, %v2875
    %v3734 = vpack.c.b16 %v2878, %v2877
    %v3735 = vpack.c.b16 %v2880, %v2879
    %v3736 = vpack.c.b16 %v2882, %v2881
    %v3737 = vpack.c.b16 %v2884, %v2883
    %v3738 = vpack.c.b16 %v2886, %v2885
    %v3739 = vpack.c.b16 %v2888, %v2887
    %v3740 = vpack.c.b16 %v2890, %v2889
    %v3741 = vpack.c.b16 %v2892, %v2891
    %v3742 = vpack.c.b16 %v2894, %v2893
    %v3743 = vpack.c.b16 %v2896, %v2895
    %v3744 = vpack.c.b16 %v2898, %v2897
    %v3745 = vpack.c.b16 %v2900, %v2899
    %v3746 = vpack.c.b16 %v2902, %v2901
    %v3747 = vpack.c.b16 %v2904, %v2903
    %v3748 = vpack.c.b16 %v2906, %v2905
    %v3749 = vpack.c.b16 %v2908, %v2907
    %v3750 = vpack.c.b16 %v2910, %v2909
    %v3751 = vpack.c.b16 %v2912, %v2911
    %v3752 = vpack.c.b16 %v2914, %v2913
    %v3753 = vpack.c.b16 %v2916, %v2915
    %v3754 = vpack.c.b16 %v2918, %v2917
    %v3755 = vpack.c.b16 %v2920, %v2919
    %v3756 = vpack.c.b16 %v2922, %v2921
    %v3757 = vpack.c.b16 %v2924, %v2923
    %v3758 = vpack.c.b16 %v2926, %v2925
    %v3759 = vpack.c.b16 %v2928, %v2927
    %v3760 = vpack.c.b16 %v2930, %v2929
    %v3761 = vpack.c.b16 %v2932, %v2931
    %v3762 = vpack.c.b16 %v2934, %v2933
    %v3763 = vpack.c.b16 %v2936, %v2935
    %v3764 = vpack.c.b16 %v2938, %v2937
    %v3765 = vpack.c.b16 %v2940, %v2939
    %v3766 = vpack.c.b16 %v2942, %v2941
    %v3767 = vpack.c.b16 %v2944, %v2943
    %v3768 = vpack.c.b16 %v2946, %v2945
    %v3769 = vpack.c.b16 %v2948, %v2947
    %v3770 = vpack.c.b16 %v2950, %v2949
    %v3771 = vpack.c.b16 %v2952, %v2951
    %v3772 = vpack.c.b16 %v2954, %v2953
    %v3773 = vpack.c.b16 %v2956, %v2955
    %v3774 = vpack.c.b16 %v2958, %v2957
    %v3775 = vpack.c.b16 %v2960, %v2959
    %v3776 = vpack.c.b16 %v2962, %v2961
    %v3777 = vpack.c.b16 %v2964, %v2963
    %v3778 = vpack.c.b16 %v2966, %v2965
    %v3779 = vpack.c.b16 %v2968, %v2967
    %v3780 = vpack.c.b16 %v2970, %v2969
    %v3781 = vpack.c.b16 %v2972, %v2971
    %v3782 = vpack.c.b16 %v2974, %v2973
    %v3783 = vpack.c.b16 %v2976, %v2975
    %v3784 = vpack.c.b16 %v2978, %v2977
    %v3785 = vpack.c.b16 %v2980, %v2979
    %v3786 = vpack.c.b16 %v2982, %v2981
    %v3787 = vpack.c.b16 %v2984, %v2983
    %v3788 = vpack.c.b16 %v2986, %v2985
    %v3789 = vpack.c.b16 %v2988, %v2987
    %v3790 = vpack.c.b16 %v2990, %v2989
    %v3791 = vpack.c.b16 %v2992, %v2991
    %v3792 = vpack.c.b16 %v2994, %v2993
    %v3793 = vpack.c.b16 %v2996, %v2995
    %v3794 = vpack.c.b16 %v2998, %v2997
    %v3795 = vpack.c.b16 %v3000, %v2999
    %v3796 = vpack.c.b16 %v3002, %v3001
    %v3797 = vpack.c.b16 %v3004, %v3003
    %v3798 = vpack.c.b16 %v3006, %v3005
    %v3799 = vpack.c.b16 %v3008, %v3007
    %v3800 = vpack.c.b16 %v3010, %v3009
    %v3801 = vpack.c.b16 %v3012, %v3011
    %v3802 = vpack.c.b16 %v3014, %v3013
    %v3803 = vpack.c.b16 %v3016, %v3015
    %v3804 = vpack.c.b16 %v3018, %v3017
    %v3805 = vpack.c.b16 %v3020, %v3019
    %v3806 = vpack.c.b16 %v3022, %v3021
    %v3807 = vpack.c.b16 %v3024, %v3023
    %v3808 = vpack.c.b16 %v3026, %v3025
    %v3809 = vpack.c.b16 %v3028, %v3027
    %v3810 = vpack.c.b16 %v3030, %v3029
    %v3811 = vpack.c.b16 %v3032, %v3031
    %v3812 = vpack.c.b16 %v3034, %v3033
    %v3813 = vpack.c.b16 %v3036, %v3035
    %v3814 = vpack.c.b16 %v3038, %v3037
    %v3815 = vpack.c.b16 %v3040, %v3039
    %v3816 = vpack.c.b16 %v3042, %v3041
    %v3817 = vpack.c.b16 %v3044, %v3043
    %v3818 = vpack.c.b16 %v3046, %v3045
    %v3819 = vpack.c.b16 %v3048, %v3047
    %v3820 = vpack.c.b16 %v3050, %v3049
    %v3821 = vpack.c.b16 %v3052, %v3051
    %v3822 = vpack.c.b16 %v3054, %v3053
    %v3823 = vpack.c.b16 %v3056, %v3055
    %v3824 = vpack.c.b16 %v3058, %v3057
    %v3825 = vpack.c.b16 %v3060, %v3059
    %v3826 = vpack.c.b16 %v3062, %v3061
    %v3827 = vpack.c.b16 %v3064, %v3063
    %v3828 = vpack.c.b16 %v3066, %v3065
    %v3829 = vpack.c.b16 %v3068, %v3067
    %v3830 = vpack.c.b16 %v3070, %v3069
    %v3831 = vpack.c.b16 %v3072, %v3071
    %v3832 = vpack.c.b16 %v3074, %v3073
    %v3833 = vpack.c.b16 %v3076, %v3075
    %v3834 = vpack.c.b16 %v3078, %v3077
    %v3835 = vpack.c.b16 %v3080, %v3079
    %v3836 = vpack.c.b16 %v3082, %v3081
    %v3837 = vpack.c.b16 %v3084, %v3083
    %v3838 = vpack.c.b16 %v3086, %v3085
    %v3839 = vpack.c.b16 %v3088, %v3087
    %v3840 = vpack.c.b16 %v3090, %v3089
    %v3841 = vpack.c.b16 %v3092, %v3091
    %v3842 = vpack.c.b16 %v3094, %v3093
    %v3843 = vpack.c.b16 %v3096, %v3095
    %v3844 = vpack.c.b16 %v3098, %v3097
    %v3845 = vpack.c.b16 %v3100, %v3099
    %v3846 = vpack.c.b16 %v3102, %v3101
    %v3847 = vpack.c.b16 %v3104, %v3103
    %v3848 = vpack.c.b16 %v3106, %v3105
    %v3849 = vpack.c.b16 %v3108, %v3107
    %v3850 = vpack.c.b16 %v3110, %v3109
    %v3851 = vpack.c.b16 %v3112, %v3111
    %v3852 = vpack.c.b16 %v3114, %v3113
    %v3853 = vpack.c.b16 %v3116, %v3115
    %v3854 = vpack.c.b16 %v3118, %v3117
    %v3855 = vpack.c.b16 %v3120, %v3119
    %v3856 = vpack.c.b16 %v3122, %v3121
    %v3857 = vpack.c.b16 %v3124, %v3123
    %v3858 = vpack.c.b16 %v3126, %v3125
    %v3859 = vpack.c.b16 %v3128, %v3127
    %v3860 = vpack.c.b16 %v3130, %v3129
    %v3861 = vpack.c.b16 %v3132, %v3131
    %v3862 = vpack.c.b16 %v3134, %v3133
    %v3863 = vpack.c.b16 %v3136, %v3135
    %v3864 = vpack.c.b16 %v3138, %v3137
    %v3865 = vpack.c.b16 %v3140, %v3139
    %v3866 = vpack.c.b16 %v3142, %v3141
    %v3867 = vpack.c.b16 %v3144, %v3143
    %v3868 = vpack.c.b16 %v3146, %v3145
    %v3869 = vpack.c.b16 %v3148, %v3147
    %v3870 = vpack.c.b16 %v3150, %v3149
    %v3871 = vpack.c.b16 %v3152, %v3151
    %v3872 = vpack.c.b16 %v3154, %v3153
    %v3873 = vpack.c.b16 %v3156, %v3155
    %v3874 = vpack.c.b16 %v3158, %v3157
    %v3875 = vpack.c.b16 %v3160, %v3159
    %v3876 = vpack.c.b16 %v3162, %v3161
    %v3877 = vpack.c.b16 %v3164, %v3163
    %v3878 = vpack.c.b16 %v3166, %v3165
    %v3879 = vpack.c.b16 %v3168, %v3167
    %v3880 = vpack.c.b16 %v3170, %v3169
    %v3881 = vpack.c.b16 %v3172, %v3171
    %v3882 = vpack.c.b16 %v3174, %v3173
    %v3883 = vpack.c.b16 %v3176, %v3175
    %v3884 = vpack.c.b16 %v3178, %v3177
    %v3885 = vpack.c.b16 %v3180, %v3179
    %v3886 = vpack.c.b16 %v3182, %v3181
    %v3887 = vpack.c.b16 %v3184, %v3183
    %v3888 = vpack.c.b16 %v3186, %v3185
    %v3889 = vpack.c.b16 %v3188, %v3187
    %v3890 = vpack.c.b16 %v3190, %v3189
    %v3891 = vpack.c.b16 %v3192, %v3191
    %v3892 = vpack.c.b16 %v3194, %v3193
    %v3893 = vpack.c.b16 %v3196, %v3195
    %v3894 = vpack.c.b16 %v3198, %v3197
    %v3895 = vpack.c.b16 %v3200, %v3199
    %v3896 = vpack.c.b16 %v3202, %v3201
    %v3897 = vpack.c.b16 %v3204, %v3203
    %v3898 = vpack.c.b16 %v3206, %v3205
    %v3899 = vpack.c.b16 %v3208, %v3207
    %v3900 = vpack.c.b16 %v3210, %v3209
    %v3901 = vpack.c.b16 %v3212, %v3211
    %v3902 = vpack.c.b16 %v3214, %v3213
    %v3903 = vpack.c.b16 %v3216, %v3215
    %v3904 = vpack.c.b16 %v3218, %v3217
    %v3905 = vpack.c.b16 %v3220, %v3219
    %v3906 = vpack.c.b16 %v3222, %v3221
    %v3907 = vpack.c.b16 %v3224, %v3223
    %v3908 = vpack.c.b16 %v3226, %v3225
    %v3909 = vpack.c.b16 %v3228, %v3227
    %v3910 = vpack.c.b16 %v3230, %v3229
    %v3911 = vpack.c.b16 %v3232, %v3231
    %v3912 = vpack.c.b16 %v3234, %v3233
    %v3913 = vpack.c.b16 %v3236, %v3235
    %v3914 = vpack.c.b16 %v3238, %v3237
    %v3915 = vpack.c.b16 %v3240, %v3239
    %v3916 = vpack.c.b16 %v3242, %v3241
    %v3917 = vpack.c.b16 %v3244, %v3243
    %v3918 = vpack.c.b16 %v3246, %v3245
    %v3919 = vpack.c.b16 %v3248, %v3247
    %v3920 = vpack.c.b16 %v3250, %v3249
    %v3921 = vpack.c.b16 %v3252, %v3251
    %v3922 = vpack.c.b16 %v3254, %v3253
    %v3923 = vpack.c.b16 %v3256, %v3255
    %v3924 = vpack.c.b16 %v3258, %v3257
    %v3925 = vpack.c.b16 %v3260, %v3259
    %v3926 = vpack.c.b16 %v3262, %v3261
    %v3927 = vpack.c.b16 %v3264, %v3263
    %v3928 = vpack.c.b16 %v3266, %v3265
    %v3929 = vpack.c.b16 %v3268, %v3267
    %v3930 = vpack.c.b16 %v3270, %v3269
    %v3931 = vpack.c.b16 %v3272, %v3271
    %v3932 = vpack.c.b16 %v3274, %v3273
    %v3933 = vpack.c.b16 %v3276, %v3275
    %v3934 = vpack.c.b16 %v3278, %v3277
    %v3935 = vpack.c.b16 %v3280, %v3279
    %v3936 = vpack.c.b16 %v3282, %v3281
    %v3937 = vpack.c.b16 %v3284, %v3283
    %v3938 = vpack.c.b16 %v3286, %v3285
    %v3939 = vpack.c.b16 %v3288, %v3287
    %v3940 = vpack.c.b16 %v3290, %v3289
    %v3941 = vpack.c.b16 %v3292, %v3291
    %v3942 = vpack.c.b16 %v3294, %v3293
    %v3943 = vpack.c.b16 %v3296, %v3295
    %v3944 = vpack.c.b16 %v3298, %v3297
    %v3945 = vpack.c.b16 %v3300, %v3299
    %v3946 = vpack.c.b16 %v3302, %v3301
    %v3947 = vpack.c.b16 %v3304, %v3303
    %v3948 = vpack.c.b16 %v3306, %v3305
    %v3949 = vpack.c.b16 %v3308, %v3307
    %v3950 = vpack.c.b16 %v3310, %v3309
    %v3951 = vpack.c.b16 %v3312, %v3311
    %v3952 = vpack.c.b16 %v3314, %v3313
    %v3953 = vpack.c.b16 %v3316, %v3315
    %v3954 = vpack.c.b16 %v3318, %v3317
    %v3955 = vpack.c.b16 %v3320, %v3319
    %v3956 = vpack.c.b16 %v3322, %v3321
    %v3957 = vpack.c.b16 %v3324, %v3323
    %v3958 = vpack.c.b16 %v3326, %v3325
    %v3959 = vpack.c.b16 %v3328, %v3327
    %v3960 = vpack.c.b16 %v3330, %v3329
    %v3961 = vpack.c.b16 %v3332, %v3331
    %v3962 = vpack.c.b16 %v3334, %v3333
    %v3963 = vpack.c.b16 %v3336, %v3335
    %v3964 = vpack.c.b16 %v3338, %v3337
    %v3965 = vpack.c.b16 %v3340, %v3339
    %v3966 = vpack.c.b16 %v3342, %v3341
    %v3967 = vpack.c.b16 %v3344, %v3343
    %v3968 = vpack.c.b16 %v3346, %v3345
    %v3969 = vpack.c.b16 %v3348, %v3347
    %v3970 = vpack.c.b16 %v3350, %v3349
    %v3971 = vpack.c.b16 %v3352, %v3351
    %v3972 = vpack.c.b16 %v3354, %v3353
    %v3973 = vpack.c.b16 %v3356, %v3355
    %v3974 = vpack.c.b16 %v3358, %v3357
    %v3975 = vpack.c.b16 %v3360, %v3359
    %v3976 = vpack.c.b16 %v3362, %v3361
    %v3977 = vpack.c.b16 %v3364, %v3363
    %v3978 = vpack.c.b16 %v3366, %v3365
    %v3979 = vpack.c.b16 %v3368, %v3367
    %v3980 = vpack.c.b16 %v3370, %v3369
    %v3981 = vpack.c.b16 %v3372, %v3371
    %v3982 = vpack.c.b16 %v3374, %v3373
    %v3983 = vpack.c.b16 %v3376, %v3375
    %v3984 = vpack.c.b16 %v3378, %v3377
    %v3985 = vpack.c.b16 %v3380, %v3379
    %v3986 = vpack.c.b16 %v3382, %v3381
    %v3987 = vpack.c.b16 %v3384, %v3383
    %v3988 = vpack.c.b16 %v3386, %v3385
    %v3989 = vpack.c.b16 %v3388, %v3387
    %v3990 = vpack.c.b16 %v3390, %v3389
    %v3991 = vpack.c.b16 %v3392, %v3391
    %v3992 = vpack.c.b16 %v3394, %v3393
    %v3993 = vpack.c.b16 %v3396, %v3395
    %v3994 = vpack.c.b16 %v3398, %v3397
    %v3995 = vpack.c.b16 %v3400, %v3399
    %v3996 = vpack.c.b16 %v3402, %v3401
    %v3997 = vpack.c.b16 %v3404, %v3403
    %v3998 = vpack.c.b16 %v3406, %v3405
    %v3999 = vpack.c.b16 %v3408, %v3407
    %v4000 = vpack.c.b16 %v3410, %v3409
    %v4001 = vpack.c.b16 %v3412, %v3411
    %v4002 = vpack.c.b16 %v3414, %v3413
    %v4003 = vpack.c.b16 %v3416, %v3415
    %v4004 = vpack.c.b16 %v3418, %v3417
    %v4005 = vpack.c.b16 %v3420, %v3419
    %v4006 = vpack.c.b16 %v3422, %v3421
    %v4007 = vpack.c.b16 %v3424, %v3423
    %v4008 = vpack.c.b16 %v3426, %v3425
    %v4009 = vpack.c.b16 %v3428, %v3427
    %v4010 = vpack.c.b16 %v3430, %v3429
    %v4011 = vpack.c.b16 %v3432, %v3431
    %v4012 = vpack.c.b16 %v3434, %v3433
    %v4013 = vpack.c.b16 %v3436, %v3435
    %v4014 = vpack.c.b16 %v3438, %v3437
    %v4015 = vpack.c.b16 %v3440, %v3439
    %v4016 = vpack.c.b16 %v3442, %v3441
    %v4017 = vpack.c.b16 %v3444, %v3443
    %v4018 = vpack.c.b16 %v3446, %v3445
    %v4019 = vpack.c.b16 %v3448, %v3447
    %v4020 = vpack.c.b16 %v3450, %v3449
    %v4021 = vpack.c.b16 %v3452, %v3451
    %v4022 = vpack.c.b16 %v3454, %v3453
    %v4023 = vpack.c.b16 %v3456, %v3455
    %v4024 = vpack.c.b16 %v3458, %v3457
    %v4025 = vpack.c.b16 %v3460, %v3459
    %v4026 = vpack.c.b16 %v3462, %v3461
    %v4027 = vpack.c.b16 %v3464, %v3463
    %v4028 = vpack.c.b16 %v3466, %v3465
    %v4029 = vpack.c.b16 %v3468, %v3467
    %v4030 = vpack.c.b16 %v3470, %v3469
    %v4031 = vpack.c.b16 %v3472, %v3471
    %v4032 = vpack.c.b16 %v3474, %v3473
    %v4033 = vpack.c.b16 %v3476, %v3475
    %v4034 = vpack.c.b16 %v3478, %v3477
    %v4035 = vpack.c.b16 %v3480, %v3479
    %v4036 = vpack.c.b16 %v3482, %v3481
    %v4037 = vpack.c.b16 %v3484, %v3483
    %v4038 = vpack.c.b16 %v3486, %v3485
    %v4039 = vpack.c.b16 %v3488, %v3487
    %v4040 = vpack.c.b16 %v3490, %v3489
    %v4041 = vpack.c.b16 %v3492, %v3491
    %v4042 = vpack.c.b16 %v3494, %v3493
    %v4043 = vpack.c.b16 %v3496, %v3495
    %v4044 = vpack.c.b16 %v3498, %v3497
    %v4045 = vpack.c.b16 %v3500, %v3499
    %v4046 = vpack.c.b16 %v3502, %v3501
    %v4047 = vpack.c.b16 %v3504, %v3503
    %v4048 = vpack.c.b16 %v3506, %v3505
    %v4049 = vpack.c.b16 %v3508, %v3507
    %v4050 = vpack.c.b16 %v3510, %v3509
    %v4051 = vpack.c.b16 %v3512, %v3511
    %v4052 = vpack.c.b16 %v3514, %v3513
    %v4053 = vpack.c.b16 %v3516, %v3515
    %v4054 = vpack.c.b16 %v3518, %v3517
    %v4055 = vpack.c.b16 %v3520, %v3519
    %v4056 = vpack.c.b16 %v3522, %v3521
    %v4057 = vpack.c.b16 %v3524, %v3523
    %v4058 = vpack.c.b16 %v3526, %v3525
    %v4059 = vpack.c.b16 %v3528, %v3527
    %v4060 = vpack.c.b16 %v3530, %v3529
    %v4061 = vpack.c.b16 %v3532, %v3531
    %v4062 = vpack.c.b16 %v3534, %v3533
    %v4063 = vpack.c.b16 %v3536, %v3535
    %v4064 = vpack.c.b16 %v3538, %v3537
    %v4065 = vpack.c.b16 %v3540, %v3539
    %v4066 = vpack.c.b16 %v3542, %v3541
    %v4067 = vpack.c.b16 %v3544, %v3543
    %v4068 = vpack.c.b16 %v3546, %v3545
    %v4069 = vpack.c.b16 %v3548, %v3547
    %v4070 = vpack.c.b16 %v3550, %v3549
    %v4071 = vpack.c.b16 %v3552, %v3551
    %v4072 = vpack.c.b16 %v3554, %v3553
    %v4073 = vpack.c.b16 %v3556, %v3555
    %v4074 = vpack.c.b16 %v3558, %v3557
    %v4075 = vpack.c.b16 %v3560, %v3559
    %v4076 = vpack.c.b16 %v3562, %v3561
    %v4077 = vpack.c.b16 %v3564, %v3563
    %v4078 = vpack.c.b16 %v3566, %v3565
    %4591 = vmatprep.subr.bf16.mxu0 0
    %4592 = vmatpush1.bf16.msra.mxu0 %v3574
    %4593 = vmatprep.subr.bf16.mxu0 0
    %4594 = vmatpush1.bf16.msra.mxu0 %v3573
    %4595 = vmatprep.subr.bf16.mxu0 0
    %4596 = vmatpush1.bf16.msra.mxu0 %v3572
    %4597 = vmatprep.subr.bf16.mxu0 0
    %4598 = vmatpush1.bf16.msra.mxu0 %v3571
    %4599 = vmatprep.subr.bf16.mxu0 0
    %4600 = vmatpush1.bf16.msra.mxu0 %v3570
    %4601 = vmatprep.subr.bf16.mxu0 0
    %4602 = vmatpush1.bf16.msra.mxu0 %v3569
    %4603 = vmatprep.subr.bf16.mxu0 0
    %4604 = vmatpush1.bf16.msra.mxu0 %v3568
    %4605 = vmatprep.subr.bf16.mxu0 0
    %4606 = vmatpush1.bf16.msra.mxu0 %v3567
    %4607 = vmatprep.subr.bf16.mxu0 0
    %4608 = vmatpush2.bf16.msra.mxu0 %v3582
    %4609 = vmatprep.subr.bf16.mxu0 0
    %4610 = vmatpush2.bf16.msra.mxu0 %v3581
    %4611 = vmatprep.subr.bf16.mxu0 0
    %4612 = vmatpush2.bf16.msra.mxu0 %v3580
    %4613 = vmatprep.subr.bf16.mxu0 0
    %4614 = vmatpush2.bf16.msra.mxu0 %v3579
    %4615 = vmatprep.subr.bf16.mxu0 0
    %4616 = vmatpush2.bf16.msra.mxu0 %v3578
    %4617 = vmatprep.subr.bf16.mxu0 0
    %4618 = vmatpush2.bf16.msra.mxu0 %v3577
    %4619 = vmatprep.subr.bf16.mxu0 0
    %4620 = vmatpush2.bf16.msra.mxu0 %v3576
    %4621 = vmatprep.subr.bf16.mxu0 0
    %4622 = vmatpush2.bf16.msra.mxu0 %v3575
    %4623 = vmatprep.mubr.bf16.mxu0 %v1100
    %4624 = vmatmul.mubr.bf16.gmra.mxu0 %v1086
    %v4625 = vpop.f32.mrf.mxu0
    %v4626 = vadd.f32 %v1053, %v4625
    %v4627 = vpop.f32.mrf.mxu0
    %v4628 = vpop.f32.mrf.mxu0
    %v4629 = vpop.f32.mrf.mxu0
    %4630 = vdwg.mxu0
    %4631 = vmatprep.subr.bf16.mxu0 0
    %4632 = vmatpush1.bf16.msra.mxu0 %v3590
    %4633 = vmatprep.subr.bf16.mxu0 0
    %4634 = vmatpush1.bf16.msra.mxu0 %v3589
    %4635 = vmatprep.subr.bf16.mxu0 0
    %4636 = vmatpush1.bf16.msra.mxu0 %v3588
    %4637 = vmatprep.subr.bf16.mxu0 0
    %4638 = vmatpush1.bf16.msra.mxu0 %v3587
    %4639 = vmatprep.subr.bf16.mxu0 0
    %4640 = vmatpush1.bf16.msra.mxu0 %v3586
    %4641 = vmatprep.subr.bf16.mxu0 0
    %4642 = vmatpush1.bf16.msra.mxu0 %v3585
    %4643 = vmatprep.subr.bf16.mxu0 0
    %4644 = vmatpush1.bf16.msra.mxu0 %v3584
    %4645 = vmatprep.subr.bf16.mxu0 0
    %4646 = vmatpush1.bf16.msra.mxu0 %v3583
    %4647 = vmatprep.subr.bf16.mxu0 0
    %4648 = vmatpush2.bf16.msra.mxu0 %v3598
    %4649 = vmatprep.subr.bf16.mxu0 0
    %4650 = vmatpush2.bf16.msra.mxu0 %v3597
    %4651 = vmatprep.subr.bf16.mxu0 0
    %4652 = vmatpush2.bf16.msra.mxu0 %v3596
    %4653 = vmatprep.subr.bf16.mxu0 0
    %4654 = vmatpush2.bf16.msra.mxu0 %v3595
    %4655 = vmatprep.subr.bf16.mxu0 0
    %4656 = vmatpush2.bf16.msra.mxu0 %v3594
    %4657 = vmatprep.subr.bf16.mxu0 0
    %4658 = vmatpush2.bf16.msra.mxu0 %v3593
    %4659 = vmatprep.subr.bf16.mxu0 0
    %4660 = vmatpush2.bf16.msra.mxu0 %v3592
    %4661 = vmatprep.subr.bf16.mxu0 0
    %4662 = vmatpush2.bf16.msra.mxu0 %v3591
    %4663 = vmatprep.mubr.bf16.mxu0 %v1110
    %4664 = vmatmul.mubr.bf16.gmra.mxu0 %v1108
    %v4665 = vpop.f32.mrf.mxu0
    %v4666 = vadd.f32 %v4626, %v4665
    %v4667 = vpop.f32.mrf.mxu0
    %v4668 = vpop.f32.mrf.mxu0
    %v4669 = vpop.f32.mrf.mxu0
    %4670 = vdwg.mxu0
    %4671 = vmatprep.subr.bf16.mxu0 0
    %4672 = vmatpush1.bf16.msra.mxu0 %v3606
    %4673 = vmatprep.subr.bf16.mxu0 0
    %4674 = vmatpush1.bf16.msra.mxu0 %v3605
    %4675 = vmatprep.subr.bf16.mxu0 0
    %4676 = vmatpush1.bf16.msra.mxu0 %v3604
    %4677 = vmatprep.subr.bf16.mxu0 0
    %4678 = vmatpush1.bf16.msra.mxu0 %v3603
    %4679 = vmatprep.subr.bf16.mxu0 0
    %4680 = vmatpush1.bf16.msra.mxu0 %v3602
    %4681 = vmatprep.subr.bf16.mxu0 0
    %4682 = vmatpush1.bf16.msra.mxu0 %v3601
    %4683 = vmatprep.subr.bf16.mxu0 0
    %4684 = vmatpush1.bf16.msra.mxu0 %v3600
    %4685 = vmatprep.subr.bf16.mxu0 0
    %4686 = vmatpush1.bf16.msra.mxu0 %v3599
    %4687 = vmatprep.subr.bf16.mxu0 0
    %4688 = vmatpush2.bf16.msra.mxu0 %v3614
    %4689 = vmatprep.subr.bf16.mxu0 0
    %4690 = vmatpush2.bf16.msra.mxu0 %v3613
    %4691 = vmatprep.subr.bf16.mxu0 0
    %4692 = vmatpush2.bf16.msra.mxu0 %v3612
    %4693 = vmatprep.subr.bf16.mxu0 0
    %4694 = vmatpush2.bf16.msra.mxu0 %v3611
    %4695 = vmatprep.subr.bf16.mxu0 0
    %4696 = vmatpush2.bf16.msra.mxu0 %v3610
    %4697 = vmatprep.subr.bf16.mxu0 0
    %4698 = vmatpush2.bf16.msra.mxu0 %v3609
    %4699 = vmatprep.subr.bf16.mxu0 0
    %4700 = vmatpush2.bf16.msra.mxu0 %v3608
    %4701 = vmatprep.subr.bf16.mxu0 0
    %4702 = vmatpush2.bf16.msra.mxu0 %v3607
    %4703 = vmatprep.mubr.bf16.mxu0 %v1107
    %4704 = vmatmul.mubr.bf16.gmra.mxu0 %v1093
    %v4705 = vpop.f32.mrf.mxu0
    %v4706 = vadd.f32 %v4666, %v4705
    %v4707 = vpop.f32.mrf.mxu0
    %v4708 = vpop.f32.mrf.mxu0
    %v4709 = vpop.f32.mrf.mxu0
    %4710 = vdwg.mxu0
    %4711 = vmatprep.subr.bf16.mxu0 0
    %4712 = vmatpush1.bf16.msra.mxu0 %v3622
    %4713 = vmatprep.subr.bf16.mxu0 0
    %4714 = vmatpush1.bf16.msra.mxu0 %v3621
    %4715 = vmatprep.subr.bf16.mxu0 0
    %4716 = vmatpush1.bf16.msra.mxu0 %v3620
    %4717 = vmatprep.subr.bf16.mxu0 0
    %4718 = vmatpush1.bf16.msra.mxu0 %v3619
    %4719 = vmatprep.subr.bf16.mxu0 0
    %4720 = vmatpush1.bf16.msra.mxu0 %v3618
    %4721 = vmatprep.subr.bf16.mxu0 0
    %4722 = vmatpush1.bf16.msra.mxu0 %v3617
    %4723 = vmatprep.subr.bf16.mxu0 0
    %4724 = vmatpush1.bf16.msra.mxu0 %v3616
    %4725 = vmatprep.subr.bf16.mxu0 0
    %4726 = vmatpush1.bf16.msra.mxu0 %v3615
    %4727 = vmatprep.subr.bf16.mxu0 0
    %4728 = vmatpush2.bf16.msra.mxu0 %v3630
    %4729 = vmatprep.subr.bf16.mxu0 0
    %4730 = vmatpush2.bf16.msra.mxu0 %v3629
    %4731 = vmatprep.subr.bf16.mxu0 0
    %4732 = vmatpush2.bf16.msra.mxu0 %v3628
    %4733 = vmatprep.subr.bf16.mxu0 0
    %4734 = vmatpush2.bf16.msra.mxu0 %v3627
    %4735 = vmatprep.subr.bf16.mxu0 0
    %4736 = vmatpush2.bf16.msra.mxu0 %v3626
    %4737 = vmatprep.subr.bf16.mxu0 0
    %4738 = vmatpush2.bf16.msra.mxu0 %v3625
    %4739 = vmatprep.subr.bf16.mxu0 0
    %4740 = vmatpush2.bf16.msra.mxu0 %v3624
    %4741 = vmatprep.subr.bf16.mxu0 0
    %4742 = vmatpush2.bf16.msra.mxu0 %v3623
    %4743 = vmatprep.mubr.bf16.mxu0 %v1111
    %4744 = vmatmul.mubr.bf16.gmra.mxu0 %v1109
    %v4745 = vpop.f32.mrf.mxu0
    %v4746 = vadd.f32 %v4706, %v4745
    %v4747 = vpop.f32.mrf.mxu0
    %v4748 = vpop.f32.mrf.mxu0
    %v4749 = vpop.f32.mrf.mxu0
    %4750 = vdwg.mxu0
    %4751 = vmatprep.subr.bf16.mxu0 0
    %4752 = vmatpush1.bf16.msra.mxu0 %v3638
    %4753 = vmatprep.subr.bf16.mxu0 0
    %4754 = vmatpush1.bf16.msra.mxu0 %v3637
    %4755 = vmatprep.subr.bf16.mxu0 0
    %4756 = vmatpush1.bf16.msra.mxu0 %v3636
    %4757 = vmatprep.subr.bf16.mxu0 0
    %4758 = vmatpush1.bf16.msra.mxu0 %v3635
    %4759 = vmatprep.subr.bf16.mxu0 0
    %4760 = vmatpush1.bf16.msra.mxu0 %v3634
    %4761 = vmatprep.subr.bf16.mxu0 0
    %4762 = vmatpush1.bf16.msra.mxu0 %v3633
    %4763 = vmatprep.subr.bf16.mxu0 0
    %4764 = vmatpush1.bf16.msra.mxu0 %v3632
    %4765 = vmatprep.subr.bf16.mxu0 0
    %4766 = vmatpush1.bf16.msra.mxu0 %v3631
    %4767 = vmatprep.subr.bf16.mxu0 0
    %4768 = vmatpush2.bf16.msra.mxu0 %v3646
    %4769 = vmatprep.subr.bf16.mxu0 0
    %4770 = vmatpush2.bf16.msra.mxu0 %v3645
    %4771 = vmatprep.subr.bf16.mxu0 0
    %4772 = vmatpush2.bf16.msra.mxu0 %v3644
    %4773 = vmatprep.subr.bf16.mxu0 0
    %4774 = vmatpush2.bf16.msra.mxu0 %v3643
    %4775 = vmatprep.subr.bf16.mxu0 0
    %4776 = vmatpush2.bf16.msra.mxu0 %v3642
    %4777 = vmatprep.subr.bf16.mxu0 0
    %4778 = vmatpush2.bf16.msra.mxu0 %v3641
    %4779 = vmatprep.subr.bf16.mxu0 0
    %4780 = vmatpush2.bf16.msra.mxu0 %v3640
    %4781 = vmatprep.subr.bf16.mxu0 0
    %4782 = vmatpush2.bf16.msra.mxu0 %v3639
    %4783 = vmatprep.mubr.bf16.mxu0 %v1149
    %4784 = vmatmul.mubr.bf16.gmra.mxu0 %v1135
    %v4785 = vpop.f32.mrf.mxu0
    %v4786 = vadd.f32 %v4746, %v4785
    %v4787 = vpop.f32.mrf.mxu0
    %v4788 = vpop.f32.mrf.mxu0
    %v4789 = vpop.f32.mrf.mxu0
    %4790 = vdwg.mxu0
    %4791 = vmatprep.subr.bf16.mxu0 0
    %4792 = vmatpush1.bf16.msra.mxu0 %v3654
    %4793 = vmatprep.subr.bf16.mxu0 0
    %4794 = vmatpush1.bf16.msra.mxu0 %v3653
    %4795 = vmatprep.subr.bf16.mxu0 0
    %4796 = vmatpush1.bf16.msra.mxu0 %v3652
    %4797 = vmatprep.subr.bf16.mxu0 0
    %4798 = vmatpush1.bf16.msra.mxu0 %v3651
    %4799 = vmatprep.subr.bf16.mxu0 0
    %4800 = vmatpush1.bf16.msra.mxu0 %v3650
    %4801 = vmatprep.subr.bf16.mxu0 0
    %4802 = vmatpush1.bf16.msra.mxu0 %v3649
    %4803 = vmatprep.subr.bf16.mxu0 0
    %4804 = vmatpush1.bf16.msra.mxu0 %v3648
    %4805 = vmatprep.subr.bf16.mxu0 0
    %4806 = vmatpush1.bf16.msra.mxu0 %v3647
    %4807 = vmatprep.subr.bf16.mxu0 0
    %4808 = vmatpush2.bf16.msra.mxu0 %v3662
    %4809 = vmatprep.subr.bf16.mxu0 0
    %4810 = vmatpush2.bf16.msra.mxu0 %v3661
    %4811 = vmatprep.subr.bf16.mxu0 0
    %4812 = vmatpush2.bf16.msra.mxu0 %v3660
    %4813 = vmatprep.subr.bf16.mxu0 0
    %4814 = vmatpush2.bf16.msra.mxu0 %v3659
    %4815 = vmatprep.subr.bf16.mxu0 0
    %4816 = vmatpush2.bf16.msra.mxu0 %v3658
    %4817 = vmatprep.subr.bf16.mxu0 0
    %4818 = vmatpush2.bf16.msra.mxu0 %v3657
    %4819 = vmatprep.subr.bf16.mxu0 0
    %4820 = vmatpush2.bf16.msra.mxu0 %v3656
    %4821 = vmatprep.subr.bf16.mxu0 0
    %4822 = vmatpush2.bf16.msra.mxu0 %v3655
    %4823 = vmatprep.mubr.bf16.mxu0 %v1159
    %4824 = vmatmul.mubr.bf16.gmra.mxu0 %v1157
    %v4825 = vpop.f32.mrf.mxu0
    %v4826 = vadd.f32 %v4786, %v4825
    %v4827 = vpop.f32.mrf.mxu0
    %v4828 = vpop.f32.mrf.mxu0
    %v4829 = vpop.f32.mrf.mxu0
    %4830 = vdwg.mxu0
    %4831 = vmatprep.subr.bf16.mxu0 0
    %4832 = vmatpush1.bf16.msra.mxu0 %v3670
    %4833 = vmatprep.subr.bf16.mxu0 0
    %4834 = vmatpush1.bf16.msra.mxu0 %v3669
    %4835 = vmatprep.subr.bf16.mxu0 0
    %4836 = vmatpush1.bf16.msra.mxu0 %v3668
    %4837 = vmatprep.subr.bf16.mxu0 0
    %4838 = vmatpush1.bf16.msra.mxu0 %v3667
    %4839 = vmatprep.subr.bf16.mxu0 0
    %4840 = vmatpush1.bf16.msra.mxu0 %v3666
    %4841 = vmatprep.subr.bf16.mxu0 0
    %4842 = vmatpush1.bf16.msra.mxu0 %v3665
    %4843 = vmatprep.subr.bf16.mxu0 0
    %4844 = vmatpush1.bf16.msra.mxu0 %v3664
    %4845 = vmatprep.subr.bf16.mxu0 0
    %4846 = vmatpush1.bf16.msra.mxu0 %v3663
    %4847 = vmatprep.subr.bf16.mxu0 0
    %4848 = vmatpush2.bf16.msra.mxu0 %v3678
    %4849 = vmatprep.subr.bf16.mxu0 0
    %4850 = vmatpush2.bf16.msra.mxu0 %v3677
    %4851 = vmatprep.subr.bf16.mxu0 0
    %4852 = vmatpush2.bf16.msra.mxu0 %v3676
    %4853 = vmatprep.subr.bf16.mxu0 0
    %4854 = vmatpush2.bf16.msra.mxu0 %v3675
    %4855 = vmatprep.subr.bf16.mxu0 0
    %4856 = vmatpush2.bf16.msra.mxu0 %v3674
    %4857 = vmatprep.subr.bf16.mxu0 0
    %4858 = vmatpush2.bf16.msra.mxu0 %v3673
    %4859 = vmatprep.subr.bf16.mxu0 0
    %4860 = vmatpush2.bf16.msra.mxu0 %v3672
    %4861 = vmatprep.subr.bf16.mxu0 0
    %4862 = vmatpush2.bf16.msra.mxu0 %v3671
    %4863 = vmatprep.mubr.bf16.mxu0 %v1156
    %4864 = vmatmul.mubr.bf16.gmra.mxu0 %v1142
    %v4865 = vpop.f32.mrf.mxu0
    %v4866 = vadd.f32 %v4826, %v4865
    %v4867 = vpop.f32.mrf.mxu0
    %v4868 = vpop.f32.mrf.mxu0
    %v4869 = vpop.f32.mrf.mxu0
    %4870 = vdwg.mxu0
    %4871 = vmatprep.subr.bf16.mxu0 0
    %4872 = vmatpush1.bf16.msra.mxu0 %v3686
    %4873 = vmatprep.subr.bf16.mxu0 0
    %4874 = vmatpush1.bf16.msra.mxu0 %v3685
    %4875 = vmatprep.subr.bf16.mxu0 0
    %4876 = vmatpush1.bf16.msra.mxu0 %v3684
    %4877 = vmatprep.subr.bf16.mxu0 0
    %4878 = vmatpush1.bf16.msra.mxu0 %v3683
    %4879 = vmatprep.subr.bf16.mxu0 0
    %4880 = vmatpush1.bf16.msra.mxu0 %v3682
    %4881 = vmatprep.subr.bf16.mxu0 0
    %4882 = vmatpush1.bf16.msra.mxu0 %v3681
    %4883 = vmatprep.subr.bf16.mxu0 0
    %4884 = vmatpush1.bf16.msra.mxu0 %v3680
    %4885 = vmatprep.subr.bf16.mxu0 0
    %4886 = vmatpush1.bf16.msra.mxu0 %v3679
    %4887 = vmatprep.subr.bf16.mxu0 0
    %4888 = vmatpush2.bf16.msra.mxu0 %v3694
    %4889 = vmatprep.subr.bf16.mxu0 0
    %4890 = vmatpush2.bf16.msra.mxu0 %v3693
    %4891 = vmatprep.subr.bf16.mxu0 0
    %4892 = vmatpush2.bf16.msra.mxu0 %v3692
    %4893 = vmatprep.subr.bf16.mxu0 0
    %4894 = vmatpush2.bf16.msra.mxu0 %v3691
    %4895 = vmatprep.subr.bf16.mxu0 0
    %4896 = vmatpush2.bf16.msra.mxu0 %v3690
    %4897 = vmatprep.subr.bf16.mxu0 0
    %4898 = vmatpush2.bf16.msra.mxu0 %v3689
    %4899 = vmatprep.subr.bf16.mxu0 0
    %4900 = vmatpush2.bf16.msra.mxu0 %v3688
    %4901 = vmatprep.subr.bf16.mxu0 0
    %4902 = vmatpush2.bf16.msra.mxu0 %v3687
    %4903 = vmatprep.mubr.bf16.mxu0 %v1160
    %4904 = vmatmul.mubr.bf16.gmra.mxu0 %v1158
    %v4905 = vpop.f32.mrf.mxu0
    %v4906 = vadd.f32 %v4866, %v4905
    %v4907 = vpop.f32.mrf.mxu0
    %v4908 = vpop.f32.mrf.mxu0
    %v4909 = vpop.f32.mrf.mxu0
    %4910 = vdwg.mxu0
    %4911 = vmatprep.subr.bf16.mxu0 0
    %4912 = vmatpush1.bf16.msra.mxu0 %v3702
    %4913 = vmatprep.subr.bf16.mxu0 0
    %4914 = vmatpush1.bf16.msra.mxu0 %v3701
    %4915 = vmatprep.subr.bf16.mxu0 0
    %4916 = vmatpush1.bf16.msra.mxu0 %v3700
    %4917 = vmatprep.subr.bf16.mxu0 0
    %4918 = vmatpush1.bf16.msra.mxu0 %v3699
    %4919 = vmatprep.subr.bf16.mxu0 0
    %4920 = vmatpush1.bf16.msra.mxu0 %v3698
    %4921 = vmatprep.subr.bf16.mxu0 0
    %4922 = vmatpush1.bf16.msra.mxu0 %v3697
    %4923 = vmatprep.subr.bf16.mxu0 0
    %4924 = vmatpush1.bf16.msra.mxu0 %v3696
    %4925 = vmatprep.subr.bf16.mxu0 0
    %4926 = vmatpush1.bf16.msra.mxu0 %v3695
    %4927 = vmatprep.subr.bf16.mxu0 0
    %4928 = vmatpush2.bf16.msra.mxu0 %v3710
    %4929 = vmatprep.subr.bf16.mxu0 0
    %4930 = vmatpush2.bf16.msra.mxu0 %v3709
    %4931 = vmatprep.subr.bf16.mxu0 0
    %4932 = vmatpush2.bf16.msra.mxu0 %v3708
    %4933 = vmatprep.subr.bf16.mxu0 0
    %4934 = vmatpush2.bf16.msra.mxu0 %v3707
    %4935 = vmatprep.subr.bf16.mxu0 0
    %4936 = vmatpush2.bf16.msra.mxu0 %v3706
    %4937 = vmatprep.subr.bf16.mxu0 0
    %4938 = vmatpush2.bf16.msra.mxu0 %v3705
    %4939 = vmatprep.subr.bf16.mxu0 0
    %4940 = vmatpush2.bf16.msra.mxu0 %v3704
    %4941 = vmatprep.subr.bf16.mxu0 0
    %4942 = vmatpush2.bf16.msra.mxu0 %v3703
    %4943 = vmatprep.mubr.bf16.mxu0 %v1198
    %4944 = vmatmul.mubr.bf16.gmra.mxu0 %v1184
    %v4945 = vpop.f32.mrf.mxu0
    %v4946 = vadd.f32 %v4906, %v4945
    %v4947 = vpop.f32.mrf.mxu0
    %v4948 = vpop.f32.mrf.mxu0
    %v4949 = vpop.f32.mrf.mxu0
    %4950 = vdwg.mxu0
    %4951 = vmatprep.subr.bf16.mxu0 0
    %4952 = vmatpush1.bf16.msra.mxu0 %v3718
    %4953 = vmatprep.subr.bf16.mxu0 0
    %4954 = vmatpush1.bf16.msra.mxu0 %v3717
    %4955 = vmatprep.subr.bf16.mxu0 0
    %4956 = vmatpush1.bf16.msra.mxu0 %v3716
    %4957 = vmatprep.subr.bf16.mxu0 0
    %4958 = vmatpush1.bf16.msra.mxu0 %v3715
    %4959 = vmatprep.subr.bf16.mxu0 0
    %4960 = vmatpush1.bf16.msra.mxu0 %v3714
    %4961 = vmatprep.subr.bf16.mxu0 0
    %4962 = vmatpush1.bf16.msra.mxu0 %v3713
    %4963 = vmatprep.subr.bf16.mxu0 0
    %4964 = vmatpush1.bf16.msra.mxu0 %v3712
    %4965 = vmatprep.subr.bf16.mxu0 0
    %4966 = vmatpush1.bf16.msra.mxu0 %v3711
    %4967 = vmatprep.subr.bf16.mxu0 0
    %4968 = vmatpush2.bf16.msra.mxu0 %v3726
    %4969 = vmatprep.subr.bf16.mxu0 0
    %4970 = vmatpush2.bf16.msra.mxu0 %v3725
    %4971 = vmatprep.subr.bf16.mxu0 0
    %4972 = vmatpush2.bf16.msra.mxu0 %v3724
    %4973 = vmatprep.subr.bf16.mxu0 0
    %4974 = vmatpush2.bf16.msra.mxu0 %v3723
    %4975 = vmatprep.subr.bf16.mxu0 0
    %4976 = vmatpush2.bf16.msra.mxu0 %v3722
    %4977 = vmatprep.subr.bf16.mxu0 0
    %4978 = vmatpush2.bf16.msra.mxu0 %v3721
    %4979 = vmatprep.subr.bf16.mxu0 0
    %4980 = vmatpush2.bf16.msra.mxu0 %v3720
    %4981 = vmatprep.subr.bf16.mxu0 0
    %4982 = vmatpush2.bf16.msra.mxu0 %v3719
    %4983 = vmatprep.mubr.bf16.mxu0 %v1208
    %4984 = vmatmul.mubr.bf16.gmra.mxu0 %v1206
    %v4985 = vpop.f32.mrf.mxu0
    %v4986 = vadd.f32 %v4946, %v4985
    %v4987 = vpop.f32.mrf.mxu0
    %v4988 = vpop.f32.mrf.mxu0
    %v4989 = vpop.f32.mrf.mxu0
    %4990 = vdwg.mxu0
    %4991 = vmatprep.subr.bf16.mxu0 0
    %4992 = vmatpush1.bf16.msra.mxu0 %v3734
    %4993 = vmatprep.subr.bf16.mxu0 0
    %4994 = vmatpush1.bf16.msra.mxu0 %v3733
    %4995 = vmatprep.subr.bf16.mxu0 0
    %4996 = vmatpush1.bf16.msra.mxu0 %v3732
    %4997 = vmatprep.subr.bf16.mxu0 0
    %4998 = vmatpush1.bf16.msra.mxu0 %v3731
    %4999 = vmatprep.subr.bf16.mxu0 0
    %5000 = vmatpush1.bf16.msra.mxu0 %v3730
    %5001 = vmatprep.subr.bf16.mxu0 0
    %5002 = vmatpush1.bf16.msra.mxu0 %v3729
    %5003 = vmatprep.subr.bf16.mxu0 0
    %5004 = vmatpush1.bf16.msra.mxu0 %v3728
    %5005 = vmatprep.subr.bf16.mxu0 0
    %5006 = vmatpush1.bf16.msra.mxu0 %v3727
    %5007 = vmatprep.subr.bf16.mxu0 0
    %5008 = vmatpush2.bf16.msra.mxu0 %v3742
    %5009 = vmatprep.subr.bf16.mxu0 0
    %5010 = vmatpush2.bf16.msra.mxu0 %v3741
    %5011 = vmatprep.subr.bf16.mxu0 0
    %5012 = vmatpush2.bf16.msra.mxu0 %v3740
    %5013 = vmatprep.subr.bf16.mxu0 0
    %5014 = vmatpush2.bf16.msra.mxu0 %v3739
    %5015 = vmatprep.subr.bf16.mxu0 0
    %5016 = vmatpush2.bf16.msra.mxu0 %v3738
    %5017 = vmatprep.subr.bf16.mxu0 0
    %5018 = vmatpush2.bf16.msra.mxu0 %v3737
    %5019 = vmatprep.subr.bf16.mxu0 0
    %5020 = vmatpush2.bf16.msra.mxu0 %v3736
    %5021 = vmatprep.subr.bf16.mxu0 0
    %5022 = vmatpush2.bf16.msra.mxu0 %v3735
    %5023 = vmatprep.mubr.bf16.mxu0 %v1205
    %5024 = vmatmul.mubr.bf16.gmra.mxu0 %v1191
    %v5025 = vpop.f32.mrf.mxu0
    %v5026 = vadd.f32 %v4986, %v5025
    %v5027 = vpop.f32.mrf.mxu0
    %v5028 = vpop.f32.mrf.mxu0
    %v5029 = vpop.f32.mrf.mxu0
    %5030 = vdwg.mxu0
    %5031 = vmatprep.subr.bf16.mxu0 0
    %5032 = vmatpush1.bf16.msra.mxu0 %v3750
    %5033 = vmatprep.subr.bf16.mxu0 0
    %5034 = vmatpush1.bf16.msra.mxu0 %v3749
    %5035 = vmatprep.subr.bf16.mxu0 0
    %5036 = vmatpush1.bf16.msra.mxu0 %v3748
    %5037 = vmatprep.subr.bf16.mxu0 0
    %5038 = vmatpush1.bf16.msra.mxu0 %v3747
    %5039 = vmatprep.subr.bf16.mxu0 0
    %5040 = vmatpush1.bf16.msra.mxu0 %v3746
    %5041 = vmatprep.subr.bf16.mxu0 0
    %5042 = vmatpush1.bf16.msra.mxu0 %v3745
    %5043 = vmatprep.subr.bf16.mxu0 0
    %5044 = vmatpush1.bf16.msra.mxu0 %v3744
    %5045 = vmatprep.subr.bf16.mxu0 0
    %5046 = vmatpush1.bf16.msra.mxu0 %v3743
    %5047 = vmatprep.subr.bf16.mxu0 0
    %5048 = vmatpush2.bf16.msra.mxu0 %v3758
    %5049 = vmatprep.subr.bf16.mxu0 0
    %5050 = vmatpush2.bf16.msra.mxu0 %v3757
    %5051 = vmatprep.subr.bf16.mxu0 0
    %5052 = vmatpush2.bf16.msra.mxu0 %v3756
    %5053 = vmatprep.subr.bf16.mxu0 0
    %5054 = vmatpush2.bf16.msra.mxu0 %v3755
    %5055 = vmatprep.subr.bf16.mxu0 0
    %5056 = vmatpush2.bf16.msra.mxu0 %v3754
    %5057 = vmatprep.subr.bf16.mxu0 0
    %5058 = vmatpush2.bf16.msra.mxu0 %v3753
    %5059 = vmatprep.subr.bf16.mxu0 0
    %5060 = vmatpush2.bf16.msra.mxu0 %v3752
    %5061 = vmatprep.subr.bf16.mxu0 0
    %5062 = vmatpush2.bf16.msra.mxu0 %v3751
    %5063 = vmatprep.mubr.bf16.mxu0 %v1209
    %5064 = vmatmul.mubr.bf16.gmra.mxu0 %v1207
    %v5065 = vpop.f32.mrf.mxu0
    %v5066 = vadd.f32 %v5026, %v5065
    %v5067 = vpop.f32.mrf.mxu0
    %v5068 = vpop.f32.mrf.mxu0
    %v5069 = vpop.f32.mrf.mxu0
    %5070 = vdwg.mxu0
    %5071 = vmatprep.subr.bf16.mxu0 0
    %5072 = vmatpush1.bf16.msra.mxu0 %v3766
    %5073 = vmatprep.subr.bf16.mxu0 0
    %5074 = vmatpush1.bf16.msra.mxu0 %v3765
    %5075 = vmatprep.subr.bf16.mxu0 0
    %5076 = vmatpush1.bf16.msra.mxu0 %v3764
    %5077 = vmatprep.subr.bf16.mxu0 0
    %5078 = vmatpush1.bf16.msra.mxu0 %v3763
    %5079 = vmatprep.subr.bf16.mxu0 0
    %5080 = vmatpush1.bf16.msra.mxu0 %v3762
    %5081 = vmatprep.subr.bf16.mxu0 0
    %5082 = vmatpush1.bf16.msra.mxu0 %v3761
    %5083 = vmatprep.subr.bf16.mxu0 0
    %5084 = vmatpush1.bf16.msra.mxu0 %v3760
    %5085 = vmatprep.subr.bf16.mxu0 0
    %5086 = vmatpush1.bf16.msra.mxu0 %v3759
    %5087 = vmatprep.subr.bf16.mxu0 0
    %5088 = vmatpush2.bf16.msra.mxu0 %v3774
    %5089 = vmatprep.subr.bf16.mxu0 0
    %5090 = vmatpush2.bf16.msra.mxu0 %v3773
    %5091 = vmatprep.subr.bf16.mxu0 0
    %5092 = vmatpush2.bf16.msra.mxu0 %v3772
    %5093 = vmatprep.subr.bf16.mxu0 0
    %5094 = vmatpush2.bf16.msra.mxu0 %v3771
    %5095 = vmatprep.subr.bf16.mxu0 0
    %5096 = vmatpush2.bf16.msra.mxu0 %v3770
    %5097 = vmatprep.subr.bf16.mxu0 0
    %5098 = vmatpush2.bf16.msra.mxu0 %v3769
    %5099 = vmatprep.subr.bf16.mxu0 0
    %5100 = vmatpush2.bf16.msra.mxu0 %v3768
    %5101 = vmatprep.subr.bf16.mxu0 0
    %5102 = vmatpush2.bf16.msra.mxu0 %v3767
    %5103 = vmatprep.mubr.bf16.mxu0 %v1247
    %5104 = vmatmul.mubr.bf16.gmra.mxu0 %v1233
    %v5105 = vpop.f32.mrf.mxu0
    %v5106 = vadd.f32 %v5066, %v5105
    %v5107 = vpop.f32.mrf.mxu0
    %v5108 = vpop.f32.mrf.mxu0
    %v5109 = vpop.f32.mrf.mxu0
    %5110 = vdwg.mxu0
    %5111 = vmatprep.subr.bf16.mxu0 0
    %5112 = vmatpush1.bf16.msra.mxu0 %v3782
    %5113 = vmatprep.subr.bf16.mxu0 0
    %5114 = vmatpush1.bf16.msra.mxu0 %v3781
    %5115 = vmatprep.subr.bf16.mxu0 0
    %5116 = vmatpush1.bf16.msra.mxu0 %v3780
    %5117 = vmatprep.subr.bf16.mxu0 0
    %5118 = vmatpush1.bf16.msra.mxu0 %v3779
    %5119 = vmatprep.subr.bf16.mxu0 0
    %5120 = vmatpush1.bf16.msra.mxu0 %v3778
    %5121 = vmatprep.subr.bf16.mxu0 0
    %5122 = vmatpush1.bf16.msra.mxu0 %v3777
    %5123 = vmatprep.subr.bf16.mxu0 0
    %5124 = vmatpush1.bf16.msra.mxu0 %v3776
    %5125 = vmatprep.subr.bf16.mxu0 0
    %5126 = vmatpush1.bf16.msra.mxu0 %v3775
    %5127 = vmatprep.subr.bf16.mxu0 0
    %5128 = vmatpush2.bf16.msra.mxu0 %v3790
    %5129 = vmatprep.subr.bf16.mxu0 0
    %5130 = vmatpush2.bf16.msra.mxu0 %v3789
    %5131 = vmatprep.subr.bf16.mxu0 0
    %5132 = vmatpush2.bf16.msra.mxu0 %v3788
    %5133 = vmatprep.subr.bf16.mxu0 0
    %5134 = vmatpush2.bf16.msra.mxu0 %v3787
    %5135 = vmatprep.subr.bf16.mxu0 0
    %5136 = vmatpush2.bf16.msra.mxu0 %v3786
    %5137 = vmatprep.subr.bf16.mxu0 0
    %5138 = vmatpush2.bf16.msra.mxu0 %v3785
    %5139 = vmatprep.subr.bf16.mxu0 0
    %5140 = vmatpush2.bf16.msra.mxu0 %v3784
    %5141 = vmatprep.subr.bf16.mxu0 0
    %5142 = vmatpush2.bf16.msra.mxu0 %v3783
    %5143 = vmatprep.mubr.bf16.mxu0 %v1257
    %5144 = vmatmul.mubr.bf16.gmra.mxu0 %v1255
    %v5145 = vpop.f32.mrf.mxu0
    %v5146 = vadd.f32 %v5106, %v5145
    %v5147 = vpop.f32.mrf.mxu0
    %v5148 = vpop.f32.mrf.mxu0
    %v5149 = vpop.f32.mrf.mxu0
    %5150 = vdwg.mxu0
    %5151 = vmatprep.subr.bf16.mxu0 0
    %5152 = vmatpush1.bf16.msra.mxu0 %v3798
    %5153 = vmatprep.subr.bf16.mxu0 0
    %5154 = vmatpush1.bf16.msra.mxu0 %v3797
    %5155 = vmatprep.subr.bf16.mxu0 0
    %5156 = vmatpush1.bf16.msra.mxu0 %v3796
    %5157 = vmatprep.subr.bf16.mxu0 0
    %5158 = vmatpush1.bf16.msra.mxu0 %v3795
    %5159 = vmatprep.subr.bf16.mxu0 0
    %5160 = vmatpush1.bf16.msra.mxu0 %v3794
    %5161 = vmatprep.subr.bf16.mxu0 0
    %5162 = vmatpush1.bf16.msra.mxu0 %v3793
    %5163 = vmatprep.subr.bf16.mxu0 0
    %5164 = vmatpush1.bf16.msra.mxu0 %v3792
    %5165 = vmatprep.subr.bf16.mxu0 0
    %5166 = vmatpush1.bf16.msra.mxu0 %v3791
    %5167 = vmatprep.subr.bf16.mxu0 0
    %5168 = vmatpush2.bf16.msra.mxu0 %v3806
    %5169 = vmatprep.subr.bf16.mxu0 0
    %5170 = vmatpush2.bf16.msra.mxu0 %v3805
    %5171 = vmatprep.subr.bf16.mxu0 0
    %5172 = vmatpush2.bf16.msra.mxu0 %v3804
    %5173 = vmatprep.subr.bf16.mxu0 0
    %5174 = vmatpush2.bf16.msra.mxu0 %v3803
    %5175 = vmatprep.subr.bf16.mxu0 0
    %5176 = vmatpush2.bf16.msra.mxu0 %v3802
    %5177 = vmatprep.subr.bf16.mxu0 0
    %5178 = vmatpush2.bf16.msra.mxu0 %v3801
    %5179 = vmatprep.subr.bf16.mxu0 0
    %5180 = vmatpush2.bf16.msra.mxu0 %v3800
    %5181 = vmatprep.subr.bf16.mxu0 0
    %5182 = vmatpush2.bf16.msra.mxu0 %v3799
    %5183 = vmatprep.mubr.bf16.mxu0 %v1254
    %5184 = vmatmul.mubr.bf16.gmra.mxu0 %v1240
    %v5185 = vpop.f32.mrf.mxu0
    %v5186 = vadd.f32 %v5146, %v5185
    %v5187 = vpop.f32.mrf.mxu0
    %v5188 = vpop.f32.mrf.mxu0
    %v5189 = vpop.f32.mrf.mxu0
    %5190 = vdwg.mxu0
    %5191 = vmatprep.subr.bf16.mxu0 0
    %5192 = vmatpush1.bf16.msra.mxu0 %v3814
    %5193 = vmatprep.subr.bf16.mxu0 0
    %5194 = vmatpush1.bf16.msra.mxu0 %v3813
    %5195 = vmatprep.subr.bf16.mxu0 0
    %5196 = vmatpush1.bf16.msra.mxu0 %v3812
    %5197 = vmatprep.subr.bf16.mxu0 0
    %5198 = vmatpush1.bf16.msra.mxu0 %v3811
    %5199 = vmatprep.subr.bf16.mxu0 0
    %5200 = vmatpush1.bf16.msra.mxu0 %v3810
    %5201 = vmatprep.subr.bf16.mxu0 0
    %5202 = vmatpush1.bf16.msra.mxu0 %v3809
    %5203 = vmatprep.subr.bf16.mxu0 0
    %5204 = vmatpush1.bf16.msra.mxu0 %v3808
    %5205 = vmatprep.subr.bf16.mxu0 0
    %5206 = vmatpush1.bf16.msra.mxu0 %v3807
    %5207 = vmatprep.subr.bf16.mxu0 0
    %5208 = vmatpush2.bf16.msra.mxu0 %v3822
    %5209 = vmatprep.subr.bf16.mxu0 0
    %5210 = vmatpush2.bf16.msra.mxu0 %v3821
    %5211 = vmatprep.subr.bf16.mxu0 0
    %5212 = vmatpush2.bf16.msra.mxu0 %v3820
    %5213 = vmatprep.subr.bf16.mxu0 0
    %5214 = vmatpush2.bf16.msra.mxu0 %v3819
    %5215 = vmatprep.subr.bf16.mxu0 0
    %5216 = vmatpush2.bf16.msra.mxu0 %v3818
    %5217 = vmatprep.subr.bf16.mxu0 0
    %5218 = vmatpush2.bf16.msra.mxu0 %v3817
    %5219 = vmatprep.subr.bf16.mxu0 0
    %5220 = vmatpush2.bf16.msra.mxu0 %v3816
    %5221 = vmatprep.subr.bf16.mxu0 0
    %5222 = vmatpush2.bf16.msra.mxu0 %v3815
    %5223 = vmatprep.mubr.bf16.mxu0 %v1258
    %5224 = vmatmul.mubr.bf16.gmra.mxu0 %v1256
    %v5225 = vpop.f32.mrf.mxu0
    %v5226 = vadd.f32 %v5186, %v5225
    %v5227 = vpop.f32.mrf.mxu0
    %v5228 = vpop.f32.mrf.mxu0
    %v5229 = vpop.f32.mrf.mxu0
    %5230 = vdwg.mxu0
    %5231 = vmatprep.subr.bf16.mxu0 0
    %5232 = vmatpush1.bf16.msra.mxu0 %v3830
    %5233 = vmatprep.subr.bf16.mxu0 0
    %5234 = vmatpush1.bf16.msra.mxu0 %v3829
    %5235 = vmatprep.subr.bf16.mxu0 0
    %5236 = vmatpush1.bf16.msra.mxu0 %v3828
    %5237 = vmatprep.subr.bf16.mxu0 0
    %5238 = vmatpush1.bf16.msra.mxu0 %v3827
    %5239 = vmatprep.subr.bf16.mxu0 0
    %5240 = vmatpush1.bf16.msra.mxu0 %v3826
    %5241 = vmatprep.subr.bf16.mxu0 0
    %5242 = vmatpush1.bf16.msra.mxu0 %v3825
    %5243 = vmatprep.subr.bf16.mxu0 0
    %5244 = vmatpush1.bf16.msra.mxu0 %v3824
    %5245 = vmatprep.subr.bf16.mxu0 0
    %5246 = vmatpush1.bf16.msra.mxu0 %v3823
    %5247 = vmatprep.subr.bf16.mxu0 0
    %5248 = vmatpush2.bf16.msra.mxu0 %v3838
    %5249 = vmatprep.subr.bf16.mxu0 0
    %5250 = vmatpush2.bf16.msra.mxu0 %v3837
    %5251 = vmatprep.subr.bf16.mxu0 0
    %5252 = vmatpush2.bf16.msra.mxu0 %v3836
    %5253 = vmatprep.subr.bf16.mxu0 0
    %5254 = vmatpush2.bf16.msra.mxu0 %v3835
    %5255 = vmatprep.subr.bf16.mxu0 0
    %5256 = vmatpush2.bf16.msra.mxu0 %v3834
    %5257 = vmatprep.subr.bf16.mxu0 0
    %5258 = vmatpush2.bf16.msra.mxu0 %v3833
    %5259 = vmatprep.subr.bf16.mxu0 0
    %5260 = vmatpush2.bf16.msra.mxu0 %v3832
    %5261 = vmatprep.subr.bf16.mxu0 0
    %5262 = vmatpush2.bf16.msra.mxu0 %v3831
    %5263 = vmatprep.mubr.bf16.mxu0 %v1296
    %5264 = vmatmul.mubr.bf16.gmra.mxu0 %v1282
    %v5265 = vpop.f32.mrf.mxu0
    %v5266 = vadd.f32 %v5226, %v5265
    %v5267 = vpop.f32.mrf.mxu0
    %v5268 = vpop.f32.mrf.mxu0
    %v5269 = vpop.f32.mrf.mxu0
    %5270 = vdwg.mxu0
    %5271 = vmatprep.subr.bf16.mxu0 0
    %5272 = vmatpush1.bf16.msra.mxu0 %v3846
    %5273 = vmatprep.subr.bf16.mxu0 0
    %5274 = vmatpush1.bf16.msra.mxu0 %v3845
    %5275 = vmatprep.subr.bf16.mxu0 0
    %5276 = vmatpush1.bf16.msra.mxu0 %v3844
    %5277 = vmatprep.subr.bf16.mxu0 0
    %5278 = vmatpush1.bf16.msra.mxu0 %v3843
    %5279 = vmatprep.subr.bf16.mxu0 0
    %5280 = vmatpush1.bf16.msra.mxu0 %v3842
    %5281 = vmatprep.subr.bf16.mxu0 0
    %5282 = vmatpush1.bf16.msra.mxu0 %v3841
    %5283 = vmatprep.subr.bf16.mxu0 0
    %5284 = vmatpush1.bf16.msra.mxu0 %v3840
    %5285 = vmatprep.subr.bf16.mxu0 0
    %5286 = vmatpush1.bf16.msra.mxu0 %v3839
    %5287 = vmatprep.subr.bf16.mxu0 0
    %5288 = vmatpush2.bf16.msra.mxu0 %v3854
    %5289 = vmatprep.subr.bf16.mxu0 0
    %5290 = vmatpush2.bf16.msra.mxu0 %v3853
    %5291 = vmatprep.subr.bf16.mxu0 0
    %5292 = vmatpush2.bf16.msra.mxu0 %v3852
    %5293 = vmatprep.subr.bf16.mxu0 0
    %5294 = vmatpush2.bf16.msra.mxu0 %v3851
    %5295 = vmatprep.subr.bf16.mxu0 0
    %5296 = vmatpush2.bf16.msra.mxu0 %v3850
    %5297 = vmatprep.subr.bf16.mxu0 0
    %5298 = vmatpush2.bf16.msra.mxu0 %v3849
    %5299 = vmatprep.subr.bf16.mxu0 0
    %5300 = vmatpush2.bf16.msra.mxu0 %v3848
    %5301 = vmatprep.subr.bf16.mxu0 0
    %5302 = vmatpush2.bf16.msra.mxu0 %v3847
    %5303 = vmatprep.mubr.bf16.mxu0 %v1306
    %5304 = vmatmul.mubr.bf16.gmra.mxu0 %v1304
    %v5305 = vpop.f32.mrf.mxu0
    %v5306 = vadd.f32 %v5266, %v5305
    %v5307 = vpop.f32.mrf.mxu0
    %v5308 = vpop.f32.mrf.mxu0
    %v5309 = vpop.f32.mrf.mxu0
    %5310 = vdwg.mxu0
    %5311 = vmatprep.subr.bf16.mxu0 0
    %5312 = vmatpush1.bf16.msra.mxu0 %v3862
    %5313 = vmatprep.subr.bf16.mxu0 0
    %5314 = vmatpush1.bf16.msra.mxu0 %v3861
    %5315 = vmatprep.subr.bf16.mxu0 0
    %5316 = vmatpush1.bf16.msra.mxu0 %v3860
    %5317 = vmatprep.subr.bf16.mxu0 0
    %5318 = vmatpush1.bf16.msra.mxu0 %v3859
    %5319 = vmatprep.subr.bf16.mxu0 0
    %5320 = vmatpush1.bf16.msra.mxu0 %v3858
    %5321 = vmatprep.subr.bf16.mxu0 0
    %5322 = vmatpush1.bf16.msra.mxu0 %v3857
    %5323 = vmatprep.subr.bf16.mxu0 0
    %5324 = vmatpush1.bf16.msra.mxu0 %v3856
    %5325 = vmatprep.subr.bf16.mxu0 0
    %5326 = vmatpush1.bf16.msra.mxu0 %v3855
    %5327 = vmatprep.subr.bf16.mxu0 0
    %5328 = vmatpush2.bf16.msra.mxu0 %v3870
    %5329 = vmatprep.subr.bf16.mxu0 0
    %5330 = vmatpush2.bf16.msra.mxu0 %v3869
    %5331 = vmatprep.subr.bf16.mxu0 0
    %5332 = vmatpush2.bf16.msra.mxu0 %v3868
    %5333 = vmatprep.subr.bf16.mxu0 0
    %5334 = vmatpush2.bf16.msra.mxu0 %v3867
    %5335 = vmatprep.subr.bf16.mxu0 0
    %5336 = vmatpush2.bf16.msra.mxu0 %v3866
    %5337 = vmatprep.subr.bf16.mxu0 0
    %5338 = vmatpush2.bf16.msra.mxu0 %v3865
    %5339 = vmatprep.subr.bf16.mxu0 0
    %5340 = vmatpush2.bf16.msra.mxu0 %v3864
    %5341 = vmatprep.subr.bf16.mxu0 0
    %5342 = vmatpush2.bf16.msra.mxu0 %v3863
    %5343 = vmatprep.mubr.bf16.mxu0 %v1303
    %5344 = vmatmul.mubr.bf16.gmra.mxu0 %v1289
    %v5345 = vpop.f32.mrf.mxu0
    %v5346 = vadd.f32 %v5306, %v5345
    %v5347 = vpop.f32.mrf.mxu0
    %v5348 = vpop.f32.mrf.mxu0
    %v5349 = vpop.f32.mrf.mxu0
    %5350 = vdwg.mxu0
    %5351 = vmatprep.subr.bf16.mxu0 0
    %5352 = vmatpush1.bf16.msra.mxu0 %v3878
    %5353 = vmatprep.subr.bf16.mxu0 0
    %5354 = vmatpush1.bf16.msra.mxu0 %v3877
    %5355 = vmatprep.subr.bf16.mxu0 0
    %5356 = vmatpush1.bf16.msra.mxu0 %v3876
    %5357 = vmatprep.subr.bf16.mxu0 0
    %5358 = vmatpush1.bf16.msra.mxu0 %v3875
    %5359 = vmatprep.subr.bf16.mxu0 0
    %5360 = vmatpush1.bf16.msra.mxu0 %v3874
    %5361 = vmatprep.subr.bf16.mxu0 0
    %5362 = vmatpush1.bf16.msra.mxu0 %v3873
    %5363 = vmatprep.subr.bf16.mxu0 0
    %5364 = vmatpush1.bf16.msra.mxu0 %v3872
    %5365 = vmatprep.subr.bf16.mxu0 0
    %5366 = vmatpush1.bf16.msra.mxu0 %v3871
    %5367 = vmatprep.subr.bf16.mxu0 0
    %5368 = vmatpush2.bf16.msra.mxu0 %v3886
    %5369 = vmatprep.subr.bf16.mxu0 0
    %5370 = vmatpush2.bf16.msra.mxu0 %v3885
    %5371 = vmatprep.subr.bf16.mxu0 0
    %5372 = vmatpush2.bf16.msra.mxu0 %v3884
    %5373 = vmatprep.subr.bf16.mxu0 0
    %5374 = vmatpush2.bf16.msra.mxu0 %v3883
    %5375 = vmatprep.subr.bf16.mxu0 0
    %5376 = vmatpush2.bf16.msra.mxu0 %v3882
    %5377 = vmatprep.subr.bf16.mxu0 0
    %5378 = vmatpush2.bf16.msra.mxu0 %v3881
    %5379 = vmatprep.subr.bf16.mxu0 0
    %5380 = vmatpush2.bf16.msra.mxu0 %v3880
    %5381 = vmatprep.subr.bf16.mxu0 0
    %5382 = vmatpush2.bf16.msra.mxu0 %v3879
    %5383 = vmatprep.mubr.bf16.mxu0 %v1307
    %5384 = vmatmul.mubr.bf16.gmra.mxu0 %v1305
    %v5385 = vpop.f32.mrf.mxu0
    %v5386 = vadd.f32 %v5346, %v5385
    %v5387 = vpop.f32.mrf.mxu0
    %v5388 = vpop.f32.mrf.mxu0
    %v5389 = vpop.f32.mrf.mxu0
    %5390 = vdwg.mxu0
    %5391 = vmatprep.subr.bf16.mxu0 0
    %5392 = vmatpush1.bf16.msra.mxu0 %v3894
    %5393 = vmatprep.subr.bf16.mxu0 0
    %5394 = vmatpush1.bf16.msra.mxu0 %v3893
    %5395 = vmatprep.subr.bf16.mxu0 0
    %5396 = vmatpush1.bf16.msra.mxu0 %v3892
    %5397 = vmatprep.subr.bf16.mxu0 0
    %5398 = vmatpush1.bf16.msra.mxu0 %v3891
    %5399 = vmatprep.subr.bf16.mxu0 0
    %5400 = vmatpush1.bf16.msra.mxu0 %v3890
    %5401 = vmatprep.subr.bf16.mxu0 0
    %5402 = vmatpush1.bf16.msra.mxu0 %v3889
    %5403 = vmatprep.subr.bf16.mxu0 0
    %5404 = vmatpush1.bf16.msra.mxu0 %v3888
    %5405 = vmatprep.subr.bf16.mxu0 0
    %5406 = vmatpush1.bf16.msra.mxu0 %v3887
    %5407 = vmatprep.subr.bf16.mxu0 0
    %5408 = vmatpush2.bf16.msra.mxu0 %v3902
    %5409 = vmatprep.subr.bf16.mxu0 0
    %5410 = vmatpush2.bf16.msra.mxu0 %v3901
    %5411 = vmatprep.subr.bf16.mxu0 0
    %5412 = vmatpush2.bf16.msra.mxu0 %v3900
    %5413 = vmatprep.subr.bf16.mxu0 0
    %5414 = vmatpush2.bf16.msra.mxu0 %v3899
    %5415 = vmatprep.subr.bf16.mxu0 0
    %5416 = vmatpush2.bf16.msra.mxu0 %v3898
    %5417 = vmatprep.subr.bf16.mxu0 0
    %5418 = vmatpush2.bf16.msra.mxu0 %v3897
    %5419 = vmatprep.subr.bf16.mxu0 0
    %5420 = vmatpush2.bf16.msra.mxu0 %v3896
    %5421 = vmatprep.subr.bf16.mxu0 0
    %5422 = vmatpush2.bf16.msra.mxu0 %v3895
    %5423 = vmatprep.mubr.bf16.mxu0 %v1345
    %5424 = vmatmul.mubr.bf16.gmra.mxu0 %v1331
    %v5425 = vpop.f32.mrf.mxu0
    %v5426 = vadd.f32 %v5386, %v5425
    %v5427 = vpop.f32.mrf.mxu0
    %v5428 = vpop.f32.mrf.mxu0
    %v5429 = vpop.f32.mrf.mxu0
    %5430 = vdwg.mxu0
    %5431 = vmatprep.subr.bf16.mxu0 0
    %5432 = vmatpush1.bf16.msra.mxu0 %v3910
    %5433 = vmatprep.subr.bf16.mxu0 0
    %5434 = vmatpush1.bf16.msra.mxu0 %v3909
    %5435 = vmatprep.subr.bf16.mxu0 0
    %5436 = vmatpush1.bf16.msra.mxu0 %v3908
    %5437 = vmatprep.subr.bf16.mxu0 0
    %5438 = vmatpush1.bf16.msra.mxu0 %v3907
    %5439 = vmatprep.subr.bf16.mxu0 0
    %5440 = vmatpush1.bf16.msra.mxu0 %v3906
    %5441 = vmatprep.subr.bf16.mxu0 0
    %5442 = vmatpush1.bf16.msra.mxu0 %v3905
    %5443 = vmatprep.subr.bf16.mxu0 0
    %5444 = vmatpush1.bf16.msra.mxu0 %v3904
    %5445 = vmatprep.subr.bf16.mxu0 0
    %5446 = vmatpush1.bf16.msra.mxu0 %v3903
    %5447 = vmatprep.subr.bf16.mxu0 0
    %5448 = vmatpush2.bf16.msra.mxu0 %v3918
    %5449 = vmatprep.subr.bf16.mxu0 0
    %5450 = vmatpush2.bf16.msra.mxu0 %v3917
    %5451 = vmatprep.subr.bf16.mxu0 0
    %5452 = vmatpush2.bf16.msra.mxu0 %v3916
    %5453 = vmatprep.subr.bf16.mxu0 0
    %5454 = vmatpush2.bf16.msra.mxu0 %v3915
    %5455 = vmatprep.subr.bf16.mxu0 0
    %5456 = vmatpush2.bf16.msra.mxu0 %v3914
    %5457 = vmatprep.subr.bf16.mxu0 0
    %5458 = vmatpush2.bf16.msra.mxu0 %v3913
    %5459 = vmatprep.subr.bf16.mxu0 0
    %5460 = vmatpush2.bf16.msra.mxu0 %v3912
    %5461 = vmatprep.subr.bf16.mxu0 0
    %5462 = vmatpush2.bf16.msra.mxu0 %v3911
    %5463 = vmatprep.mubr.bf16.mxu0 %v1355
    %5464 = vmatmul.mubr.bf16.gmra.mxu0 %v1353
    %v5465 = vpop.f32.mrf.mxu0
    %v5466 = vadd.f32 %v5426, %v5465
    %v5467 = vpop.f32.mrf.mxu0
    %v5468 = vpop.f32.mrf.mxu0
    %v5469 = vpop.f32.mrf.mxu0
    %5470 = vdwg.mxu0
    %5471 = vmatprep.subr.bf16.mxu0 0
    %5472 = vmatpush1.bf16.msra.mxu0 %v3926
    %5473 = vmatprep.subr.bf16.mxu0 0
    %5474 = vmatpush1.bf16.msra.mxu0 %v3925
    %5475 = vmatprep.subr.bf16.mxu0 0
    %5476 = vmatpush1.bf16.msra.mxu0 %v3924
    %5477 = vmatprep.subr.bf16.mxu0 0
    %5478 = vmatpush1.bf16.msra.mxu0 %v3923
    %5479 = vmatprep.subr.bf16.mxu0 0
    %5480 = vmatpush1.bf16.msra.mxu0 %v3922
    %5481 = vmatprep.subr.bf16.mxu0 0
    %5482 = vmatpush1.bf16.msra.mxu0 %v3921
    %5483 = vmatprep.subr.bf16.mxu0 0
    %5484 = vmatpush1.bf16.msra.mxu0 %v3920
    %5485 = vmatprep.subr.bf16.mxu0 0
    %5486 = vmatpush1.bf16.msra.mxu0 %v3919
    %5487 = vmatprep.subr.bf16.mxu0 0
    %5488 = vmatpush2.bf16.msra.mxu0 %v3934
    %5489 = vmatprep.subr.bf16.mxu0 0
    %5490 = vmatpush2.bf16.msra.mxu0 %v3933
    %5491 = vmatprep.subr.bf16.mxu0 0
    %5492 = vmatpush2.bf16.msra.mxu0 %v3932
    %5493 = vmatprep.subr.bf16.mxu0 0
    %5494 = vmatpush2.bf16.msra.mxu0 %v3931
    %5495 = vmatprep.subr.bf16.mxu0 0
    %5496 = vmatpush2.bf16.msra.mxu0 %v3930
    %5497 = vmatprep.subr.bf16.mxu0 0
    %5498 = vmatpush2.bf16.msra.mxu0 %v3929
    %5499 = vmatprep.subr.bf16.mxu0 0
    %5500 = vmatpush2.bf16.msra.mxu0 %v3928
    %5501 = vmatprep.subr.bf16.mxu0 0
    %5502 = vmatpush2.bf16.msra.mxu0 %v3927
    %5503 = vmatprep.mubr.bf16.mxu0 %v1352
    %5504 = vmatmul.mubr.bf16.gmra.mxu0 %v1338
    %v5505 = vpop.f32.mrf.mxu0
    %v5506 = vadd.f32 %v5466, %v5505
    %v5507 = vpop.f32.mrf.mxu0
    %v5508 = vpop.f32.mrf.mxu0
    %v5509 = vpop.f32.mrf.mxu0
    %5510 = vdwg.mxu0
    %5511 = vmatprep.subr.bf16.mxu0 0
    %5512 = vmatpush1.bf16.msra.mxu0 %v3942
    %5513 = vmatprep.subr.bf16.mxu0 0
    %5514 = vmatpush1.bf16.msra.mxu0 %v3941
    %5515 = vmatprep.subr.bf16.mxu0 0
    %5516 = vmatpush1.bf16.msra.mxu0 %v3940
    %5517 = vmatprep.subr.bf16.mxu0 0
    %5518 = vmatpush1.bf16.msra.mxu0 %v3939
    %5519 = vmatprep.subr.bf16.mxu0 0
    %5520 = vmatpush1.bf16.msra.mxu0 %v3938
    %5521 = vmatprep.subr.bf16.mxu0 0
    %5522 = vmatpush1.bf16.msra.mxu0 %v3937
    %5523 = vmatprep.subr.bf16.mxu0 0
    %5524 = vmatpush1.bf16.msra.mxu0 %v3936
    %5525 = vmatprep.subr.bf16.mxu0 0
    %5526 = vmatpush1.bf16.msra.mxu0 %v3935
    %5527 = vmatprep.subr.bf16.mxu0 0
    %5528 = vmatpush2.bf16.msra.mxu0 %v3950
    %5529 = vmatprep.subr.bf16.mxu0 0
    %5530 = vmatpush2.bf16.msra.mxu0 %v3949
    %5531 = vmatprep.subr.bf16.mxu0 0
    %5532 = vmatpush2.bf16.msra.mxu0 %v3948
    %5533 = vmatprep.subr.bf16.mxu0 0
    %5534 = vmatpush2.bf16.msra.mxu0 %v3947
    %5535 = vmatprep.subr.bf16.mxu0 0
    %5536 = vmatpush2.bf16.msra.mxu0 %v3946
    %5537 = vmatprep.subr.bf16.mxu0 0
    %5538 = vmatpush2.bf16.msra.mxu0 %v3945
    %5539 = vmatprep.subr.bf16.mxu0 0
    %5540 = vmatpush2.bf16.msra.mxu0 %v3944
    %5541 = vmatprep.subr.bf16.mxu0 0
    %5542 = vmatpush2.bf16.msra.mxu0 %v3943
    %5543 = vmatprep.mubr.bf16.mxu0 %v1356
    %5544 = vmatmul.mubr.bf16.gmra.mxu0 %v1354
    %v5545 = vpop.f32.mrf.mxu0
    %v5546 = vadd.f32 %v5506, %v5545
    %v5547 = vpop.f32.mrf.mxu0
    %v5548 = vpop.f32.mrf.mxu0
    %v5549 = vpop.f32.mrf.mxu0
    %5550 = vdwg.mxu0
    %5551 = vmatprep.subr.bf16.mxu0 0
    %5552 = vmatpush1.bf16.msra.mxu0 %v3958
    %5553 = vmatprep.subr.bf16.mxu0 0
    %5554 = vmatpush1.bf16.msra.mxu0 %v3957
    %5555 = vmatprep.subr.bf16.mxu0 0
    %5556 = vmatpush1.bf16.msra.mxu0 %v3956
    %5557 = vmatprep.subr.bf16.mxu0 0
    %5558 = vmatpush1.bf16.msra.mxu0 %v3955
    %5559 = vmatprep.subr.bf16.mxu0 0
    %5560 = vmatpush1.bf16.msra.mxu0 %v3954
    %5561 = vmatprep.subr.bf16.mxu0 0
    %5562 = vmatpush1.bf16.msra.mxu0 %v3953
    %5563 = vmatprep.subr.bf16.mxu0 0
    %5564 = vmatpush1.bf16.msra.mxu0 %v3952
    %5565 = vmatprep.subr.bf16.mxu0 0
    %5566 = vmatpush1.bf16.msra.mxu0 %v3951
    %5567 = vmatprep.subr.bf16.mxu0 0
    %5568 = vmatpush2.bf16.msra.mxu0 %v3966
    %5569 = vmatprep.subr.bf16.mxu0 0
    %5570 = vmatpush2.bf16.msra.mxu0 %v3965
    %5571 = vmatprep.subr.bf16.mxu0 0
    %5572 = vmatpush2.bf16.msra.mxu0 %v3964
    %5573 = vmatprep.subr.bf16.mxu0 0
    %5574 = vmatpush2.bf16.msra.mxu0 %v3963
    %5575 = vmatprep.subr.bf16.mxu0 0
    %5576 = vmatpush2.bf16.msra.mxu0 %v3962
    %5577 = vmatprep.subr.bf16.mxu0 0
    %5578 = vmatpush2.bf16.msra.mxu0 %v3961
    %5579 = vmatprep.subr.bf16.mxu0 0
    %5580 = vmatpush2.bf16.msra.mxu0 %v3960
    %5581 = vmatprep.subr.bf16.mxu0 0
    %5582 = vmatpush2.bf16.msra.mxu0 %v3959
    %5583 = vmatprep.mubr.bf16.mxu0 %v1394
    %5584 = vmatmul.mubr.bf16.gmra.mxu0 %v1380
    %v5585 = vpop.f32.mrf.mxu0
    %v5586 = vadd.f32 %v5546, %v5585
    %v5587 = vpop.f32.mrf.mxu0
    %v5588 = vpop.f32.mrf.mxu0
    %v5589 = vpop.f32.mrf.mxu0
    %5590 = vdwg.mxu0
    %5591 = vmatprep.subr.bf16.mxu0 0
    %5592 = vmatpush1.bf16.msra.mxu0 %v3974
    %5593 = vmatprep.subr.bf16.mxu0 0
    %5594 = vmatpush1.bf16.msra.mxu0 %v3973
    %5595 = vmatprep.subr.bf16.mxu0 0
    %5596 = vmatpush1.bf16.msra.mxu0 %v3972
    %5597 = vmatprep.subr.bf16.mxu0 0
    %5598 = vmatpush1.bf16.msra.mxu0 %v3971
    %5599 = vmatprep.subr.bf16.mxu0 0
    %5600 = vmatpush1.bf16.msra.mxu0 %v3970
    %5601 = vmatprep.subr.bf16.mxu0 0
    %5602 = vmatpush1.bf16.msra.mxu0 %v3969
    %5603 = vmatprep.subr.bf16.mxu0 0
    %5604 = vmatpush1.bf16.msra.mxu0 %v3968
    %5605 = vmatprep.subr.bf16.mxu0 0
    %5606 = vmatpush1.bf16.msra.mxu0 %v3967
    %5607 = vmatprep.subr.bf16.mxu0 0
    %5608 = vmatpush2.bf16.msra.mxu0 %v3982
    %5609 = vmatprep.subr.bf16.mxu0 0
    %5610 = vmatpush2.bf16.msra.mxu0 %v3981
    %5611 = vmatprep.subr.bf16.mxu0 0
    %5612 = vmatpush2.bf16.msra.mxu0 %v3980
    %5613 = vmatprep.subr.bf16.mxu0 0
    %5614 = vmatpush2.bf16.msra.mxu0 %v3979
    %5615 = vmatprep.subr.bf16.mxu0 0
    %5616 = vmatpush2.bf16.msra.mxu0 %v3978
    %5617 = vmatprep.subr.bf16.mxu0 0
    %5618 = vmatpush2.bf16.msra.mxu0 %v3977
    %5619 = vmatprep.subr.bf16.mxu0 0
    %5620 = vmatpush2.bf16.msra.mxu0 %v3976
    %5621 = vmatprep.subr.bf16.mxu0 0
    %5622 = vmatpush2.bf16.msra.mxu0 %v3975
    %5623 = vmatprep.mubr.bf16.mxu0 %v1404
    %5624 = vmatmul.mubr.bf16.gmra.mxu0 %v1402
    %v5625 = vpop.f32.mrf.mxu0
    %v5626 = vadd.f32 %v5586, %v5625
    %v5627 = vpop.f32.mrf.mxu0
    %v5628 = vpop.f32.mrf.mxu0
    %v5629 = vpop.f32.mrf.mxu0
    %5630 = vdwg.mxu0
    %5631 = vmatprep.subr.bf16.mxu0 0
    %5632 = vmatpush1.bf16.msra.mxu0 %v3990
    %5633 = vmatprep.subr.bf16.mxu0 0
    %5634 = vmatpush1.bf16.msra.mxu0 %v3989
    %5635 = vmatprep.subr.bf16.mxu0 0
    %5636 = vmatpush1.bf16.msra.mxu0 %v3988
    %5637 = vmatprep.subr.bf16.mxu0 0
    %5638 = vmatpush1.bf16.msra.mxu0 %v3987
    %5639 = vmatprep.subr.bf16.mxu0 0
    %5640 = vmatpush1.bf16.msra.mxu0 %v3986
    %5641 = vmatprep.subr.bf16.mxu0 0
    %5642 = vmatpush1.bf16.msra.mxu0 %v3985
    %5643 = vmatprep.subr.bf16.mxu0 0
    %5644 = vmatpush1.bf16.msra.mxu0 %v3984
    %5645 = vmatprep.subr.bf16.mxu0 0
    %5646 = vmatpush1.bf16.msra.mxu0 %v3983
    %5647 = vmatprep.subr.bf16.mxu0 0
    %5648 = vmatpush2.bf16.msra.mxu0 %v3998
    %5649 = vmatprep.subr.bf16.mxu0 0
    %5650 = vmatpush2.bf16.msra.mxu0 %v3997
    %5651 = vmatprep.subr.bf16.mxu0 0
    %5652 = vmatpush2.bf16.msra.mxu0 %v3996
    %5653 = vmatprep.subr.bf16.mxu0 0
    %5654 = vmatpush2.bf16.msra.mxu0 %v3995
    %5655 = vmatprep.subr.bf16.mxu0 0
    %5656 = vmatpush2.bf16.msra.mxu0 %v3994
    %5657 = vmatprep.subr.bf16.mxu0 0
    %5658 = vmatpush2.bf16.msra.mxu0 %v3993
    %5659 = vmatprep.subr.bf16.mxu0 0
    %5660 = vmatpush2.bf16.msra.mxu0 %v3992
    %5661 = vmatprep.subr.bf16.mxu0 0
    %5662 = vmatpush2.bf16.msra.mxu0 %v3991
    %5663 = vmatprep.mubr.bf16.mxu0 %v1401
    %5664 = vmatmul.mubr.bf16.gmra.mxu0 %v1387
    %v5665 = vpop.f32.mrf.mxu0
    %v5666 = vadd.f32 %v5626, %v5665
    %v5667 = vpop.f32.mrf.mxu0
    %v5668 = vpop.f32.mrf.mxu0
    %v5669 = vpop.f32.mrf.mxu0
    %5670 = vdwg.mxu0
    %5671 = vmatprep.subr.bf16.mxu0 0
    %5672 = vmatpush1.bf16.msra.mxu0 %v4006
    %5673 = vmatprep.subr.bf16.mxu0 0
    %5674 = vmatpush1.bf16.msra.mxu0 %v4005
    %5675 = vmatprep.subr.bf16.mxu0 0
    %5676 = vmatpush1.bf16.msra.mxu0 %v4004
    %5677 = vmatprep.subr.bf16.mxu0 0
    %5678 = vmatpush1.bf16.msra.mxu0 %v4003
    %5679 = vmatprep.subr.bf16.mxu0 0
    %5680 = vmatpush1.bf16.msra.mxu0 %v4002
    %5681 = vmatprep.subr.bf16.mxu0 0
    %5682 = vmatpush1.bf16.msra.mxu0 %v4001
    %5683 = vmatprep.subr.bf16.mxu0 0
    %5684 = vmatpush1.bf16.msra.mxu0 %v4000
    %5685 = vmatprep.subr.bf16.mxu0 0
    %5686 = vmatpush1.bf16.msra.mxu0 %v3999
    %5687 = vmatprep.subr.bf16.mxu0 0
    %5688 = vmatpush2.bf16.msra.mxu0 %v4014
    %5689 = vmatprep.subr.bf16.mxu0 0
    %5690 = vmatpush2.bf16.msra.mxu0 %v4013
    %5691 = vmatprep.subr.bf16.mxu0 0
    %5692 = vmatpush2.bf16.msra.mxu0 %v4012
    %5693 = vmatprep.subr.bf16.mxu0 0
    %5694 = vmatpush2.bf16.msra.mxu0 %v4011
    %5695 = vmatprep.subr.bf16.mxu0 0
    %5696 = vmatpush2.bf16.msra.mxu0 %v4010
    %5697 = vmatprep.subr.bf16.mxu0 0
    %5698 = vmatpush2.bf16.msra.mxu0 %v4009
    %5699 = vmatprep.subr.bf16.mxu0 0
    %5700 = vmatpush2.bf16.msra.mxu0 %v4008
    %5701 = vmatprep.subr.bf16.mxu0 0
    %5702 = vmatpush2.bf16.msra.mxu0 %v4007
    %5703 = vmatprep.mubr.bf16.mxu0 %v1405
    %5704 = vmatmul.mubr.bf16.gmra.mxu0 %v1403
    %v5705 = vpop.f32.mrf.mxu0
    %v5706 = vadd.f32 %v5666, %v5705
    %v5707 = vpop.f32.mrf.mxu0
    %v5708 = vpop.f32.mrf.mxu0
    %v5709 = vpop.f32.mrf.mxu0
    %5710 = vdwg.mxu0
    %5711 = vmatprep.subr.bf16.mxu0 0
    %5712 = vmatpush1.bf16.msra.mxu0 %v4022
    %5713 = vmatprep.subr.bf16.mxu0 0
    %5714 = vmatpush1.bf16.msra.mxu0 %v4021
    %5715 = vmatprep.subr.bf16.mxu0 0
    %5716 = vmatpush1.bf16.msra.mxu0 %v4020
    %5717 = vmatprep.subr.bf16.mxu0 0
    %5718 = vmatpush1.bf16.msra.mxu0 %v4019
    %5719 = vmatprep.subr.bf16.mxu0 0
    %5720 = vmatpush1.bf16.msra.mxu0 %v4018
    %5721 = vmatprep.subr.bf16.mxu0 0
    %5722 = vmatpush1.bf16.msra.mxu0 %v4017
    %5723 = vmatprep.subr.bf16.mxu0 0
    %5724 = vmatpush1.bf16.msra.mxu0 %v4016
    %5725 = vmatprep.subr.bf16.mxu0 0
    %5726 = vmatpush1.bf16.msra.mxu0 %v4015
    %5727 = vmatprep.subr.bf16.mxu0 0
    %5728 = vmatpush2.bf16.msra.mxu0 %v4030
    %5729 = vmatprep.subr.bf16.mxu0 0
    %5730 = vmatpush2.bf16.msra.mxu0 %v4029
    %5731 = vmatprep.subr.bf16.mxu0 0
    %5732 = vmatpush2.bf16.msra.mxu0 %v4028
    %5733 = vmatprep.subr.bf16.mxu0 0
    %5734 = vmatpush2.bf16.msra.mxu0 %v4027
    %5735 = vmatprep.subr.bf16.mxu0 0
    %5736 = vmatpush2.bf16.msra.mxu0 %v4026
    %5737 = vmatprep.subr.bf16.mxu0 0
    %5738 = vmatpush2.bf16.msra.mxu0 %v4025
    %5739 = vmatprep.subr.bf16.mxu0 0
    %5740 = vmatpush2.bf16.msra.mxu0 %v4024
    %5741 = vmatprep.subr.bf16.mxu0 0
    %5742 = vmatpush2.bf16.msra.mxu0 %v4023
    %5743 = vmatprep.mubr.bf16.mxu0 %v1443
    %5744 = vmatmul.mubr.bf16.gmra.mxu0 %v1429
    %v5745 = vpop.f32.mrf.mxu0
    %v5746 = vadd.f32 %v5706, %v5745
    %v5747 = vpop.f32.mrf.mxu0
    %v5748 = vpop.f32.mrf.mxu0
    %v5749 = vpop.f32.mrf.mxu0
    %5750 = vdwg.mxu0
    %5751 = vmatprep.subr.bf16.mxu0 0
    %5752 = vmatpush1.bf16.msra.mxu0 %v4038
    %5753 = vmatprep.subr.bf16.mxu0 0
    %5754 = vmatpush1.bf16.msra.mxu0 %v4037
    %5755 = vmatprep.subr.bf16.mxu0 0
    %5756 = vmatpush1.bf16.msra.mxu0 %v4036
    %5757 = vmatprep.subr.bf16.mxu0 0
    %5758 = vmatpush1.bf16.msra.mxu0 %v4035
    %5759 = vmatprep.subr.bf16.mxu0 0
    %5760 = vmatpush1.bf16.msra.mxu0 %v4034
    %5761 = vmatprep.subr.bf16.mxu0 0
    %5762 = vmatpush1.bf16.msra.mxu0 %v4033
    %5763 = vmatprep.subr.bf16.mxu0 0
    %5764 = vmatpush1.bf16.msra.mxu0 %v4032
    %5765 = vmatprep.subr.bf16.mxu0 0
    %5766 = vmatpush1.bf16.msra.mxu0 %v4031
    %5767 = vmatprep.subr.bf16.mxu0 0
    %5768 = vmatpush2.bf16.msra.mxu0 %v4046
    %5769 = vmatprep.subr.bf16.mxu0 0
    %5770 = vmatpush2.bf16.msra.mxu0 %v4045
    %5771 = vmatprep.subr.bf16.mxu0 0
    %5772 = vmatpush2.bf16.msra.mxu0 %v4044
    %5773 = vmatprep.subr.bf16.mxu0 0
    %5774 = vmatpush2.bf16.msra.mxu0 %v4043
    %5775 = vmatprep.subr.bf16.mxu0 0
    %5776 = vmatpush2.bf16.msra.mxu0 %v4042
    %5777 = vmatprep.subr.bf16.mxu0 0
    %5778 = vmatpush2.bf16.msra.mxu0 %v4041
    %5779 = vmatprep.subr.bf16.mxu0 0
    %5780 = vmatpush2.bf16.msra.mxu0 %v4040
    %5781 = vmatprep.subr.bf16.mxu0 0
    %5782 = vmatpush2.bf16.msra.mxu0 %v4039
    %5783 = vmatprep.mubr.bf16.mxu0 %v1453
    %5784 = vmatmul.mubr.bf16.gmra.mxu0 %v1451
    %v5785 = vpop.f32.mrf.mxu0
    %v5786 = vadd.f32 %v5746, %v5785
    %v5787 = vpop.f32.mrf.mxu0
    %v5788 = vpop.f32.mrf.mxu0
    %v5789 = vpop.f32.mrf.mxu0
    %5790 = vdwg.mxu0
    %5791 = vmatprep.subr.bf16.mxu0 0
    %5792 = vmatpush1.bf16.msra.mxu0 %v4054
    %5793 = vmatprep.subr.bf16.mxu0 0
    %5794 = vmatpush1.bf16.msra.mxu0 %v4053
    %5795 = vmatprep.subr.bf16.mxu0 0
    %5796 = vmatpush1.bf16.msra.mxu0 %v4052
    %5797 = vmatprep.subr.bf16.mxu0 0
    %5798 = vmatpush1.bf16.msra.mxu0 %v4051
    %5799 = vmatprep.subr.bf16.mxu0 0
    %5800 = vmatpush1.bf16.msra.mxu0 %v4050
    %5801 = vmatprep.subr.bf16.mxu0 0
    %5802 = vmatpush1.bf16.msra.mxu0 %v4049
    %5803 = vmatprep.subr.bf16.mxu0 0
    %5804 = vmatpush1.bf16.msra.mxu0 %v4048
    %5805 = vmatprep.subr.bf16.mxu0 0
    %5806 = vmatpush1.bf16.msra.mxu0 %v4047
    %5807 = vmatprep.subr.bf16.mxu0 0
    %5808 = vmatpush2.bf16.msra.mxu0 %v4062
    %5809 = vmatprep.subr.bf16.mxu0 0
    %5810 = vmatpush2.bf16.msra.mxu0 %v4061
    %5811 = vmatprep.subr.bf16.mxu0 0
    %5812 = vmatpush2.bf16.msra.mxu0 %v4060
    %5813 = vmatprep.subr.bf16.mxu0 0
    %5814 = vmatpush2.bf16.msra.mxu0 %v4059
    %5815 = vmatprep.subr.bf16.mxu0 0
    %5816 = vmatpush2.bf16.msra.mxu0 %v4058
    %5817 = vmatprep.subr.bf16.mxu0 0
    %5818 = vmatpush2.bf16.msra.mxu0 %v4057
    %5819 = vmatprep.subr.bf16.mxu0 0
    %5820 = vmatpush2.bf16.msra.mxu0 %v4056
    %5821 = vmatprep.subr.bf16.mxu0 0
    %5822 = vmatpush2.bf16.msra.mxu0 %v4055
    %5823 = vmatprep.mubr.bf16.mxu0 %v1450
    %5824 = vmatmul.mubr.bf16.gmra.mxu0 %v1436
    %v5825 = vpop.f32.mrf.mxu0
    %v5826 = vadd.f32 %v5786, %v5825
    %v5827 = vpop.f32.mrf.mxu0
    %v5828 = vpop.f32.mrf.mxu0
    %v5829 = vpop.f32.mrf.mxu0
    %5830 = vdwg.mxu0
    %5831 = vmatprep.subr.bf16.mxu0 0
    %5832 = vmatpush1.bf16.msra.mxu0 %v4070
    %5833 = vmatprep.subr.bf16.mxu0 0
    %5834 = vmatpush1.bf16.msra.mxu0 %v4069
    %5835 = vmatprep.subr.bf16.mxu0 0
    %5836 = vmatpush1.bf16.msra.mxu0 %v4068
    %5837 = vmatprep.subr.bf16.mxu0 0
    %5838 = vmatpush1.bf16.msra.mxu0 %v4067
    %5839 = vmatprep.subr.bf16.mxu0 0
    %5840 = vmatpush1.bf16.msra.mxu0 %v4066
    %5841 = vmatprep.subr.bf16.mxu0 0
    %5842 = vmatpush1.bf16.msra.mxu0 %v4065
    %5843 = vmatprep.subr.bf16.mxu0 0
    %5844 = vmatpush1.bf16.msra.mxu0 %v4064
    %5845 = vmatprep.subr.bf16.mxu0 0
    %5846 = vmatpush1.bf16.msra.mxu0 %v4063
    %5847 = vmatprep.subr.bf16.mxu0 0
    %5848 = vmatpush2.bf16.msra.mxu0 %v4078
    %5849 = vmatprep.subr.bf16.mxu0 0
    %5850 = vmatpush2.bf16.msra.mxu0 %v4077
    %5851 = vmatprep.subr.bf16.mxu0 0
    %5852 = vmatpush2.bf16.msra.mxu0 %v4076
    %5853 = vmatprep.subr.bf16.mxu0 0
    %5854 = vmatpush2.bf16.msra.mxu0 %v4075
    %5855 = vmatprep.subr.bf16.mxu0 0
    %5856 = vmatpush2.bf16.msra.mxu0 %v4074
    %5857 = vmatprep.subr.bf16.mxu0 0
    %5858 = vmatpush2.bf16.msra.mxu0 %v4073
    %5859 = vmatprep.subr.bf16.mxu0 0
    %5860 = vmatpush2.bf16.msra.mxu0 %v4072
    %5861 = vmatprep.subr.bf16.mxu0 0
    %5862 = vmatpush2.bf16.msra.mxu0 %v4071
    %5863 = vmatprep.mubr.bf16.mxu0 %v1454
    %5864 = vmatmul.mubr.bf16.gmra.mxu0 %v1452
    %v5865 = vpop.f32.mrf.mxu0
    %v5866 = vadd.f32 %v5826, %v5865
    %v5867 = vpop.f32.mrf.mxu0
    %v5868 = vpop.f32.mrf.mxu0
    %v5869 = vpop.f32.mrf.mxu0
    %5870 = vdwg.mxu0
    %5872 = vset.pattern.permute.xlu0 6
    %5873 = vperm.xlu0 %5872, %v5866
    %v5874 = vpop.permute.xlu0 %5873
    %v5876 = vadd.f32 %v5874, %v5866
    %vm5877 = vcmask 41984
    %v5878 = vsel %vm5877, %v5866, 0.0
    %5879 = vadd.xlane.f32.xlu0 %v5878
    %v5880 = vpop.xlane.xlu0 %5879
    %v5881 = vrot.slane %v5880, 4
    %v5882 = vadd.f32 %v5880, %v5881
    %v5883 = vrot.slane %v5882, 2
    %v5884 = vadd.f32 %v5882, %v5883
    %v5885 = vrot.slane %v5884, 1
    %v5886 = vadd.f32 %v5884, %v5885
    %s5887 = vtos %v5886
    %v5888 = vrcp.pop 12.0
    %s5889 = vtos %v5888
    %s5890 = smul.f32 %s5887, %s5889
    %v5891 = vstv %s5890
    %v5892 = vsub.f32 %v5876, %v5891
    %5893 = vst.msk [vmem:[#allocation2] sm:$0x3] %vm5877, %v5892
    // Predicated region
    $region14: #{deep_q_forward.9} parent=1 // pred_check
      _
    $region15: #{deep_q_forward.9} parent=1 // pred_check_branch
      %5895 = sbr.rel (0) target = $region17
    $region16: #{deep_q_forward.9} parent=1 // pred_region
      %s5897 = ssub.s32 32, 32
      %5898 = vsyncadd [#allocation3], %s5897
      %s5900 = sshll.u32 [#allocation2], 4
      %s5901 = int_to_ptr.vmem [resolvable:$true] %s5900
      %5903 = dma.vmem_to_hbm [thread:$0]  %s5901, 32, %s3, [#allocation3]
    $region17: #{deep_q_forward.9} parent=1 // pred_fallthru
      _
    // Predicated region
    $region18: #{deep_q_forward.9} parent=1 // pred_check
      _
    $region19: #{deep_q_forward.9} parent=1 // pred_check_branch
      %5905 = sbr.rel (0) target = $region21
    $region20: #{deep_q_forward.9} parent=1 // pred_region
      %5906 = dma.done [#allocation3], 32
    $region21: #{deep_q_forward.9} parent=1 // pred_fallthru
      _
    %5907 = vsyncpa [#allocation3], 1

</llo_original>
